<compile_context>
chip_gen: v7x
topology: tpu7x:2x2x1
jax: 0.10.0
libtpu: 0.0.40
codegen_flags: <defaults>
</compile_context>

<pallas_src>
import jax
import jax.numpy as jnp
from jax import lax
from jax.experimental import pallas as pl
from jax.experimental.pallas import tpu as pltpu

_SQ_K = 3            # inception square kernel
_BAND_K = 11         # inception band kernel
_MASK_K = 5          # WTConv2d stand-in kernel
_P = _BAND_K // 2    # x padding (covers the 3x3, 1x11 and 11x1 branches)
_PM = _MASK_K // 2   # mask padding


# ---------------------------------------------------------------------------
# Fused kernel: inception dw-convs -> mask conv + sigmoid -> masked pool ->
# v-projection -> output projection, one batch element per grid step.
# ---------------------------------------------------------------------------
def _make_fused_kernel(H, W, dim):
    P, PM = _P, _PM

    def kernel(x_ref, m_ref, w_hw_ref, w_w_ref, w_h_ref, idm_ref, bias_ref,
               w_wt_ref, b_wt_ref, w_v_ref, w_o_ref, b_o_ref,
               o_ref, xp, mp):
        # ---- zero-padded activations in VMEM scratch (no XLA pad pass) -----
        xp[...] = jnp.zeros_like(xp)
        mp[...] = jnp.zeros_like(mp)
        xp[P:P + H, P:P + W, :] = x_ref[0]          # (H, W, dim)
        mp[PM:PM + H, PM:PM + W, :] = m_ref[0]      # (H, W, 1)

        # ---- InceptionDWConv2d: identity + 3 depthwise branches ------------
        # Per-tap weights are full-C vectors (zero outside their branch), so
        # each tap is one fused multiply-add over an (H, W, C) slab.
        w_hw = w_hw_ref[...]                        # (9,  C)
        w_w = w_w_ref[...]                          # (11, C)
        w_h = w_h_ref[...]                          # (11, C)
        y = xp[P:P + H, P:P + W, :] * idm_ref[...] + bias_ref[...]
        r = _SQ_K // 2
        for i in range(_SQ_K):                      # 3x3 branch
            for j in range(_SQ_K):
                t = i * _SQ_K + j
                y = y + xp[P - r + i:P - r + i + H,
                           P - r + j:P - r + j + W, :] * w_hw[t:t + 1, :]
        rb = _BAND_K // 2
        for j in range(_BAND_K):                    # 1x11 branch
            y = y + xp[P:P + H, P - rb + j:P - rb + j + W, :] * w_w[j:j + 1, :]
        for i in range(_BAND_K):                    # 11x1 branch
            y = y + xp[P - rb + i:P - rb + i + H, P:P + W, :] * w_h[i:i + 1, :]

        # ---- mask conv (WTConv2d stand-in) + sigmoid (EUP slot) -------------
        w_wt = w_wt_ref[...]                        # (25, 1)
        mc = jnp.zeros((H, W, 1), jnp.float32)
        for i in range(_MASK_K):
            for j in range(_MASK_K):
                t = i * _MASK_K + j
                mc = mc + mp[i:i + H, j:j + W, :] * w_wt[t:t + 1, :]
        m = jax.nn.sigmoid(mc + b_wt_ref[...])      # (H, W, 1)

        # ---- MaskAveragePooling fused with to_qkv (only the v chunk lives) --
        # softmax over the single pooled key token == 1  =>  q, k, dots dead;
        # the pool is linear  =>  pool(W_v @ y) == W_v @ pool(y).
        area = jnp.sum(m) + jnp.float32(0.0005)
        yp = jnp.sum(jnp.sum(y * m, axis=0), axis=0, keepdims=True)   # (1, C)
        pooled = yp / area

        # ---- v projection + to_out Linear (Dropout p=0 == identity) ---------
        vf = jnp.dot(pooled, w_v_ref[...],
                     preferred_element_type=jnp.float32)              # (1, inner)
        out = jnp.dot(vf, w_o_ref[...],
                      preferred_element_type=jnp.float32) + b_o_ref[...]  # (1, C)
        o_ref[...] = out.reshape(1, 1, dim)

    return kernel


# ---------------------------------------------------------------------------
# One-time repack of PyTorch-layout params into the fused-kernel layout.
# ---------------------------------------------------------------------------
def pack_params(params, dim, heads, dim_head):
    inner = heads * dim_head
    gc = int(dim * 0.125)
    c_id = dim - 3 * gc
    f32 = jnp.float32

    w_hw = jnp.zeros((_SQ_K * _SQ_K, dim), f32).at[:, c_id:c_id + gc].set(
        params['w_hw'].reshape(gc, _SQ_K * _SQ_K).T.astype(f32))
    w_w = jnp.zeros((_BAND_K, dim), f32).at[:, c_id + gc:c_id + 2 * gc].set(
        params['w_w'].reshape(gc, _BAND_K).T.astype(f32))
    w_h = jnp.zeros((_BAND_K, dim), f32).at[:, c_id + 2 * gc:dim].set(
        params['w_h'].reshape(gc, _BAND_K).T.astype(f32))
    bias = jnp.zeros((dim,), f32)
    bias = bias.at[c_id:c_id + gc].set(params['b_hw'].astype(f32))
    bias = bias.at[c_id + gc:c_id + 2 * gc].set(params['b_w'].astype(f32))
    bias = bias.at[c_id + 2 * gc:dim].set(params['b_h'].astype(f32))
    idm = (jnp.arange(dim) < c_id).astype(f32)

    w_v = params['w_qkv'][2 * inner:3 * inner, :]    # only the v chunk is live
    return dict(
        w_hw=w_hw, w_w=w_w, w_h=w_h,
        idm=idm.reshape(1, dim), bias=bias.reshape(1, dim),
        w_wt=params['w_wt'].reshape(_MASK_K * _MASK_K, 1).astype(f32),
        b_wt=params['b_wt'].reshape(1, 1).astype(f32),
        w_v_t=jnp.transpose(w_v).astype(f32),                  # (dim, inner)
        w_out_t=jnp.transpose(params['w_out']).astype(f32),    # (inner, dim)
        b_out=params['b_out'].reshape(1, dim).astype(f32),
    )


# ---------------------------------------------------------------------------
# Forward wrapper: one pallas_call, grid over batch.
# ---------------------------------------------------------------------------
def kaem_fft_forward(packed, x, mask, dim, heads, dim_head):
    """x: (B, dim, H, W); mask: (B, 1, H, W) -> (B, H*W, dim)."""
    B, _, H, W = x.shape
    inner = heads * dim_head

    # Layout plumbing only: channels-last so C sits on TPU lanes.
    x_nhwc = jnp.transpose(x, (0, 2, 3, 1)).astype(jnp.float32)      # (B,H,W,C)
    m_nhwc = jnp.transpose(mask, (0, 2, 3, 1)).astype(jnp.float32)   # (B,H,W,1)

    def wspec(shape):
        return pl.BlockSpec(shape, lambda b: (0,) * len(shape))

    out_vec = pl.pallas_call(
        _make_fused_kernel(H, W, dim),
        out_shape=jax.ShapeDtypeStruct((B, 1, dim), jnp.float32),
        grid=(B,),     # one batch element per grid step; "parallel" -> uses
                       # both v7x TensorCores, plain loop on v5e/v6e.
        in_specs=[
            pl.BlockSpec((1, H, W, dim), lambda b: (b, 0, 0, 0)),
            pl.BlockSpec((1, H, W, 1), lambda b: (b, 0, 0, 0)),
            wspec((_SQ_K * _SQ_K, dim)),
            wspec((_BAND_K, dim)),
            wspec((_BAND_K, dim)),
            wspec((1, dim)),
            wspec((1, dim)),
            wspec((_MASK_K * _MASK_K, 1)),
            wspec((1, 1)),
            wspec((dim, inner)),
            wspec((inner, dim)),
            wspec((1, dim)),
        ],
        out_specs=pl.BlockSpec((1, 1, dim), lambda b: (b, 0, 0)),
        scratch_shapes=[
            pltpu.VMEM((H + 2 * _P, W + 2 * _P, dim), jnp.float32),  # padded x
            pltpu.VMEM((H + 2 * _PM, W + 2 * _PM, 1), jnp.float32),  # padded mask
        ],
        compiler_params=pltpu.CompilerParams(
            dimension_semantics=("parallel",)),
        # TODO(synk): for much larger H/W/dim, tile spatially (halo'd row
        # blocks) and set vmem_limit_bytes with headroom for v7x's 64 MiB VMEM.
    )(x_nhwc, m_nhwc,
      packed['w_hw'], packed['w_w'], packed['w_h'],
      packed['idm'], packed['bias'],
      packed['w_wt'], packed['b_wt'],
      packed['w_v_t'], packed['w_out_t'], packed['b_out'])

    # Every token's attention output is identical (softmax over one pooled key
    # is 1), so broadcasting the per-batch vector reproduces (B, H*W, dim).
    return jnp.broadcast_to(out_vec, (B, H * W, dim))


# ---------------------------------------------------------------------------
# Deterministic parameter init (shapes match the PyTorch module).
# ---------------------------------------------------------------------------
def init_params(key, dim, heads, dim_head):
    inner = heads * dim_head
    gc = int(dim * 0.125)
    ks = jax.random.split(key, 11)

    def nrm(k, shape, s=0.1):
        return s * jax.random.normal(k, shape, jnp.float32)

    return dict(
        w_hw=nrm(ks[0], (gc, 1, 3, 3)),   b_hw=nrm(ks[1], (gc,)),
        w_w=nrm(ks[2], (gc, 1, 1, 11)),   b_w=nrm(ks[3], (gc,)),
        w_h=nrm(ks[4], (gc, 1, 11, 1)),   b_h=nrm(ks[5], (gc,)),
        w_wt=nrm(ks[6], (1, 1, 5, 5)),    b_wt=nrm(ks[7], (1,)),
        w_qkv=nrm(ks[8], (inner * 3, dim)),        # Conv2d(dim, 3*inner, 1, bias=False)
        w_out=nrm(ks[9], (dim, inner)),            # Linear(inner, dim)
        b_out=nrm(ks[10], (dim,)),
    )


# ---------------------------------------------------------------------------
# Pure-JAX reference following the PyTorch module op-for-op (for validation).
# ---------------------------------------------------------------------------
def reference_forward(params, x, mask, dim, heads, dim_head):
    B, _, H, W = x.shape
    inner = heads * dim_head
    gc = int(dim * 0.125)
    c_id = dim - 3 * gc
    scale = dim_head ** -0.5

    def dwconv(z, w, b):
        out = lax.conv_general_dilated(
            z, w, (1, 1), 'SAME', feature_group_count=w.shape[0],
            dimension_numbers=('NCHW', 'OIHW', 'NCHW'))
        return out + b.reshape(1, -1, 1, 1)

    y = jnp.concatenate([
        x[:, :c_id],
        dwconv(x[:, c_id:c_id + gc], params['w_hw'], params['b_hw']),
        dwconv(x[:, c_id + gc:c_id + 2 * gc], params['w_w'], params['b_w']),
        dwconv(x[:, c_id + 2 * gc:], params['w_h'], params['b_h']),
    ], axis=1)
    m = jax.nn.sigmoid(dwconv(mask, params['w_wt'], params['b_wt']))

    qkv = jnp.einsum('bchw,oc->bohw', y, params['w_qkv'])
    q, k, v = jnp.split(qkv, 3, axis=1)

    area = jnp.sum(m, axis=(2, 3)) + 0.0005                      # (B, 1)
    pool = lambda z: jnp.sum(z * m, axis=(2, 3)) / area          # (B, inner)
    kf, vf = pool(k), pool(v)

    qh = q.reshape(B, heads, dim_head, H * W).transpose(0, 1, 3, 2)
    kh = kf.reshape(B, heads, 1, dim_head)
    vh = vf.reshape(B, heads, 1, dim_head)
    dots = jnp.einsum('bhnd,bhkd->bhnk', qh, kh) * scale
    attn = jax.nn.softmax(dots, axis=-1)                         # == 1 (1 key)
    out = jnp.einsum('bhnk,bhkd->bhnd', attn, vh)
    out = out.transpose(0, 2, 1, 3).reshape(B, H * W, inner)
    return out @ params['w_out'].T + params['b_out']


if __name__ == "__main__":
    dim, heads, dim_head = 16, 4, 8
    B, H, W = 2, 16, 16

    key = jax.random.PRNGKey(0)
    kx, km, kp = jax.random.split(key, 3)
    x = jax.random.normal(kx, (B, dim, H, W), jnp.float32)
    mask = jax.random.normal(km, (B, 1, H, W), jnp.float32)
    params = init_params(kp, dim, heads, dim_head)
    packed = pack_params(params, dim, heads, dim_head)

    out = kaem_fft_forward(packed, x, mask, dim, heads, dim_head)
    jax.block_until_ready(out)
    assert out.shape == (B, H * W, dim), out.shape
    assert bool(jnp.all(jnp.isfinite(out)))

    ref = reference_forward(params, x, mask, dim, heads, dim_head)
    assert bool(jnp.allclose(out, ref, atol=1e-3, rtol=1e-3)), \
        float(jnp.max(jnp.abs(out - ref)))

    print("KERNEL_OK")
</pallas_src>

<mosaic_0001>
module attributes {stable_mosaic.version = 11 : i64} {
  func.func @kernel(%arg0: i32, %arg1: memref<1x16x16x16xf32, #tpu.memory_space<vmem>>, %arg2: memref<1x16x16x1xf32, #tpu.memory_space<vmem>>, %arg3: memref<9x16xf32, #tpu.memory_space<vmem>>, %arg4: memref<11x16xf32, #tpu.memory_space<vmem>>, %arg5: memref<11x16xf32, #tpu.memory_space<vmem>>, %arg6: memref<1x16xf32, #tpu.memory_space<vmem>>, %arg7: memref<1x16xf32, #tpu.memory_space<vmem>>, %arg8: memref<25x1xf32, #tpu.memory_space<vmem>>, %arg9: memref<1x1xf32, #tpu.memory_space<vmem>>, %arg10: memref<16x32xf32, #tpu.memory_space<vmem>>, %arg11: memref<32x16xf32, #tpu.memory_space<vmem>>, %arg12: memref<1x16xf32, #tpu.memory_space<vmem>>, %arg13: memref<1x1x16xf32, #tpu.memory_space<vmem>>, %arg14: memref<26x26x16xf32, #tpu.memory_space<vmem>>, %arg15: memref<20x20x1xf32, #tpu.memory_space<vmem>>) attributes {dimension_semantics = [#tpu.dimension_semantics<parallel>], iteration_bounds = array<i64: 2>, scalar_prefetch = 0 : i64, scratch_operands = 2 : i64, tpu.core_type = #tpu.core_type<tc>, window_params = [{transform_indices = @transform_0, window_bounds = array<i64: 1, 16, 16, 16>}, {transform_indices = @transform_1, window_bounds = array<i64: 1, 16, 16, 1>}, {pipeline_mode = #tpu.pipeline_mode<synchronous>, transform_indices = @transform_2, window_bounds = array<i64: 9, 16>}, {pipeline_mode = #tpu.pipeline_mode<synchronous>, transform_indices = @transform_3, window_bounds = array<i64: 11, 16>}, {pipeline_mode = #tpu.pipeline_mode<synchronous>, transform_indices = @transform_4, window_bounds = array<i64: 11, 16>}, {pipeline_mode = #tpu.pipeline_mode<synchronous>, transform_indices = @transform_5, window_bounds = array<i64: 1, 16>}, {pipeline_mode = #tpu.pipeline_mode<synchronous>, transform_indices = @transform_6, window_bounds = array<i64: 1, 16>}, {pipeline_mode = #tpu.pipeline_mode<synchronous>, transform_indices = @transform_7, window_bounds = array<i64: 25, 1>}, {pipeline_mode = #tpu.pipeline_mode<synchronous>, transform_indices = @transform_8, window_bounds = array<i64: 1, 1>}, {pipeline_mode = #tpu.pipeline_mode<synchronous>, transform_indices = @transform_9, window_bounds = array<i64: 16, 32>}, {pipeline_mode = #tpu.pipeline_mode<synchronous>, transform_indices = @transform_10, window_bounds = array<i64: 32, 16>}, {pipeline_mode = #tpu.pipeline_mode<synchronous>, transform_indices = @transform_11, window_bounds = array<i64: 1, 16>}, {transform_indices = @transform_12, window_bounds = array<i64: 1, 1, 16>}]} {
    %cst = arith.constant 0.000000e+00 : f32
    %0 = vector.broadcast %cst : f32 to vector<26x26x16xf32>
    %c0 = arith.constant 0 : index
    %c0_0 = arith.constant 0 : index
    %c0_1 = arith.constant 0 : index
    %1 = vector.load %arg14[%c0, %c0_0, %c0_1] : memref<26x26x16xf32, #tpu.memory_space<vmem>>, vector<26x26x16xf32>
    tpu.vector_store %arg14[%c0, %c0_0, %c0_1], %0 {strides = array<i32>} : memref<26x26x16xf32, #tpu.memory_space<vmem>>, vector<26x26x16xf32>,
    %cst_2 = arith.constant 0.000000e+00 : f32
    %2 = vector.broadcast %cst_2 : f32 to vector<20x20x1xf32>
    %c0_3 = arith.constant 0 : index
    %c0_4 = arith.constant 0 : index
    %c0_5 = arith.constant 0 : index
    %3 = vector.load %arg15[%c0_3, %c0_4, %c0_5] : memref<20x20x1xf32, #tpu.memory_space<vmem>>, vector<20x20x1xf32>
    tpu.vector_store %arg15[%c0_3, %c0_4, %c0_5], %2 {strides = array<i32>} : memref<20x20x1xf32, #tpu.memory_space<vmem>>, vector<20x20x1xf32>,
    %c0_6 = arith.constant 0 : index
    %c0_7 = arith.constant 0 : index
    %c0_8 = arith.constant 0 : index
    %c0_9 = arith.constant 0 : index
    %4 = vector.load %arg1[%c0_6, %c0_7, %c0_8, %c0_9] : memref<1x16x16x16xf32, #tpu.memory_space<vmem>>, vector<1x16x16x16xf32>
    %5 = vector.shape_cast %4 : vector<1x16x16x16xf32> to vector<16x16x16xf32>
    %c5 = arith.constant 5 : index
    %c5_10 = arith.constant 5 : index
    %c0_11 = arith.constant 0 : index
    %6 = vector.load %arg14[%c5, %c5_10, %c0_11] : memref<26x26x16xf32, #tpu.memory_space<vmem>>, vector<16x16x16xf32>
    tpu.vector_store %arg14[%c5, %c5_10, %c0_11], %5 {strides = array<i32>} : memref<26x26x16xf32, #tpu.memory_space<vmem>>, vector<16x16x16xf32>,
    %c0_12 = arith.constant 0 : index
    %c0_13 = arith.constant 0 : index
    %c0_14 = arith.constant 0 : index
    %c0_15 = arith.constant 0 : index
    %7 = vector.load %arg2[%c0_12, %c0_13, %c0_14, %c0_15] : memref<1x16x16x1xf32, #tpu.memory_space<vmem>>, vector<1x16x16x1xf32>
    %8 = vector.shape_cast %7 : vector<1x16x16x1xf32> to vector<16x16x1xf32>
    %c2 = arith.constant 2 : index
    %c2_16 = arith.constant 2 : index
    %c0_17 = arith.constant 0 : index
    %9 = vector.load %arg15[%c2, %c2_16, %c0_17] : memref<20x20x1xf32, #tpu.memory_space<vmem>>, vector<16x16x1xf32>
    tpu.vector_store %arg15[%c2, %c2_16, %c0_17], %8 {strides = array<i32>} : memref<20x20x1xf32, #tpu.memory_space<vmem>>, vector<16x16x1xf32>,
    %c0_18 = arith.constant 0 : index
    %c0_19 = arith.constant 0 : index
    %10 = vector.load %arg3[%c0_18, %c0_19] : memref<9x16xf32, #tpu.memory_space<vmem>>, vector<9x16xf32>
    %c0_20 = arith.constant 0 : index
    %c0_21 = arith.constant 0 : index
    %11 = vector.load %arg4[%c0_20, %c0_21] : memref<11x16xf32, #tpu.memory_space<vmem>>, vector<11x16xf32>
    %c0_22 = arith.constant 0 : index
    %c0_23 = arith.constant 0 : index
    %12 = vector.load %arg5[%c0_22, %c0_23] : memref<11x16xf32, #tpu.memory_space<vmem>>, vector<11x16xf32>
    %c5_24 = arith.constant 5 : index
    %c5_25 = arith.constant 5 : index
    %c0_26 = arith.constant 0 : index
    %13 = vector.load %arg14[%c5_24, %c5_25, %c0_26] : memref<26x26x16xf32, #tpu.memory_space<vmem>>, vector<16x16x16xf32>
    %c0_27 = arith.constant 0 : index
    %c0_28 = arith.constant 0 : index
    %14 = vector.load %arg6[%c0_27, %c0_28] : memref<1x16xf32, #tpu.memory_space<vmem>>, vector<1x16xf32>
    %15 = vector.shape_cast %14 : vector<1x16xf32> to vector<1x1x16xf32>
    %16 = vector.broadcast %15 : vector<1x1x16xf32> to vector<16x16x16xf32>
    %17 = arith.mulf %13, %16 : vector<16x16x16xf32>
    %c0_29 = arith.constant 0 : index
    %c0_30 = arith.constant 0 : index
    %18 = vector.load %arg7[%c0_29, %c0_30] : memref<1x16xf32, #tpu.memory_space<vmem>>, vector<1x16xf32>
    %19 = vector.shape_cast %18 : vector<1x16xf32> to vector<1x1x16xf32>
    %20 = vector.broadcast %19 : vector<1x1x16xf32> to vector<16x16x16xf32>
    %21 = arith.addf %17, %20 : vector<16x16x16xf32>
    %c4 = arith.constant 4 : index
    %c4_31 = arith.constant 4 : index
    %c0_32 = arith.constant 0 : index
    %22 = vector.load %arg14[%c4, %c4_31, %c0_32] : memref<26x26x16xf32, #tpu.memory_space<vmem>>, vector<16x16x16xf32>
    %23 = vector.extract_strided_slice %10 {offsets = [0, 0], sizes = [1, 16], strides = [1, 1]} : vector<9x16xf32> to vector<1x16xf32>
    %24 = vector.shape_cast %23 : vector<1x16xf32> to vector<1x1x16xf32>
    %25 = vector.broadcast %24 : vector<1x1x16xf32> to vector<16x16x16xf32>
    %26 = arith.mulf %22, %25 : vector<16x16x16xf32>
    %27 = arith.addf %21, %26 : vector<16x16x16xf32>
    %c4_33 = arith.constant 4 : index
    %c5_34 = arith.constant 5 : index
    %c0_35 = arith.constant 0 : index
    %28 = vector.load %arg14[%c4_33, %c5_34, %c0_35] : memref<26x26x16xf32, #tpu.memory_space<vmem>>, vector<16x16x16xf32>
    %29 = vector.extract_strided_slice %10 {offsets = [1, 0], sizes = [1, 16], strides = [1, 1]} : vector<9x16xf32> to vector<1x16xf32>
    %30 = vector.shape_cast %29 : vector<1x16xf32> to vector<1x1x16xf32>
    %31 = vector.broadcast %30 : vector<1x1x16xf32> to vector<16x16x16xf32>
    %32 = arith.mulf %28, %31 : vector<16x16x16xf32>
    %33 = arith.addf %27, %32 : vector<16x16x16xf32>
    %c4_36 = arith.constant 4 : index
    %c6 = arith.constant 6 : index
    %c0_37 = arith.constant 0 : index
    %34 = vector.load %arg14[%c4_36, %c6, %c0_37] : memref<26x26x16xf32, #tpu.memory_space<vmem>>, vector<16x16x16xf32>
    %35 = vector.extract_strided_slice %10 {offsets = [2, 0], sizes = [1, 16], strides = [1, 1]} : vector<9x16xf32> to vector<1x16xf32>
    %36 = vector.shape_cast %35 : vector<1x16xf32> to vector<1x1x16xf32>
    %37 = vector.broadcast %36 : vector<1x1x16xf32> to vector<16x16x16xf32>
    %38 = arith.mulf %34, %37 : vector<16x16x16xf32>
    %39 = arith.addf %33, %38 : vector<16x16x16xf32>
    %c5_38 = arith.constant 5 : index
    %c4_39 = arith.constant 4 : index
    %c0_40 = arith.constant 0 : index
    %40 = vector.load %arg14[%c5_38, %c4_39, %c0_40] : memref<26x26x16xf32, #tpu.memory_space<vmem>>, vector<16x16x16xf32>
    %41 = vector.extract_strided_slice %10 {offsets = [3, 0], sizes = [1, 16], strides = [1, 1]} : vector<9x16xf32> to vector<1x16xf32>
    %42 = vector.shape_cast %41 : vector<1x16xf32> to vector<1x1x16xf32>
    %43 = vector.broadcast %42 : vector<1x1x16xf32> to vector<16x16x16xf32>
    %44 = arith.mulf %40, %43 : vector<16x16x16xf32>
    %45 = arith.addf %39, %44 : vector<16x16x16xf32>
    %c5_41 = arith.constant 5 : index
    %c5_42 = arith.constant 5 : index
    %c0_43 = arith.constant 0 : index
    %46 = vector.load %arg14[%c5_41, %c5_42, %c0_43] : memref<26x26x16xf32, #tpu.memory_space<vmem>>, vector<16x16x16xf32>
    %47 = vector.extract_strided_slice %10 {offsets = [4, 0], sizes = [1, 16], strides = [1, 1]} : vector<9x16xf32> to vector<1x16xf32>
    %48 = vector.shape_cast %47 : vector<1x16xf32> to vector<1x1x16xf32>
    %49 = vector.broadcast %48 : vector<1x1x16xf32> to vector<16x16x16xf32>
    %50 = arith.mulf %46, %49 : vector<16x16x16xf32>
    %51 = arith.addf %45, %50 : vector<16x16x16xf32>
    %c5_44 = arith.constant 5 : index
    %c6_45 = arith.constant 6 : index
    %c0_46 = arith.constant 0 : index
    %52 = vector.load %arg14[%c5_44, %c6_45, %c0_46] : memref<26x26x16xf32, #tpu.memory_space<vmem>>, vector<16x16x16xf32>
    %53 = vector.extract_strided_slice %10 {offsets = [5, 0], sizes = [1, 16], strides = [1, 1]} : vector<9x16xf32> to vector<1x16xf32>
    %54 = vector.shape_cast %53 : vector<1x16xf32> to vector<1x1x16xf32>
    %55 = vector.broadcast %54 : vector<1x1x16xf32> to vector<16x16x16xf32>
    %56 = arith.mulf %52, %55 : vector<16x16x16xf32>
    %57 = arith.addf %51, %56 : vector<16x16x16xf32>
    %c6_47 = arith.constant 6 : index
    %c4_48 = arith.constant 4 : index
    %c0_49 = arith.constant 0 : index
    %58 = vector.load %arg14[%c6_47, %c4_48, %c0_49] : memref<26x26x16xf32, #tpu.memory_space<vmem>>, vector<16x16x16xf32>
    %59 = vector.extract_strided_slice %10 {offsets = [6, 0], sizes = [1, 16], strides = [1, 1]} : vector<9x16xf32> to vector<1x16xf32>
    %60 = vector.shape_cast %59 : vector<1x16xf32> to vector<1x1x16xf32>
    %61 = vector.broadcast %60 : vector<1x1x16xf32> to vector<16x16x16xf32>
    %62 = arith.mulf %58, %61 : vector<16x16x16xf32>
    %63 = arith.addf %57, %62 : vector<16x16x16xf32>
    %c6_50 = arith.constant 6 : index
    %c5_51 = arith.constant 5 : index
    %c0_52 = arith.constant 0 : index
    %64 = vector.load %arg14[%c6_50, %c5_51, %c0_52] : memref<26x26x16xf32, #tpu.memory_space<vmem>>, vector<16x16x16xf32>
    %65 = vector.extract_strided_slice %10 {offsets = [7, 0], sizes = [1, 16], strides = [1, 1]} : vector<9x16xf32> to vector<1x16xf32>
    %66 = vector.shape_cast %65 : vector<1x16xf32> to vector<1x1x16xf32>
    %67 = vector.broadcast %66 : vector<1x1x16xf32> to vector<16x16x16xf32>
    %68 = arith.mulf %64, %67 : vector<16x16x16xf32>
    %69 = arith.addf %63, %68 : vector<16x16x16xf32>
    %c6_53 = arith.constant 6 : index
    %c6_54 = arith.constant 6 : index
    %c0_55 = arith.constant 0 : index
    %70 = vector.load %arg14[%c6_53, %c6_54, %c0_55] : memref<26x26x16xf32, #tpu.memory_space<vmem>>, vector<16x16x16xf32>
    %71 = vector.extract_strided_slice %10 {offsets = [8, 0], sizes = [1, 16], strides = [1, 1]} : vector<9x16xf32> to vector<1x16xf32>
    %72 = vector.shape_cast %71 : vector<1x16xf32> to vector<1x1x16xf32>
    %73 = vector.broadcast %72 : vector<1x1x16xf32> to vector<16x16x16xf32>
    %74 = arith.mulf %70, %73 : vector<16x16x16xf32>
    %75 = arith.addf %69, %74 : vector<16x16x16xf32>
    %c5_56 = arith.constant 5 : index
    %c0_57 = arith.constant 0 : index
    %c0_58 = arith.constant 0 : index
    %76 = vector.load %arg14[%c5_56, %c0_57, %c0_58] : memref<26x26x16xf32, #tpu.memory_space<vmem>>, vector<16x16x16xf32>
    %77 = vector.extract_strided_slice %11 {offsets = [0, 0], sizes = [1, 16], strides = [1, 1]} : vector<11x16xf32> to vector<1x16xf32>
    %78 = vector.shape_cast %77 : vector<1x16xf32> to vector<1x1x16xf32>
    %79 = vector.broadcast %78 : vector<1x1x16xf32> to vector<16x16x16xf32>
    %80 = arith.mulf %76, %79 : vector<16x16x16xf32>
    %81 = arith.addf %75, %80 : vector<16x16x16xf32>
    %c5_59 = arith.constant 5 : index
    %c1 = arith.constant 1 : index
    %c0_60 = arith.constant 0 : index
    %82 = vector.load %arg14[%c5_59, %c1, %c0_60] : memref<26x26x16xf32, #tpu.memory_space<vmem>>, vector<16x16x16xf32>
    %83 = vector.extract_strided_slice %11 {offsets = [1, 0], sizes = [1, 16], strides = [1, 1]} : vector<11x16xf32> to vector<1x16xf32>
    %84 = vector.shape_cast %83 : vector<1x16xf32> to vector<1x1x16xf32>
    %85 = vector.broadcast %84 : vector<1x1x16xf32> to vector<16x16x16xf32>
    %86 = arith.mulf %82, %85 : vector<16x16x16xf32>
    %87 = arith.addf %81, %86 : vector<16x16x16xf32>
    %c5_61 = arith.constant 5 : index
    %c2_62 = arith.constant 2 : index
    %c0_63 = arith.constant 0 : index
    %88 = vector.load %arg14[%c5_61, %c2_62, %c0_63] : memref<26x26x16xf32, #tpu.memory_space<vmem>>, vector<16x16x16xf32>
    %89 = vector.extract_strided_slice %11 {offsets = [2, 0], sizes = [1, 16], strides = [1, 1]} : vector<11x16xf32> to vector<1x16xf32>
    %90 = vector.shape_cast %89 : vector<1x16xf32> to vector<1x1x16xf32>
    %91 = vector.broadcast %90 : vector<1x1x16xf32> to vector<16x16x16xf32>
    %92 = arith.mulf %88, %91 : vector<16x16x16xf32>
    %93 = arith.addf %87, %92 : vector<16x16x16xf32>
    %c5_64 = arith.constant 5 : index
    %c3 = arith.constant 3 : index
    %c0_65 = arith.constant 0 : index
    %94 = vector.load %arg14[%c5_64, %c3, %c0_65] : memref<26x26x16xf32, #tpu.memory_space<vmem>>, vector<16x16x16xf32>
    %95 = vector.extract_strided_slice %11 {offsets = [3, 0], sizes = [1, 16], strides = [1, 1]} : vector<11x16xf32> to vector<1x16xf32>
    %96 = vector.shape_cast %95 : vector<1x16xf32> to vector<1x1x16xf32>
    %97 = vector.broadcast %96 : vector<1x1x16xf32> to vector<16x16x16xf32>
    %98 = arith.mulf %94, %97 : vector<16x16x16xf32>
    %99 = arith.addf %93, %98 : vector<16x16x16xf32>
    %c5_66 = arith.constant 5 : index
    %c4_67 = arith.constant 4 : index
    %c0_68 = arith.constant 0 : index
    %100 = vector.load %arg14[%c5_66, %c4_67, %c0_68] : memref<26x26x16xf32, #tpu.memory_space<vmem>>, vector<16x16x16xf32>
    %101 = vector.extract_strided_slice %11 {offsets = [4, 0], sizes = [1, 16], strides = [1, 1]} : vector<11x16xf32> to vector<1x16xf32>
    %102 = vector.shape_cast %101 : vector<1x16xf32> to vector<1x1x16xf32>
    %103 = vector.broadcast %102 : vector<1x1x16xf32> to vector<16x16x16xf32>
    %104 = arith.mulf %100, %103 : vector<16x16x16xf32>
    %105 = arith.addf %99, %104 : vector<16x16x16xf32>
    %c5_69 = arith.constant 5 : index
    %c5_70 = arith.constant 5 : index
    %c0_71 = arith.constant 0 : index
    %106 = vector.load %arg14[%c5_69, %c5_70, %c0_71] : memref<26x26x16xf32, #tpu.memory_space<vmem>>, vector<16x16x16xf32>
    %107 = vector.extract_strided_slice %11 {offsets = [5, 0], sizes = [1, 16], strides = [1, 1]} : vector<11x16xf32> to vector<1x16xf32>
    %108 = vector.shape_cast %107 : vector<1x16xf32> to vector<1x1x16xf32>
    %109 = vector.broadcast %108 : vector<1x1x16xf32> to vector<16x16x16xf32>
    %110 = arith.mulf %106, %109 : vector<16x16x16xf32>
    %111 = arith.addf %105, %110 : vector<16x16x16xf32>
    %c5_72 = arith.constant 5 : index
    %c6_73 = arith.constant 6 : index
    %c0_74 = arith.constant 0 : index
    %112 = vector.load %arg14[%c5_72, %c6_73, %c0_74] : memref<26x26x16xf32, #tpu.memory_space<vmem>>, vector<16x16x16xf32>
    %113 = vector.extract_strided_slice %11 {offsets = [6, 0], sizes = [1, 16], strides = [1, 1]} : vector<11x16xf32> to vector<1x16xf32>
    %114 = vector.shape_cast %113 : vector<1x16xf32> to vector<1x1x16xf32>
    %115 = vector.broadcast %114 : vector<1x1x16xf32> to vector<16x16x16xf32>
    %116 = arith.mulf %112, %115 : vector<16x16x16xf32>
    %117 = arith.addf %111, %116 : vector<16x16x16xf32>
    %c5_75 = arith.constant 5 : index
    %c7 = arith.constant 7 : index
    %c0_76 = arith.constant 0 : index
    %118 = vector.load %arg14[%c5_75, %c7, %c0_76] : memref<26x26x16xf32, #tpu.memory_space<vmem>>, vector<16x16x16xf32>
    %119 = vector.extract_strided_slice %11 {offsets = [7, 0], sizes = [1, 16], strides = [1, 1]} : vector<11x16xf32> to vector<1x16xf32>
    %120 = vector.shape_cast %119 : vector<1x16xf32> to vector<1x1x16xf32>
    %121 = vector.broadcast %120 : vector<1x1x16xf32> to vector<16x16x16xf32>
    %122 = arith.mulf %118, %121 : vector<16x16x16xf32>
    %123 = arith.addf %117, %122 : vector<16x16x16xf32>
    %c5_77 = arith.constant 5 : index
    %c8 = arith.constant 8 : index
    %c0_78 = arith.constant 0 : index
    %124 = vector.load %arg14[%c5_77, %c8, %c0_78] : memref<26x26x16xf32, #tpu.memory_space<vmem>>, vector<16x16x16xf32>
    %125 = vector.extract_strided_slice %11 {offsets = [8, 0], sizes = [1, 16], strides = [1, 1]} : vector<11x16xf32> to vector<1x16xf32>
    %126 = vector.shape_cast %125 : vector<1x16xf32> to vector<1x1x16xf32>
    %127 = vector.broadcast %126 : vector<1x1x16xf32> to vector<16x16x16xf32>
    %128 = arith.mulf %124, %127 : vector<16x16x16xf32>
    %129 = arith.addf %123, %128 : vector<16x16x16xf32>
    %c5_79 = arith.constant 5 : index
    %c9 = arith.constant 9 : index
    %c0_80 = arith.constant 0 : index
    %130 = vector.load %arg14[%c5_79, %c9, %c0_80] : memref<26x26x16xf32, #tpu.memory_space<vmem>>, vector<16x16x16xf32>
    %131 = vector.extract_strided_slice %11 {offsets = [9, 0], sizes = [1, 16], strides = [1, 1]} : vector<11x16xf32> to vector<1x16xf32>
    %132 = vector.shape_cast %131 : vector<1x16xf32> to vector<1x1x16xf32>
    %133 = vector.broadcast %132 : vector<1x1x16xf32> to vector<16x16x16xf32>
    %134 = arith.mulf %130, %133 : vector<16x16x16xf32>
    %135 = arith.addf %129, %134 : vector<16x16x16xf32>
    %c5_81 = arith.constant 5 : index
    %c10 = arith.constant 10 : index
    %c0_82 = arith.constant 0 : index
    %136 = vector.load %arg14[%c5_81, %c10, %c0_82] : memref<26x26x16xf32, #tpu.memory_space<vmem>>, vector<16x16x16xf32>
    %137 = vector.extract_strided_slice %11 {offsets = [10, 0], sizes = [1, 16], strides = [1, 1]} : vector<11x16xf32> to vector<1x16xf32>
    %138 = vector.shape_cast %137 : vector<1x16xf32> to vector<1x1x16xf32>
    %139 = vector.broadcast %138 : vector<1x1x16xf32> to vector<16x16x16xf32>
    %140 = arith.mulf %136, %139 : vector<16x16x16xf32>
    %141 = arith.addf %135, %140 : vector<16x16x16xf32>
    %c0_83 = arith.constant 0 : index
    %c5_84 = arith.constant 5 : index
    %c0_85 = arith.constant 0 : index
    %142 = vector.load %arg14[%c0_83, %c5_84, %c0_85] : memref<26x26x16xf32, #tpu.memory_space<vmem>>, vector<16x16x16xf32>
    %143 = vector.extract_strided_slice %12 {offsets = [0, 0], sizes = [1, 16], strides = [1, 1]} : vector<11x16xf32> to vector<1x16xf32>
    %144 = vector.shape_cast %143 : vector<1x16xf32> to vector<1x1x16xf32>
    %145 = vector.broadcast %144 : vector<1x1x16xf32> to vector<16x16x16xf32>
    %146 = arith.mulf %142, %145 : vector<16x16x16xf32>
    %147 = arith.addf %141, %146 : vector<16x16x16xf32>
    %c1_86 = arith.constant 1 : index
    %c5_87 = arith.constant 5 : index
    %c0_88 = arith.constant 0 : index
    %148 = vector.load %arg14[%c1_86, %c5_87, %c0_88] : memref<26x26x16xf32, #tpu.memory_space<vmem>>, vector<16x16x16xf32>
    %149 = vector.extract_strided_slice %12 {offsets = [1, 0], sizes = [1, 16], strides = [1, 1]} : vector<11x16xf32> to vector<1x16xf32>
    %150 = vector.shape_cast %149 : vector<1x16xf32> to vector<1x1x16xf32>
    %151 = vector.broadcast %150 : vector<1x1x16xf32> to vector<16x16x16xf32>
    %152 = arith.mulf %148, %151 : vector<16x16x16xf32>
    %153 = arith.addf %147, %152 : vector<16x16x16xf32>
    %c2_89 = arith.constant 2 : index
    %c5_90 = arith.constant 5 : index
    %c0_91 = arith.constant 0 : index
    %154 = vector.load %arg14[%c2_89, %c5_90, %c0_91] : memref<26x26x16xf32, #tpu.memory_space<vmem>>, vector<16x16x16xf32>
    %155 = vector.extract_strided_slice %12 {offsets = [2, 0], sizes = [1, 16], strides = [1, 1]} : vector<11x16xf32> to vector<1x16xf32>
    %156 = vector.shape_cast %155 : vector<1x16xf32> to vector<1x1x16xf32>
    %157 = vector.broadcast %156 : vector<1x1x16xf32> to vector<16x16x16xf32>
    %158 = arith.mulf %154, %157 : vector<16x16x16xf32>
    %159 = arith.addf %153, %158 : vector<16x16x16xf32>
    %c3_92 = arith.constant 3 : index
    %c5_93 = arith.constant 5 : index
    %c0_94 = arith.constant 0 : index
    %160 = vector.load %arg14[%c3_92, %c5_93, %c0_94] : memref<26x26x16xf32, #tpu.memory_space<vmem>>, vector<16x16x16xf32>
    %161 = vector.extract_strided_slice %12 {offsets = [3, 0], sizes = [1, 16], strides = [1, 1]} : vector<11x16xf32> to vector<1x16xf32>
    %162 = vector.shape_cast %161 : vector<1x16xf32> to vector<1x1x16xf32>
    %163 = vector.broadcast %162 : vector<1x1x16xf32> to vector<16x16x16xf32>
    %164 = arith.mulf %160, %163 : vector<16x16x16xf32>
    %165 = arith.addf %159, %164 : vector<16x16x16xf32>
    %c4_95 = arith.constant 4 : index
    %c5_96 = arith.constant 5 : index
    %c0_97 = arith.constant 0 : index
    %166 = vector.load %arg14[%c4_95, %c5_96, %c0_97] : memref<26x26x16xf32, #tpu.memory_space<vmem>>, vector<16x16x16xf32>
    %167 = vector.extract_strided_slice %12 {offsets = [4, 0], sizes = [1, 16], strides = [1, 1]} : vector<11x16xf32> to vector<1x16xf32>
    %168 = vector.shape_cast %167 : vector<1x16xf32> to vector<1x1x16xf32>
    %169 = vector.broadcast %168 : vector<1x1x16xf32> to vector<16x16x16xf32>
    %170 = arith.mulf %166, %169 : vector<16x16x16xf32>
    %171 = arith.addf %165, %170 : vector<16x16x16xf32>
    %c5_98 = arith.constant 5 : index
    %c5_99 = arith.constant 5 : index
    %c0_100 = arith.constant 0 : index
    %172 = vector.load %arg14[%c5_98, %c5_99, %c0_100] : memref<26x26x16xf32, #tpu.memory_space<vmem>>, vector<16x16x16xf32>
    %173 = vector.extract_strided_slice %12 {offsets = [5, 0], sizes = [1, 16], strides = [1, 1]} : vector<11x16xf32> to vector<1x16xf32>
    %174 = vector.shape_cast %173 : vector<1x16xf32> to vector<1x1x16xf32>
    %175 = vector.broadcast %174 : vector<1x1x16xf32> to vector<16x16x16xf32>
    %176 = arith.mulf %172, %175 : vector<16x16x16xf32>
    %177 = arith.addf %171, %176 : vector<16x16x16xf32>
    %c6_101 = arith.constant 6 : index
    %c5_102 = arith.constant 5 : index
    %c0_103 = arith.constant 0 : index
    %178 = vector.load %arg14[%c6_101, %c5_102, %c0_103] : memref<26x26x16xf32, #tpu.memory_space<vmem>>, vector<16x16x16xf32>
    %179 = vector.extract_strided_slice %12 {offsets = [6, 0], sizes = [1, 16], strides = [1, 1]} : vector<11x16xf32> to vector<1x16xf32>
    %180 = vector.shape_cast %179 : vector<1x16xf32> to vector<1x1x16xf32>
    %181 = vector.broadcast %180 : vector<1x1x16xf32> to vector<16x16x16xf32>
    %182 = arith.mulf %178, %181 : vector<16x16x16xf32>
    %183 = arith.addf %177, %182 : vector<16x16x16xf32>
    %c7_104 = arith.constant 7 : index
    %c5_105 = arith.constant 5 : index
    %c0_106 = arith.constant 0 : index
    %184 = vector.load %arg14[%c7_104, %c5_105, %c0_106] : memref<26x26x16xf32, #tpu.memory_space<vmem>>, vector<16x16x16xf32>
    %185 = vector.extract_strided_slice %12 {offsets = [7, 0], sizes = [1, 16], strides = [1, 1]} : vector<11x16xf32> to vector<1x16xf32>
    %186 = vector.shape_cast %185 : vector<1x16xf32> to vector<1x1x16xf32>
    %187 = vector.broadcast %186 : vector<1x1x16xf32> to vector<16x16x16xf32>
    %188 = arith.mulf %184, %187 : vector<16x16x16xf32>
    %189 = arith.addf %183, %188 : vector<16x16x16xf32>
    %c8_107 = arith.constant 8 : index
    %c5_108 = arith.constant 5 : index
    %c0_109 = arith.constant 0 : index
    %190 = vector.load %arg14[%c8_107, %c5_108, %c0_109] : memref<26x26x16xf32, #tpu.memory_space<vmem>>, vector<16x16x16xf32>
    %191 = vector.extract_strided_slice %12 {offsets = [8, 0], sizes = [1, 16], strides = [1, 1]} : vector<11x16xf32> to vector<1x16xf32>
    %192 = vector.shape_cast %191 : vector<1x16xf32> to vector<1x1x16xf32>
    %193 = vector.broadcast %192 : vector<1x1x16xf32> to vector<16x16x16xf32>
    %194 = arith.mulf %190, %193 : vector<16x16x16xf32>
    %195 = arith.addf %189, %194 : vector<16x16x16xf32>
    %c9_110 = arith.constant 9 : index
    %c5_111 = arith.constant 5 : index
    %c0_112 = arith.constant 0 : index
    %196 = vector.load %arg14[%c9_110, %c5_111, %c0_112] : memref<26x26x16xf32, #tpu.memory_space<vmem>>, vector<16x16x16xf32>
    %197 = vector.extract_strided_slice %12 {offsets = [9, 0], sizes = [1, 16], strides = [1, 1]} : vector<11x16xf32> to vector<1x16xf32>
    %198 = vector.shape_cast %197 : vector<1x16xf32> to vector<1x1x16xf32>
    %199 = vector.broadcast %198 : vector<1x1x16xf32> to vector<16x16x16xf32>
    %200 = arith.mulf %196, %199 : vector<16x16x16xf32>
    %201 = arith.addf %195, %200 : vector<16x16x16xf32>
    %c10_113 = arith.constant 10 : index
    %c5_114 = arith.constant 5 : index
    %c0_115 = arith.constant 0 : index
    %202 = vector.load %arg14[%c10_113, %c5_114, %c0_115] : memref<26x26x16xf32, #tpu.memory_space<vmem>>, vector<16x16x16xf32>
    %203 = vector.extract_strided_slice %12 {offsets = [10, 0], sizes = [1, 16], strides = [1, 1]} : vector<11x16xf32> to vector<1x16xf32>
    %204 = vector.shape_cast %203 : vector<1x16xf32> to vector<1x1x16xf32>
    %205 = vector.broadcast %204 : vector<1x1x16xf32> to vector<16x16x16xf32>
    %206 = arith.mulf %202, %205 : vector<16x16x16xf32>
    %207 = arith.addf %201, %206 : vector<16x16x16xf32>
    %c0_116 = arith.constant 0 : index
    %c0_117 = arith.constant 0 : index
    %208 = vector.load %arg8[%c0_116, %c0_117] : memref<25x1xf32, #tpu.memory_space<vmem>>, vector<25x1xf32>
    %cst_118 = arith.constant 0.000000e+00 : f32
    %209 = vector.broadcast %cst_118 : f32 to vector<16x16x1xf32>
    %c0_119 = arith.constant 0 : index
    %c0_120 = arith.constant 0 : index
    %c0_121 = arith.constant 0 : index
    %210 = vector.load %arg15[%c0_119, %c0_120, %c0_121] : memref<20x20x1xf32, #tpu.memory_space<vmem>>, vector<16x16x1xf32>
    %211 = vector.extract_strided_slice %208 {offsets = [0, 0], sizes = [1, 1], strides = [1, 1]} : vector<25x1xf32> to vector<1x1xf32>
    %212 = vector.shape_cast %211 : vector<1x1xf32> to vector<1x1x1xf32>
    %213 = vector.broadcast %212 : vector<1x1x1xf32> to vector<16x16x1xf32>
    %214 = arith.mulf %210, %213 : vector<16x16x1xf32>
    %215 = arith.addf %209, %214 : vector<16x16x1xf32>
    %c0_122 = arith.constant 0 : index
    %c1_123 = arith.constant 1 : index
    %c0_124 = arith.constant 0 : index
    %216 = vector.load %arg15[%c0_122, %c1_123, %c0_124] : memref<20x20x1xf32, #tpu.memory_space<vmem>>, vector<16x16x1xf32>
    %217 = vector.extract_strided_slice %208 {offsets = [1, 0], sizes = [1, 1], strides = [1, 1]} : vector<25x1xf32> to vector<1x1xf32>
    %218 = vector.shape_cast %217 : vector<1x1xf32> to vector<1x1x1xf32>
    %219 = vector.broadcast %218 : vector<1x1x1xf32> to vector<16x16x1xf32>
    %220 = arith.mulf %216, %219 : vector<16x16x1xf32>
    %221 = arith.addf %215, %220 : vector<16x16x1xf32>
    %c0_125 = arith.constant 0 : index
    %c2_126 = arith.constant 2 : index
    %c0_127 = arith.constant 0 : index
    %222 = vector.load %arg15[%c0_125, %c2_126, %c0_127] : memref<20x20x1xf32, #tpu.memory_space<vmem>>, vector<16x16x1xf32>
    %223 = vector.extract_strided_slice %208 {offsets = [2, 0], sizes = [1, 1], strides = [1, 1]} : vector<25x1xf32> to vector<1x1xf32>
    %224 = vector.shape_cast %223 : vector<1x1xf32> to vector<1x1x1xf32>
    %225 = vector.broadcast %224 : vector<1x1x1xf32> to vector<16x16x1xf32>
    %226 = arith.mulf %222, %225 : vector<16x16x1xf32>
    %227 = arith.addf %221, %226 : vector<16x16x1xf32>
    %c0_128 = arith.constant 0 : index
    %c3_129 = arith.constant 3 : index
    %c0_130 = arith.constant 0 : index
    %228 = vector.load %arg15[%c0_128, %c3_129, %c0_130] : memref<20x20x1xf32, #tpu.memory_space<vmem>>, vector<16x16x1xf32>
    %229 = vector.extract_strided_slice %208 {offsets = [3, 0], sizes = [1, 1], strides = [1, 1]} : vector<25x1xf32> to vector<1x1xf32>
    %230 = vector.shape_cast %229 : vector<1x1xf32> to vector<1x1x1xf32>
    %231 = vector.broadcast %230 : vector<1x1x1xf32> to vector<16x16x1xf32>
    %232 = arith.mulf %228, %231 : vector<16x16x1xf32>
    %233 = arith.addf %227, %232 : vector<16x16x1xf32>
    %c0_131 = arith.constant 0 : index
    %c4_132 = arith.constant 4 : index
    %c0_133 = arith.constant 0 : index
    %234 = vector.load %arg15[%c0_131, %c4_132, %c0_133] : memref<20x20x1xf32, #tpu.memory_space<vmem>>, vector<16x16x1xf32>
    %235 = vector.extract_strided_slice %208 {offsets = [4, 0], sizes = [1, 1], strides = [1, 1]} : vector<25x1xf32> to vector<1x1xf32>
    %236 = vector.shape_cast %235 : vector<1x1xf32> to vector<1x1x1xf32>
    %237 = vector.broadcast %236 : vector<1x1x1xf32> to vector<16x16x1xf32>
    %238 = arith.mulf %234, %237 : vector<16x16x1xf32>
    %239 = arith.addf %233, %238 : vector<16x16x1xf32>
    %c1_134 = arith.constant 1 : index
    %c0_135 = arith.constant 0 : index
    %c0_136 = arith.constant 0 : index
    %240 = vector.load %arg15[%c1_134, %c0_135, %c0_136] : memref<20x20x1xf32, #tpu.memory_space<vmem>>, vector<16x16x1xf32>
    %241 = vector.extract_strided_slice %208 {offsets = [5, 0], sizes = [1, 1], strides = [1, 1]} : vector<25x1xf32> to vector<1x1xf32>
    %242 = vector.shape_cast %241 : vector<1x1xf32> to vector<1x1x1xf32>
    %243 = vector.broadcast %242 : vector<1x1x1xf32> to vector<16x16x1xf32>
    %244 = arith.mulf %240, %243 : vector<16x16x1xf32>
    %245 = arith.addf %239, %244 : vector<16x16x1xf32>
    %c1_137 = arith.constant 1 : index
    %c1_138 = arith.constant 1 : index
    %c0_139 = arith.constant 0 : index
    %246 = vector.load %arg15[%c1_137, %c1_138, %c0_139] : memref<20x20x1xf32, #tpu.memory_space<vmem>>, vector<16x16x1xf32>
    %247 = vector.extract_strided_slice %208 {offsets = [6, 0], sizes = [1, 1], strides = [1, 1]} : vector<25x1xf32> to vector<1x1xf32>
    %248 = vector.shape_cast %247 : vector<1x1xf32> to vector<1x1x1xf32>
    %249 = vector.broadcast %248 : vector<1x1x1xf32> to vector<16x16x1xf32>
    %250 = arith.mulf %246, %249 : vector<16x16x1xf32>
    %251 = arith.addf %245, %250 : vector<16x16x1xf32>
    %c1_140 = arith.constant 1 : index
    %c2_141 = arith.constant 2 : index
    %c0_142 = arith.constant 0 : index
    %252 = vector.load %arg15[%c1_140, %c2_141, %c0_142] : memref<20x20x1xf32, #tpu.memory_space<vmem>>, vector<16x16x1xf32>
    %253 = vector.extract_strided_slice %208 {offsets = [7, 0], sizes = [1, 1], strides = [1, 1]} : vector<25x1xf32> to vector<1x1xf32>
    %254 = vector.shape_cast %253 : vector<1x1xf32> to vector<1x1x1xf32>
    %255 = vector.broadcast %254 : vector<1x1x1xf32> to vector<16x16x1xf32>
    %256 = arith.mulf %252, %255 : vector<16x16x1xf32>
    %257 = arith.addf %251, %256 : vector<16x16x1xf32>
    %c1_143 = arith.constant 1 : index
    %c3_144 = arith.constant 3 : index
    %c0_145 = arith.constant 0 : index
    %258 = vector.load %arg15[%c1_143, %c3_144, %c0_145] : memref<20x20x1xf32, #tpu.memory_space<vmem>>, vector<16x16x1xf32>
    %259 = vector.extract_strided_slice %208 {offsets = [8, 0], sizes = [1, 1], strides = [1, 1]} : vector<25x1xf32> to vector<1x1xf32>
    %260 = vector.shape_cast %259 : vector<1x1xf32> to vector<1x1x1xf32>
    %261 = vector.broadcast %260 : vector<1x1x1xf32> to vector<16x16x1xf32>
    %262 = arith.mulf %258, %261 : vector<16x16x1xf32>
    %263 = arith.addf %257, %262 : vector<16x16x1xf32>
    %c1_146 = arith.constant 1 : index
    %c4_147 = arith.constant 4 : index
    %c0_148 = arith.constant 0 : index
    %264 = vector.load %arg15[%c1_146, %c4_147, %c0_148] : memref<20x20x1xf32, #tpu.memory_space<vmem>>, vector<16x16x1xf32>
    %265 = vector.extract_strided_slice %208 {offsets = [9, 0], sizes = [1, 1], strides = [1, 1]} : vector<25x1xf32> to vector<1x1xf32>
    %266 = vector.shape_cast %265 : vector<1x1xf32> to vector<1x1x1xf32>
    %267 = vector.broadcast %266 : vector<1x1x1xf32> to vector<16x16x1xf32>
    %268 = arith.mulf %264, %267 : vector<16x16x1xf32>
    %269 = arith.addf %263, %268 : vector<16x16x1xf32>
    %c2_149 = arith.constant 2 : index
    %c0_150 = arith.constant 0 : index
    %c0_151 = arith.constant 0 : index
    %270 = vector.load %arg15[%c2_149, %c0_150, %c0_151] : memref<20x20x1xf32, #tpu.memory_space<vmem>>, vector<16x16x1xf32>
    %271 = vector.extract_strided_slice %208 {offsets = [10, 0], sizes = [1, 1], strides = [1, 1]} : vector<25x1xf32> to vector<1x1xf32>
    %272 = vector.shape_cast %271 : vector<1x1xf32> to vector<1x1x1xf32>
    %273 = vector.broadcast %272 : vector<1x1x1xf32> to vector<16x16x1xf32>
    %274 = arith.mulf %270, %273 : vector<16x16x1xf32>
    %275 = arith.addf %269, %274 : vector<16x16x1xf32>
    %c2_152 = arith.constant 2 : index
    %c1_153 = arith.constant 1 : index
    %c0_154 = arith.constant 0 : index
    %276 = vector.load %arg15[%c2_152, %c1_153, %c0_154] : memref<20x20x1xf32, #tpu.memory_space<vmem>>, vector<16x16x1xf32>
    %277 = vector.extract_strided_slice %208 {offsets = [11, 0], sizes = [1, 1], strides = [1, 1]} : vector<25x1xf32> to vector<1x1xf32>
    %278 = vector.shape_cast %277 : vector<1x1xf32> to vector<1x1x1xf32>
    %279 = vector.broadcast %278 : vector<1x1x1xf32> to vector<16x16x1xf32>
    %280 = arith.mulf %276, %279 : vector<16x16x1xf32>
    %281 = arith.addf %275, %280 : vector<16x16x1xf32>
    %c2_155 = arith.constant 2 : index
    %c2_156 = arith.constant 2 : index
    %c0_157 = arith.constant 0 : index
    %282 = vector.load %arg15[%c2_155, %c2_156, %c0_157] : memref<20x20x1xf32, #tpu.memory_space<vmem>>, vector<16x16x1xf32>
    %283 = vector.extract_strided_slice %208 {offsets = [12, 0], sizes = [1, 1], strides = [1, 1]} : vector<25x1xf32> to vector<1x1xf32>
    %284 = vector.shape_cast %283 : vector<1x1xf32> to vector<1x1x1xf32>
    %285 = vector.broadcast %284 : vector<1x1x1xf32> to vector<16x16x1xf32>
    %286 = arith.mulf %282, %285 : vector<16x16x1xf32>
    %287 = arith.addf %281, %286 : vector<16x16x1xf32>
    %c2_158 = arith.constant 2 : index
    %c3_159 = arith.constant 3 : index
    %c0_160 = arith.constant 0 : index
    %288 = vector.load %arg15[%c2_158, %c3_159, %c0_160] : memref<20x20x1xf32, #tpu.memory_space<vmem>>, vector<16x16x1xf32>
    %289 = vector.extract_strided_slice %208 {offsets = [13, 0], sizes = [1, 1], strides = [1, 1]} : vector<25x1xf32> to vector<1x1xf32>
    %290 = vector.shape_cast %289 : vector<1x1xf32> to vector<1x1x1xf32>
    %291 = vector.broadcast %290 : vector<1x1x1xf32> to vector<16x16x1xf32>
    %292 = arith.mulf %288, %291 : vector<16x16x1xf32>
    %293 = arith.addf %287, %292 : vector<16x16x1xf32>
    %c2_161 = arith.constant 2 : index
    %c4_162 = arith.constant 4 : index
    %c0_163 = arith.constant 0 : index
    %294 = vector.load %arg15[%c2_161, %c4_162, %c0_163] : memref<20x20x1xf32, #tpu.memory_space<vmem>>, vector<16x16x1xf32>
    %295 = vector.extract_strided_slice %208 {offsets = [14, 0], sizes = [1, 1], strides = [1, 1]} : vector<25x1xf32> to vector<1x1xf32>
    %296 = vector.shape_cast %295 : vector<1x1xf32> to vector<1x1x1xf32>
    %297 = vector.broadcast %296 : vector<1x1x1xf32> to vector<16x16x1xf32>
    %298 = arith.mulf %294, %297 : vector<16x16x1xf32>
    %299 = arith.addf %293, %298 : vector<16x16x1xf32>
    %c3_164 = arith.constant 3 : index
    %c0_165 = arith.constant 0 : index
    %c0_166 = arith.constant 0 : index
    %300 = vector.load %arg15[%c3_164, %c0_165, %c0_166] : memref<20x20x1xf32, #tpu.memory_space<vmem>>, vector<16x16x1xf32>
    %301 = vector.extract_strided_slice %208 {offsets = [15, 0], sizes = [1, 1], strides = [1, 1]} : vector<25x1xf32> to vector<1x1xf32>
    %302 = vector.shape_cast %301 : vector<1x1xf32> to vector<1x1x1xf32>
    %303 = vector.broadcast %302 : vector<1x1x1xf32> to vector<16x16x1xf32>
    %304 = arith.mulf %300, %303 : vector<16x16x1xf32>
    %305 = arith.addf %299, %304 : vector<16x16x1xf32>
    %c3_167 = arith.constant 3 : index
    %c1_168 = arith.constant 1 : index
    %c0_169 = arith.constant 0 : index
    %306 = vector.load %arg15[%c3_167, %c1_168, %c0_169] : memref<20x20x1xf32, #tpu.memory_space<vmem>>, vector<16x16x1xf32>
    %307 = vector.extract_strided_slice %208 {offsets = [16, 0], sizes = [1, 1], strides = [1, 1]} : vector<25x1xf32> to vector<1x1xf32>
    %308 = vector.shape_cast %307 : vector<1x1xf32> to vector<1x1x1xf32>
    %309 = vector.broadcast %308 : vector<1x1x1xf32> to vector<16x16x1xf32>
    %310 = arith.mulf %306, %309 : vector<16x16x1xf32>
    %311 = arith.addf %305, %310 : vector<16x16x1xf32>
    %c3_170 = arith.constant 3 : index
    %c2_171 = arith.constant 2 : index
    %c0_172 = arith.constant 0 : index
    %312 = vector.load %arg15[%c3_170, %c2_171, %c0_172] : memref<20x20x1xf32, #tpu.memory_space<vmem>>, vector<16x16x1xf32>
    %313 = vector.extract_strided_slice %208 {offsets = [17, 0], sizes = [1, 1], strides = [1, 1]} : vector<25x1xf32> to vector<1x1xf32>
    %314 = vector.shape_cast %313 : vector<1x1xf32> to vector<1x1x1xf32>
    %315 = vector.broadcast %314 : vector<1x1x1xf32> to vector<16x16x1xf32>
    %316 = arith.mulf %312, %315 : vector<16x16x1xf32>
    %317 = arith.addf %311, %316 : vector<16x16x1xf32>
    %c3_173 = arith.constant 3 : index
    %c3_174 = arith.constant 3 : index
    %c0_175 = arith.constant 0 : index
    %318 = vector.load %arg15[%c3_173, %c3_174, %c0_175] : memref<20x20x1xf32, #tpu.memory_space<vmem>>, vector<16x16x1xf32>
    %319 = vector.extract_strided_slice %208 {offsets = [18, 0], sizes = [1, 1], strides = [1, 1]} : vector<25x1xf32> to vector<1x1xf32>
    %320 = vector.shape_cast %319 : vector<1x1xf32> to vector<1x1x1xf32>
    %321 = vector.broadcast %320 : vector<1x1x1xf32> to vector<16x16x1xf32>
    %322 = arith.mulf %318, %321 : vector<16x16x1xf32>
    %323 = arith.addf %317, %322 : vector<16x16x1xf32>
    %c3_176 = arith.constant 3 : index
    %c4_177 = arith.constant 4 : index
    %c0_178 = arith.constant 0 : index
    %324 = vector.load %arg15[%c3_176, %c4_177, %c0_178] : memref<20x20x1xf32, #tpu.memory_space<vmem>>, vector<16x16x1xf32>
    %325 = vector.extract_strided_slice %208 {offsets = [19, 0], sizes = [1, 1], strides = [1, 1]} : vector<25x1xf32> to vector<1x1xf32>
    %326 = vector.shape_cast %325 : vector<1x1xf32> to vector<1x1x1xf32>
    %327 = vector.broadcast %326 : vector<1x1x1xf32> to vector<16x16x1xf32>
    %328 = arith.mulf %324, %327 : vector<16x16x1xf32>
    %329 = arith.addf %323, %328 : vector<16x16x1xf32>
    %c4_179 = arith.constant 4 : index
    %c0_180 = arith.constant 0 : index
    %c0_181 = arith.constant 0 : index
    %330 = vector.load %arg15[%c4_179, %c0_180, %c0_181] : memref<20x20x1xf32, #tpu.memory_space<vmem>>, vector<16x16x1xf32>
    %331 = vector.extract_strided_slice %208 {offsets = [20, 0], sizes = [1, 1], strides = [1, 1]} : vector<25x1xf32> to vector<1x1xf32>
    %332 = vector.shape_cast %331 : vector<1x1xf32> to vector<1x1x1xf32>
    %333 = vector.broadcast %332 : vector<1x1x1xf32> to vector<16x16x1xf32>
    %334 = arith.mulf %330, %333 : vector<16x16x1xf32>
    %335 = arith.addf %329, %334 : vector<16x16x1xf32>
    %c4_182 = arith.constant 4 : index
    %c1_183 = arith.constant 1 : index
    %c0_184 = arith.constant 0 : index
    %336 = vector.load %arg15[%c4_182, %c1_183, %c0_184] : memref<20x20x1xf32, #tpu.memory_space<vmem>>, vector<16x16x1xf32>
    %337 = vector.extract_strided_slice %208 {offsets = [21, 0], sizes = [1, 1], strides = [1, 1]} : vector<25x1xf32> to vector<1x1xf32>
    %338 = vector.shape_cast %337 : vector<1x1xf32> to vector<1x1x1xf32>
    %339 = vector.broadcast %338 : vector<1x1x1xf32> to vector<16x16x1xf32>
    %340 = arith.mulf %336, %339 : vector<16x16x1xf32>
    %341 = arith.addf %335, %340 : vector<16x16x1xf32>
    %c4_185 = arith.constant 4 : index
    %c2_186 = arith.constant 2 : index
    %c0_187 = arith.constant 0 : index
    %342 = vector.load %arg15[%c4_185, %c2_186, %c0_187] : memref<20x20x1xf32, #tpu.memory_space<vmem>>, vector<16x16x1xf32>
    %343 = vector.extract_strided_slice %208 {offsets = [22, 0], sizes = [1, 1], strides = [1, 1]} : vector<25x1xf32> to vector<1x1xf32>
    %344 = vector.shape_cast %343 : vector<1x1xf32> to vector<1x1x1xf32>
    %345 = vector.broadcast %344 : vector<1x1x1xf32> to vector<16x16x1xf32>
    %346 = arith.mulf %342, %345 : vector<16x16x1xf32>
    %347 = arith.addf %341, %346 : vector<16x16x1xf32>
    %c4_188 = arith.constant 4 : index
    %c3_189 = arith.constant 3 : index
    %c0_190 = arith.constant 0 : index
    %348 = vector.load %arg15[%c4_188, %c3_189, %c0_190] : memref<20x20x1xf32, #tpu.memory_space<vmem>>, vector<16x16x1xf32>
    %349 = vector.extract_strided_slice %208 {offsets = [23, 0], sizes = [1, 1], strides = [1, 1]} : vector<25x1xf32> to vector<1x1xf32>
    %350 = vector.shape_cast %349 : vector<1x1xf32> to vector<1x1x1xf32>
    %351 = vector.broadcast %350 : vector<1x1x1xf32> to vector<16x16x1xf32>
    %352 = arith.mulf %348, %351 : vector<16x16x1xf32>
    %353 = arith.addf %347, %352 : vector<16x16x1xf32>
    %c4_191 = arith.constant 4 : index
    %c4_192 = arith.constant 4 : index
    %c0_193 = arith.constant 0 : index
    %354 = vector.load %arg15[%c4_191, %c4_192, %c0_193] : memref<20x20x1xf32, #tpu.memory_space<vmem>>, vector<16x16x1xf32>
    %355 = vector.extract_strided_slice %208 {offsets = [24, 0], sizes = [1, 1], strides = [1, 1]} : vector<25x1xf32> to vector<1x1xf32>
    %356 = vector.shape_cast %355 : vector<1x1xf32> to vector<1x1x1xf32>
    %357 = vector.broadcast %356 : vector<1x1x1xf32> to vector<16x16x1xf32>
    %358 = arith.mulf %354, %357 : vector<16x16x1xf32>
    %359 = arith.addf %353, %358 : vector<16x16x1xf32>
    %c0_194 = arith.constant 0 : index
    %c0_195 = arith.constant 0 : index
    %360 = vector.load %arg9[%c0_194, %c0_195] : memref<1x1xf32, #tpu.memory_space<vmem>>, vector<1x1xf32>
    %361 = vector.shape_cast %360 : vector<1x1xf32> to vector<1x1x1xf32>
    %362 = vector.broadcast %361 : vector<1x1x1xf32> to vector<16x16x1xf32>
    %363 = arith.addf %359, %362 : vector<16x16x1xf32>
    %364 = arith.negf %363 : vector<16x16x1xf32>
    %365 = math.exp %364 : vector<16x16x1xf32>
    %cst_196 = arith.constant 1.000000e+00 : f32
    %366 = vector.broadcast %cst_196 : f32 to vector<16x16x1xf32>
    %367 = arith.addf %366, %365 : vector<16x16x1xf32>
    %368 = arith.divf %366, %367 : vector<16x16x1xf32>
    %369 = vector.shape_cast %368 : vector<16x16x1xf32> to vector<1x16x16x1xf32>
    %cst_197 = arith.constant dense<0.000000e+00> : vector<1xf32>
    %370 = vector.multi_reduction <add>, %369, %cst_197 [1, 2, 3] : vector<1x16x16x1xf32> to vector<1xf32>
    %371 = vector.shape_cast %370 : vector<1xf32> to vector<1x1x1x1xf32>
    %372 = vector.extract %371[0, 0, 0, 0] : f32 from vector<1x1x1x1xf32>
    %cst_198 = arith.constant 5.000000e-04 : f32
    %373 = arith.addf %372, %cst_198 : f32
    %374 = vector.broadcast %368 : vector<16x16x1xf32> to vector<16x16x16xf32>
    %375 = arith.mulf %207, %374 : vector<16x16x16xf32>
    %cst_199 = arith.constant dense<0.000000e+00> : vector<16x16xf32>
    %376 = vector.multi_reduction <add>, %375, %cst_199 [0] : vector<16x16x16xf32> to vector<16x16xf32>
    %cst_200 = arith.constant dense<0.000000e+00> : vector<16xf32>
    %377 = vector.multi_reduction <add>, %376, %cst_200 [0] : vector<16x16xf32> to vector<16xf32>
    %378 = vector.shape_cast %377 : vector<16xf32> to vector<1x16xf32>
    %379 = vector.broadcast %373 : f32 to vector<1x16xf32>
    %380 = arith.divf %378, %379 : vector<1x16xf32>
    %c0_201 = arith.constant 0 : index
    %c0_202 = arith.constant 0 : index
    %381 = vector.load %arg10[%c0_201, %c0_202] : memref<16x32xf32, #tpu.memory_space<vmem>>, vector<16x32xf32>
    %cst_203 = arith.constant dense<0.000000e+00> : vector<1x32xf32>
    %382 = tpu.matmul %380, %381, %cst_203 {dimension_numbers = #tpu.dot_dimension_numbers<[1], [0], [0], [1], [0, 0, 1, 1], [], []>} : vector<1x16xf32>, vector<16x32xf32>, vector<1x32xf32> -> vector<1x32xf32>
    %c0_204 = arith.constant 0 : index
    %c0_205 = arith.constant 0 : index
    %383 = vector.load %arg11[%c0_204, %c0_205] : memref<32x16xf32, #tpu.memory_space<vmem>>, vector<32x16xf32>
    %cst_206 = arith.constant dense<0.000000e+00> : vector<1x16xf32>
    %384 = tpu.matmul %382, %383, %cst_206 {dimension_numbers = #tpu.dot_dimension_numbers<[1], [0], [0], [1], [0, 0, 1, 1], [], []>} : vector<1x32xf32>, vector<32x16xf32>, vector<1x16xf32> -> vector<1x16xf32>
    %c0_207 = arith.constant 0 : index
    %c0_208 = arith.constant 0 : index
    %385 = vector.load %arg12[%c0_207, %c0_208] : memref<1x16xf32, #tpu.memory_space<vmem>>, vector<1x16xf32>
    %386 = arith.addf %384, %385 : vector<1x16xf32>
    %387 = vector.shape_cast %386 : vector<1x16xf32> to vector<1x1x16xf32>
    %c0_209 = arith.constant 0 : index
    %c0_210 = arith.constant 0 : index
    %c0_211 = arith.constant 0 : index
    %388 = vector.load %arg13[%c0_209, %c0_210, %c0_211] : memref<1x1x16xf32, #tpu.memory_space<vmem>>, vector<1x1x16xf32>
    tpu.vector_store %arg13[%c0_209, %c0_210, %c0_211], %387 {strides = array<i32>} : memref<1x1x16xf32, #tpu.memory_space<vmem>>, vector<1x1x16xf32>,
    return
  }
  func.func @transform_0(%arg0: i32) -> (i32, i32, i32, i32) {
    %c0_i32 = arith.constant 0 : i32
    %c0_i32_0 = arith.constant 0 : i32
    %c0_i32_1 = arith.constant 0 : i32
    %c0_i32_2 = arith.constant 0 : i32
    return %arg0, %c0_i32, %c0_i32_0, %c0_i32_1 : i32, i32, i32, i32
  }
  func.func @transform_1(%arg0: i32) -> (i32, i32, i32, i32) {
    %c0_i32 = arith.constant 0 : i32
    %c0_i32_0 = arith.constant 0 : i32
    %c0_i32_1 = arith.constant 0 : i32
    %c0_i32_2 = arith.constant 0 : i32
    return %arg0, %c0_i32, %c0_i32_0, %c0_i32_1 : i32, i32, i32, i32
  }
  func.func @transform_2(%arg0: i32) -> (i32, i32) {
    %c0_i32 = arith.constant 0 : i32
    %c0_i32_0 = arith.constant 0 : i32
    %c0_i32_1 = arith.constant 0 : i32
    return %c0_i32, %c0_i32_0 : i32, i32
  }
  func.func @transform_3(%arg0: i32) -> (i32, i32) {
    %c0_i32 = arith.constant 0 : i32
    %c0_i32_0 = arith.constant 0 : i32
    %c0_i32_1 = arith.constant 0 : i32
    return %c0_i32, %c0_i32_0 : i32, i32
  }
  func.func @transform_4(%arg0: i32) -> (i32, i32) {
    %c0_i32 = arith.constant 0 : i32
    %c0_i32_0 = arith.constant 0 : i32
    %c0_i32_1 = arith.constant 0 : i32
    return %c0_i32, %c0_i32_0 : i32, i32
  }
  func.func @transform_5(%arg0: i32) -> (i32, i32) {
    %c0_i32 = arith.constant 0 : i32
    %c0_i32_0 = arith.constant 0 : i32
    %c0_i32_1 = arith.constant 0 : i32
    return %c0_i32, %c0_i32_0 : i32, i32
  }
  func.func @transform_6(%arg0: i32) -> (i32, i32) {
    %c0_i32 = arith.constant 0 : i32
    %c0_i32_0 = arith.constant 0 : i32
    %c0_i32_1 = arith.constant 0 : i32
    return %c0_i32, %c0_i32_0 : i32, i32
  }
  func.func @transform_7(%arg0: i32) -> (i32, i32) {
    %c0_i32 = arith.constant 0 : i32
    %c0_i32_0 = arith.constant 0 : i32
    %c0_i32_1 = arith.constant 0 : i32
    return %c0_i32, %c0_i32_0 : i32, i32
  }
  func.func @transform_8(%arg0: i32) -> (i32, i32) {
    %c0_i32 = arith.constant 0 : i32
    %c0_i32_0 = arith.constant 0 : i32
    %c0_i32_1 = arith.constant 0 : i32
    return %c0_i32, %c0_i32_0 : i32, i32
  }
  func.func @transform_9(%arg0: i32) -> (i32, i32) {
    %c0_i32 = arith.constant 0 : i32
    %c0_i32_0 = arith.constant 0 : i32
    %c0_i32_1 = arith.constant 0 : i32
    return %c0_i32, %c0_i32_0 : i32, i32
  }
  func.func @transform_10(%arg0: i32) -> (i32, i32) {
    %c0_i32 = arith.constant 0 : i32
    %c0_i32_0 = arith.constant 0 : i32
    %c0_i32_1 = arith.constant 0 : i32
    return %c0_i32, %c0_i32_0 : i32, i32
  }
  func.func @transform_11(%arg0: i32) -> (i32, i32) {
    %c0_i32 = arith.constant 0 : i32
    %c0_i32_0 = arith.constant 0 : i32
    %c0_i32_1 = arith.constant 0 : i32
    return %c0_i32, %c0_i32_0 : i32, i32
  }
  func.func @transform_12(%arg0: i32) -> (i32, i32, i32) {
    %c0_i32 = arith.constant 0 : i32
    %c0_i32_0 = arith.constant 0 : i32
    %c0_i32_1 = arith.constant 0 : i32
    return %arg0, %c0_i32, %c0_i32_0 : i32, i32, i32
  }
}

</mosaic_0001>

<llo_original>
// kernel: tpu_custom_call.1
$region0: #{tpu_custom_call.1}
  #allocation0 [shape = 'u32[]', space=smem, size = 0x4, offset = 0x4, fixed_abs, tag = 'smem constant byte address 0x4 - core index']
  #allocation1 [shape = 'u32[144,128]{1,0:T(1,128)}', space=vmem, size = 0x12000, scoped, tag = 'internal scratch']
  #allocation2 [shape = 'f32[26,26,16]{2,1,0:T(8,128)}', space=vmem, size = 0x68000, scoped, tag = 'scratch operand']
  #allocation3 [shape = 'f32[20,20,1]{2,1,0:T(8,128)}', space=vmem, size = 0x3c000, scoped, tag = 'scratch operand']
  #allocation4 [shape = 'f32[1,1]{1,0:T(1,128)S(1)}', space=vmem, size = 0x200, scoped, tag = 'scoped memory for tpu_custom_call.1']
  %s0 = inlined_call_operand.vmem [shape: f32[2,16,16,16], index: 0, kind: input, shape index: {}]
  %s1 = inlined_call_operand.vmem [shape: f32[2,16,16,1], index: 1, kind: input, shape index: {}]
  %s2 = inlined_call_operand.vmem [shape: f32[9,16], index: 2, kind: input, shape index: {}]
  %s3 = inlined_call_operand.vmem [shape: f32[11,16], index: 3, kind: input, shape index: {}]
  %s4 = inlined_call_operand.vmem [shape: f32[11,16], index: 4, kind: input, shape index: {}]
  %s5 = inlined_call_operand.vmem [shape: f32[1,16], index: 5, kind: input, shape index: {}]
  %s6 = inlined_call_operand.vmem [shape: f32[1,16], index: 6, kind: input, shape index: {}]
  %s7 = inlined_call_operand.vmem [shape: f32[25,1], index: 7, kind: input, shape index: {}]
  %s8 = inlined_call_operand.<no memory space> [shape: f32[1,1], index: 8, kind: input, shape index: {}]
  %s9 = inlined_call_operand.vmem [shape: f32[16,32], index: 9, kind: input, shape index: {}]
  %s10 = inlined_call_operand.vmem [shape: f32[32,16], index: 10, kind: input, shape index: {}]
  %s11 = inlined_call_operand.vmem [shape: f32[1,16], index: 11, kind: input, shape index: {}]
  %s12 = inlined_call_operand.hbm [shape: f32[2,1,16], index: 12, kind: output, shape index: {}]
  %s13 = sld [smem:[#allocation0]]
  $region81: #{tpu_custom_call.1} parent=0
    _
  %s15 = ssub.s32 1, %s13
  %s16 = scalar_select 0, %s15, %s13
  %v17 = vstv %s8
  %18 = vst [vmem:[#allocation4] sm:$0x1] %v17
  $region1: #{tpu_custom_call.1} parent=0
    #allocation5 [shape = 'u8[1024]{0}', space=vmem, size = 0x400, scoped, tag = 'output window, operand 0']
    #allocation6 [shape = 's32[2]{0}', space=sflag, size = 0x8, scoped, tag = 'scoped memory for tpu_custom_call.1']
    %19 = vsyncpa [#allocation6], 0
    %s20 = scalar_lea.sflag [#allocation6], 1
    %21 = vsyncpa %s20, 0
    loop: start=0, step=1, limit=4
    $region2: #{tpu_custom_call.1} parent=1 // loop_pre_header
      _
    $region3: #{tpu_custom_call.1} parent=1 // loop_header
      %s23 = sphi 0, %s27
      %p24 = scmp.ge.s32.totalorder %s23, 4
      %s33 = sphi 0, %s35
      %s36 = sphi 0, %s33
      %s37 = sphi 0, %s36
      %s53 = sphi 0, %s37
      %s59 = sphi 0, %s61
      %s62 = sphi 0, %s59
      %s63 = sphi 0, %s62
      %s79 = sphi 0, %s63
      %s83 = sphi 0, %s83
      %s85 = sphi 0, %s83
      %s86 = sphi 0, %s85
      %s100 = sphi 0, %s86
      %s104 = sphi 0, %s104
      %s106 = sphi 0, %s104
      %s107 = sphi 0, %s106
      %s121 = sphi 0, %s107
      %s125 = sphi 0, %s125
      %s127 = sphi 0, %s125
      %s128 = sphi 0, %s127
      %s142 = sphi 0, %s128
      %s146 = sphi 0, %s146
      %s148 = sphi 0, %s146
      %s149 = sphi 0, %s148
      %s163 = sphi 0, %s149
      %s167 = sphi 0, %s167
      %s169 = sphi 0, %s167
      %s170 = sphi 0, %s169
      %s184 = sphi 0, %s170
      %s188 = sphi 0, %s188
      %s190 = sphi 0, %s188
      %s191 = sphi 0, %s190
      %s205 = sphi 0, %s191
      %s209 = sphi 0, %s209
      %s211 = sphi 0, %s209
      %s212 = sphi 0, %s211
      %s226 = sphi 0, %s212
      %s230 = sphi 0, %s230
      %s232 = sphi 0, %s230
      %s233 = sphi 0, %s232
      %s247 = sphi 0, %s233
      %s251 = sphi 0, %s251
      %s253 = sphi 0, %s251
      %s254 = sphi 0, %s253
      %s268 = sphi 0, %s254
      %s272 = sphi 0, %s272
      %s274 = sphi 0, %s272
      %s275 = sphi 0, %s274
      %s289 = sphi 0, %s275
      %s295 = sphi 0, %s297
      %s298 = sphi 0, %s295
      %s299 = sphi 0, %s298
      %s315 = sphi 0, %s299
    $region4: #{tpu_custom_call.1} parent=1 // loop_header_branch
      %26 = sbr.rel (%p24) target = $region8
    $region5: #{tpu_custom_call.1} parent=1 // loop_body
      %s28 = ssub.s32 %s23, 1
      %s29 = ssub.s32 %s23, 2
      %s30 = sadd.s32 %s23, 1
      %s31 = ssub.s32 %s23, %s30
      %p32 = scmp.eq.s32.totalorder %s31, 0
      %s34 = sadd.s32 %s33, 1
      %s35 = scalar_select %p32, %s33, %s34
      %p38 = pneg %p32
      %p39 = scmp.eq.s32.totalorder %s23, 1
      %p40 = por %p38, %p39
      %p41 = scmp.ne.s32.totalorder %s33, %s36
      %p42 = scmp.eq.s32.totalorder %s23, 0
      %p43 = por %p41, %p42
      %p44 = scmp.ne.s32.totalorder %s33, %s36
      %p45 = scmp.eq.s32.totalorder %s28, 1
      %p46 = por %p44, %p45
      %p47 = scmp.ne.s32.totalorder %s36, %s37
      %p48 = scmp.eq.s32.totalorder %s28, 0
      %p49 = por %p47, %p48
      %p50 = scmp.ne.s32.totalorder %s36, %s37
      %p51 = scmp.eq.s32.totalorder %s29, 1
      %p52 = por %p50, %p51
      %p54 = scmp.ne.s32.totalorder %s37, %s53
      %p55 = scmp.eq.s32.totalorder %s29, 0
      %p56 = por %p54, %p55
      %s57 = ssub.s32 %s23, %s30
      %p58 = scmp.eq.s32.totalorder %s57, 0
      %s60 = sadd.s32 %s59, 1
      %s61 = scalar_select %p58, %s59, %s60
      %p64 = pneg %p58
      %p65 = scmp.eq.s32.totalorder %s23, 1
      %p66 = por %p64, %p65
      %p67 = scmp.ne.s32.totalorder %s59, %s62
      %p68 = scmp.eq.s32.totalorder %s23, 0
      %p69 = por %p67, %p68
      %p70 = scmp.ne.s32.totalorder %s59, %s62
      %p71 = scmp.eq.s32.totalorder %s28, 1
      %p72 = por %p70, %p71
      %p73 = scmp.ne.s32.totalorder %s62, %s63
      %p74 = scmp.eq.s32.totalorder %s28, 0
      %p75 = por %p73, %p74
      %p76 = scmp.ne.s32.totalorder %s62, %s63
      %p77 = scmp.eq.s32.totalorder %s29, 1
      %p78 = por %p76, %p77
      %p80 = scmp.ne.s32.totalorder %s63, %s79
      %p81 = scmp.eq.s32.totalorder %s29, 0
      %p82 = por %p80, %p81
      %s84 = sadd.s32 %s83, 1
      %p87 = scmp.eq.s32.totalorder %s23, 1
      %p88 = scmp.ne.s32.totalorder %s83, %s85
      %p89 = scmp.eq.s32.totalorder %s23, 0
      %p90 = por %p88, %p89
      %p91 = scmp.ne.s32.totalorder %s83, %s85
      %p92 = scmp.eq.s32.totalorder %s28, 1
      %p93 = por %p91, %p92
      %p94 = scmp.ne.s32.totalorder %s85, %s86
      %p95 = scmp.eq.s32.totalorder %s28, 0
      %p96 = por %p94, %p95
      %p97 = scmp.ne.s32.totalorder %s85, %s86
      %p98 = scmp.eq.s32.totalorder %s29, 1
      %p99 = por %p97, %p98
      %p101 = scmp.ne.s32.totalorder %s86, %s100
      %p102 = scmp.eq.s32.totalorder %s29, 0
      %p103 = por %p101, %p102
      %s105 = sadd.s32 %s104, 1
      %p108 = scmp.eq.s32.totalorder %s23, 1
      %p109 = scmp.ne.s32.totalorder %s104, %s106
      %p110 = scmp.eq.s32.totalorder %s23, 0
      %p111 = por %p109, %p110
      %p112 = scmp.ne.s32.totalorder %s104, %s106
      %p113 = scmp.eq.s32.totalorder %s28, 1
      %p114 = por %p112, %p113
      %p115 = scmp.ne.s32.totalorder %s106, %s107
      %p116 = scmp.eq.s32.totalorder %s28, 0
      %p117 = por %p115, %p116
      %p118 = scmp.ne.s32.totalorder %s106, %s107
      %p119 = scmp.eq.s32.totalorder %s29, 1
      %p120 = por %p118, %p119
      %p122 = scmp.ne.s32.totalorder %s107, %s121
      %p123 = scmp.eq.s32.totalorder %s29, 0
      %p124 = por %p122, %p123
      %s126 = sadd.s32 %s125, 1
      %p129 = scmp.eq.s32.totalorder %s23, 1
      %p130 = scmp.ne.s32.totalorder %s125, %s127
      %p131 = scmp.eq.s32.totalorder %s23, 0
      %p132 = por %p130, %p131
      %p133 = scmp.ne.s32.totalorder %s125, %s127
      %p134 = scmp.eq.s32.totalorder %s28, 1
      %p135 = por %p133, %p134
      %p136 = scmp.ne.s32.totalorder %s127, %s128
      %p137 = scmp.eq.s32.totalorder %s28, 0
      %p138 = por %p136, %p137
      %p139 = scmp.ne.s32.totalorder %s127, %s128
      %p140 = scmp.eq.s32.totalorder %s29, 1
      %p141 = por %p139, %p140
      %p143 = scmp.ne.s32.totalorder %s128, %s142
      %p144 = scmp.eq.s32.totalorder %s29, 0
      %p145 = por %p143, %p144
      %s147 = sadd.s32 %s146, 1
      %p150 = scmp.eq.s32.totalorder %s23, 1
      %p151 = scmp.ne.s32.totalorder %s146, %s148
      %p152 = scmp.eq.s32.totalorder %s23, 0
      %p153 = por %p151, %p152
      %p154 = scmp.ne.s32.totalorder %s146, %s148
      %p155 = scmp.eq.s32.totalorder %s28, 1
      %p156 = por %p154, %p155
      %p157 = scmp.ne.s32.totalorder %s148, %s149
      %p158 = scmp.eq.s32.totalorder %s28, 0
      %p159 = por %p157, %p158
      %p160 = scmp.ne.s32.totalorder %s148, %s149
      %p161 = scmp.eq.s32.totalorder %s29, 1
      %p162 = por %p160, %p161
      %p164 = scmp.ne.s32.totalorder %s149, %s163
      %p165 = scmp.eq.s32.totalorder %s29, 0
      %p166 = por %p164, %p165
      %s168 = sadd.s32 %s167, 1
      %p171 = scmp.eq.s32.totalorder %s23, 1
      %p172 = scmp.ne.s32.totalorder %s167, %s169
      %p173 = scmp.eq.s32.totalorder %s23, 0
      %p174 = por %p172, %p173
      %p175 = scmp.ne.s32.totalorder %s167, %s169
      %p176 = scmp.eq.s32.totalorder %s28, 1
      %p177 = por %p175, %p176
      %p178 = scmp.ne.s32.totalorder %s169, %s170
      %p179 = scmp.eq.s32.totalorder %s28, 0
      %p180 = por %p178, %p179
      %p181 = scmp.ne.s32.totalorder %s169, %s170
      %p182 = scmp.eq.s32.totalorder %s29, 1
      %p183 = por %p181, %p182
      %p185 = scmp.ne.s32.totalorder %s170, %s184
      %p186 = scmp.eq.s32.totalorder %s29, 0
      %p187 = por %p185, %p186
      %s189 = sadd.s32 %s188, 1
      %p192 = scmp.eq.s32.totalorder %s23, 1
      %p193 = scmp.ne.s32.totalorder %s188, %s190
      %p194 = scmp.eq.s32.totalorder %s23, 0
      %p195 = por %p193, %p194
      %p196 = scmp.ne.s32.totalorder %s188, %s190
      %p197 = scmp.eq.s32.totalorder %s28, 1
      %p198 = por %p196, %p197
      %p199 = scmp.ne.s32.totalorder %s190, %s191
      %p200 = scmp.eq.s32.totalorder %s28, 0
      %p201 = por %p199, %p200
      %p202 = scmp.ne.s32.totalorder %s190, %s191
      %p203 = scmp.eq.s32.totalorder %s29, 1
      %p204 = por %p202, %p203
      %p206 = scmp.ne.s32.totalorder %s191, %s205
      %p207 = scmp.eq.s32.totalorder %s29, 0
      %p208 = por %p206, %p207
      %s210 = sadd.s32 %s209, 1
      %p213 = scmp.eq.s32.totalorder %s23, 1
      %p214 = scmp.ne.s32.totalorder %s209, %s211
      %p215 = scmp.eq.s32.totalorder %s23, 0
      %p216 = por %p214, %p215
      %p217 = scmp.ne.s32.totalorder %s209, %s211
      %p218 = scmp.eq.s32.totalorder %s28, 1
      %p219 = por %p217, %p218
      %p220 = scmp.ne.s32.totalorder %s211, %s212
      %p221 = scmp.eq.s32.totalorder %s28, 0
      %p222 = por %p220, %p221
      %p223 = scmp.ne.s32.totalorder %s211, %s212
      %p224 = scmp.eq.s32.totalorder %s29, 1
      %p225 = por %p223, %p224
      %p227 = scmp.ne.s32.totalorder %s212, %s226
      %p228 = scmp.eq.s32.totalorder %s29, 0
      %p229 = por %p227, %p228
      %s231 = sadd.s32 %s230, 1
      %p234 = scmp.eq.s32.totalorder %s23, 1
      %p235 = scmp.ne.s32.totalorder %s230, %s232
      %p236 = scmp.eq.s32.totalorder %s23, 0
      %p237 = por %p235, %p236
      %p238 = scmp.ne.s32.totalorder %s230, %s232
      %p239 = scmp.eq.s32.totalorder %s28, 1
      %p240 = por %p238, %p239
      %p241 = scmp.ne.s32.totalorder %s232, %s233
      %p242 = scmp.eq.s32.totalorder %s28, 0
      %p243 = por %p241, %p242
      %p244 = scmp.ne.s32.totalorder %s232, %s233
      %p245 = scmp.eq.s32.totalorder %s29, 1
      %p246 = por %p244, %p245
      %p248 = scmp.ne.s32.totalorder %s233, %s247
      %p249 = scmp.eq.s32.totalorder %s29, 0
      %p250 = por %p248, %p249
      %s252 = sadd.s32 %s251, 1
      %p255 = scmp.eq.s32.totalorder %s23, 1
      %p256 = scmp.ne.s32.totalorder %s251, %s253
      %p257 = scmp.eq.s32.totalorder %s23, 0
      %p258 = por %p256, %p257
      %p259 = scmp.ne.s32.totalorder %s251, %s253
      %p260 = scmp.eq.s32.totalorder %s28, 1
      %p261 = por %p259, %p260
      %p262 = scmp.ne.s32.totalorder %s253, %s254
      %p263 = scmp.eq.s32.totalorder %s28, 0
      %p264 = por %p262, %p263
      %p265 = scmp.ne.s32.totalorder %s253, %s254
      %p266 = scmp.eq.s32.totalorder %s29, 1
      %p267 = por %p265, %p266
      %p269 = scmp.ne.s32.totalorder %s254, %s268
      %p270 = scmp.eq.s32.totalorder %s29, 0
      %p271 = por %p269, %p270
      %s273 = sadd.s32 %s272, 1
      %p276 = scmp.eq.s32.totalorder %s23, 1
      %p277 = scmp.ne.s32.totalorder %s272, %s274
      %p278 = scmp.eq.s32.totalorder %s23, 0
      %p279 = por %p277, %p278
      %p280 = scmp.ne.s32.totalorder %s272, %s274
      %p281 = scmp.eq.s32.totalorder %s28, 1
      %p282 = por %p280, %p281
      %p283 = scmp.ne.s32.totalorder %s274, %s275
      %p284 = scmp.eq.s32.totalorder %s28, 0
      %p285 = por %p283, %p284
      %p286 = scmp.ne.s32.totalorder %s274, %s275
      %p287 = scmp.eq.s32.totalorder %s29, 1
      %p288 = por %p286, %p287
      %p290 = scmp.ne.s32.totalorder %s275, %s289
      %p291 = scmp.eq.s32.totalorder %s29, 0
      %p292 = por %p290, %p291
      %s293 = ssub.s32 %s23, %s30
      %p294 = scmp.eq.s32.totalorder %s293, 0
      %s296 = sadd.s32 %s295, 1
      %s297 = scalar_select %p294, %s295, %s296
      %p300 = pneg %p294
      %p301 = scmp.eq.s32.totalorder %s23, 1
      %p302 = por %p300, %p301
      %p303 = scmp.ne.s32.totalorder %s295, %s298
      %p304 = scmp.eq.s32.totalorder %s23, 0
      %p305 = por %p303, %p304
      %p306 = scmp.ne.s32.totalorder %s295, %s298
      %p307 = scmp.eq.s32.totalorder %s28, 1
      %p308 = por %p306, %p307
      %p309 = scmp.ne.s32.totalorder %s298, %s299
      %p310 = scmp.eq.s32.totalorder %s28, 0
      %p311 = por %p309, %p310
      %p312 = scmp.ne.s32.totalorder %s298, %s299
      %p313 = scmp.eq.s32.totalorder %s29, 1
      %p314 = por %p312, %p313
      %p316 = scmp.ne.s32.totalorder %s299, %s315
      %p317 = scmp.eq.s32.totalorder %s29, 0
      %p318 = por %p316, %p317
      %p319 = scmp.le.s32.totalorder 1, %s23
      %p320 = scmp.lt.s32.totalorder %s23, 3
      %p321 = pnand %p319, %p320
      %p322 = pneg %p321
      // Predicated region
      $region9: #{tpu_custom_call.1} parent=5 // pred_check
        _
      $region10: #{tpu_custom_call.1} parent=5 // pred_check_branch
        %324 = sbr.rel (%p321) target = $region12
      $region11: #{tpu_custom_call.1} parent=5 // pred_region
        %s325 = ssub.s32 %s23, 1
        // Predicated region
        $region13: #{tpu_custom_call.1} parent=11 // pred_check
          %p326 = pneg %p96
        $region14: #{tpu_custom_call.1} parent=11 // pred_check_branch
          %328 = sbr.rel (%p326) target = $region16
        $region15: #{tpu_custom_call.1} parent=11 // pred_region
          _
        $region16: #{tpu_custom_call.1} parent=11 // pred_fallthru
          _
        // Predicated region
        $region17: #{tpu_custom_call.1} parent=11 // pred_check
          %p329 = pneg %p117
        $region18: #{tpu_custom_call.1} parent=11 // pred_check_branch
          %331 = sbr.rel (%p329) target = $region20
        $region19: #{tpu_custom_call.1} parent=11 // pred_region
          _
        $region20: #{tpu_custom_call.1} parent=11 // pred_fallthru
          _
        // Predicated region
        $region21: #{tpu_custom_call.1} parent=11 // pred_check
          %p332 = pneg %p138
        $region22: #{tpu_custom_call.1} parent=11 // pred_check_branch
          %334 = sbr.rel (%p332) target = $region24
        $region23: #{tpu_custom_call.1} parent=11 // pred_region
          _
        $region24: #{tpu_custom_call.1} parent=11 // pred_fallthru
          _
        // Predicated region
        $region25: #{tpu_custom_call.1} parent=11 // pred_check
          %p335 = pneg %p159
        $region26: #{tpu_custom_call.1} parent=11 // pred_check_branch
          %337 = sbr.rel (%p335) target = $region28
        $region27: #{tpu_custom_call.1} parent=11 // pred_region
          _
        $region28: #{tpu_custom_call.1} parent=11 // pred_fallthru
          _
        // Predicated region
        $region29: #{tpu_custom_call.1} parent=11 // pred_check
          %p338 = pneg %p180
        $region30: #{tpu_custom_call.1} parent=11 // pred_check_branch
          %340 = sbr.rel (%p338) target = $region32
        $region31: #{tpu_custom_call.1} parent=11 // pred_region
          _
        $region32: #{tpu_custom_call.1} parent=11 // pred_fallthru
          _
        // Predicated region
        $region33: #{tpu_custom_call.1} parent=11 // pred_check
          %p341 = pneg %p201
        $region34: #{tpu_custom_call.1} parent=11 // pred_check_branch
          %343 = sbr.rel (%p341) target = $region36
        $region35: #{tpu_custom_call.1} parent=11 // pred_region
          _
        $region36: #{tpu_custom_call.1} parent=11 // pred_fallthru
          _
        // Predicated region
        $region37: #{tpu_custom_call.1} parent=11 // pred_check
          %p344 = pneg %p222
        $region38: #{tpu_custom_call.1} parent=11 // pred_check_branch
          %346 = sbr.rel (%p344) target = $region40
        $region39: #{tpu_custom_call.1} parent=11 // pred_region
          _
        $region40: #{tpu_custom_call.1} parent=11 // pred_fallthru
          _
        // Predicated region
        $region41: #{tpu_custom_call.1} parent=11 // pred_check
          %p347 = pneg %p243
        $region42: #{tpu_custom_call.1} parent=11 // pred_check_branch
          %349 = sbr.rel (%p347) target = $region44
        $region43: #{tpu_custom_call.1} parent=11 // pred_region
          _
        $region44: #{tpu_custom_call.1} parent=11 // pred_fallthru
          _
        // Predicated region
        $region45: #{tpu_custom_call.1} parent=11 // pred_check
          %p350 = pneg %p264
        $region46: #{tpu_custom_call.1} parent=11 // pred_check_branch
          %352 = sbr.rel (%p350) target = $region48
        $region47: #{tpu_custom_call.1} parent=11 // pred_region
          _
        $region48: #{tpu_custom_call.1} parent=11 // pred_fallthru
          _
        // Predicated region
        $region49: #{tpu_custom_call.1} parent=11 // pred_check
          %p353 = pneg %p285
        $region50: #{tpu_custom_call.1} parent=11 // pred_check_branch
          %355 = sbr.rel (%p353) target = $region52
        $region51: #{tpu_custom_call.1} parent=11 // pred_region
          _
        $region52: #{tpu_custom_call.1} parent=11 // pred_fallthru
          _
      $region12: #{tpu_custom_call.1} parent=5 // pred_fallthru
        _
      %p356 = scmp.lt.s32.totalorder %s23, 2
      // Predicated region
      $region53: #{tpu_custom_call.1} parent=5 // pred_check
        %p357 = pneg %p356
      $region54: #{tpu_custom_call.1} parent=5 // pred_check_branch
        %359 = sbr.rel (%p357) target = $region56
      $region55: #{tpu_custom_call.1} parent=5 // pred_region
        // Predicated region
        $region57: #{tpu_custom_call.1} parent=55 // pred_check
          %p360 = pneg %p43
        $region58: #{tpu_custom_call.1} parent=55 // pred_check_branch
          %362 = sbr.rel (%p360) target = $region60
        $region59: #{tpu_custom_call.1} parent=55 // pred_region
          %p363 = scmp.lt.s32.totalorder %s23, 1
          %s364 = scalar_select %p363, %s23, 1
          %s365 = smul.addr %s364, 32
          %s366 = smul.addr %s365, 8
          %s367 = scalar_lea.vmem %s0, %s366
        $region60: #{tpu_custom_call.1} parent=55 // pred_fallthru
          _
        // Predicated region
        $region61: #{tpu_custom_call.1} parent=55 // pred_check
          %p368 = pneg %p69
        $region62: #{tpu_custom_call.1} parent=55 // pred_check_branch
          %370 = sbr.rel (%p368) target = $region64
        $region63: #{tpu_custom_call.1} parent=55 // pred_region
          %p371 = scmp.lt.s32.totalorder %s23, 1
          %s372 = scalar_select %p371, %s23, 1
          %s373 = smul.addr %s372, 32
          %s374 = smul.addr %s373, 8
          %s375 = scalar_lea.vmem %s1, %s374
        $region64: #{tpu_custom_call.1} parent=55 // pred_fallthru
          _
      $region56: #{tpu_custom_call.1} parent=5 // pred_fallthru
        _
      %p376 = scmp.le.s32.totalorder 1, %s23
      %p377 = scmp.lt.s32.totalorder %s23, 3
      %p378 = pnand %p376, %p377
      %p379 = pneg %p378
      // Predicated region
      $region65: #{tpu_custom_call.1} parent=5 // pred_check
        _
      $region66: #{tpu_custom_call.1} parent=5 // pred_check_branch
        %381 = sbr.rel (%p378) target = $region68
      $region67: #{tpu_custom_call.1} parent=5 // pred_region
        %s382 = ssub.s32 %s23, 1
        %p383 = scmp.lt.s32.totalorder %s28, 1
        %s384 = scalar_select %p383, %s28, 1
        %s385 = smul.addr %s384, 32
        %s386 = smul.addr %s385, 8
        %s387 = scalar_lea.vmem %s0, %s386
        %p388 = pneg %p49
        %p389 = pneg %p46
        %p390 = scmp.lt.s32.totalorder %s28, 1
        %s391 = scalar_select %p390, %s28, 1
        %s392 = smul.addr %s391, 32
        %s393 = smul.addr %s392, 8
        %s394 = scalar_lea.vmem %s1, %s393
        %p395 = pneg %p75
        %p396 = pneg %p72
        %p397 = pneg %p96
        %p398 = pneg %p93
        %p399 = pneg %p117
        %p400 = pneg %p114
        %p401 = pneg %p138
        %p402 = pneg %p135
        %p403 = pneg %p159
        %p404 = pneg %p156
        %p405 = pneg %p180
        %p406 = pneg %p177
        %p407 = pneg %p201
        %p408 = pneg %p198
        %p409 = pneg %p222
        %p410 = pneg %p219
        %p411 = pneg %p243
        %p412 = pneg %p240
        %p413 = pneg %p264
        %p414 = pneg %p261
        %p415 = pneg %p285
        %p416 = pneg %p282
        %p417 = pneg %p311
        %p418 = pneg %p308
        %s419 = sand.u32 %s298, 1
        %s420 = scalar_lea.sflag [#allocation6], %s419
        %s421 = sand.u32 %s298, 1
        %s422 = scalar_lea.vmem [#allocation5], %s421
        %p423 = scmp.lt.s32.totalorder %s28, 1
        %s424 = scalar_select %p423, %s28, 1
        %s425 = smul.addr %s424, 32
        %s426 = smul.addr %s425, 8
        %s427 = scalar_lea.vmem %s0, %s426
        %p428 = scmp.lt.s32.totalorder %s28, 1
        %s429 = scalar_select %p428, %s28, 1
        %s430 = smul.addr %s429, 32
        %s431 = smul.addr %s430, 8
        %s432 = scalar_lea.vmem %s1, %s431
        %vm433 = vcmask 130048
        %434 = vst.msk [vmem:[#allocation2] sm:$0xff] %vm433, 0.0
        %435 = vst.msk [vmem:[#allocation2 + $0x8] sm:$0xff] %vm433, 0.0
        %436 = vst.msk [vmem:[#allocation2 + $0x10] sm:$0xff] %vm433, 0.0
        %vm437 = vcmask 123904
        %438 = vst.msk [vmem:[#allocation2 + $0x18] sm:$0x3] %vm437, 0.0
        %439 = vst.msk [vmem:[#allocation2 + $0x20] sm:$0xff] %vm433, 0.0
        %440 = vst.msk [vmem:[#allocation2 + $0x28] sm:$0xff] %vm433, 0.0
        %441 = vst.msk [vmem:[#allocation2 + $0x30] sm:$0xff] %vm433, 0.0
        %442 = vst.msk [vmem:[#allocation2 + $0x38] sm:$0x3] %vm437, 0.0
        %443 = vst.msk [vmem:[#allocation2 + $0x40] sm:$0xff] %vm433, 0.0
        %444 = vst.msk [vmem:[#allocation2 + $0x48] sm:$0xff] %vm433, 0.0
        %445 = vst.msk [vmem:[#allocation2 + $0x50] sm:$0xff] %vm433, 0.0
        %446 = vst.msk [vmem:[#allocation2 + $0x58] sm:$0x3] %vm437, 0.0
        %447 = vst.msk [vmem:[#allocation2 + $0x60] sm:$0xff] %vm433, 0.0
        %448 = vst.msk [vmem:[#allocation2 + $0x68] sm:$0xff] %vm433, 0.0
        %449 = vst.msk [vmem:[#allocation2 + $0x70] sm:$0xff] %vm433, 0.0
        %450 = vst.msk [vmem:[#allocation2 + $0x78] sm:$0x3] %vm437, 0.0
        %451 = vst.msk [vmem:[#allocation2 + $0x80] sm:$0xff] %vm433, 0.0
        %452 = vst.msk [vmem:[#allocation2 + $0x88] sm:$0xff] %vm433, 0.0
        %453 = vst.msk [vmem:[#allocation2 + $0x90] sm:$0xff] %vm433, 0.0
        %454 = vst.msk [vmem:[#allocation2 + $0x98] sm:$0x3] %vm437, 0.0
        %455 = vst.msk [vmem:[#allocation2 + $0xa0] sm:$0xff] %vm433, 0.0
        %456 = vst.msk [vmem:[#allocation2 + $0xa8] sm:$0xff] %vm433, 0.0
        %457 = vst.msk [vmem:[#allocation2 + $0xb0] sm:$0xff] %vm433, 0.0
        %458 = vst.msk [vmem:[#allocation2 + $0xb8] sm:$0x3] %vm437, 0.0
        %459 = vst.msk [vmem:[#allocation2 + $0xc0] sm:$0xff] %vm433, 0.0
        %460 = vst.msk [vmem:[#allocation2 + $0xc8] sm:$0xff] %vm433, 0.0
        %461 = vst.msk [vmem:[#allocation2 + $0xd0] sm:$0xff] %vm433, 0.0
        %462 = vst.msk [vmem:[#allocation2 + $0xd8] sm:$0x3] %vm437, 0.0
        %463 = vst.msk [vmem:[#allocation2 + $0xe0] sm:$0xff] %vm433, 0.0
        %464 = vst.msk [vmem:[#allocation2 + $0xe8] sm:$0xff] %vm433, 0.0
        %465 = vst.msk [vmem:[#allocation2 + $0xf0] sm:$0xff] %vm433, 0.0
        %466 = vst.msk [vmem:[#allocation2 + $0xf8] sm:$0x3] %vm437, 0.0
        %467 = vst.msk [vmem:[#allocation2 + $0x100] sm:$0xff] %vm433, 0.0
        %468 = vst.msk [vmem:[#allocation2 + $0x108] sm:$0xff] %vm433, 0.0
        %469 = vst.msk [vmem:[#allocation2 + $0x110] sm:$0xff] %vm433, 0.0
        %470 = vst.msk [vmem:[#allocation2 + $0x118] sm:$0x3] %vm437, 0.0
        %471 = vst.msk [vmem:[#allocation2 + $0x120] sm:$0xff] %vm433, 0.0
        %472 = vst.msk [vmem:[#allocation2 + $0x128] sm:$0xff] %vm433, 0.0
        %473 = vst.msk [vmem:[#allocation2 + $0x130] sm:$0xff] %vm433, 0.0
        %474 = vst.msk [vmem:[#allocation2 + $0x138] sm:$0x3] %vm437, 0.0
        %475 = vst.msk [vmem:[#allocation2 + $0x140] sm:$0xff] %vm433, 0.0
        %476 = vst.msk [vmem:[#allocation2 + $0x148] sm:$0xff] %vm433, 0.0
        %477 = vst.msk [vmem:[#allocation2 + $0x150] sm:$0xff] %vm433, 0.0
        %478 = vst.msk [vmem:[#allocation2 + $0x158] sm:$0x3] %vm437, 0.0
        %479 = vst.msk [vmem:[#allocation2 + $0x160] sm:$0xff] %vm433, 0.0
        %480 = vst.msk [vmem:[#allocation2 + $0x168] sm:$0xff] %vm433, 0.0
        %481 = vst.msk [vmem:[#allocation2 + $0x170] sm:$0xff] %vm433, 0.0
        %482 = vst.msk [vmem:[#allocation2 + $0x178] sm:$0x3] %vm437, 0.0
        %483 = vst.msk [vmem:[#allocation2 + $0x180] sm:$0xff] %vm433, 0.0
        %484 = vst.msk [vmem:[#allocation2 + $0x188] sm:$0xff] %vm433, 0.0
        %485 = vst.msk [vmem:[#allocation2 + $0x190] sm:$0xff] %vm433, 0.0
        %486 = vst.msk [vmem:[#allocation2 + $0x198] sm:$0x3] %vm437, 0.0
        %487 = vst.msk [vmem:[#allocation2 + $0x1a0] sm:$0xff] %vm433, 0.0
        %488 = vst.msk [vmem:[#allocation2 + $0x1a8] sm:$0xff] %vm433, 0.0
        %489 = vst.msk [vmem:[#allocation2 + $0x1b0] sm:$0xff] %vm433, 0.0
        %490 = vst.msk [vmem:[#allocation2 + $0x1b8] sm:$0x3] %vm437, 0.0
        %491 = vst.msk [vmem:[#allocation2 + $0x1c0] sm:$0xff] %vm433, 0.0
        %492 = vst.msk [vmem:[#allocation2 + $0x1c8] sm:$0xff] %vm433, 0.0
        %493 = vst.msk [vmem:[#allocation2 + $0x1d0] sm:$0xff] %vm433, 0.0
        %494 = vst.msk [vmem:[#allocation2 + $0x1d8] sm:$0x3] %vm437, 0.0
        %495 = vst.msk [vmem:[#allocation2 + $0x1e0] sm:$0xff] %vm433, 0.0
        %496 = vst.msk [vmem:[#allocation2 + $0x1e8] sm:$0xff] %vm433, 0.0
        %497 = vst.msk [vmem:[#allocation2 + $0x1f0] sm:$0xff] %vm433, 0.0
        %498 = vst.msk [vmem:[#allocation2 + $0x1f8] sm:$0x3] %vm437, 0.0
        %499 = vst.msk [vmem:[#allocation2 + $0x200] sm:$0xff] %vm433, 0.0
        %500 = vst.msk [vmem:[#allocation2 + $0x208] sm:$0xff] %vm433, 0.0
        %501 = vst.msk [vmem:[#allocation2 + $0x210] sm:$0xff] %vm433, 0.0
        %502 = vst.msk [vmem:[#allocation2 + $0x218] sm:$0x3] %vm437, 0.0
        %503 = vst.msk [vmem:[#allocation2 + $0x220] sm:$0xff] %vm433, 0.0
        %504 = vst.msk [vmem:[#allocation2 + $0x228] sm:$0xff] %vm433, 0.0
        %505 = vst.msk [vmem:[#allocation2 + $0x230] sm:$0xff] %vm433, 0.0
        %506 = vst.msk [vmem:[#allocation2 + $0x238] sm:$0x3] %vm437, 0.0
        %507 = vst.msk [vmem:[#allocation2 + $0x240] sm:$0xff] %vm433, 0.0
        %508 = vst.msk [vmem:[#allocation2 + $0x248] sm:$0xff] %vm433, 0.0
        %509 = vst.msk [vmem:[#allocation2 + $0x250] sm:$0xff] %vm433, 0.0
        %510 = vst.msk [vmem:[#allocation2 + $0x258] sm:$0x3] %vm437, 0.0
        %511 = vst.msk [vmem:[#allocation2 + $0x260] sm:$0xff] %vm433, 0.0
        %512 = vst.msk [vmem:[#allocation2 + $0x268] sm:$0xff] %vm433, 0.0
        %513 = vst.msk [vmem:[#allocation2 + $0x270] sm:$0xff] %vm433, 0.0
        %514 = vst.msk [vmem:[#allocation2 + $0x278] sm:$0x3] %vm437, 0.0
        %515 = vst.msk [vmem:[#allocation2 + $0x280] sm:$0xff] %vm433, 0.0
        %516 = vst.msk [vmem:[#allocation2 + $0x288] sm:$0xff] %vm433, 0.0
        %517 = vst.msk [vmem:[#allocation2 + $0x290] sm:$0xff] %vm433, 0.0
        %518 = vst.msk [vmem:[#allocation2 + $0x298] sm:$0x3] %vm437, 0.0
        %519 = vst.msk [vmem:[#allocation2 + $0x2a0] sm:$0xff] %vm433, 0.0
        %520 = vst.msk [vmem:[#allocation2 + $0x2a8] sm:$0xff] %vm433, 0.0
        %521 = vst.msk [vmem:[#allocation2 + $0x2b0] sm:$0xff] %vm433, 0.0
        %522 = vst.msk [vmem:[#allocation2 + $0x2b8] sm:$0x3] %vm437, 0.0
        %523 = vst.msk [vmem:[#allocation2 + $0x2c0] sm:$0xff] %vm433, 0.0
        %524 = vst.msk [vmem:[#allocation2 + $0x2c8] sm:$0xff] %vm433, 0.0
        %525 = vst.msk [vmem:[#allocation2 + $0x2d0] sm:$0xff] %vm433, 0.0
        %526 = vst.msk [vmem:[#allocation2 + $0x2d8] sm:$0x3] %vm437, 0.0
        %527 = vst.msk [vmem:[#allocation2 + $0x2e0] sm:$0xff] %vm433, 0.0
        %528 = vst.msk [vmem:[#allocation2 + $0x2e8] sm:$0xff] %vm433, 0.0
        %529 = vst.msk [vmem:[#allocation2 + $0x2f0] sm:$0xff] %vm433, 0.0
        %530 = vst.msk [vmem:[#allocation2 + $0x2f8] sm:$0x3] %vm437, 0.0
        %531 = vst.msk [vmem:[#allocation2 + $0x300] sm:$0xff] %vm433, 0.0
        %532 = vst.msk [vmem:[#allocation2 + $0x308] sm:$0xff] %vm433, 0.0
        %533 = vst.msk [vmem:[#allocation2 + $0x310] sm:$0xff] %vm433, 0.0
        %534 = vst.msk [vmem:[#allocation2 + $0x318] sm:$0x3] %vm437, 0.0
        %535 = vst.msk [vmem:[#allocation2 + $0x320] sm:$0xff] %vm433, 0.0
        %536 = vst.msk [vmem:[#allocation2 + $0x328] sm:$0xff] %vm433, 0.0
        %537 = vst.msk [vmem:[#allocation2 + $0x330] sm:$0xff] %vm433, 0.0
        %538 = vst.msk [vmem:[#allocation2 + $0x338] sm:$0x3] %vm437, 0.0
        %vm539 = vcmask 7168
        %540 = vst.msk [vmem:[#allocation3] sm:$0xff] %vm539, 0.0
        %541 = vst.msk [vmem:[#allocation3 + $0x8] sm:$0xff] %vm539, 0.0
        %vm542 = vcmask 3072
        %543 = vst.msk [vmem:[#allocation3 + $0x10] sm:$0xf] %vm542, 0.0
        %544 = vst.msk [vmem:[#allocation3 + $0x18] sm:$0xff] %vm539, 0.0
        %545 = vst.msk [vmem:[#allocation3 + $0x20] sm:$0xff] %vm539, 0.0
        %546 = vst.msk [vmem:[#allocation3 + $0x28] sm:$0xf] %vm542, 0.0
        %547 = vst.msk [vmem:[#allocation3 + $0x30] sm:$0xff] %vm539, 0.0
        %548 = vst.msk [vmem:[#allocation3 + $0x38] sm:$0xff] %vm539, 0.0
        %549 = vst.msk [vmem:[#allocation3 + $0x40] sm:$0xf] %vm542, 0.0
        %550 = vst.msk [vmem:[#allocation3 + $0x48] sm:$0xff] %vm539, 0.0
        %551 = vst.msk [vmem:[#allocation3 + $0x50] sm:$0xff] %vm539, 0.0
        %552 = vst.msk [vmem:[#allocation3 + $0x58] sm:$0xf] %vm542, 0.0
        %553 = vst.msk [vmem:[#allocation3 + $0x60] sm:$0xff] %vm539, 0.0
        %554 = vst.msk [vmem:[#allocation3 + $0x68] sm:$0xff] %vm539, 0.0
        %555 = vst.msk [vmem:[#allocation3 + $0x70] sm:$0xf] %vm542, 0.0
        %556 = vst.msk [vmem:[#allocation3 + $0x78] sm:$0xff] %vm539, 0.0
        %557 = vst.msk [vmem:[#allocation3 + $0x80] sm:$0xff] %vm539, 0.0
        %558 = vst.msk [vmem:[#allocation3 + $0x88] sm:$0xf] %vm542, 0.0
        %559 = vst.msk [vmem:[#allocation3 + $0x90] sm:$0xff] %vm539, 0.0
        %560 = vst.msk [vmem:[#allocation3 + $0x98] sm:$0xff] %vm539, 0.0
        %561 = vst.msk [vmem:[#allocation3 + $0xa0] sm:$0xf] %vm542, 0.0
        %562 = vst.msk [vmem:[#allocation3 + $0xa8] sm:$0xff] %vm539, 0.0
        %563 = vst.msk [vmem:[#allocation3 + $0xb0] sm:$0xff] %vm539, 0.0
        %564 = vst.msk [vmem:[#allocation3 + $0xb8] sm:$0xf] %vm542, 0.0
        %565 = vst.msk [vmem:[#allocation3 + $0xc0] sm:$0xff] %vm539, 0.0
        %566 = vst.msk [vmem:[#allocation3 + $0xc8] sm:$0xff] %vm539, 0.0
        %567 = vst.msk [vmem:[#allocation3 + $0xd0] sm:$0xf] %vm542, 0.0
        %568 = vst.msk [vmem:[#allocation3 + $0xd8] sm:$0xff] %vm539, 0.0
        %569 = vst.msk [vmem:[#allocation3 + $0xe0] sm:$0xff] %vm539, 0.0
        %570 = vst.msk [vmem:[#allocation3 + $0xe8] sm:$0xf] %vm542, 0.0
        %571 = vst.msk [vmem:[#allocation3 + $0xf0] sm:$0xff] %vm539, 0.0
        %572 = vst.msk [vmem:[#allocation3 + $0xf8] sm:$0xff] %vm539, 0.0
        %573 = vst.msk [vmem:[#allocation3 + $0x100] sm:$0xf] %vm542, 0.0
        %574 = vst.msk [vmem:[#allocation3 + $0x108] sm:$0xff] %vm539, 0.0
        %575 = vst.msk [vmem:[#allocation3 + $0x110] sm:$0xff] %vm539, 0.0
        %576 = vst.msk [vmem:[#allocation3 + $0x118] sm:$0xf] %vm542, 0.0
        %577 = vst.msk [vmem:[#allocation3 + $0x120] sm:$0xff] %vm539, 0.0
        %578 = vst.msk [vmem:[#allocation3 + $0x128] sm:$0xff] %vm539, 0.0
        %579 = vst.msk [vmem:[#allocation3 + $0x130] sm:$0xf] %vm542, 0.0
        %580 = vst.msk [vmem:[#allocation3 + $0x138] sm:$0xff] %vm539, 0.0
        %581 = vst.msk [vmem:[#allocation3 + $0x140] sm:$0xff] %vm539, 0.0
        %582 = vst.msk [vmem:[#allocation3 + $0x148] sm:$0xf] %vm542, 0.0
        %583 = vst.msk [vmem:[#allocation3 + $0x150] sm:$0xff] %vm539, 0.0
        %584 = vst.msk [vmem:[#allocation3 + $0x158] sm:$0xff] %vm539, 0.0
        %585 = vst.msk [vmem:[#allocation3 + $0x160] sm:$0xf] %vm542, 0.0
        %586 = vst.msk [vmem:[#allocation3 + $0x168] sm:$0xff] %vm539, 0.0
        %587 = vst.msk [vmem:[#allocation3 + $0x170] sm:$0xff] %vm539, 0.0
        %588 = vst.msk [vmem:[#allocation3 + $0x178] sm:$0xf] %vm542, 0.0
        %589 = vst.msk [vmem:[#allocation3 + $0x180] sm:$0xff] %vm539, 0.0
        %590 = vst.msk [vmem:[#allocation3 + $0x188] sm:$0xff] %vm539, 0.0
        %591 = vst.msk [vmem:[#allocation3 + $0x190] sm:$0xf] %vm542, 0.0
        %592 = vst.msk [vmem:[#allocation3 + $0x198] sm:$0xff] %vm539, 0.0
        %593 = vst.msk [vmem:[#allocation3 + $0x1a0] sm:$0xff] %vm539, 0.0
        %594 = vst.msk [vmem:[#allocation3 + $0x1a8] sm:$0xf] %vm542, 0.0
        %595 = vst.msk [vmem:[#allocation3 + $0x1b0] sm:$0xff] %vm539, 0.0
        %596 = vst.msk [vmem:[#allocation3 + $0x1b8] sm:$0xff] %vm539, 0.0
        %597 = vst.msk [vmem:[#allocation3 + $0x1c0] sm:$0xf] %vm542, 0.0
        %598 = vst.msk [vmem:[#allocation3 + $0x1c8] sm:$0xff] %vm539, 0.0
        %599 = vst.msk [vmem:[#allocation3 + $0x1d0] sm:$0xff] %vm539, 0.0
        %600 = vst.msk [vmem:[#allocation3 + $0x1d8] sm:$0xf] %vm542, 0.0
        %v601 = vld [vmem:[%s427] sm:$0xff]
        %v602 = vld [vmem:[%s427 + $0x8] sm:$0xff]
        %v603 = vld [vmem:[%s427 + $0x10] sm:$0xff]
        %v604 = vld [vmem:[%s427 + $0x18] sm:$0xff]
        %v605 = vld [vmem:[%s427 + $0x20] sm:$0xff]
        %v606 = vld [vmem:[%s427 + $0x28] sm:$0xff]
        %v607 = vld [vmem:[%s427 + $0x30] sm:$0xff]
        %v608 = vld [vmem:[%s427 + $0x38] sm:$0xff]
        %v609 = vld [vmem:[%s427 + $0x40] sm:$0xff]
        %v610 = vld [vmem:[%s427 + $0x48] sm:$0xff]
        %v611 = vld [vmem:[%s427 + $0x50] sm:$0xff]
        %v612 = vld [vmem:[%s427 + $0x58] sm:$0xff]
        %v613 = vld [vmem:[%s427 + $0x60] sm:$0xff]
        %v614 = vld [vmem:[%s427 + $0x68] sm:$0xff]
        %v615 = vld [vmem:[%s427 + $0x70] sm:$0xff]
        %v616 = vld [vmem:[%s427 + $0x78] sm:$0xff]
        %v617 = vld [vmem:[%s427 + $0x80] sm:$0xff]
        %v618 = vld [vmem:[%s427 + $0x88] sm:$0xff]
        %v619 = vld [vmem:[%s427 + $0x90] sm:$0xff]
        %v620 = vld [vmem:[%s427 + $0x98] sm:$0xff]
        %v621 = vld [vmem:[%s427 + $0xa0] sm:$0xff]
        %v622 = vld [vmem:[%s427 + $0xa8] sm:$0xff]
        %v623 = vld [vmem:[%s427 + $0xb0] sm:$0xff]
        %v624 = vld [vmem:[%s427 + $0xb8] sm:$0xff]
        %v625 = vld [vmem:[%s427 + $0xc0] sm:$0xff]
        %v626 = vld [vmem:[%s427 + $0xc8] sm:$0xff]
        %v627 = vld [vmem:[%s427 + $0xd0] sm:$0xff]
        %v628 = vld [vmem:[%s427 + $0xd8] sm:$0xff]
        %v629 = vld [vmem:[%s427 + $0xe0] sm:$0xff]
        %v630 = vld [vmem:[%s427 + $0xe8] sm:$0xff]
        %v631 = vld [vmem:[%s427 + $0xf0] sm:$0xff]
        %v632 = vld [vmem:[%s427 + $0xf8] sm:$0xff]
        %s633 = scalar_lea.vmem [#allocation2], 160
        %634 = vst.msk [vmem:[%s633 + $0x5] sm:$0xff] %vm433, %v601
        %635 = vst.msk [vmem:[%s633 + $0xd] sm:$0xff] %vm433, %v602
        %636 = vst.msk [vmem:[%s633 + $0x25] sm:$0xff] %vm433, %v603
        %637 = vst.msk [vmem:[%s633 + $0x2d] sm:$0xff] %vm433, %v604
        %638 = vst.msk [vmem:[%s633 + $0x45] sm:$0xff] %vm433, %v605
        %639 = vst.msk [vmem:[%s633 + $0x4d] sm:$0xff] %vm433, %v606
        %640 = vst.msk [vmem:[%s633 + $0x65] sm:$0xff] %vm433, %v607
        %641 = vst.msk [vmem:[%s633 + $0x6d] sm:$0xff] %vm433, %v608
        %642 = vst.msk [vmem:[%s633 + $0x85] sm:$0xff] %vm433, %v609
        %643 = vst.msk [vmem:[%s633 + $0x8d] sm:$0xff] %vm433, %v610
        %644 = vst.msk [vmem:[%s633 + $0xa5] sm:$0xff] %vm433, %v611
        %645 = vst.msk [vmem:[%s633 + $0xad] sm:$0xff] %vm433, %v612
        %646 = vst.msk [vmem:[%s633 + $0xc5] sm:$0xff] %vm433, %v613
        %647 = vst.msk [vmem:[%s633 + $0xcd] sm:$0xff] %vm433, %v614
        %648 = vst.msk [vmem:[%s633 + $0xe5] sm:$0xff] %vm433, %v615
        %649 = vst.msk [vmem:[%s633 + $0xed] sm:$0xff] %vm433, %v616
        %650 = vst.msk [vmem:[%s633 + $0x105] sm:$0xff] %vm433, %v617
        %651 = vst.msk [vmem:[%s633 + $0x10d] sm:$0xff] %vm433, %v618
        %652 = vst.msk [vmem:[%s633 + $0x125] sm:$0xff] %vm433, %v619
        %653 = vst.msk [vmem:[%s633 + $0x12d] sm:$0xff] %vm433, %v620
        %654 = vst.msk [vmem:[%s633 + $0x145] sm:$0xff] %vm433, %v621
        %655 = vst.msk [vmem:[%s633 + $0x14d] sm:$0xff] %vm433, %v622
        %656 = vst.msk [vmem:[%s633 + $0x165] sm:$0xff] %vm433, %v623
        %657 = vst.msk [vmem:[%s633 + $0x16d] sm:$0xff] %vm433, %v624
        %658 = vst.msk [vmem:[%s633 + $0x185] sm:$0xff] %vm433, %v625
        %659 = vst.msk [vmem:[%s633 + $0x18d] sm:$0xff] %vm433, %v626
        %660 = vst.msk [vmem:[%s633 + $0x1a5] sm:$0xff] %vm433, %v627
        %661 = vst.msk [vmem:[%s633 + $0x1ad] sm:$0xff] %vm433, %v628
        %662 = vst.msk [vmem:[%s633 + $0x1c5] sm:$0xff] %vm433, %v629
        %663 = vst.msk [vmem:[%s633 + $0x1cd] sm:$0xff] %vm433, %v630
        %664 = vst.msk [vmem:[%s633 + $0x1e5] sm:$0xff] %vm433, %v631
        %665 = vst.msk [vmem:[%s633 + $0x1ed] sm:$0xff] %vm433, %v632
        %v666 = vld [vmem:[%s432] sm:$0xff]
        %v667 = vld [vmem:[%s432 + $0x8] sm:$0xff]
        %v668 = vld [vmem:[%s432 + $0x10] sm:$0xff]
        %v669 = vld [vmem:[%s432 + $0x18] sm:$0xff]
        %v670 = vld [vmem:[%s432 + $0x20] sm:$0xff]
        %v671 = vld [vmem:[%s432 + $0x28] sm:$0xff]
        %v672 = vld [vmem:[%s432 + $0x30] sm:$0xff]
        %v673 = vld [vmem:[%s432 + $0x38] sm:$0xff]
        %v674 = vld [vmem:[%s432 + $0x40] sm:$0xff]
        %v675 = vld [vmem:[%s432 + $0x48] sm:$0xff]
        %v676 = vld [vmem:[%s432 + $0x50] sm:$0xff]
        %v677 = vld [vmem:[%s432 + $0x58] sm:$0xff]
        %v678 = vld [vmem:[%s432 + $0x60] sm:$0xff]
        %v679 = vld [vmem:[%s432 + $0x68] sm:$0xff]
        %v680 = vld [vmem:[%s432 + $0x70] sm:$0xff]
        %v681 = vld [vmem:[%s432 + $0x78] sm:$0xff]
        %v682 = vld [vmem:[%s432 + $0x80] sm:$0xff]
        %v683 = vld [vmem:[%s432 + $0x88] sm:$0xff]
        %v684 = vld [vmem:[%s432 + $0x90] sm:$0xff]
        %v685 = vld [vmem:[%s432 + $0x98] sm:$0xff]
        %v686 = vld [vmem:[%s432 + $0xa0] sm:$0xff]
        %v687 = vld [vmem:[%s432 + $0xa8] sm:$0xff]
        %v688 = vld [vmem:[%s432 + $0xb0] sm:$0xff]
        %v689 = vld [vmem:[%s432 + $0xb8] sm:$0xff]
        %v690 = vld [vmem:[%s432 + $0xc0] sm:$0xff]
        %v691 = vld [vmem:[%s432 + $0xc8] sm:$0xff]
        %v692 = vld [vmem:[%s432 + $0xd0] sm:$0xff]
        %v693 = vld [vmem:[%s432 + $0xd8] sm:$0xff]
        %v694 = vld [vmem:[%s432 + $0xe0] sm:$0xff]
        %v695 = vld [vmem:[%s432 + $0xe8] sm:$0xff]
        %v696 = vld [vmem:[%s432 + $0xf0] sm:$0xff]
        %v697 = vld [vmem:[%s432 + $0xf8] sm:$0xff]
        %s698 = scalar_lea.vmem [#allocation3], 48
        %699 = vst.msk [vmem:[%s698 + $0x2] sm:$0xff] %vm539, %v666
        %700 = vst.msk [vmem:[%s698 + $0xa] sm:$0xff] %vm539, %v667
        %701 = vst.msk [vmem:[%s698 + $0x1a] sm:$0xff] %vm539, %v668
        %702 = vst.msk [vmem:[%s698 + $0x22] sm:$0xff] %vm539, %v669
        %703 = vst.msk [vmem:[%s698 + $0x32] sm:$0xff] %vm539, %v670
        %704 = vst.msk [vmem:[%s698 + $0x3a] sm:$0xff] %vm539, %v671
        %705 = vst.msk [vmem:[%s698 + $0x4a] sm:$0xff] %vm539, %v672
        %706 = vst.msk [vmem:[%s698 + $0x52] sm:$0xff] %vm539, %v673
        %707 = vst.msk [vmem:[%s698 + $0x62] sm:$0xff] %vm539, %v674
        %708 = vst.msk [vmem:[%s698 + $0x6a] sm:$0xff] %vm539, %v675
        %709 = vst.msk [vmem:[%s698 + $0x7a] sm:$0xff] %vm539, %v676
        %710 = vst.msk [vmem:[%s698 + $0x82] sm:$0xff] %vm539, %v677
        %711 = vst.msk [vmem:[%s698 + $0x92] sm:$0xff] %vm539, %v678
        %712 = vst.msk [vmem:[%s698 + $0x9a] sm:$0xff] %vm539, %v679
        %713 = vst.msk [vmem:[%s698 + $0xaa] sm:$0xff] %vm539, %v680
        %714 = vst.msk [vmem:[%s698 + $0xb2] sm:$0xff] %vm539, %v681
        %715 = vst.msk [vmem:[%s698 + $0xc2] sm:$0xff] %vm539, %v682
        %716 = vst.msk [vmem:[%s698 + $0xca] sm:$0xff] %vm539, %v683
        %717 = vst.msk [vmem:[%s698 + $0xda] sm:$0xff] %vm539, %v684
        %718 = vst.msk [vmem:[%s698 + $0xe2] sm:$0xff] %vm539, %v685
        %719 = vst.msk [vmem:[%s698 + $0xf2] sm:$0xff] %vm539, %v686
        %720 = vst.msk [vmem:[%s698 + $0xfa] sm:$0xff] %vm539, %v687
        %721 = vst.msk [vmem:[%s698 + $0x10a] sm:$0xff] %vm539, %v688
        %722 = vst.msk [vmem:[%s698 + $0x112] sm:$0xff] %vm539, %v689
        %723 = vst.msk [vmem:[%s698 + $0x122] sm:$0xff] %vm539, %v690
        %724 = vst.msk [vmem:[%s698 + $0x12a] sm:$0xff] %vm539, %v691
        %725 = vst.msk [vmem:[%s698 + $0x13a] sm:$0xff] %vm539, %v692
        %726 = vst.msk [vmem:[%s698 + $0x142] sm:$0xff] %vm539, %v693
        %727 = vst.msk [vmem:[%s698 + $0x152] sm:$0xff] %vm539, %v694
        %728 = vst.msk [vmem:[%s698 + $0x15a] sm:$0xff] %vm539, %v695
        %729 = vst.msk [vmem:[%s698 + $0x16a] sm:$0xff] %vm539, %v696
        %730 = vst.msk [vmem:[%s698 + $0x172] sm:$0xff] %vm539, %v697
        %v731 = vld [vmem:[%s2] sm:$0xff]
        %v732 = vld [vmem:[%s2 + $0x8] sm:$0x1]
        %v733 = vld [vmem:[%s3] sm:$0xff]
        %v734 = vld [vmem:[%s3 + $0x8] sm:$0x7]
        %v735 = vld [vmem:[%s4] sm:$0xff]
        %v736 = vld [vmem:[%s4 + $0x8] sm:$0x7]
        %v737 = vld [vmem:[%s633 + $0x5] sm:$0xff]
        %v738 = vld [vmem:[%s633 + $0xd] sm:$0xff]
        %v739 = vld [vmem:[%s633 + $0x25] sm:$0xff]
        %v740 = vld [vmem:[%s633 + $0x2d] sm:$0xff]
        %v741 = vld [vmem:[%s633 + $0x45] sm:$0xff]
        %v742 = vld [vmem:[%s633 + $0x4d] sm:$0xff]
        %v743 = vld [vmem:[%s633 + $0x65] sm:$0xff]
        %v744 = vld [vmem:[%s633 + $0x6d] sm:$0xff]
        %v745 = vld [vmem:[%s633 + $0x85] sm:$0xff]
        %v746 = vld [vmem:[%s633 + $0x8d] sm:$0xff]
        %v747 = vld [vmem:[%s633 + $0xa5] sm:$0xff]
        %v748 = vld [vmem:[%s633 + $0xad] sm:$0xff]
        %v749 = vld [vmem:[%s633 + $0xc5] sm:$0xff]
        %v750 = vld [vmem:[%s633 + $0xcd] sm:$0xff]
        %v751 = vld [vmem:[%s633 + $0xe5] sm:$0xff]
        %v752 = vld [vmem:[%s633 + $0xed] sm:$0xff]
        %v753 = vld [vmem:[%s633 + $0x105] sm:$0xff]
        %v754 = vld [vmem:[%s633 + $0x10d] sm:$0xff]
        %v755 = vld [vmem:[%s633 + $0x125] sm:$0xff]
        %v756 = vld [vmem:[%s633 + $0x12d] sm:$0xff]
        %v757 = vld [vmem:[%s633 + $0x145] sm:$0xff]
        %v758 = vld [vmem:[%s633 + $0x14d] sm:$0xff]
        %v759 = vld [vmem:[%s633 + $0x165] sm:$0xff]
        %v760 = vld [vmem:[%s633 + $0x16d] sm:$0xff]
        %v761 = vld [vmem:[%s633 + $0x185] sm:$0xff]
        %v762 = vld [vmem:[%s633 + $0x18d] sm:$0xff]
        %v763 = vld [vmem:[%s633 + $0x1a5] sm:$0xff]
        %v764 = vld [vmem:[%s633 + $0x1ad] sm:$0xff]
        %v765 = vld [vmem:[%s633 + $0x1c5] sm:$0xff]
        %v766 = vld [vmem:[%s633 + $0x1cd] sm:$0xff]
        %v767 = vld [vmem:[%s633 + $0x1e5] sm:$0xff]
        %v768 = vld [vmem:[%s633 + $0x1ed] sm:$0xff]
        %v769 = vld [vmem:[%s5] sm:$0x1]
        %v771 = vlaneseq
        %v772 = vshrl.u32 %v771, 7
        %v773 = vsub.s32 0, %v772
        %v774 = vrot.slane %v769, %v773
        %v776 = vmul.f32 %v737, %v774
        %v777 = vmul.f32 %v738, %v774
        %v778 = vmul.f32 %v739, %v774
        %v779 = vmul.f32 %v740, %v774
        %v780 = vmul.f32 %v741, %v774
        %v781 = vmul.f32 %v742, %v774
        %v782 = vmul.f32 %v743, %v774
        %v783 = vmul.f32 %v744, %v774
        %v784 = vmul.f32 %v745, %v774
        %v785 = vmul.f32 %v746, %v774
        %v786 = vmul.f32 %v747, %v774
        %v787 = vmul.f32 %v748, %v774
        %v788 = vmul.f32 %v749, %v774
        %v789 = vmul.f32 %v750, %v774
        %v790 = vmul.f32 %v751, %v774
        %v791 = vmul.f32 %v752, %v774
        %v792 = vmul.f32 %v753, %v774
        %v793 = vmul.f32 %v754, %v774
        %v794 = vmul.f32 %v755, %v774
        %v795 = vmul.f32 %v756, %v774
        %v796 = vmul.f32 %v757, %v774
        %v797 = vmul.f32 %v758, %v774
        %v798 = vmul.f32 %v759, %v774
        %v799 = vmul.f32 %v760, %v774
        %v800 = vmul.f32 %v761, %v774
        %v801 = vmul.f32 %v762, %v774
        %v802 = vmul.f32 %v763, %v774
        %v803 = vmul.f32 %v764, %v774
        %v804 = vmul.f32 %v765, %v774
        %v805 = vmul.f32 %v766, %v774
        %v806 = vmul.f32 %v767, %v774
        %v807 = vmul.f32 %v768, %v774
        %v808 = vld [vmem:[%s6] sm:$0x1]
        %v810 = vlaneseq
        %v811 = vshrl.u32 %v810, 7
        %v812 = vsub.s32 0, %v811
        %v813 = vrot.slane %v808, %v812
        %v815 = vadd.f32 %v776, %v813
        %v816 = vadd.f32 %v777, %v813
        %v817 = vadd.f32 %v778, %v813
        %v818 = vadd.f32 %v779, %v813
        %v819 = vadd.f32 %v780, %v813
        %v820 = vadd.f32 %v781, %v813
        %v821 = vadd.f32 %v782, %v813
        %v822 = vadd.f32 %v783, %v813
        %v823 = vadd.f32 %v784, %v813
        %v824 = vadd.f32 %v785, %v813
        %v825 = vadd.f32 %v786, %v813
        %v826 = vadd.f32 %v787, %v813
        %v827 = vadd.f32 %v788, %v813
        %v828 = vadd.f32 %v789, %v813
        %v829 = vadd.f32 %v790, %v813
        %v830 = vadd.f32 %v791, %v813
        %v831 = vadd.f32 %v792, %v813
        %v832 = vadd.f32 %v793, %v813
        %v833 = vadd.f32 %v794, %v813
        %v834 = vadd.f32 %v795, %v813
        %v835 = vadd.f32 %v796, %v813
        %v836 = vadd.f32 %v797, %v813
        %v837 = vadd.f32 %v798, %v813
        %v838 = vadd.f32 %v799, %v813
        %v839 = vadd.f32 %v800, %v813
        %v840 = vadd.f32 %v801, %v813
        %v841 = vadd.f32 %v802, %v813
        %v842 = vadd.f32 %v803, %v813
        %v843 = vadd.f32 %v804, %v813
        %v844 = vadd.f32 %v805, %v813
        %v845 = vadd.f32 %v806, %v813
        %v846 = vadd.f32 %v807, %v813
        %s847 = scalar_lea.vmem [#allocation2], 128
        %v848 = vld [vmem:[%s847 + $0x4] sm:$0xff]
        %v849 = vld [vmem:[%s847 + $0xc] sm:$0xff]
        %v850 = vld [vmem:[%s847 + $0x24] sm:$0xff]
        %v851 = vld [vmem:[%s847 + $0x2c] sm:$0xff]
        %v852 = vld [vmem:[%s847 + $0x44] sm:$0xff]
        %v853 = vld [vmem:[%s847 + $0x4c] sm:$0xff]
        %v854 = vld [vmem:[%s847 + $0x64] sm:$0xff]
        %v855 = vld [vmem:[%s847 + $0x6c] sm:$0xff]
        %v856 = vld [vmem:[%s847 + $0x84] sm:$0xff]
        %v857 = vld [vmem:[%s847 + $0x8c] sm:$0xff]
        %v858 = vld [vmem:[%s847 + $0xa4] sm:$0xff]
        %v859 = vld [vmem:[%s847 + $0xac] sm:$0xff]
        %v860 = vld [vmem:[%s847 + $0xc4] sm:$0xff]
        %v861 = vld [vmem:[%s847 + $0xcc] sm:$0xff]
        %v862 = vld [vmem:[%s847 + $0xe4] sm:$0xff]
        %v863 = vld [vmem:[%s847 + $0xec] sm:$0xff]
        %v864 = vld [vmem:[%s847 + $0x104] sm:$0xff]
        %v865 = vld [vmem:[%s847 + $0x10c] sm:$0xff]
        %v866 = vld [vmem:[%s847 + $0x124] sm:$0xff]
        %v867 = vld [vmem:[%s847 + $0x12c] sm:$0xff]
        %v868 = vld [vmem:[%s847 + $0x144] sm:$0xff]
        %v869 = vld [vmem:[%s847 + $0x14c] sm:$0xff]
        %v870 = vld [vmem:[%s847 + $0x164] sm:$0xff]
        %v871 = vld [vmem:[%s847 + $0x16c] sm:$0xff]
        %v872 = vld [vmem:[%s847 + $0x184] sm:$0xff]
        %v873 = vld [vmem:[%s847 + $0x18c] sm:$0xff]
        %v874 = vld [vmem:[%s847 + $0x1a4] sm:$0xff]
        %v875 = vld [vmem:[%s847 + $0x1ac] sm:$0xff]
        %v876 = vld [vmem:[%s847 + $0x1c4] sm:$0xff]
        %v877 = vld [vmem:[%s847 + $0x1cc] sm:$0xff]
        %v878 = vld [vmem:[%s847 + $0x1e4] sm:$0xff]
        %v879 = vld [vmem:[%s847 + $0x1ec] sm:$0xff]
        %v880 = vlaneseq
        %v881 = vshrl.u32 %v880, 7
        %v882 = vsub.s32 0, %v881
        %v883 = vrot.slane %v731, %v882
        %v884 = vmul.f32 %v848, %v883
        %v885 = vmul.f32 %v849, %v883
        %v886 = vmul.f32 %v850, %v883
        %v887 = vmul.f32 %v851, %v883
        %v888 = vmul.f32 %v852, %v883
        %v889 = vmul.f32 %v853, %v883
        %v890 = vmul.f32 %v854, %v883
        %v891 = vmul.f32 %v855, %v883
        %v892 = vmul.f32 %v856, %v883
        %v893 = vmul.f32 %v857, %v883
        %v894 = vmul.f32 %v858, %v883
        %v895 = vmul.f32 %v859, %v883
        %v896 = vmul.f32 %v860, %v883
        %v897 = vmul.f32 %v861, %v883
        %v898 = vmul.f32 %v862, %v883
        %v899 = vmul.f32 %v863, %v883
        %v900 = vmul.f32 %v864, %v883
        %v901 = vmul.f32 %v865, %v883
        %v902 = vmul.f32 %v866, %v883
        %v903 = vmul.f32 %v867, %v883
        %v904 = vmul.f32 %v868, %v883
        %v905 = vmul.f32 %v869, %v883
        %v906 = vmul.f32 %v870, %v883
        %v907 = vmul.f32 %v871, %v883
        %v908 = vmul.f32 %v872, %v883
        %v909 = vmul.f32 %v873, %v883
        %v910 = vmul.f32 %v874, %v883
        %v911 = vmul.f32 %v875, %v883
        %v912 = vmul.f32 %v876, %v883
        %v913 = vmul.f32 %v877, %v883
        %v914 = vmul.f32 %v878, %v883
        %v915 = vmul.f32 %v879, %v883
        %v916 = vadd.f32 %v815, %v884
        %v917 = vadd.f32 %v816, %v885
        %v918 = vadd.f32 %v817, %v886
        %v919 = vadd.f32 %v818, %v887
        %v920 = vadd.f32 %v819, %v888
        %v921 = vadd.f32 %v820, %v889
        %v922 = vadd.f32 %v821, %v890
        %v923 = vadd.f32 %v822, %v891
        %v924 = vadd.f32 %v823, %v892
        %v925 = vadd.f32 %v824, %v893
        %v926 = vadd.f32 %v825, %v894
        %v927 = vadd.f32 %v826, %v895
        %v928 = vadd.f32 %v827, %v896
        %v929 = vadd.f32 %v828, %v897
        %v930 = vadd.f32 %v829, %v898
        %v931 = vadd.f32 %v830, %v899
        %v932 = vadd.f32 %v831, %v900
        %v933 = vadd.f32 %v832, %v901
        %v934 = vadd.f32 %v833, %v902
        %v935 = vadd.f32 %v834, %v903
        %v936 = vadd.f32 %v835, %v904
        %v937 = vadd.f32 %v836, %v905
        %v938 = vadd.f32 %v837, %v906
        %v939 = vadd.f32 %v838, %v907
        %v940 = vadd.f32 %v839, %v908
        %v941 = vadd.f32 %v840, %v909
        %v942 = vadd.f32 %v841, %v910
        %v943 = vadd.f32 %v842, %v911
        %v944 = vadd.f32 %v843, %v912
        %v945 = vadd.f32 %v844, %v913
        %v946 = vadd.f32 %v845, %v914
        %v947 = vadd.f32 %v846, %v915
        %v948 = vld [vmem:[%s847 + $0x5] sm:$0xff]
        %v949 = vld [vmem:[%s847 + $0xd] sm:$0xff]
        %v950 = vld [vmem:[%s847 + $0x25] sm:$0xff]
        %v951 = vld [vmem:[%s847 + $0x2d] sm:$0xff]
        %v952 = vld [vmem:[%s847 + $0x45] sm:$0xff]
        %v953 = vld [vmem:[%s847 + $0x4d] sm:$0xff]
        %v954 = vld [vmem:[%s847 + $0x65] sm:$0xff]
        %v955 = vld [vmem:[%s847 + $0x6d] sm:$0xff]
        %v956 = vld [vmem:[%s847 + $0x85] sm:$0xff]
        %v957 = vld [vmem:[%s847 + $0x8d] sm:$0xff]
        %v958 = vld [vmem:[%s847 + $0xa5] sm:$0xff]
        %v959 = vld [vmem:[%s847 + $0xad] sm:$0xff]
        %v960 = vld [vmem:[%s847 + $0xc5] sm:$0xff]
        %v961 = vld [vmem:[%s847 + $0xcd] sm:$0xff]
        %v962 = vld [vmem:[%s847 + $0xe5] sm:$0xff]
        %v963 = vld [vmem:[%s847 + $0xed] sm:$0xff]
        %v964 = vld [vmem:[%s847 + $0x105] sm:$0xff]
        %v965 = vld [vmem:[%s847 + $0x10d] sm:$0xff]
        %v966 = vld [vmem:[%s847 + $0x125] sm:$0xff]
        %v967 = vld [vmem:[%s847 + $0x12d] sm:$0xff]
        %v968 = vld [vmem:[%s847 + $0x145] sm:$0xff]
        %v969 = vld [vmem:[%s847 + $0x14d] sm:$0xff]
        %v970 = vld [vmem:[%s847 + $0x165] sm:$0xff]
        %v971 = vld [vmem:[%s847 + $0x16d] sm:$0xff]
        %v972 = vld [vmem:[%s847 + $0x185] sm:$0xff]
        %v973 = vld [vmem:[%s847 + $0x18d] sm:$0xff]
        %v974 = vld [vmem:[%s847 + $0x1a5] sm:$0xff]
        %v975 = vld [vmem:[%s847 + $0x1ad] sm:$0xff]
        %v976 = vld [vmem:[%s847 + $0x1c5] sm:$0xff]
        %v977 = vld [vmem:[%s847 + $0x1cd] sm:$0xff]
        %v978 = vld [vmem:[%s847 + $0x1e5] sm:$0xff]
        %v979 = vld [vmem:[%s847 + $0x1ed] sm:$0xff]
        %v980 = vlaneseq
        %v981 = vshrl.u32 %v980, 7
        %v982 = vsub.s32 1, %v981
        %v983 = vrot.slane %v731, %v982
        %v984 = vmul.f32 %v948, %v983
        %v985 = vmul.f32 %v949, %v983
        %v986 = vmul.f32 %v950, %v983
        %v987 = vmul.f32 %v951, %v983
        %v988 = vmul.f32 %v952, %v983
        %v989 = vmul.f32 %v953, %v983
        %v990 = vmul.f32 %v954, %v983
        %v991 = vmul.f32 %v955, %v983
        %v992 = vmul.f32 %v956, %v983
        %v993 = vmul.f32 %v957, %v983
        %v994 = vmul.f32 %v958, %v983
        %v995 = vmul.f32 %v959, %v983
        %v996 = vmul.f32 %v960, %v983
        %v997 = vmul.f32 %v961, %v983
        %v998 = vmul.f32 %v962, %v983
        %v999 = vmul.f32 %v963, %v983
        %v1000 = vmul.f32 %v964, %v983
        %v1001 = vmul.f32 %v965, %v983
        %v1002 = vmul.f32 %v966, %v983
        %v1003 = vmul.f32 %v967, %v983
        %v1004 = vmul.f32 %v968, %v983
        %v1005 = vmul.f32 %v969, %v983
        %v1006 = vmul.f32 %v970, %v983
        %v1007 = vmul.f32 %v971, %v983
        %v1008 = vmul.f32 %v972, %v983
        %v1009 = vmul.f32 %v973, %v983
        %v1010 = vmul.f32 %v974, %v983
        %v1011 = vmul.f32 %v975, %v983
        %v1012 = vmul.f32 %v976, %v983
        %v1013 = vmul.f32 %v977, %v983
        %v1014 = vmul.f32 %v978, %v983
        %v1015 = vmul.f32 %v979, %v983
        %v1016 = vadd.f32 %v916, %v984
        %v1017 = vadd.f32 %v917, %v985
        %v1018 = vadd.f32 %v918, %v986
        %v1019 = vadd.f32 %v919, %v987
        %v1020 = vadd.f32 %v920, %v988
        %v1021 = vadd.f32 %v921, %v989
        %v1022 = vadd.f32 %v922, %v990
        %v1023 = vadd.f32 %v923, %v991
        %v1024 = vadd.f32 %v924, %v992
        %v1025 = vadd.f32 %v925, %v993
        %v1026 = vadd.f32 %v926, %v994
        %v1027 = vadd.f32 %v927, %v995
        %v1028 = vadd.f32 %v928, %v996
        %v1029 = vadd.f32 %v929, %v997
        %v1030 = vadd.f32 %v930, %v998
        %v1031 = vadd.f32 %v931, %v999
        %v1032 = vadd.f32 %v932, %v1000
        %v1033 = vadd.f32 %v933, %v1001
        %v1034 = vadd.f32 %v934, %v1002
        %v1035 = vadd.f32 %v935, %v1003
        %v1036 = vadd.f32 %v936, %v1004
        %v1037 = vadd.f32 %v937, %v1005
        %v1038 = vadd.f32 %v938, %v1006
        %v1039 = vadd.f32 %v939, %v1007
        %v1040 = vadd.f32 %v940, %v1008
        %v1041 = vadd.f32 %v941, %v1009
        %v1042 = vadd.f32 %v942, %v1010
        %v1043 = vadd.f32 %v943, %v1011
        %v1044 = vadd.f32 %v944, %v1012
        %v1045 = vadd.f32 %v945, %v1013
        %v1046 = vadd.f32 %v946, %v1014
        %v1047 = vadd.f32 %v947, %v1015
        %v1048 = vld [vmem:[%s847 + $0x6] sm:$0xff]
        %v1049 = vld [vmem:[%s847 + $0xe] sm:$0xff]
        %v1050 = vld [vmem:[%s847 + $0x26] sm:$0xff]
        %v1051 = vld [vmem:[%s847 + $0x2e] sm:$0xff]
        %v1052 = vld [vmem:[%s847 + $0x46] sm:$0xff]
        %v1053 = vld [vmem:[%s847 + $0x4e] sm:$0xff]
        %v1054 = vld [vmem:[%s847 + $0x66] sm:$0xff]
        %v1055 = vld [vmem:[%s847 + $0x6e] sm:$0xff]
        %v1056 = vld [vmem:[%s847 + $0x86] sm:$0xff]
        %v1057 = vld [vmem:[%s847 + $0x8e] sm:$0xff]
        %v1058 = vld [vmem:[%s847 + $0xa6] sm:$0xff]
        %v1059 = vld [vmem:[%s847 + $0xae] sm:$0xff]
        %v1060 = vld [vmem:[%s847 + $0xc6] sm:$0xff]
        %v1061 = vld [vmem:[%s847 + $0xce] sm:$0xff]
        %v1062 = vld [vmem:[%s847 + $0xe6] sm:$0xff]
        %v1063 = vld [vmem:[%s847 + $0xee] sm:$0xff]
        %v1064 = vld [vmem:[%s847 + $0x106] sm:$0xff]
        %v1065 = vld [vmem:[%s847 + $0x10e] sm:$0xff]
        %v1066 = vld [vmem:[%s847 + $0x126] sm:$0xff]
        %v1067 = vld [vmem:[%s847 + $0x12e] sm:$0xff]
        %v1068 = vld [vmem:[%s847 + $0x146] sm:$0xff]
        %v1069 = vld [vmem:[%s847 + $0x14e] sm:$0xff]
        %v1070 = vld [vmem:[%s847 + $0x166] sm:$0xff]
        %v1071 = vld [vmem:[%s847 + $0x16e] sm:$0xff]
        %v1072 = vld [vmem:[%s847 + $0x186] sm:$0xff]
        %v1073 = vld [vmem:[%s847 + $0x18e] sm:$0xff]
        %v1074 = vld [vmem:[%s847 + $0x1a6] sm:$0xff]
        %v1075 = vld [vmem:[%s847 + $0x1ae] sm:$0xff]
        %v1076 = vld [vmem:[%s847 + $0x1c6] sm:$0xff]
        %v1077 = vld [vmem:[%s847 + $0x1ce] sm:$0xff]
        %v1078 = vld [vmem:[%s847 + $0x1e6] sm:$0xff]
        %v1079 = vld [vmem:[%s847 + $0x1ee] sm:$0xff]
        %v1080 = vlaneseq
        %v1081 = vshrl.u32 %v1080, 7
        %v1082 = vsub.s32 2, %v1081
        %v1083 = vrot.slane %v731, %v1082
        %v1084 = vmul.f32 %v1048, %v1083
        %v1085 = vmul.f32 %v1049, %v1083
        %v1086 = vmul.f32 %v1050, %v1083
        %v1087 = vmul.f32 %v1051, %v1083
        %v1088 = vmul.f32 %v1052, %v1083
        %v1089 = vmul.f32 %v1053, %v1083
        %v1090 = vmul.f32 %v1054, %v1083
        %v1091 = vmul.f32 %v1055, %v1083
        %v1092 = vmul.f32 %v1056, %v1083
        %v1093 = vmul.f32 %v1057, %v1083
        %v1094 = vmul.f32 %v1058, %v1083
        %v1095 = vmul.f32 %v1059, %v1083
        %v1096 = vmul.f32 %v1060, %v1083
        %v1097 = vmul.f32 %v1061, %v1083
        %v1098 = vmul.f32 %v1062, %v1083
        %v1099 = vmul.f32 %v1063, %v1083
        %v1100 = vmul.f32 %v1064, %v1083
        %v1101 = vmul.f32 %v1065, %v1083
        %v1102 = vmul.f32 %v1066, %v1083
        %v1103 = vmul.f32 %v1067, %v1083
        %v1104 = vmul.f32 %v1068, %v1083
        %v1105 = vmul.f32 %v1069, %v1083
        %v1106 = vmul.f32 %v1070, %v1083
        %v1107 = vmul.f32 %v1071, %v1083
        %v1108 = vmul.f32 %v1072, %v1083
        %v1109 = vmul.f32 %v1073, %v1083
        %v1110 = vmul.f32 %v1074, %v1083
        %v1111 = vmul.f32 %v1075, %v1083
        %v1112 = vmul.f32 %v1076, %v1083
        %v1113 = vmul.f32 %v1077, %v1083
        %v1114 = vmul.f32 %v1078, %v1083
        %v1115 = vmul.f32 %v1079, %v1083
        %v1116 = vadd.f32 %v1016, %v1084
        %v1117 = vadd.f32 %v1017, %v1085
        %v1118 = vadd.f32 %v1018, %v1086
        %v1119 = vadd.f32 %v1019, %v1087
        %v1120 = vadd.f32 %v1020, %v1088
        %v1121 = vadd.f32 %v1021, %v1089
        %v1122 = vadd.f32 %v1022, %v1090
        %v1123 = vadd.f32 %v1023, %v1091
        %v1124 = vadd.f32 %v1024, %v1092
        %v1125 = vadd.f32 %v1025, %v1093
        %v1126 = vadd.f32 %v1026, %v1094
        %v1127 = vadd.f32 %v1027, %v1095
        %v1128 = vadd.f32 %v1028, %v1096
        %v1129 = vadd.f32 %v1029, %v1097
        %v1130 = vadd.f32 %v1030, %v1098
        %v1131 = vadd.f32 %v1031, %v1099
        %v1132 = vadd.f32 %v1032, %v1100
        %v1133 = vadd.f32 %v1033, %v1101
        %v1134 = vadd.f32 %v1034, %v1102
        %v1135 = vadd.f32 %v1035, %v1103
        %v1136 = vadd.f32 %v1036, %v1104
        %v1137 = vadd.f32 %v1037, %v1105
        %v1138 = vadd.f32 %v1038, %v1106
        %v1139 = vadd.f32 %v1039, %v1107
        %v1140 = vadd.f32 %v1040, %v1108
        %v1141 = vadd.f32 %v1041, %v1109
        %v1142 = vadd.f32 %v1042, %v1110
        %v1143 = vadd.f32 %v1043, %v1111
        %v1144 = vadd.f32 %v1044, %v1112
        %v1145 = vadd.f32 %v1045, %v1113
        %v1146 = vadd.f32 %v1046, %v1114
        %v1147 = vadd.f32 %v1047, %v1115
        %v1148 = vld [vmem:[%s633 + $0x4] sm:$0xff]
        %v1149 = vld [vmem:[%s633 + $0xc] sm:$0xff]
        %v1150 = vld [vmem:[%s633 + $0x24] sm:$0xff]
        %v1151 = vld [vmem:[%s633 + $0x2c] sm:$0xff]
        %v1152 = vld [vmem:[%s633 + $0x44] sm:$0xff]
        %v1153 = vld [vmem:[%s633 + $0x4c] sm:$0xff]
        %v1154 = vld [vmem:[%s633 + $0x64] sm:$0xff]
        %v1155 = vld [vmem:[%s633 + $0x6c] sm:$0xff]
        %v1156 = vld [vmem:[%s633 + $0x84] sm:$0xff]
        %v1157 = vld [vmem:[%s633 + $0x8c] sm:$0xff]
        %v1158 = vld [vmem:[%s633 + $0xa4] sm:$0xff]
        %v1159 = vld [vmem:[%s633 + $0xac] sm:$0xff]
        %v1160 = vld [vmem:[%s633 + $0xc4] sm:$0xff]
        %v1161 = vld [vmem:[%s633 + $0xcc] sm:$0xff]
        %v1162 = vld [vmem:[%s633 + $0xe4] sm:$0xff]
        %v1163 = vld [vmem:[%s633 + $0xec] sm:$0xff]
        %v1164 = vld [vmem:[%s633 + $0x104] sm:$0xff]
        %v1165 = vld [vmem:[%s633 + $0x10c] sm:$0xff]
        %v1166 = vld [vmem:[%s633 + $0x124] sm:$0xff]
        %v1167 = vld [vmem:[%s633 + $0x12c] sm:$0xff]
        %v1168 = vld [vmem:[%s633 + $0x144] sm:$0xff]
        %v1169 = vld [vmem:[%s633 + $0x14c] sm:$0xff]
        %v1170 = vld [vmem:[%s633 + $0x164] sm:$0xff]
        %v1171 = vld [vmem:[%s633 + $0x16c] sm:$0xff]
        %v1172 = vld [vmem:[%s633 + $0x184] sm:$0xff]
        %v1173 = vld [vmem:[%s633 + $0x18c] sm:$0xff]
        %v1174 = vld [vmem:[%s633 + $0x1a4] sm:$0xff]
        %v1175 = vld [vmem:[%s633 + $0x1ac] sm:$0xff]
        %v1176 = vld [vmem:[%s633 + $0x1c4] sm:$0xff]
        %v1177 = vld [vmem:[%s633 + $0x1cc] sm:$0xff]
        %v1178 = vld [vmem:[%s633 + $0x1e4] sm:$0xff]
        %v1179 = vld [vmem:[%s633 + $0x1ec] sm:$0xff]
        %v1180 = vlaneseq
        %v1181 = vshrl.u32 %v1180, 7
        %v1182 = vsub.s32 3, %v1181
        %v1183 = vrot.slane %v731, %v1182
        %v1184 = vmul.f32 %v1148, %v1183
        %v1185 = vmul.f32 %v1149, %v1183
        %v1186 = vmul.f32 %v1150, %v1183
        %v1187 = vmul.f32 %v1151, %v1183
        %v1188 = vmul.f32 %v1152, %v1183
        %v1189 = vmul.f32 %v1153, %v1183
        %v1190 = vmul.f32 %v1154, %v1183
        %v1191 = vmul.f32 %v1155, %v1183
        %v1192 = vmul.f32 %v1156, %v1183
        %v1193 = vmul.f32 %v1157, %v1183
        %v1194 = vmul.f32 %v1158, %v1183
        %v1195 = vmul.f32 %v1159, %v1183
        %v1196 = vmul.f32 %v1160, %v1183
        %v1197 = vmul.f32 %v1161, %v1183
        %v1198 = vmul.f32 %v1162, %v1183
        %v1199 = vmul.f32 %v1163, %v1183
        %v1200 = vmul.f32 %v1164, %v1183
        %v1201 = vmul.f32 %v1165, %v1183
        %v1202 = vmul.f32 %v1166, %v1183
        %v1203 = vmul.f32 %v1167, %v1183
        %v1204 = vmul.f32 %v1168, %v1183
        %v1205 = vmul.f32 %v1169, %v1183
        %v1206 = vmul.f32 %v1170, %v1183
        %v1207 = vmul.f32 %v1171, %v1183
        %v1208 = vmul.f32 %v1172, %v1183
        %v1209 = vmul.f32 %v1173, %v1183
        %v1210 = vmul.f32 %v1174, %v1183
        %v1211 = vmul.f32 %v1175, %v1183
        %v1212 = vmul.f32 %v1176, %v1183
        %v1213 = vmul.f32 %v1177, %v1183
        %v1214 = vmul.f32 %v1178, %v1183
        %v1215 = vmul.f32 %v1179, %v1183
        %v1216 = vadd.f32 %v1116, %v1184
        %v1217 = vadd.f32 %v1117, %v1185
        %v1218 = vadd.f32 %v1118, %v1186
        %v1219 = vadd.f32 %v1119, %v1187
        %v1220 = vadd.f32 %v1120, %v1188
        %v1221 = vadd.f32 %v1121, %v1189
        %v1222 = vadd.f32 %v1122, %v1190
        %v1223 = vadd.f32 %v1123, %v1191
        %v1224 = vadd.f32 %v1124, %v1192
        %v1225 = vadd.f32 %v1125, %v1193
        %v1226 = vadd.f32 %v1126, %v1194
        %v1227 = vadd.f32 %v1127, %v1195
        %v1228 = vadd.f32 %v1128, %v1196
        %v1229 = vadd.f32 %v1129, %v1197
        %v1230 = vadd.f32 %v1130, %v1198
        %v1231 = vadd.f32 %v1131, %v1199
        %v1232 = vadd.f32 %v1132, %v1200
        %v1233 = vadd.f32 %v1133, %v1201
        %v1234 = vadd.f32 %v1134, %v1202
        %v1235 = vadd.f32 %v1135, %v1203
        %v1236 = vadd.f32 %v1136, %v1204
        %v1237 = vadd.f32 %v1137, %v1205
        %v1238 = vadd.f32 %v1138, %v1206
        %v1239 = vadd.f32 %v1139, %v1207
        %v1240 = vadd.f32 %v1140, %v1208
        %v1241 = vadd.f32 %v1141, %v1209
        %v1242 = vadd.f32 %v1142, %v1210
        %v1243 = vadd.f32 %v1143, %v1211
        %v1244 = vadd.f32 %v1144, %v1212
        %v1245 = vadd.f32 %v1145, %v1213
        %v1246 = vadd.f32 %v1146, %v1214
        %v1247 = vadd.f32 %v1147, %v1215
        %v1248 = vlaneseq
        %v1249 = vshrl.u32 %v1248, 7
        %v1250 = vsub.s32 4, %v1249
        %v1251 = vrot.slane %v731, %v1250
        %v1252 = vmul.f32 %v737, %v1251
        %v1253 = vmul.f32 %v738, %v1251
        %v1254 = vmul.f32 %v739, %v1251
        %v1255 = vmul.f32 %v740, %v1251
        %v1256 = vmul.f32 %v741, %v1251
        %v1257 = vmul.f32 %v742, %v1251
        %v1258 = vmul.f32 %v743, %v1251
        %v1259 = vmul.f32 %v744, %v1251
        %v1260 = vmul.f32 %v745, %v1251
        %v1261 = vmul.f32 %v746, %v1251
        %v1262 = vmul.f32 %v747, %v1251
        %v1263 = vmul.f32 %v748, %v1251
        %v1264 = vmul.f32 %v749, %v1251
        %v1265 = vmul.f32 %v750, %v1251
        %v1266 = vmul.f32 %v751, %v1251
        %v1267 = vmul.f32 %v752, %v1251
        %v1268 = vmul.f32 %v753, %v1251
        %v1269 = vmul.f32 %v754, %v1251
        %v1270 = vmul.f32 %v755, %v1251
        %v1271 = vmul.f32 %v756, %v1251
        %v1272 = vmul.f32 %v757, %v1251
        %v1273 = vmul.f32 %v758, %v1251
        %v1274 = vmul.f32 %v759, %v1251
        %v1275 = vmul.f32 %v760, %v1251
        %v1276 = vmul.f32 %v761, %v1251
        %v1277 = vmul.f32 %v762, %v1251
        %v1278 = vmul.f32 %v763, %v1251
        %v1279 = vmul.f32 %v764, %v1251
        %v1280 = vmul.f32 %v765, %v1251
        %v1281 = vmul.f32 %v766, %v1251
        %v1282 = vmul.f32 %v767, %v1251
        %v1283 = vmul.f32 %v768, %v1251
        %v1284 = vadd.f32 %v1216, %v1252
        %v1285 = vadd.f32 %v1217, %v1253
        %v1286 = vadd.f32 %v1218, %v1254
        %v1287 = vadd.f32 %v1219, %v1255
        %v1288 = vadd.f32 %v1220, %v1256
        %v1289 = vadd.f32 %v1221, %v1257
        %v1290 = vadd.f32 %v1222, %v1258
        %v1291 = vadd.f32 %v1223, %v1259
        %v1292 = vadd.f32 %v1224, %v1260
        %v1293 = vadd.f32 %v1225, %v1261
        %v1294 = vadd.f32 %v1226, %v1262
        %v1295 = vadd.f32 %v1227, %v1263
        %v1296 = vadd.f32 %v1228, %v1264
        %v1297 = vadd.f32 %v1229, %v1265
        %v1298 = vadd.f32 %v1230, %v1266
        %v1299 = vadd.f32 %v1231, %v1267
        %v1300 = vadd.f32 %v1232, %v1268
        %v1301 = vadd.f32 %v1233, %v1269
        %v1302 = vadd.f32 %v1234, %v1270
        %v1303 = vadd.f32 %v1235, %v1271
        %v1304 = vadd.f32 %v1236, %v1272
        %v1305 = vadd.f32 %v1237, %v1273
        %v1306 = vadd.f32 %v1238, %v1274
        %v1307 = vadd.f32 %v1239, %v1275
        %v1308 = vadd.f32 %v1240, %v1276
        %v1309 = vadd.f32 %v1241, %v1277
        %v1310 = vadd.f32 %v1242, %v1278
        %v1311 = vadd.f32 %v1243, %v1279
        %v1312 = vadd.f32 %v1244, %v1280
        %v1313 = vadd.f32 %v1245, %v1281
        %v1314 = vadd.f32 %v1246, %v1282
        %v1315 = vadd.f32 %v1247, %v1283
        %v1316 = vld [vmem:[%s633 + $0x6] sm:$0xff]
        %v1317 = vld [vmem:[%s633 + $0xe] sm:$0xff]
        %v1318 = vld [vmem:[%s633 + $0x26] sm:$0xff]
        %v1319 = vld [vmem:[%s633 + $0x2e] sm:$0xff]
        %v1320 = vld [vmem:[%s633 + $0x46] sm:$0xff]
        %v1321 = vld [vmem:[%s633 + $0x4e] sm:$0xff]
        %v1322 = vld [vmem:[%s633 + $0x66] sm:$0xff]
        %v1323 = vld [vmem:[%s633 + $0x6e] sm:$0xff]
        %v1324 = vld [vmem:[%s633 + $0x86] sm:$0xff]
        %v1325 = vld [vmem:[%s633 + $0x8e] sm:$0xff]
        %v1326 = vld [vmem:[%s633 + $0xa6] sm:$0xff]
        %v1327 = vld [vmem:[%s633 + $0xae] sm:$0xff]
        %v1328 = vld [vmem:[%s633 + $0xc6] sm:$0xff]
        %v1329 = vld [vmem:[%s633 + $0xce] sm:$0xff]
        %v1330 = vld [vmem:[%s633 + $0xe6] sm:$0xff]
        %v1331 = vld [vmem:[%s633 + $0xee] sm:$0xff]
        %v1332 = vld [vmem:[%s633 + $0x106] sm:$0xff]
        %v1333 = vld [vmem:[%s633 + $0x10e] sm:$0xff]
        %v1334 = vld [vmem:[%s633 + $0x126] sm:$0xff]
        %v1335 = vld [vmem:[%s633 + $0x12e] sm:$0xff]
        %v1336 = vld [vmem:[%s633 + $0x146] sm:$0xff]
        %v1337 = vld [vmem:[%s633 + $0x14e] sm:$0xff]
        %v1338 = vld [vmem:[%s633 + $0x166] sm:$0xff]
        %v1339 = vld [vmem:[%s633 + $0x16e] sm:$0xff]
        %v1340 = vld [vmem:[%s633 + $0x186] sm:$0xff]
        %v1341 = vld [vmem:[%s633 + $0x18e] sm:$0xff]
        %v1342 = vld [vmem:[%s633 + $0x1a6] sm:$0xff]
        %v1343 = vld [vmem:[%s633 + $0x1ae] sm:$0xff]
        %v1344 = vld [vmem:[%s633 + $0x1c6] sm:$0xff]
        %v1345 = vld [vmem:[%s633 + $0x1ce] sm:$0xff]
        %v1346 = vld [vmem:[%s633 + $0x1e6] sm:$0xff]
        %v1347 = vld [vmem:[%s633 + $0x1ee] sm:$0xff]
        %v1348 = vlaneseq
        %v1349 = vshrl.u32 %v1348, 7
        %v1350 = vsub.s32 5, %v1349
        %v1351 = vrot.slane %v731, %v1350
        %v1352 = vmul.f32 %v1316, %v1351
        %v1353 = vmul.f32 %v1317, %v1351
        %v1354 = vmul.f32 %v1318, %v1351
        %v1355 = vmul.f32 %v1319, %v1351
        %v1356 = vmul.f32 %v1320, %v1351
        %v1357 = vmul.f32 %v1321, %v1351
        %v1358 = vmul.f32 %v1322, %v1351
        %v1359 = vmul.f32 %v1323, %v1351
        %v1360 = vmul.f32 %v1324, %v1351
        %v1361 = vmul.f32 %v1325, %v1351
        %v1362 = vmul.f32 %v1326, %v1351
        %v1363 = vmul.f32 %v1327, %v1351
        %v1364 = vmul.f32 %v1328, %v1351
        %v1365 = vmul.f32 %v1329, %v1351
        %v1366 = vmul.f32 %v1330, %v1351
        %v1367 = vmul.f32 %v1331, %v1351
        %v1368 = vmul.f32 %v1332, %v1351
        %v1369 = vmul.f32 %v1333, %v1351
        %v1370 = vmul.f32 %v1334, %v1351
        %v1371 = vmul.f32 %v1335, %v1351
        %v1372 = vmul.f32 %v1336, %v1351
        %v1373 = vmul.f32 %v1337, %v1351
        %v1374 = vmul.f32 %v1338, %v1351
        %v1375 = vmul.f32 %v1339, %v1351
        %v1376 = vmul.f32 %v1340, %v1351
        %v1377 = vmul.f32 %v1341, %v1351
        %v1378 = vmul.f32 %v1342, %v1351
        %v1379 = vmul.f32 %v1343, %v1351
        %v1380 = vmul.f32 %v1344, %v1351
        %v1381 = vmul.f32 %v1345, %v1351
        %v1382 = vmul.f32 %v1346, %v1351
        %v1383 = vmul.f32 %v1347, %v1351
        %v1384 = vadd.f32 %v1284, %v1352
        %v1385 = vadd.f32 %v1285, %v1353
        %v1386 = vadd.f32 %v1286, %v1354
        %v1387 = vadd.f32 %v1287, %v1355
        %v1388 = vadd.f32 %v1288, %v1356
        %v1389 = vadd.f32 %v1289, %v1357
        %v1390 = vadd.f32 %v1290, %v1358
        %v1391 = vadd.f32 %v1291, %v1359
        %v1392 = vadd.f32 %v1292, %v1360
        %v1393 = vadd.f32 %v1293, %v1361
        %v1394 = vadd.f32 %v1294, %v1362
        %v1395 = vadd.f32 %v1295, %v1363
        %v1396 = vadd.f32 %v1296, %v1364
        %v1397 = vadd.f32 %v1297, %v1365
        %v1398 = vadd.f32 %v1298, %v1366
        %v1399 = vadd.f32 %v1299, %v1367
        %v1400 = vadd.f32 %v1300, %v1368
        %v1401 = vadd.f32 %v1301, %v1369
        %v1402 = vadd.f32 %v1302, %v1370
        %v1403 = vadd.f32 %v1303, %v1371
        %v1404 = vadd.f32 %v1304, %v1372
        %v1405 = vadd.f32 %v1305, %v1373
        %v1406 = vadd.f32 %v1306, %v1374
        %v1407 = vadd.f32 %v1307, %v1375
        %v1408 = vadd.f32 %v1308, %v1376
        %v1409 = vadd.f32 %v1309, %v1377
        %v1410 = vadd.f32 %v1310, %v1378
        %v1411 = vadd.f32 %v1311, %v1379
        %v1412 = vadd.f32 %v1312, %v1380
        %v1413 = vadd.f32 %v1313, %v1381
        %v1414 = vadd.f32 %v1314, %v1382
        %v1415 = vadd.f32 %v1315, %v1383
        %s1416 = scalar_lea.vmem [#allocation2], 192
        %v1417 = vld [vmem:[%s1416 + $0x4] sm:$0xff]
        %v1418 = vld [vmem:[%s1416 + $0xc] sm:$0xff]
        %v1419 = vld [vmem:[%s1416 + $0x24] sm:$0xff]
        %v1420 = vld [vmem:[%s1416 + $0x2c] sm:$0xff]
        %v1421 = vld [vmem:[%s1416 + $0x44] sm:$0xff]
        %v1422 = vld [vmem:[%s1416 + $0x4c] sm:$0xff]
        %v1423 = vld [vmem:[%s1416 + $0x64] sm:$0xff]
        %v1424 = vld [vmem:[%s1416 + $0x6c] sm:$0xff]
        %v1425 = vld [vmem:[%s1416 + $0x84] sm:$0xff]
        %v1426 = vld [vmem:[%s1416 + $0x8c] sm:$0xff]
        %v1427 = vld [vmem:[%s1416 + $0xa4] sm:$0xff]
        %v1428 = vld [vmem:[%s1416 + $0xac] sm:$0xff]
        %v1429 = vld [vmem:[%s1416 + $0xc4] sm:$0xff]
        %v1430 = vld [vmem:[%s1416 + $0xcc] sm:$0xff]
        %v1431 = vld [vmem:[%s1416 + $0xe4] sm:$0xff]
        %v1432 = vld [vmem:[%s1416 + $0xec] sm:$0xff]
        %v1433 = vld [vmem:[%s1416 + $0x104] sm:$0xff]
        %v1434 = vld [vmem:[%s1416 + $0x10c] sm:$0xff]
        %v1435 = vld [vmem:[%s1416 + $0x124] sm:$0xff]
        %v1436 = vld [vmem:[%s1416 + $0x12c] sm:$0xff]
        %v1437 = vld [vmem:[%s1416 + $0x144] sm:$0xff]
        %v1438 = vld [vmem:[%s1416 + $0x14c] sm:$0xff]
        %v1439 = vld [vmem:[%s1416 + $0x164] sm:$0xff]
        %v1440 = vld [vmem:[%s1416 + $0x16c] sm:$0xff]
        %v1441 = vld [vmem:[%s1416 + $0x184] sm:$0xff]
        %v1442 = vld [vmem:[%s1416 + $0x18c] sm:$0xff]
        %v1443 = vld [vmem:[%s1416 + $0x1a4] sm:$0xff]
        %v1444 = vld [vmem:[%s1416 + $0x1ac] sm:$0xff]
        %v1445 = vld [vmem:[%s1416 + $0x1c4] sm:$0xff]
        %v1446 = vld [vmem:[%s1416 + $0x1cc] sm:$0xff]
        %v1447 = vld [vmem:[%s1416 + $0x1e4] sm:$0xff]
        %v1448 = vld [vmem:[%s1416 + $0x1ec] sm:$0xff]
        %v1449 = vlaneseq
        %v1450 = vshrl.u32 %v1449, 7
        %v1451 = vsub.s32 6, %v1450
        %v1452 = vrot.slane %v731, %v1451
        %v1453 = vmul.f32 %v1417, %v1452
        %v1454 = vmul.f32 %v1418, %v1452
        %v1455 = vmul.f32 %v1419, %v1452
        %v1456 = vmul.f32 %v1420, %v1452
        %v1457 = vmul.f32 %v1421, %v1452
        %v1458 = vmul.f32 %v1422, %v1452
        %v1459 = vmul.f32 %v1423, %v1452
        %v1460 = vmul.f32 %v1424, %v1452
        %v1461 = vmul.f32 %v1425, %v1452
        %v1462 = vmul.f32 %v1426, %v1452
        %v1463 = vmul.f32 %v1427, %v1452
        %v1464 = vmul.f32 %v1428, %v1452
        %v1465 = vmul.f32 %v1429, %v1452
        %v1466 = vmul.f32 %v1430, %v1452
        %v1467 = vmul.f32 %v1431, %v1452
        %v1468 = vmul.f32 %v1432, %v1452
        %v1469 = vmul.f32 %v1433, %v1452
        %v1470 = vmul.f32 %v1434, %v1452
        %v1471 = vmul.f32 %v1435, %v1452
        %v1472 = vmul.f32 %v1436, %v1452
        %v1473 = vmul.f32 %v1437, %v1452
        %v1474 = vmul.f32 %v1438, %v1452
        %v1475 = vmul.f32 %v1439, %v1452
        %v1476 = vmul.f32 %v1440, %v1452
        %v1477 = vmul.f32 %v1441, %v1452
        %v1478 = vmul.f32 %v1442, %v1452
        %v1479 = vmul.f32 %v1443, %v1452
        %v1480 = vmul.f32 %v1444, %v1452
        %v1481 = vmul.f32 %v1445, %v1452
        %v1482 = vmul.f32 %v1446, %v1452
        %v1483 = vmul.f32 %v1447, %v1452
        %v1484 = vmul.f32 %v1448, %v1452
        %v1485 = vadd.f32 %v1384, %v1453
        %v1486 = vadd.f32 %v1385, %v1454
        %v1487 = vadd.f32 %v1386, %v1455
        %v1488 = vadd.f32 %v1387, %v1456
        %v1489 = vadd.f32 %v1388, %v1457
        %v1490 = vadd.f32 %v1389, %v1458
        %v1491 = vadd.f32 %v1390, %v1459
        %v1492 = vadd.f32 %v1391, %v1460
        %v1493 = vadd.f32 %v1392, %v1461
        %v1494 = vadd.f32 %v1393, %v1462
        %v1495 = vadd.f32 %v1394, %v1463
        %v1496 = vadd.f32 %v1395, %v1464
        %v1497 = vadd.f32 %v1396, %v1465
        %v1498 = vadd.f32 %v1397, %v1466
        %v1499 = vadd.f32 %v1398, %v1467
        %v1500 = vadd.f32 %v1399, %v1468
        %v1501 = vadd.f32 %v1400, %v1469
        %v1502 = vadd.f32 %v1401, %v1470
        %v1503 = vadd.f32 %v1402, %v1471
        %v1504 = vadd.f32 %v1403, %v1472
        %v1505 = vadd.f32 %v1404, %v1473
        %v1506 = vadd.f32 %v1405, %v1474
        %v1507 = vadd.f32 %v1406, %v1475
        %v1508 = vadd.f32 %v1407, %v1476
        %v1509 = vadd.f32 %v1408, %v1477
        %v1510 = vadd.f32 %v1409, %v1478
        %v1511 = vadd.f32 %v1410, %v1479
        %v1512 = vadd.f32 %v1411, %v1480
        %v1513 = vadd.f32 %v1412, %v1481
        %v1514 = vadd.f32 %v1413, %v1482
        %v1515 = vadd.f32 %v1414, %v1483
        %v1516 = vadd.f32 %v1415, %v1484
        %v1517 = vld [vmem:[%s1416 + $0x5] sm:$0xff]
        %v1518 = vld [vmem:[%s1416 + $0xd] sm:$0xff]
        %v1519 = vld [vmem:[%s1416 + $0x25] sm:$0xff]
        %v1520 = vld [vmem:[%s1416 + $0x2d] sm:$0xff]
        %v1521 = vld [vmem:[%s1416 + $0x45] sm:$0xff]
        %v1522 = vld [vmem:[%s1416 + $0x4d] sm:$0xff]
        %v1523 = vld [vmem:[%s1416 + $0x65] sm:$0xff]
        %v1524 = vld [vmem:[%s1416 + $0x6d] sm:$0xff]
        %v1525 = vld [vmem:[%s1416 + $0x85] sm:$0xff]
        %v1526 = vld [vmem:[%s1416 + $0x8d] sm:$0xff]
        %v1527 = vld [vmem:[%s1416 + $0xa5] sm:$0xff]
        %v1528 = vld [vmem:[%s1416 + $0xad] sm:$0xff]
        %v1529 = vld [vmem:[%s1416 + $0xc5] sm:$0xff]
        %v1530 = vld [vmem:[%s1416 + $0xcd] sm:$0xff]
        %v1531 = vld [vmem:[%s1416 + $0xe5] sm:$0xff]
        %v1532 = vld [vmem:[%s1416 + $0xed] sm:$0xff]
        %v1533 = vld [vmem:[%s1416 + $0x105] sm:$0xff]
        %v1534 = vld [vmem:[%s1416 + $0x10d] sm:$0xff]
        %v1535 = vld [vmem:[%s1416 + $0x125] sm:$0xff]
        %v1536 = vld [vmem:[%s1416 + $0x12d] sm:$0xff]
        %v1537 = vld [vmem:[%s1416 + $0x145] sm:$0xff]
        %v1538 = vld [vmem:[%s1416 + $0x14d] sm:$0xff]
        %v1539 = vld [vmem:[%s1416 + $0x165] sm:$0xff]
        %v1540 = vld [vmem:[%s1416 + $0x16d] sm:$0xff]
        %v1541 = vld [vmem:[%s1416 + $0x185] sm:$0xff]
        %v1542 = vld [vmem:[%s1416 + $0x18d] sm:$0xff]
        %v1543 = vld [vmem:[%s1416 + $0x1a5] sm:$0xff]
        %v1544 = vld [vmem:[%s1416 + $0x1ad] sm:$0xff]
        %v1545 = vld [vmem:[%s1416 + $0x1c5] sm:$0xff]
        %v1546 = vld [vmem:[%s1416 + $0x1cd] sm:$0xff]
        %v1547 = vld [vmem:[%s1416 + $0x1e5] sm:$0xff]
        %v1548 = vld [vmem:[%s1416 + $0x1ed] sm:$0xff]
        %v1549 = vlaneseq
        %v1550 = vshrl.u32 %v1549, 7
        %v1551 = vsub.s32 7, %v1550
        %v1552 = vrot.slane %v731, %v1551
        %v1553 = vmul.f32 %v1517, %v1552
        %v1554 = vmul.f32 %v1518, %v1552
        %v1555 = vmul.f32 %v1519, %v1552
        %v1556 = vmul.f32 %v1520, %v1552
        %v1557 = vmul.f32 %v1521, %v1552
        %v1558 = vmul.f32 %v1522, %v1552
        %v1559 = vmul.f32 %v1523, %v1552
        %v1560 = vmul.f32 %v1524, %v1552
        %v1561 = vmul.f32 %v1525, %v1552
        %v1562 = vmul.f32 %v1526, %v1552
        %v1563 = vmul.f32 %v1527, %v1552
        %v1564 = vmul.f32 %v1528, %v1552
        %v1565 = vmul.f32 %v1529, %v1552
        %v1566 = vmul.f32 %v1530, %v1552
        %v1567 = vmul.f32 %v1531, %v1552
        %v1568 = vmul.f32 %v1532, %v1552
        %v1569 = vmul.f32 %v1533, %v1552
        %v1570 = vmul.f32 %v1534, %v1552
        %v1571 = vmul.f32 %v1535, %v1552
        %v1572 = vmul.f32 %v1536, %v1552
        %v1573 = vmul.f32 %v1537, %v1552
        %v1574 = vmul.f32 %v1538, %v1552
        %v1575 = vmul.f32 %v1539, %v1552
        %v1576 = vmul.f32 %v1540, %v1552
        %v1577 = vmul.f32 %v1541, %v1552
        %v1578 = vmul.f32 %v1542, %v1552
        %v1579 = vmul.f32 %v1543, %v1552
        %v1580 = vmul.f32 %v1544, %v1552
        %v1581 = vmul.f32 %v1545, %v1552
        %v1582 = vmul.f32 %v1546, %v1552
        %v1583 = vmul.f32 %v1547, %v1552
        %v1584 = vmul.f32 %v1548, %v1552
        %v1585 = vadd.f32 %v1485, %v1553
        %v1586 = vadd.f32 %v1486, %v1554
        %v1587 = vadd.f32 %v1487, %v1555
        %v1588 = vadd.f32 %v1488, %v1556
        %v1589 = vadd.f32 %v1489, %v1557
        %v1590 = vadd.f32 %v1490, %v1558
        %v1591 = vadd.f32 %v1491, %v1559
        %v1592 = vadd.f32 %v1492, %v1560
        %v1593 = vadd.f32 %v1493, %v1561
        %v1594 = vadd.f32 %v1494, %v1562
        %v1595 = vadd.f32 %v1495, %v1563
        %v1596 = vadd.f32 %v1496, %v1564
        %v1597 = vadd.f32 %v1497, %v1565
        %v1598 = vadd.f32 %v1498, %v1566
        %v1599 = vadd.f32 %v1499, %v1567
        %v1600 = vadd.f32 %v1500, %v1568
        %v1601 = vadd.f32 %v1501, %v1569
        %v1602 = vadd.f32 %v1502, %v1570
        %v1603 = vadd.f32 %v1503, %v1571
        %v1604 = vadd.f32 %v1504, %v1572
        %v1605 = vadd.f32 %v1505, %v1573
        %v1606 = vadd.f32 %v1506, %v1574
        %v1607 = vadd.f32 %v1507, %v1575
        %v1608 = vadd.f32 %v1508, %v1576
        %v1609 = vadd.f32 %v1509, %v1577
        %v1610 = vadd.f32 %v1510, %v1578
        %v1611 = vadd.f32 %v1511, %v1579
        %v1612 = vadd.f32 %v1512, %v1580
        %v1613 = vadd.f32 %v1513, %v1581
        %v1614 = vadd.f32 %v1514, %v1582
        %v1615 = vadd.f32 %v1515, %v1583
        %v1616 = vadd.f32 %v1516, %v1584
        %v1617 = vld [vmem:[%s1416 + $0x6] sm:$0xff]
        %v1618 = vld [vmem:[%s1416 + $0xe] sm:$0xff]
        %v1619 = vld [vmem:[%s1416 + $0x26] sm:$0xff]
        %v1620 = vld [vmem:[%s1416 + $0x2e] sm:$0xff]
        %v1621 = vld [vmem:[%s1416 + $0x46] sm:$0xff]
        %v1622 = vld [vmem:[%s1416 + $0x4e] sm:$0xff]
        %v1623 = vld [vmem:[%s1416 + $0x66] sm:$0xff]
        %v1624 = vld [vmem:[%s1416 + $0x6e] sm:$0xff]
        %v1625 = vld [vmem:[%s1416 + $0x86] sm:$0xff]
        %v1626 = vld [vmem:[%s1416 + $0x8e] sm:$0xff]
        %v1627 = vld [vmem:[%s1416 + $0xa6] sm:$0xff]
        %v1628 = vld [vmem:[%s1416 + $0xae] sm:$0xff]
        %v1629 = vld [vmem:[%s1416 + $0xc6] sm:$0xff]
        %v1630 = vld [vmem:[%s1416 + $0xce] sm:$0xff]
        %v1631 = vld [vmem:[%s1416 + $0xe6] sm:$0xff]
        %v1632 = vld [vmem:[%s1416 + $0xee] sm:$0xff]
        %v1633 = vld [vmem:[%s1416 + $0x106] sm:$0xff]
        %v1634 = vld [vmem:[%s1416 + $0x10e] sm:$0xff]
        %v1635 = vld [vmem:[%s1416 + $0x126] sm:$0xff]
        %v1636 = vld [vmem:[%s1416 + $0x12e] sm:$0xff]
        %v1637 = vld [vmem:[%s1416 + $0x146] sm:$0xff]
        %v1638 = vld [vmem:[%s1416 + $0x14e] sm:$0xff]
        %v1639 = vld [vmem:[%s1416 + $0x166] sm:$0xff]
        %v1640 = vld [vmem:[%s1416 + $0x16e] sm:$0xff]
        %v1641 = vld [vmem:[%s1416 + $0x186] sm:$0xff]
        %v1642 = vld [vmem:[%s1416 + $0x18e] sm:$0xff]
        %v1643 = vld [vmem:[%s1416 + $0x1a6] sm:$0xff]
        %v1644 = vld [vmem:[%s1416 + $0x1ae] sm:$0xff]
        %v1645 = vld [vmem:[%s1416 + $0x1c6] sm:$0xff]
        %v1646 = vld [vmem:[%s1416 + $0x1ce] sm:$0xff]
        %v1647 = vld [vmem:[%s1416 + $0x1e6] sm:$0xff]
        %v1648 = vld [vmem:[%s1416 + $0x1ee] sm:$0xff]
        %v1649 = vlaneseq
        %v1650 = vshrl.u32 %v1649, 7
        %v1651 = vsub.s32 0, %v1650
        %v1652 = vrot.slane %v732, %v1651
        %v1653 = vmul.f32 %v1617, %v1652
        %v1654 = vmul.f32 %v1618, %v1652
        %v1655 = vmul.f32 %v1619, %v1652
        %v1656 = vmul.f32 %v1620, %v1652
        %v1657 = vmul.f32 %v1621, %v1652
        %v1658 = vmul.f32 %v1622, %v1652
        %v1659 = vmul.f32 %v1623, %v1652
        %v1660 = vmul.f32 %v1624, %v1652
        %v1661 = vmul.f32 %v1625, %v1652
        %v1662 = vmul.f32 %v1626, %v1652
        %v1663 = vmul.f32 %v1627, %v1652
        %v1664 = vmul.f32 %v1628, %v1652
        %v1665 = vmul.f32 %v1629, %v1652
        %v1666 = vmul.f32 %v1630, %v1652
        %v1667 = vmul.f32 %v1631, %v1652
        %v1668 = vmul.f32 %v1632, %v1652
        %v1669 = vmul.f32 %v1633, %v1652
        %v1670 = vmul.f32 %v1634, %v1652
        %v1671 = vmul.f32 %v1635, %v1652
        %v1672 = vmul.f32 %v1636, %v1652
        %v1673 = vmul.f32 %v1637, %v1652
        %v1674 = vmul.f32 %v1638, %v1652
        %v1675 = vmul.f32 %v1639, %v1652
        %v1676 = vmul.f32 %v1640, %v1652
        %v1677 = vmul.f32 %v1641, %v1652
        %v1678 = vmul.f32 %v1642, %v1652
        %v1679 = vmul.f32 %v1643, %v1652
        %v1680 = vmul.f32 %v1644, %v1652
        %v1681 = vmul.f32 %v1645, %v1652
        %v1682 = vmul.f32 %v1646, %v1652
        %v1683 = vmul.f32 %v1647, %v1652
        %v1684 = vmul.f32 %v1648, %v1652
        %v1685 = vadd.f32 %v1585, %v1653
        %v1686 = vadd.f32 %v1586, %v1654
        %v1687 = vadd.f32 %v1587, %v1655
        %v1688 = vadd.f32 %v1588, %v1656
        %v1689 = vadd.f32 %v1589, %v1657
        %v1690 = vadd.f32 %v1590, %v1658
        %v1691 = vadd.f32 %v1591, %v1659
        %v1692 = vadd.f32 %v1592, %v1660
        %v1693 = vadd.f32 %v1593, %v1661
        %v1694 = vadd.f32 %v1594, %v1662
        %v1695 = vadd.f32 %v1595, %v1663
        %v1696 = vadd.f32 %v1596, %v1664
        %v1697 = vadd.f32 %v1597, %v1665
        %v1698 = vadd.f32 %v1598, %v1666
        %v1699 = vadd.f32 %v1599, %v1667
        %v1700 = vadd.f32 %v1600, %v1668
        %v1701 = vadd.f32 %v1601, %v1669
        %v1702 = vadd.f32 %v1602, %v1670
        %v1703 = vadd.f32 %v1603, %v1671
        %v1704 = vadd.f32 %v1604, %v1672
        %v1705 = vadd.f32 %v1605, %v1673
        %v1706 = vadd.f32 %v1606, %v1674
        %v1707 = vadd.f32 %v1607, %v1675
        %v1708 = vadd.f32 %v1608, %v1676
        %v1709 = vadd.f32 %v1609, %v1677
        %v1710 = vadd.f32 %v1610, %v1678
        %v1711 = vadd.f32 %v1611, %v1679
        %v1712 = vadd.f32 %v1612, %v1680
        %v1713 = vadd.f32 %v1613, %v1681
        %v1714 = vadd.f32 %v1614, %v1682
        %v1715 = vadd.f32 %v1615, %v1683
        %v1716 = vadd.f32 %v1616, %v1684
        %v1717 = vld [vmem:[%s633] sm:$0xff]
        %v1718 = vld [vmem:[%s633 + $0x8] sm:$0xff]
        %v1719 = vld [vmem:[%s633 + $0x20] sm:$0xff]
        %v1720 = vld [vmem:[%s633 + $0x28] sm:$0xff]
        %v1721 = vld [vmem:[%s633 + $0x40] sm:$0xff]
        %v1722 = vld [vmem:[%s633 + $0x48] sm:$0xff]
        %v1723 = vld [vmem:[%s633 + $0x60] sm:$0xff]
        %v1724 = vld [vmem:[%s633 + $0x68] sm:$0xff]
        %v1725 = vld [vmem:[%s633 + $0x80] sm:$0xff]
        %v1726 = vld [vmem:[%s633 + $0x88] sm:$0xff]
        %v1727 = vld [vmem:[%s633 + $0xa0] sm:$0xff]
        %v1728 = vld [vmem:[%s633 + $0xa8] sm:$0xff]
        %v1729 = vld [vmem:[%s633 + $0xc0] sm:$0xff]
        %v1730 = vld [vmem:[%s633 + $0xc8] sm:$0xff]
        %v1731 = vld [vmem:[%s633 + $0xe0] sm:$0xff]
        %v1732 = vld [vmem:[%s633 + $0xe8] sm:$0xff]
        %v1733 = vld [vmem:[%s633 + $0x100] sm:$0xff]
        %v1734 = vld [vmem:[%s633 + $0x108] sm:$0xff]
        %v1735 = vld [vmem:[%s633 + $0x120] sm:$0xff]
        %v1736 = vld [vmem:[%s633 + $0x128] sm:$0xff]
        %v1737 = vld [vmem:[%s633 + $0x140] sm:$0xff]
        %v1738 = vld [vmem:[%s633 + $0x148] sm:$0xff]
        %v1739 = vld [vmem:[%s633 + $0x160] sm:$0xff]
        %v1740 = vld [vmem:[%s633 + $0x168] sm:$0xff]
        %v1741 = vld [vmem:[%s633 + $0x180] sm:$0xff]
        %v1742 = vld [vmem:[%s633 + $0x188] sm:$0xff]
        %v1743 = vld [vmem:[%s633 + $0x1a0] sm:$0xff]
        %v1744 = vld [vmem:[%s633 + $0x1a8] sm:$0xff]
        %v1745 = vld [vmem:[%s633 + $0x1c0] sm:$0xff]
        %v1746 = vld [vmem:[%s633 + $0x1c8] sm:$0xff]
        %v1747 = vld [vmem:[%s633 + $0x1e0] sm:$0xff]
        %v1748 = vld [vmem:[%s633 + $0x1e8] sm:$0xff]
        %v1749 = vlaneseq
        %v1750 = vshrl.u32 %v1749, 7
        %v1751 = vsub.s32 0, %v1750
        %v1752 = vrot.slane %v733, %v1751
        %v1753 = vmul.f32 %v1717, %v1752
        %v1754 = vmul.f32 %v1718, %v1752
        %v1755 = vmul.f32 %v1719, %v1752
        %v1756 = vmul.f32 %v1720, %v1752
        %v1757 = vmul.f32 %v1721, %v1752
        %v1758 = vmul.f32 %v1722, %v1752
        %v1759 = vmul.f32 %v1723, %v1752
        %v1760 = vmul.f32 %v1724, %v1752
        %v1761 = vmul.f32 %v1725, %v1752
        %v1762 = vmul.f32 %v1726, %v1752
        %v1763 = vmul.f32 %v1727, %v1752
        %v1764 = vmul.f32 %v1728, %v1752
        %v1765 = vmul.f32 %v1729, %v1752
        %v1766 = vmul.f32 %v1730, %v1752
        %v1767 = vmul.f32 %v1731, %v1752
        %v1768 = vmul.f32 %v1732, %v1752
        %v1769 = vmul.f32 %v1733, %v1752
        %v1770 = vmul.f32 %v1734, %v1752
        %v1771 = vmul.f32 %v1735, %v1752
        %v1772 = vmul.f32 %v1736, %v1752
        %v1773 = vmul.f32 %v1737, %v1752
        %v1774 = vmul.f32 %v1738, %v1752
        %v1775 = vmul.f32 %v1739, %v1752
        %v1776 = vmul.f32 %v1740, %v1752
        %v1777 = vmul.f32 %v1741, %v1752
        %v1778 = vmul.f32 %v1742, %v1752
        %v1779 = vmul.f32 %v1743, %v1752
        %v1780 = vmul.f32 %v1744, %v1752
        %v1781 = vmul.f32 %v1745, %v1752
        %v1782 = vmul.f32 %v1746, %v1752
        %v1783 = vmul.f32 %v1747, %v1752
        %v1784 = vmul.f32 %v1748, %v1752
        %v1785 = vadd.f32 %v1685, %v1753
        %v1786 = vadd.f32 %v1686, %v1754
        %v1787 = vadd.f32 %v1687, %v1755
        %v1788 = vadd.f32 %v1688, %v1756
        %v1789 = vadd.f32 %v1689, %v1757
        %v1790 = vadd.f32 %v1690, %v1758
        %v1791 = vadd.f32 %v1691, %v1759
        %v1792 = vadd.f32 %v1692, %v1760
        %v1793 = vadd.f32 %v1693, %v1761
        %v1794 = vadd.f32 %v1694, %v1762
        %v1795 = vadd.f32 %v1695, %v1763
        %v1796 = vadd.f32 %v1696, %v1764
        %v1797 = vadd.f32 %v1697, %v1765
        %v1798 = vadd.f32 %v1698, %v1766
        %v1799 = vadd.f32 %v1699, %v1767
        %v1800 = vadd.f32 %v1700, %v1768
        %v1801 = vadd.f32 %v1701, %v1769
        %v1802 = vadd.f32 %v1702, %v1770
        %v1803 = vadd.f32 %v1703, %v1771
        %v1804 = vadd.f32 %v1704, %v1772
        %v1805 = vadd.f32 %v1705, %v1773
        %v1806 = vadd.f32 %v1706, %v1774
        %v1807 = vadd.f32 %v1707, %v1775
        %v1808 = vadd.f32 %v1708, %v1776
        %v1809 = vadd.f32 %v1709, %v1777
        %v1810 = vadd.f32 %v1710, %v1778
        %v1811 = vadd.f32 %v1711, %v1779
        %v1812 = vadd.f32 %v1712, %v1780
        %v1813 = vadd.f32 %v1713, %v1781
        %v1814 = vadd.f32 %v1714, %v1782
        %v1815 = vadd.f32 %v1715, %v1783
        %v1816 = vadd.f32 %v1716, %v1784
        %v1817 = vld [vmem:[%s633 + $0x1] sm:$0xff]
        %v1818 = vld [vmem:[%s633 + $0x9] sm:$0xff]
        %v1819 = vld [vmem:[%s633 + $0x21] sm:$0xff]
        %v1820 = vld [vmem:[%s633 + $0x29] sm:$0xff]
        %v1821 = vld [vmem:[%s633 + $0x41] sm:$0xff]
        %v1822 = vld [vmem:[%s633 + $0x49] sm:$0xff]
        %v1823 = vld [vmem:[%s633 + $0x61] sm:$0xff]
        %v1824 = vld [vmem:[%s633 + $0x69] sm:$0xff]
        %v1825 = vld [vmem:[%s633 + $0x81] sm:$0xff]
        %v1826 = vld [vmem:[%s633 + $0x89] sm:$0xff]
        %v1827 = vld [vmem:[%s633 + $0xa1] sm:$0xff]
        %v1828 = vld [vmem:[%s633 + $0xa9] sm:$0xff]
        %v1829 = vld [vmem:[%s633 + $0xc1] sm:$0xff]
        %v1830 = vld [vmem:[%s633 + $0xc9] sm:$0xff]
        %v1831 = vld [vmem:[%s633 + $0xe1] sm:$0xff]
        %v1832 = vld [vmem:[%s633 + $0xe9] sm:$0xff]
        %v1833 = vld [vmem:[%s633 + $0x101] sm:$0xff]
        %v1834 = vld [vmem:[%s633 + $0x109] sm:$0xff]
        %v1835 = vld [vmem:[%s633 + $0x121] sm:$0xff]
        %v1836 = vld [vmem:[%s633 + $0x129] sm:$0xff]
        %v1837 = vld [vmem:[%s633 + $0x141] sm:$0xff]
        %v1838 = vld [vmem:[%s633 + $0x149] sm:$0xff]
        %v1839 = vld [vmem:[%s633 + $0x161] sm:$0xff]
        %v1840 = vld [vmem:[%s633 + $0x169] sm:$0xff]
        %v1841 = vld [vmem:[%s633 + $0x181] sm:$0xff]
        %v1842 = vld [vmem:[%s633 + $0x189] sm:$0xff]
        %v1843 = vld [vmem:[%s633 + $0x1a1] sm:$0xff]
        %v1844 = vld [vmem:[%s633 + $0x1a9] sm:$0xff]
        %v1845 = vld [vmem:[%s633 + $0x1c1] sm:$0xff]
        %v1846 = vld [vmem:[%s633 + $0x1c9] sm:$0xff]
        %v1847 = vld [vmem:[%s633 + $0x1e1] sm:$0xff]
        %v1848 = vld [vmem:[%s633 + $0x1e9] sm:$0xff]
        %v1849 = vlaneseq
        %v1850 = vshrl.u32 %v1849, 7
        %v1851 = vsub.s32 1, %v1850
        %v1852 = vrot.slane %v733, %v1851
        %v1853 = vmul.f32 %v1817, %v1852
        %v1854 = vmul.f32 %v1818, %v1852
        %v1855 = vmul.f32 %v1819, %v1852
        %v1856 = vmul.f32 %v1820, %v1852
        %v1857 = vmul.f32 %v1821, %v1852
        %v1858 = vmul.f32 %v1822, %v1852
        %v1859 = vmul.f32 %v1823, %v1852
        %v1860 = vmul.f32 %v1824, %v1852
        %v1861 = vmul.f32 %v1825, %v1852
        %v1862 = vmul.f32 %v1826, %v1852
        %v1863 = vmul.f32 %v1827, %v1852
        %v1864 = vmul.f32 %v1828, %v1852
        %v1865 = vmul.f32 %v1829, %v1852
        %v1866 = vmul.f32 %v1830, %v1852
        %v1867 = vmul.f32 %v1831, %v1852
        %v1868 = vmul.f32 %v1832, %v1852
        %v1869 = vmul.f32 %v1833, %v1852
        %v1870 = vmul.f32 %v1834, %v1852
        %v1871 = vmul.f32 %v1835, %v1852
        %v1872 = vmul.f32 %v1836, %v1852
        %v1873 = vmul.f32 %v1837, %v1852
        %v1874 = vmul.f32 %v1838, %v1852
        %v1875 = vmul.f32 %v1839, %v1852
        %v1876 = vmul.f32 %v1840, %v1852
        %v1877 = vmul.f32 %v1841, %v1852
        %v1878 = vmul.f32 %v1842, %v1852
        %v1879 = vmul.f32 %v1843, %v1852
        %v1880 = vmul.f32 %v1844, %v1852
        %v1881 = vmul.f32 %v1845, %v1852
        %v1882 = vmul.f32 %v1846, %v1852
        %v1883 = vmul.f32 %v1847, %v1852
        %v1884 = vmul.f32 %v1848, %v1852
        %v1885 = vadd.f32 %v1785, %v1853
        %v1886 = vadd.f32 %v1786, %v1854
        %v1887 = vadd.f32 %v1787, %v1855
        %v1888 = vadd.f32 %v1788, %v1856
        %v1889 = vadd.f32 %v1789, %v1857
        %v1890 = vadd.f32 %v1790, %v1858
        %v1891 = vadd.f32 %v1791, %v1859
        %v1892 = vadd.f32 %v1792, %v1860
        %v1893 = vadd.f32 %v1793, %v1861
        %v1894 = vadd.f32 %v1794, %v1862
        %v1895 = vadd.f32 %v1795, %v1863
        %v1896 = vadd.f32 %v1796, %v1864
        %v1897 = vadd.f32 %v1797, %v1865
        %v1898 = vadd.f32 %v1798, %v1866
        %v1899 = vadd.f32 %v1799, %v1867
        %v1900 = vadd.f32 %v1800, %v1868
        %v1901 = vadd.f32 %v1801, %v1869
        %v1902 = vadd.f32 %v1802, %v1870
        %v1903 = vadd.f32 %v1803, %v1871
        %v1904 = vadd.f32 %v1804, %v1872
        %v1905 = vadd.f32 %v1805, %v1873
        %v1906 = vadd.f32 %v1806, %v1874
        %v1907 = vadd.f32 %v1807, %v1875
        %v1908 = vadd.f32 %v1808, %v1876
        %v1909 = vadd.f32 %v1809, %v1877
        %v1910 = vadd.f32 %v1810, %v1878
        %v1911 = vadd.f32 %v1811, %v1879
        %v1912 = vadd.f32 %v1812, %v1880
        %v1913 = vadd.f32 %v1813, %v1881
        %v1914 = vadd.f32 %v1814, %v1882
        %v1915 = vadd.f32 %v1815, %v1883
        %v1916 = vadd.f32 %v1816, %v1884
        %v1917 = vld [vmem:[%s633 + $0x2] sm:$0xff]
        %v1918 = vld [vmem:[%s633 + $0xa] sm:$0xff]
        %v1919 = vld [vmem:[%s633 + $0x22] sm:$0xff]
        %v1920 = vld [vmem:[%s633 + $0x2a] sm:$0xff]
        %v1921 = vld [vmem:[%s633 + $0x42] sm:$0xff]
        %v1922 = vld [vmem:[%s633 + $0x4a] sm:$0xff]
        %v1923 = vld [vmem:[%s633 + $0x62] sm:$0xff]
        %v1924 = vld [vmem:[%s633 + $0x6a] sm:$0xff]
        %v1925 = vld [vmem:[%s633 + $0x82] sm:$0xff]
        %v1926 = vld [vmem:[%s633 + $0x8a] sm:$0xff]
        %v1927 = vld [vmem:[%s633 + $0xa2] sm:$0xff]
        %v1928 = vld [vmem:[%s633 + $0xaa] sm:$0xff]
        %v1929 = vld [vmem:[%s633 + $0xc2] sm:$0xff]
        %v1930 = vld [vmem:[%s633 + $0xca] sm:$0xff]
        %v1931 = vld [vmem:[%s633 + $0xe2] sm:$0xff]
        %v1932 = vld [vmem:[%s633 + $0xea] sm:$0xff]
        %v1933 = vld [vmem:[%s633 + $0x102] sm:$0xff]
        %v1934 = vld [vmem:[%s633 + $0x10a] sm:$0xff]
        %v1935 = vld [vmem:[%s633 + $0x122] sm:$0xff]
        %v1936 = vld [vmem:[%s633 + $0x12a] sm:$0xff]
        %v1937 = vld [vmem:[%s633 + $0x142] sm:$0xff]
        %v1938 = vld [vmem:[%s633 + $0x14a] sm:$0xff]
        %v1939 = vld [vmem:[%s633 + $0x162] sm:$0xff]
        %v1940 = vld [vmem:[%s633 + $0x16a] sm:$0xff]
        %v1941 = vld [vmem:[%s633 + $0x182] sm:$0xff]
        %v1942 = vld [vmem:[%s633 + $0x18a] sm:$0xff]
        %v1943 = vld [vmem:[%s633 + $0x1a2] sm:$0xff]
        %v1944 = vld [vmem:[%s633 + $0x1aa] sm:$0xff]
        %v1945 = vld [vmem:[%s633 + $0x1c2] sm:$0xff]
        %v1946 = vld [vmem:[%s633 + $0x1ca] sm:$0xff]
        %v1947 = vld [vmem:[%s633 + $0x1e2] sm:$0xff]
        %v1948 = vld [vmem:[%s633 + $0x1ea] sm:$0xff]
        %v1949 = vlaneseq
        %v1950 = vshrl.u32 %v1949, 7
        %v1951 = vsub.s32 2, %v1950
        %v1952 = vrot.slane %v733, %v1951
        %v1953 = vmul.f32 %v1917, %v1952
        %v1954 = vmul.f32 %v1918, %v1952
        %v1955 = vmul.f32 %v1919, %v1952
        %v1956 = vmul.f32 %v1920, %v1952
        %v1957 = vmul.f32 %v1921, %v1952
        %v1958 = vmul.f32 %v1922, %v1952
        %v1959 = vmul.f32 %v1923, %v1952
        %v1960 = vmul.f32 %v1924, %v1952
        %v1961 = vmul.f32 %v1925, %v1952
        %v1962 = vmul.f32 %v1926, %v1952
        %v1963 = vmul.f32 %v1927, %v1952
        %v1964 = vmul.f32 %v1928, %v1952
        %v1965 = vmul.f32 %v1929, %v1952
        %v1966 = vmul.f32 %v1930, %v1952
        %v1967 = vmul.f32 %v1931, %v1952
        %v1968 = vmul.f32 %v1932, %v1952
        %v1969 = vmul.f32 %v1933, %v1952
        %v1970 = vmul.f32 %v1934, %v1952
        %v1971 = vmul.f32 %v1935, %v1952
        %v1972 = vmul.f32 %v1936, %v1952
        %v1973 = vmul.f32 %v1937, %v1952
        %v1974 = vmul.f32 %v1938, %v1952
        %v1975 = vmul.f32 %v1939, %v1952
        %v1976 = vmul.f32 %v1940, %v1952
        %v1977 = vmul.f32 %v1941, %v1952
        %v1978 = vmul.f32 %v1942, %v1952
        %v1979 = vmul.f32 %v1943, %v1952
        %v1980 = vmul.f32 %v1944, %v1952
        %v1981 = vmul.f32 %v1945, %v1952
        %v1982 = vmul.f32 %v1946, %v1952
        %v1983 = vmul.f32 %v1947, %v1952
        %v1984 = vmul.f32 %v1948, %v1952
        %v1985 = vadd.f32 %v1885, %v1953
        %v1986 = vadd.f32 %v1886, %v1954
        %v1987 = vadd.f32 %v1887, %v1955
        %v1988 = vadd.f32 %v1888, %v1956
        %v1989 = vadd.f32 %v1889, %v1957
        %v1990 = vadd.f32 %v1890, %v1958
        %v1991 = vadd.f32 %v1891, %v1959
        %v1992 = vadd.f32 %v1892, %v1960
        %v1993 = vadd.f32 %v1893, %v1961
        %v1994 = vadd.f32 %v1894, %v1962
        %v1995 = vadd.f32 %v1895, %v1963
        %v1996 = vadd.f32 %v1896, %v1964
        %v1997 = vadd.f32 %v1897, %v1965
        %v1998 = vadd.f32 %v1898, %v1966
        %v1999 = vadd.f32 %v1899, %v1967
        %v2000 = vadd.f32 %v1900, %v1968
        %v2001 = vadd.f32 %v1901, %v1969
        %v2002 = vadd.f32 %v1902, %v1970
        %v2003 = vadd.f32 %v1903, %v1971
        %v2004 = vadd.f32 %v1904, %v1972
        %v2005 = vadd.f32 %v1905, %v1973
        %v2006 = vadd.f32 %v1906, %v1974
        %v2007 = vadd.f32 %v1907, %v1975
        %v2008 = vadd.f32 %v1908, %v1976
        %v2009 = vadd.f32 %v1909, %v1977
        %v2010 = vadd.f32 %v1910, %v1978
        %v2011 = vadd.f32 %v1911, %v1979
        %v2012 = vadd.f32 %v1912, %v1980
        %v2013 = vadd.f32 %v1913, %v1981
        %v2014 = vadd.f32 %v1914, %v1982
        %v2015 = vadd.f32 %v1915, %v1983
        %v2016 = vadd.f32 %v1916, %v1984
        %v2017 = vld [vmem:[%s633 + $0x3] sm:$0xff]
        %v2018 = vld [vmem:[%s633 + $0xb] sm:$0xff]
        %v2019 = vld [vmem:[%s633 + $0x23] sm:$0xff]
        %v2020 = vld [vmem:[%s633 + $0x2b] sm:$0xff]
        %v2021 = vld [vmem:[%s633 + $0x43] sm:$0xff]
        %v2022 = vld [vmem:[%s633 + $0x4b] sm:$0xff]
        %v2023 = vld [vmem:[%s633 + $0x63] sm:$0xff]
        %v2024 = vld [vmem:[%s633 + $0x6b] sm:$0xff]
        %v2025 = vld [vmem:[%s633 + $0x83] sm:$0xff]
        %v2026 = vld [vmem:[%s633 + $0x8b] sm:$0xff]
        %v2027 = vld [vmem:[%s633 + $0xa3] sm:$0xff]
        %v2028 = vld [vmem:[%s633 + $0xab] sm:$0xff]
        %v2029 = vld [vmem:[%s633 + $0xc3] sm:$0xff]
        %v2030 = vld [vmem:[%s633 + $0xcb] sm:$0xff]
        %v2031 = vld [vmem:[%s633 + $0xe3] sm:$0xff]
        %v2032 = vld [vmem:[%s633 + $0xeb] sm:$0xff]
        %v2033 = vld [vmem:[%s633 + $0x103] sm:$0xff]
        %v2034 = vld [vmem:[%s633 + $0x10b] sm:$0xff]
        %v2035 = vld [vmem:[%s633 + $0x123] sm:$0xff]
        %v2036 = vld [vmem:[%s633 + $0x12b] sm:$0xff]
        %v2037 = vld [vmem:[%s633 + $0x143] sm:$0xff]
        %v2038 = vld [vmem:[%s633 + $0x14b] sm:$0xff]
        %v2039 = vld [vmem:[%s633 + $0x163] sm:$0xff]
        %v2040 = vld [vmem:[%s633 + $0x16b] sm:$0xff]
        %v2041 = vld [vmem:[%s633 + $0x183] sm:$0xff]
        %v2042 = vld [vmem:[%s633 + $0x18b] sm:$0xff]
        %v2043 = vld [vmem:[%s633 + $0x1a3] sm:$0xff]
        %v2044 = vld [vmem:[%s633 + $0x1ab] sm:$0xff]
        %v2045 = vld [vmem:[%s633 + $0x1c3] sm:$0xff]
        %v2046 = vld [vmem:[%s633 + $0x1cb] sm:$0xff]
        %v2047 = vld [vmem:[%s633 + $0x1e3] sm:$0xff]
        %v2048 = vld [vmem:[%s633 + $0x1eb] sm:$0xff]
        %v2049 = vlaneseq
        %v2050 = vshrl.u32 %v2049, 7
        %v2051 = vsub.s32 3, %v2050
        %v2052 = vrot.slane %v733, %v2051
        %v2053 = vmul.f32 %v2017, %v2052
        %v2054 = vmul.f32 %v2018, %v2052
        %v2055 = vmul.f32 %v2019, %v2052
        %v2056 = vmul.f32 %v2020, %v2052
        %v2057 = vmul.f32 %v2021, %v2052
        %v2058 = vmul.f32 %v2022, %v2052
        %v2059 = vmul.f32 %v2023, %v2052
        %v2060 = vmul.f32 %v2024, %v2052
        %v2061 = vmul.f32 %v2025, %v2052
        %v2062 = vmul.f32 %v2026, %v2052
        %v2063 = vmul.f32 %v2027, %v2052
        %v2064 = vmul.f32 %v2028, %v2052
        %v2065 = vmul.f32 %v2029, %v2052
        %v2066 = vmul.f32 %v2030, %v2052
        %v2067 = vmul.f32 %v2031, %v2052
        %v2068 = vmul.f32 %v2032, %v2052
        %v2069 = vmul.f32 %v2033, %v2052
        %v2070 = vmul.f32 %v2034, %v2052
        %v2071 = vmul.f32 %v2035, %v2052
        %v2072 = vmul.f32 %v2036, %v2052
        %v2073 = vmul.f32 %v2037, %v2052
        %v2074 = vmul.f32 %v2038, %v2052
        %v2075 = vmul.f32 %v2039, %v2052
        %v2076 = vmul.f32 %v2040, %v2052
        %v2077 = vmul.f32 %v2041, %v2052
        %v2078 = vmul.f32 %v2042, %v2052
        %v2079 = vmul.f32 %v2043, %v2052
        %v2080 = vmul.f32 %v2044, %v2052
        %v2081 = vmul.f32 %v2045, %v2052
        %v2082 = vmul.f32 %v2046, %v2052
        %v2083 = vmul.f32 %v2047, %v2052
        %v2084 = vmul.f32 %v2048, %v2052
        %v2085 = vadd.f32 %v1985, %v2053
        %v2086 = vadd.f32 %v1986, %v2054
        %v2087 = vadd.f32 %v1987, %v2055
        %v2088 = vadd.f32 %v1988, %v2056
        %v2089 = vadd.f32 %v1989, %v2057
        %v2090 = vadd.f32 %v1990, %v2058
        %v2091 = vadd.f32 %v1991, %v2059
        %v2092 = vadd.f32 %v1992, %v2060
        %v2093 = vadd.f32 %v1993, %v2061
        %v2094 = vadd.f32 %v1994, %v2062
        %v2095 = vadd.f32 %v1995, %v2063
        %v2096 = vadd.f32 %v1996, %v2064
        %v2097 = vadd.f32 %v1997, %v2065
        %v2098 = vadd.f32 %v1998, %v2066
        %v2099 = vadd.f32 %v1999, %v2067
        %v2100 = vadd.f32 %v2000, %v2068
        %v2101 = vadd.f32 %v2001, %v2069
        %v2102 = vadd.f32 %v2002, %v2070
        %v2103 = vadd.f32 %v2003, %v2071
        %v2104 = vadd.f32 %v2004, %v2072
        %v2105 = vadd.f32 %v2005, %v2073
        %v2106 = vadd.f32 %v2006, %v2074
        %v2107 = vadd.f32 %v2007, %v2075
        %v2108 = vadd.f32 %v2008, %v2076
        %v2109 = vadd.f32 %v2009, %v2077
        %v2110 = vadd.f32 %v2010, %v2078
        %v2111 = vadd.f32 %v2011, %v2079
        %v2112 = vadd.f32 %v2012, %v2080
        %v2113 = vadd.f32 %v2013, %v2081
        %v2114 = vadd.f32 %v2014, %v2082
        %v2115 = vadd.f32 %v2015, %v2083
        %v2116 = vadd.f32 %v2016, %v2084
        %v2117 = vlaneseq
        %v2118 = vshrl.u32 %v2117, 7
        %v2119 = vsub.s32 4, %v2118
        %v2120 = vrot.slane %v733, %v2119
        %v2121 = vmul.f32 %v1148, %v2120
        %v2122 = vmul.f32 %v1149, %v2120
        %v2123 = vmul.f32 %v1150, %v2120
        %v2124 = vmul.f32 %v1151, %v2120
        %v2125 = vmul.f32 %v1152, %v2120
        %v2126 = vmul.f32 %v1153, %v2120
        %v2127 = vmul.f32 %v1154, %v2120
        %v2128 = vmul.f32 %v1155, %v2120
        %v2129 = vmul.f32 %v1156, %v2120
        %v2130 = vmul.f32 %v1157, %v2120
        %v2131 = vmul.f32 %v1158, %v2120
        %v2132 = vmul.f32 %v1159, %v2120
        %v2133 = vmul.f32 %v1160, %v2120
        %v2134 = vmul.f32 %v1161, %v2120
        %v2135 = vmul.f32 %v1162, %v2120
        %v2136 = vmul.f32 %v1163, %v2120
        %v2137 = vmul.f32 %v1164, %v2120
        %v2138 = vmul.f32 %v1165, %v2120
        %v2139 = vmul.f32 %v1166, %v2120
        %v2140 = vmul.f32 %v1167, %v2120
        %v2141 = vmul.f32 %v1168, %v2120
        %v2142 = vmul.f32 %v1169, %v2120
        %v2143 = vmul.f32 %v1170, %v2120
        %v2144 = vmul.f32 %v1171, %v2120
        %v2145 = vmul.f32 %v1172, %v2120
        %v2146 = vmul.f32 %v1173, %v2120
        %v2147 = vmul.f32 %v1174, %v2120
        %v2148 = vmul.f32 %v1175, %v2120
        %v2149 = vmul.f32 %v1176, %v2120
        %v2150 = vmul.f32 %v1177, %v2120
        %v2151 = vmul.f32 %v1178, %v2120
        %v2152 = vmul.f32 %v1179, %v2120
        %v2153 = vadd.f32 %v2085, %v2121
        %v2154 = vadd.f32 %v2086, %v2122
        %v2155 = vadd.f32 %v2087, %v2123
        %v2156 = vadd.f32 %v2088, %v2124
        %v2157 = vadd.f32 %v2089, %v2125
        %v2158 = vadd.f32 %v2090, %v2126
        %v2159 = vadd.f32 %v2091, %v2127
        %v2160 = vadd.f32 %v2092, %v2128
        %v2161 = vadd.f32 %v2093, %v2129
        %v2162 = vadd.f32 %v2094, %v2130
        %v2163 = vadd.f32 %v2095, %v2131
        %v2164 = vadd.f32 %v2096, %v2132
        %v2165 = vadd.f32 %v2097, %v2133
        %v2166 = vadd.f32 %v2098, %v2134
        %v2167 = vadd.f32 %v2099, %v2135
        %v2168 = vadd.f32 %v2100, %v2136
        %v2169 = vadd.f32 %v2101, %v2137
        %v2170 = vadd.f32 %v2102, %v2138
        %v2171 = vadd.f32 %v2103, %v2139
        %v2172 = vadd.f32 %v2104, %v2140
        %v2173 = vadd.f32 %v2105, %v2141
        %v2174 = vadd.f32 %v2106, %v2142
        %v2175 = vadd.f32 %v2107, %v2143
        %v2176 = vadd.f32 %v2108, %v2144
        %v2177 = vadd.f32 %v2109, %v2145
        %v2178 = vadd.f32 %v2110, %v2146
        %v2179 = vadd.f32 %v2111, %v2147
        %v2180 = vadd.f32 %v2112, %v2148
        %v2181 = vadd.f32 %v2113, %v2149
        %v2182 = vadd.f32 %v2114, %v2150
        %v2183 = vadd.f32 %v2115, %v2151
        %v2184 = vadd.f32 %v2116, %v2152
        %v2185 = vlaneseq
        %v2186 = vshrl.u32 %v2185, 7
        %v2187 = vsub.s32 5, %v2186
        %v2188 = vrot.slane %v733, %v2187
        %v2189 = vmul.f32 %v737, %v2188
        %v2190 = vmul.f32 %v738, %v2188
        %v2191 = vmul.f32 %v739, %v2188
        %v2192 = vmul.f32 %v740, %v2188
        %v2193 = vmul.f32 %v741, %v2188
        %v2194 = vmul.f32 %v742, %v2188
        %v2195 = vmul.f32 %v743, %v2188
        %v2196 = vmul.f32 %v744, %v2188
        %v2197 = vmul.f32 %v745, %v2188
        %v2198 = vmul.f32 %v746, %v2188
        %v2199 = vmul.f32 %v747, %v2188
        %v2200 = vmul.f32 %v748, %v2188
        %v2201 = vmul.f32 %v749, %v2188
        %v2202 = vmul.f32 %v750, %v2188
        %v2203 = vmul.f32 %v751, %v2188
        %v2204 = vmul.f32 %v752, %v2188
        %v2205 = vmul.f32 %v753, %v2188
        %v2206 = vmul.f32 %v754, %v2188
        %v2207 = vmul.f32 %v755, %v2188
        %v2208 = vmul.f32 %v756, %v2188
        %v2209 = vmul.f32 %v757, %v2188
        %v2210 = vmul.f32 %v758, %v2188
        %v2211 = vmul.f32 %v759, %v2188
        %v2212 = vmul.f32 %v760, %v2188
        %v2213 = vmul.f32 %v761, %v2188
        %v2214 = vmul.f32 %v762, %v2188
        %v2215 = vmul.f32 %v763, %v2188
        %v2216 = vmul.f32 %v764, %v2188
        %v2217 = vmul.f32 %v765, %v2188
        %v2218 = vmul.f32 %v766, %v2188
        %v2219 = vmul.f32 %v767, %v2188
        %v2220 = vmul.f32 %v768, %v2188
        %v2221 = vadd.f32 %v2153, %v2189
        %v2222 = vadd.f32 %v2154, %v2190
        %v2223 = vadd.f32 %v2155, %v2191
        %v2224 = vadd.f32 %v2156, %v2192
        %v2225 = vadd.f32 %v2157, %v2193
        %v2226 = vadd.f32 %v2158, %v2194
        %v2227 = vadd.f32 %v2159, %v2195
        %v2228 = vadd.f32 %v2160, %v2196
        %v2229 = vadd.f32 %v2161, %v2197
        %v2230 = vadd.f32 %v2162, %v2198
        %v2231 = vadd.f32 %v2163, %v2199
        %v2232 = vadd.f32 %v2164, %v2200
        %v2233 = vadd.f32 %v2165, %v2201
        %v2234 = vadd.f32 %v2166, %v2202
        %v2235 = vadd.f32 %v2167, %v2203
        %v2236 = vadd.f32 %v2168, %v2204
        %v2237 = vadd.f32 %v2169, %v2205
        %v2238 = vadd.f32 %v2170, %v2206
        %v2239 = vadd.f32 %v2171, %v2207
        %v2240 = vadd.f32 %v2172, %v2208
        %v2241 = vadd.f32 %v2173, %v2209
        %v2242 = vadd.f32 %v2174, %v2210
        %v2243 = vadd.f32 %v2175, %v2211
        %v2244 = vadd.f32 %v2176, %v2212
        %v2245 = vadd.f32 %v2177, %v2213
        %v2246 = vadd.f32 %v2178, %v2214
        %v2247 = vadd.f32 %v2179, %v2215
        %v2248 = vadd.f32 %v2180, %v2216
        %v2249 = vadd.f32 %v2181, %v2217
        %v2250 = vadd.f32 %v2182, %v2218
        %v2251 = vadd.f32 %v2183, %v2219
        %v2252 = vadd.f32 %v2184, %v2220
        %v2253 = vlaneseq
        %v2254 = vshrl.u32 %v2253, 7
        %v2255 = vsub.s32 6, %v2254
        %v2256 = vrot.slane %v733, %v2255
        %v2257 = vmul.f32 %v1316, %v2256
        %v2258 = vmul.f32 %v1317, %v2256
        %v2259 = vmul.f32 %v1318, %v2256
        %v2260 = vmul.f32 %v1319, %v2256
        %v2261 = vmul.f32 %v1320, %v2256
        %v2262 = vmul.f32 %v1321, %v2256
        %v2263 = vmul.f32 %v1322, %v2256
        %v2264 = vmul.f32 %v1323, %v2256
        %v2265 = vmul.f32 %v1324, %v2256
        %v2266 = vmul.f32 %v1325, %v2256
        %v2267 = vmul.f32 %v1326, %v2256
        %v2268 = vmul.f32 %v1327, %v2256
        %v2269 = vmul.f32 %v1328, %v2256
        %v2270 = vmul.f32 %v1329, %v2256
        %v2271 = vmul.f32 %v1330, %v2256
        %v2272 = vmul.f32 %v1331, %v2256
        %v2273 = vmul.f32 %v1332, %v2256
        %v2274 = vmul.f32 %v1333, %v2256
        %v2275 = vmul.f32 %v1334, %v2256
        %v2276 = vmul.f32 %v1335, %v2256
        %v2277 = vmul.f32 %v1336, %v2256
        %v2278 = vmul.f32 %v1337, %v2256
        %v2279 = vmul.f32 %v1338, %v2256
        %v2280 = vmul.f32 %v1339, %v2256
        %v2281 = vmul.f32 %v1340, %v2256
        %v2282 = vmul.f32 %v1341, %v2256
        %v2283 = vmul.f32 %v1342, %v2256
        %v2284 = vmul.f32 %v1343, %v2256
        %v2285 = vmul.f32 %v1344, %v2256
        %v2286 = vmul.f32 %v1345, %v2256
        %v2287 = vmul.f32 %v1346, %v2256
        %v2288 = vmul.f32 %v1347, %v2256
        %v2289 = vadd.f32 %v2221, %v2257
        %v2290 = vadd.f32 %v2222, %v2258
        %v2291 = vadd.f32 %v2223, %v2259
        %v2292 = vadd.f32 %v2224, %v2260
        %v2293 = vadd.f32 %v2225, %v2261
        %v2294 = vadd.f32 %v2226, %v2262
        %v2295 = vadd.f32 %v2227, %v2263
        %v2296 = vadd.f32 %v2228, %v2264
        %v2297 = vadd.f32 %v2229, %v2265
        %v2298 = vadd.f32 %v2230, %v2266
        %v2299 = vadd.f32 %v2231, %v2267
        %v2300 = vadd.f32 %v2232, %v2268
        %v2301 = vadd.f32 %v2233, %v2269
        %v2302 = vadd.f32 %v2234, %v2270
        %v2303 = vadd.f32 %v2235, %v2271
        %v2304 = vadd.f32 %v2236, %v2272
        %v2305 = vadd.f32 %v2237, %v2273
        %v2306 = vadd.f32 %v2238, %v2274
        %v2307 = vadd.f32 %v2239, %v2275
        %v2308 = vadd.f32 %v2240, %v2276
        %v2309 = vadd.f32 %v2241, %v2277
        %v2310 = vadd.f32 %v2242, %v2278
        %v2311 = vadd.f32 %v2243, %v2279
        %v2312 = vadd.f32 %v2244, %v2280
        %v2313 = vadd.f32 %v2245, %v2281
        %v2314 = vadd.f32 %v2246, %v2282
        %v2315 = vadd.f32 %v2247, %v2283
        %v2316 = vadd.f32 %v2248, %v2284
        %v2317 = vadd.f32 %v2249, %v2285
        %v2318 = vadd.f32 %v2250, %v2286
        %v2319 = vadd.f32 %v2251, %v2287
        %v2320 = vadd.f32 %v2252, %v2288
        %v2321 = vld [vmem:[%s633 + $0x7] sm:$0xff]
        %v2322 = vld [vmem:[%s633 + $0xf] sm:$0xff]
        %v2323 = vld [vmem:[%s633 + $0x27] sm:$0xff]
        %v2324 = vld [vmem:[%s633 + $0x2f] sm:$0xff]
        %v2325 = vld [vmem:[%s633 + $0x47] sm:$0xff]
        %v2326 = vld [vmem:[%s633 + $0x4f] sm:$0xff]
        %v2327 = vld [vmem:[%s633 + $0x67] sm:$0xff]
        %v2328 = vld [vmem:[%s633 + $0x6f] sm:$0xff]
        %v2329 = vld [vmem:[%s633 + $0x87] sm:$0xff]
        %v2330 = vld [vmem:[%s633 + $0x8f] sm:$0xff]
        %v2331 = vld [vmem:[%s633 + $0xa7] sm:$0xff]
        %v2332 = vld [vmem:[%s633 + $0xaf] sm:$0xff]
        %v2333 = vld [vmem:[%s633 + $0xc7] sm:$0xff]
        %v2334 = vld [vmem:[%s633 + $0xcf] sm:$0xff]
        %v2335 = vld [vmem:[%s633 + $0xe7] sm:$0xff]
        %v2336 = vld [vmem:[%s633 + $0xef] sm:$0xff]
        %v2337 = vld [vmem:[%s633 + $0x107] sm:$0xff]
        %v2338 = vld [vmem:[%s633 + $0x10f] sm:$0xff]
        %v2339 = vld [vmem:[%s633 + $0x127] sm:$0xff]
        %v2340 = vld [vmem:[%s633 + $0x12f] sm:$0xff]
        %v2341 = vld [vmem:[%s633 + $0x147] sm:$0xff]
        %v2342 = vld [vmem:[%s633 + $0x14f] sm:$0xff]
        %v2343 = vld [vmem:[%s633 + $0x167] sm:$0xff]
        %v2344 = vld [vmem:[%s633 + $0x16f] sm:$0xff]
        %v2345 = vld [vmem:[%s633 + $0x187] sm:$0xff]
        %v2346 = vld [vmem:[%s633 + $0x18f] sm:$0xff]
        %v2347 = vld [vmem:[%s633 + $0x1a7] sm:$0xff]
        %v2348 = vld [vmem:[%s633 + $0x1af] sm:$0xff]
        %v2349 = vld [vmem:[%s633 + $0x1c7] sm:$0xff]
        %v2350 = vld [vmem:[%s633 + $0x1cf] sm:$0xff]
        %v2351 = vld [vmem:[%s633 + $0x1e7] sm:$0xff]
        %v2352 = vld [vmem:[%s633 + $0x1ef] sm:$0xff]
        %v2353 = vlaneseq
        %v2354 = vshrl.u32 %v2353, 7
        %v2355 = vsub.s32 7, %v2354
        %v2356 = vrot.slane %v733, %v2355
        %v2357 = vmul.f32 %v2321, %v2356
        %v2358 = vmul.f32 %v2322, %v2356
        %v2359 = vmul.f32 %v2323, %v2356
        %v2360 = vmul.f32 %v2324, %v2356
        %v2361 = vmul.f32 %v2325, %v2356
        %v2362 = vmul.f32 %v2326, %v2356
        %v2363 = vmul.f32 %v2327, %v2356
        %v2364 = vmul.f32 %v2328, %v2356
        %v2365 = vmul.f32 %v2329, %v2356
        %v2366 = vmul.f32 %v2330, %v2356
        %v2367 = vmul.f32 %v2331, %v2356
        %v2368 = vmul.f32 %v2332, %v2356
        %v2369 = vmul.f32 %v2333, %v2356
        %v2370 = vmul.f32 %v2334, %v2356
        %v2371 = vmul.f32 %v2335, %v2356
        %v2372 = vmul.f32 %v2336, %v2356
        %v2373 = vmul.f32 %v2337, %v2356
        %v2374 = vmul.f32 %v2338, %v2356
        %v2375 = vmul.f32 %v2339, %v2356
        %v2376 = vmul.f32 %v2340, %v2356
        %v2377 = vmul.f32 %v2341, %v2356
        %v2378 = vmul.f32 %v2342, %v2356
        %v2379 = vmul.f32 %v2343, %v2356
        %v2380 = vmul.f32 %v2344, %v2356
        %v2381 = vmul.f32 %v2345, %v2356
        %v2382 = vmul.f32 %v2346, %v2356
        %v2383 = vmul.f32 %v2347, %v2356
        %v2384 = vmul.f32 %v2348, %v2356
        %v2385 = vmul.f32 %v2349, %v2356
        %v2386 = vmul.f32 %v2350, %v2356
        %v2387 = vmul.f32 %v2351, %v2356
        %v2388 = vmul.f32 %v2352, %v2356
        %v2389 = vadd.f32 %v2289, %v2357
        %v2390 = vadd.f32 %v2290, %v2358
        %v2391 = vadd.f32 %v2291, %v2359
        %v2392 = vadd.f32 %v2292, %v2360
        %v2393 = vadd.f32 %v2293, %v2361
        %v2394 = vadd.f32 %v2294, %v2362
        %v2395 = vadd.f32 %v2295, %v2363
        %v2396 = vadd.f32 %v2296, %v2364
        %v2397 = vadd.f32 %v2297, %v2365
        %v2398 = vadd.f32 %v2298, %v2366
        %v2399 = vadd.f32 %v2299, %v2367
        %v2400 = vadd.f32 %v2300, %v2368
        %v2401 = vadd.f32 %v2301, %v2369
        %v2402 = vadd.f32 %v2302, %v2370
        %v2403 = vadd.f32 %v2303, %v2371
        %v2404 = vadd.f32 %v2304, %v2372
        %v2405 = vadd.f32 %v2305, %v2373
        %v2406 = vadd.f32 %v2306, %v2374
        %v2407 = vadd.f32 %v2307, %v2375
        %v2408 = vadd.f32 %v2308, %v2376
        %v2409 = vadd.f32 %v2309, %v2377
        %v2410 = vadd.f32 %v2310, %v2378
        %v2411 = vadd.f32 %v2311, %v2379
        %v2412 = vadd.f32 %v2312, %v2380
        %v2413 = vadd.f32 %v2313, %v2381
        %v2414 = vadd.f32 %v2314, %v2382
        %v2415 = vadd.f32 %v2315, %v2383
        %v2416 = vadd.f32 %v2316, %v2384
        %v2417 = vadd.f32 %v2317, %v2385
        %v2418 = vadd.f32 %v2318, %v2386
        %v2419 = vadd.f32 %v2319, %v2387
        %v2420 = vadd.f32 %v2320, %v2388
        %v2421 = vld [vmem:[%s633 + $0x10] sm:$0xff]
        %v2422 = vld [vmem:[%s633 + $0x30] sm:$0xff]
        %v2423 = vld [vmem:[%s633 + $0x50] sm:$0xff]
        %v2424 = vld [vmem:[%s633 + $0x70] sm:$0xff]
        %v2425 = vld [vmem:[%s633 + $0x90] sm:$0xff]
        %v2426 = vld [vmem:[%s633 + $0xb0] sm:$0xff]
        %v2427 = vld [vmem:[%s633 + $0xd0] sm:$0xff]
        %v2428 = vld [vmem:[%s633 + $0xf0] sm:$0xff]
        %v2429 = vld [vmem:[%s633 + $0x110] sm:$0xff]
        %v2430 = vld [vmem:[%s633 + $0x130] sm:$0xff]
        %v2431 = vld [vmem:[%s633 + $0x150] sm:$0xff]
        %v2432 = vld [vmem:[%s633 + $0x170] sm:$0xff]
        %v2433 = vld [vmem:[%s633 + $0x190] sm:$0xff]
        %v2434 = vld [vmem:[%s633 + $0x1b0] sm:$0xff]
        %v2435 = vld [vmem:[%s633 + $0x1d0] sm:$0xff]
        %v2436 = vld [vmem:[%s633 + $0x1f0] sm:$0xff]
        %v2437 = vlaneseq
        %v2438 = vshrl.u32 %v2437, 7
        %v2439 = vsub.s32 0, %v2438
        %v2440 = vrot.slane %v734, %v2439
        %v2441 = vmul.f32 %v1718, %v2440
        %v2442 = vmul.f32 %v2421, %v2440
        %v2443 = vmul.f32 %v1720, %v2440
        %v2444 = vmul.f32 %v2422, %v2440
        %v2445 = vmul.f32 %v1722, %v2440
        %v2446 = vmul.f32 %v2423, %v2440
        %v2447 = vmul.f32 %v1724, %v2440
        %v2448 = vmul.f32 %v2424, %v2440
        %v2449 = vmul.f32 %v1726, %v2440
        %v2450 = vmul.f32 %v2425, %v2440
        %v2451 = vmul.f32 %v1728, %v2440
        %v2452 = vmul.f32 %v2426, %v2440
        %v2453 = vmul.f32 %v1730, %v2440
        %v2454 = vmul.f32 %v2427, %v2440
        %v2455 = vmul.f32 %v1732, %v2440
        %v2456 = vmul.f32 %v2428, %v2440
        %v2457 = vmul.f32 %v1734, %v2440
        %v2458 = vmul.f32 %v2429, %v2440
        %v2459 = vmul.f32 %v1736, %v2440
        %v2460 = vmul.f32 %v2430, %v2440
        %v2461 = vmul.f32 %v1738, %v2440
        %v2462 = vmul.f32 %v2431, %v2440
        %v2463 = vmul.f32 %v1740, %v2440
        %v2464 = vmul.f32 %v2432, %v2440
        %v2465 = vmul.f32 %v1742, %v2440
        %v2466 = vmul.f32 %v2433, %v2440
        %v2467 = vmul.f32 %v1744, %v2440
        %v2468 = vmul.f32 %v2434, %v2440
        %v2469 = vmul.f32 %v1746, %v2440
        %v2470 = vmul.f32 %v2435, %v2440
        %v2471 = vmul.f32 %v1748, %v2440
        %v2472 = vmul.f32 %v2436, %v2440
        %v2473 = vadd.f32 %v2389, %v2441
        %v2474 = vadd.f32 %v2390, %v2442
        %v2475 = vadd.f32 %v2391, %v2443
        %v2476 = vadd.f32 %v2392, %v2444
        %v2477 = vadd.f32 %v2393, %v2445
        %v2478 = vadd.f32 %v2394, %v2446
        %v2479 = vadd.f32 %v2395, %v2447
        %v2480 = vadd.f32 %v2396, %v2448
        %v2481 = vadd.f32 %v2397, %v2449
        %v2482 = vadd.f32 %v2398, %v2450
        %v2483 = vadd.f32 %v2399, %v2451
        %v2484 = vadd.f32 %v2400, %v2452
        %v2485 = vadd.f32 %v2401, %v2453
        %v2486 = vadd.f32 %v2402, %v2454
        %v2487 = vadd.f32 %v2403, %v2455
        %v2488 = vadd.f32 %v2404, %v2456
        %v2489 = vadd.f32 %v2405, %v2457
        %v2490 = vadd.f32 %v2406, %v2458
        %v2491 = vadd.f32 %v2407, %v2459
        %v2492 = vadd.f32 %v2408, %v2460
        %v2493 = vadd.f32 %v2409, %v2461
        %v2494 = vadd.f32 %v2410, %v2462
        %v2495 = vadd.f32 %v2411, %v2463
        %v2496 = vadd.f32 %v2412, %v2464
        %v2497 = vadd.f32 %v2413, %v2465
        %v2498 = vadd.f32 %v2414, %v2466
        %v2499 = vadd.f32 %v2415, %v2467
        %v2500 = vadd.f32 %v2416, %v2468
        %v2501 = vadd.f32 %v2417, %v2469
        %v2502 = vadd.f32 %v2418, %v2470
        %v2503 = vadd.f32 %v2419, %v2471
        %v2504 = vadd.f32 %v2420, %v2472
        %v2505 = vld [vmem:[%s633 + $0x11] sm:$0xff]
        %v2506 = vld [vmem:[%s633 + $0x31] sm:$0xff]
        %v2507 = vld [vmem:[%s633 + $0x51] sm:$0xff]
        %v2508 = vld [vmem:[%s633 + $0x71] sm:$0xff]
        %v2509 = vld [vmem:[%s633 + $0x91] sm:$0xff]
        %v2510 = vld [vmem:[%s633 + $0xb1] sm:$0xff]
        %v2511 = vld [vmem:[%s633 + $0xd1] sm:$0xff]
        %v2512 = vld [vmem:[%s633 + $0xf1] sm:$0xff]
        %v2513 = vld [vmem:[%s633 + $0x111] sm:$0xff]
        %v2514 = vld [vmem:[%s633 + $0x131] sm:$0xff]
        %v2515 = vld [vmem:[%s633 + $0x151] sm:$0xff]
        %v2516 = vld [vmem:[%s633 + $0x171] sm:$0xff]
        %v2517 = vld [vmem:[%s633 + $0x191] sm:$0xff]
        %v2518 = vld [vmem:[%s633 + $0x1b1] sm:$0xff]
        %v2519 = vld [vmem:[%s633 + $0x1d1] sm:$0xff]
        %v2520 = vld [vmem:[%s633 + $0x1f1] sm:$0xff]
        %v2521 = vlaneseq
        %v2522 = vshrl.u32 %v2521, 7
        %v2523 = vsub.s32 1, %v2522
        %v2524 = vrot.slane %v734, %v2523
        %v2525 = vmul.f32 %v1818, %v2524
        %v2526 = vmul.f32 %v2505, %v2524
        %v2527 = vmul.f32 %v1820, %v2524
        %v2528 = vmul.f32 %v2506, %v2524
        %v2529 = vmul.f32 %v1822, %v2524
        %v2530 = vmul.f32 %v2507, %v2524
        %v2531 = vmul.f32 %v1824, %v2524
        %v2532 = vmul.f32 %v2508, %v2524
        %v2533 = vmul.f32 %v1826, %v2524
        %v2534 = vmul.f32 %v2509, %v2524
        %v2535 = vmul.f32 %v1828, %v2524
        %v2536 = vmul.f32 %v2510, %v2524
        %v2537 = vmul.f32 %v1830, %v2524
        %v2538 = vmul.f32 %v2511, %v2524
        %v2539 = vmul.f32 %v1832, %v2524
        %v2540 = vmul.f32 %v2512, %v2524
        %v2541 = vmul.f32 %v1834, %v2524
        %v2542 = vmul.f32 %v2513, %v2524
        %v2543 = vmul.f32 %v1836, %v2524
        %v2544 = vmul.f32 %v2514, %v2524
        %v2545 = vmul.f32 %v1838, %v2524
        %v2546 = vmul.f32 %v2515, %v2524
        %v2547 = vmul.f32 %v1840, %v2524
        %v2548 = vmul.f32 %v2516, %v2524
        %v2549 = vmul.f32 %v1842, %v2524
        %v2550 = vmul.f32 %v2517, %v2524
        %v2551 = vmul.f32 %v1844, %v2524
        %v2552 = vmul.f32 %v2518, %v2524
        %v2553 = vmul.f32 %v1846, %v2524
        %v2554 = vmul.f32 %v2519, %v2524
        %v2555 = vmul.f32 %v1848, %v2524
        %v2556 = vmul.f32 %v2520, %v2524
        %v2557 = vadd.f32 %v2473, %v2525
        %v2558 = vadd.f32 %v2474, %v2526
        %v2559 = vadd.f32 %v2475, %v2527
        %v2560 = vadd.f32 %v2476, %v2528
        %v2561 = vadd.f32 %v2477, %v2529
        %v2562 = vadd.f32 %v2478, %v2530
        %v2563 = vadd.f32 %v2479, %v2531
        %v2564 = vadd.f32 %v2480, %v2532
        %v2565 = vadd.f32 %v2481, %v2533
        %v2566 = vadd.f32 %v2482, %v2534
        %v2567 = vadd.f32 %v2483, %v2535
        %v2568 = vadd.f32 %v2484, %v2536
        %v2569 = vadd.f32 %v2485, %v2537
        %v2570 = vadd.f32 %v2486, %v2538
        %v2571 = vadd.f32 %v2487, %v2539
        %v2572 = vadd.f32 %v2488, %v2540
        %v2573 = vadd.f32 %v2489, %v2541
        %v2574 = vadd.f32 %v2490, %v2542
        %v2575 = vadd.f32 %v2491, %v2543
        %v2576 = vadd.f32 %v2492, %v2544
        %v2577 = vadd.f32 %v2493, %v2545
        %v2578 = vadd.f32 %v2494, %v2546
        %v2579 = vadd.f32 %v2495, %v2547
        %v2580 = vadd.f32 %v2496, %v2548
        %v2581 = vadd.f32 %v2497, %v2549
        %v2582 = vadd.f32 %v2498, %v2550
        %v2583 = vadd.f32 %v2499, %v2551
        %v2584 = vadd.f32 %v2500, %v2552
        %v2585 = vadd.f32 %v2501, %v2553
        %v2586 = vadd.f32 %v2502, %v2554
        %v2587 = vadd.f32 %v2503, %v2555
        %v2588 = vadd.f32 %v2504, %v2556
        %v2589 = vld [vmem:[%s633 + $0x12] sm:$0xff]
        %v2590 = vld [vmem:[%s633 + $0x32] sm:$0xff]
        %v2591 = vld [vmem:[%s633 + $0x52] sm:$0xff]
        %v2592 = vld [vmem:[%s633 + $0x72] sm:$0xff]
        %v2593 = vld [vmem:[%s633 + $0x92] sm:$0xff]
        %v2594 = vld [vmem:[%s633 + $0xb2] sm:$0xff]
        %v2595 = vld [vmem:[%s633 + $0xd2] sm:$0xff]
        %v2596 = vld [vmem:[%s633 + $0xf2] sm:$0xff]
        %v2597 = vld [vmem:[%s633 + $0x112] sm:$0xff]
        %v2598 = vld [vmem:[%s633 + $0x132] sm:$0xff]
        %v2599 = vld [vmem:[%s633 + $0x152] sm:$0xff]
        %v2600 = vld [vmem:[%s633 + $0x172] sm:$0xff]
        %v2601 = vld [vmem:[%s633 + $0x192] sm:$0xff]
        %v2602 = vld [vmem:[%s633 + $0x1b2] sm:$0xff]
        %v2603 = vld [vmem:[%s633 + $0x1d2] sm:$0xff]
        %v2604 = vld [vmem:[%s633 + $0x1f2] sm:$0xff]
        %v2605 = vlaneseq
        %v2606 = vshrl.u32 %v2605, 7
        %v2607 = vsub.s32 2, %v2606
        %v2608 = vrot.slane %v734, %v2607
        %v2609 = vmul.f32 %v1918, %v2608
        %v2610 = vmul.f32 %v2589, %v2608
        %v2611 = vmul.f32 %v1920, %v2608
        %v2612 = vmul.f32 %v2590, %v2608
        %v2613 = vmul.f32 %v1922, %v2608
        %v2614 = vmul.f32 %v2591, %v2608
        %v2615 = vmul.f32 %v1924, %v2608
        %v2616 = vmul.f32 %v2592, %v2608
        %v2617 = vmul.f32 %v1926, %v2608
        %v2618 = vmul.f32 %v2593, %v2608
        %v2619 = vmul.f32 %v1928, %v2608
        %v2620 = vmul.f32 %v2594, %v2608
        %v2621 = vmul.f32 %v1930, %v2608
        %v2622 = vmul.f32 %v2595, %v2608
        %v2623 = vmul.f32 %v1932, %v2608
        %v2624 = vmul.f32 %v2596, %v2608
        %v2625 = vmul.f32 %v1934, %v2608
        %v2626 = vmul.f32 %v2597, %v2608
        %v2627 = vmul.f32 %v1936, %v2608
        %v2628 = vmul.f32 %v2598, %v2608
        %v2629 = vmul.f32 %v1938, %v2608
        %v2630 = vmul.f32 %v2599, %v2608
        %v2631 = vmul.f32 %v1940, %v2608
        %v2632 = vmul.f32 %v2600, %v2608
        %v2633 = vmul.f32 %v1942, %v2608
        %v2634 = vmul.f32 %v2601, %v2608
        %v2635 = vmul.f32 %v1944, %v2608
        %v2636 = vmul.f32 %v2602, %v2608
        %v2637 = vmul.f32 %v1946, %v2608
        %v2638 = vmul.f32 %v2603, %v2608
        %v2639 = vmul.f32 %v1948, %v2608
        %v2640 = vmul.f32 %v2604, %v2608
        %v2641 = vadd.f32 %v2557, %v2609
        %v2642 = vadd.f32 %v2558, %v2610
        %v2643 = vadd.f32 %v2559, %v2611
        %v2644 = vadd.f32 %v2560, %v2612
        %v2645 = vadd.f32 %v2561, %v2613
        %v2646 = vadd.f32 %v2562, %v2614
        %v2647 = vadd.f32 %v2563, %v2615
        %v2648 = vadd.f32 %v2564, %v2616
        %v2649 = vadd.f32 %v2565, %v2617
        %v2650 = vadd.f32 %v2566, %v2618
        %v2651 = vadd.f32 %v2567, %v2619
        %v2652 = vadd.f32 %v2568, %v2620
        %v2653 = vadd.f32 %v2569, %v2621
        %v2654 = vadd.f32 %v2570, %v2622
        %v2655 = vadd.f32 %v2571, %v2623
        %v2656 = vadd.f32 %v2572, %v2624
        %v2657 = vadd.f32 %v2573, %v2625
        %v2658 = vadd.f32 %v2574, %v2626
        %v2659 = vadd.f32 %v2575, %v2627
        %v2660 = vadd.f32 %v2576, %v2628
        %v2661 = vadd.f32 %v2577, %v2629
        %v2662 = vadd.f32 %v2578, %v2630
        %v2663 = vadd.f32 %v2579, %v2631
        %v2664 = vadd.f32 %v2580, %v2632
        %v2665 = vadd.f32 %v2581, %v2633
        %v2666 = vadd.f32 %v2582, %v2634
        %v2667 = vadd.f32 %v2583, %v2635
        %v2668 = vadd.f32 %v2584, %v2636
        %v2669 = vadd.f32 %v2585, %v2637
        %v2670 = vadd.f32 %v2586, %v2638
        %v2671 = vadd.f32 %v2587, %v2639
        %v2672 = vadd.f32 %v2588, %v2640
        %v2673 = vld [vmem:[#allocation2 + $0x5] sm:$0xff]
        %v2674 = vld [vmem:[#allocation2 + $0xd] sm:$0xff]
        %v2675 = vld [vmem:[#allocation2 + $0x25] sm:$0xff]
        %v2676 = vld [vmem:[#allocation2 + $0x2d] sm:$0xff]
        %v2677 = vld [vmem:[#allocation2 + $0x45] sm:$0xff]
        %v2678 = vld [vmem:[#allocation2 + $0x4d] sm:$0xff]
        %v2679 = vld [vmem:[#allocation2 + $0x65] sm:$0xff]
        %v2680 = vld [vmem:[#allocation2 + $0x6d] sm:$0xff]
        %v2681 = vld [vmem:[#allocation2 + $0x85] sm:$0xff]
        %v2682 = vld [vmem:[#allocation2 + $0x8d] sm:$0xff]
        %v2683 = vld [vmem:[#allocation2 + $0xa5] sm:$0xff]
        %v2684 = vld [vmem:[#allocation2 + $0xad] sm:$0xff]
        %v2685 = vld [vmem:[#allocation2 + $0xc5] sm:$0xff]
        %v2686 = vld [vmem:[#allocation2 + $0xcd] sm:$0xff]
        %v2687 = vld [vmem:[#allocation2 + $0xe5] sm:$0xff]
        %v2688 = vld [vmem:[#allocation2 + $0xed] sm:$0xff]
        %v2689 = vld [vmem:[#allocation2 + $0x105] sm:$0xff]
        %v2690 = vld [vmem:[#allocation2 + $0x10d] sm:$0xff]
        %v2691 = vld [vmem:[#allocation2 + $0x125] sm:$0xff]
        %v2692 = vld [vmem:[#allocation2 + $0x12d] sm:$0xff]
        %v2693 = vld [vmem:[#allocation2 + $0x145] sm:$0xff]
        %v2694 = vld [vmem:[#allocation2 + $0x14d] sm:$0xff]
        %v2695 = vld [vmem:[#allocation2 + $0x165] sm:$0xff]
        %v2696 = vld [vmem:[#allocation2 + $0x16d] sm:$0xff]
        %v2697 = vld [vmem:[#allocation2 + $0x185] sm:$0xff]
        %v2698 = vld [vmem:[#allocation2 + $0x18d] sm:$0xff]
        %v2699 = vld [vmem:[#allocation2 + $0x1a5] sm:$0xff]
        %v2700 = vld [vmem:[#allocation2 + $0x1ad] sm:$0xff]
        %v2701 = vld [vmem:[#allocation2 + $0x1c5] sm:$0xff]
        %v2702 = vld [vmem:[#allocation2 + $0x1cd] sm:$0xff]
        %v2703 = vld [vmem:[#allocation2 + $0x1e5] sm:$0xff]
        %v2704 = vld [vmem:[#allocation2 + $0x1ed] sm:$0xff]
        %v2705 = vlaneseq
        %v2706 = vshrl.u32 %v2705, 7
        %v2707 = vsub.s32 0, %v2706
        %v2708 = vrot.slane %v735, %v2707
        %v2709 = vmul.f32 %v2673, %v2708
        %v2710 = vmul.f32 %v2674, %v2708
        %v2711 = vmul.f32 %v2675, %v2708
        %v2712 = vmul.f32 %v2676, %v2708
        %v2713 = vmul.f32 %v2677, %v2708
        %v2714 = vmul.f32 %v2678, %v2708
        %v2715 = vmul.f32 %v2679, %v2708
        %v2716 = vmul.f32 %v2680, %v2708
        %v2717 = vmul.f32 %v2681, %v2708
        %v2718 = vmul.f32 %v2682, %v2708
        %v2719 = vmul.f32 %v2683, %v2708
        %v2720 = vmul.f32 %v2684, %v2708
        %v2721 = vmul.f32 %v2685, %v2708
        %v2722 = vmul.f32 %v2686, %v2708
        %v2723 = vmul.f32 %v2687, %v2708
        %v2724 = vmul.f32 %v2688, %v2708
        %v2725 = vmul.f32 %v2689, %v2708
        %v2726 = vmul.f32 %v2690, %v2708
        %v2727 = vmul.f32 %v2691, %v2708
        %v2728 = vmul.f32 %v2692, %v2708
        %v2729 = vmul.f32 %v2693, %v2708
        %v2730 = vmul.f32 %v2694, %v2708
        %v2731 = vmul.f32 %v2695, %v2708
        %v2732 = vmul.f32 %v2696, %v2708
        %v2733 = vmul.f32 %v2697, %v2708
        %v2734 = vmul.f32 %v2698, %v2708
        %v2735 = vmul.f32 %v2699, %v2708
        %v2736 = vmul.f32 %v2700, %v2708
        %v2737 = vmul.f32 %v2701, %v2708
        %v2738 = vmul.f32 %v2702, %v2708
        %v2739 = vmul.f32 %v2703, %v2708
        %v2740 = vmul.f32 %v2704, %v2708
        %v2741 = vadd.f32 %v2641, %v2709
        %v2742 = vadd.f32 %v2642, %v2710
        %v2743 = vadd.f32 %v2643, %v2711
        %v2744 = vadd.f32 %v2644, %v2712
        %v2745 = vadd.f32 %v2645, %v2713
        %v2746 = vadd.f32 %v2646, %v2714
        %v2747 = vadd.f32 %v2647, %v2715
        %v2748 = vadd.f32 %v2648, %v2716
        %v2749 = vadd.f32 %v2649, %v2717
        %v2750 = vadd.f32 %v2650, %v2718
        %v2751 = vadd.f32 %v2651, %v2719
        %v2752 = vadd.f32 %v2652, %v2720
        %v2753 = vadd.f32 %v2653, %v2721
        %v2754 = vadd.f32 %v2654, %v2722
        %v2755 = vadd.f32 %v2655, %v2723
        %v2756 = vadd.f32 %v2656, %v2724
        %v2757 = vadd.f32 %v2657, %v2725
        %v2758 = vadd.f32 %v2658, %v2726
        %v2759 = vadd.f32 %v2659, %v2727
        %v2760 = vadd.f32 %v2660, %v2728
        %v2761 = vadd.f32 %v2661, %v2729
        %v2762 = vadd.f32 %v2662, %v2730
        %v2763 = vadd.f32 %v2663, %v2731
        %v2764 = vadd.f32 %v2664, %v2732
        %v2765 = vadd.f32 %v2665, %v2733
        %v2766 = vadd.f32 %v2666, %v2734
        %v2767 = vadd.f32 %v2667, %v2735
        %v2768 = vadd.f32 %v2668, %v2736
        %v2769 = vadd.f32 %v2669, %v2737
        %v2770 = vadd.f32 %v2670, %v2738
        %v2771 = vadd.f32 %v2671, %v2739
        %v2772 = vadd.f32 %v2672, %v2740
        %s2773 = scalar_lea.vmem [#allocation2], 32
        %v2774 = vld [vmem:[%s2773 + $0x5] sm:$0xff]
        %v2775 = vld [vmem:[%s2773 + $0xd] sm:$0xff]
        %v2776 = vld [vmem:[%s2773 + $0x25] sm:$0xff]
        %v2777 = vld [vmem:[%s2773 + $0x2d] sm:$0xff]
        %v2778 = vld [vmem:[%s2773 + $0x45] sm:$0xff]
        %v2779 = vld [vmem:[%s2773 + $0x4d] sm:$0xff]
        %v2780 = vld [vmem:[%s2773 + $0x65] sm:$0xff]
        %v2781 = vld [vmem:[%s2773 + $0x6d] sm:$0xff]
        %v2782 = vld [vmem:[%s2773 + $0x85] sm:$0xff]
        %v2783 = vld [vmem:[%s2773 + $0x8d] sm:$0xff]
        %v2784 = vld [vmem:[%s2773 + $0xa5] sm:$0xff]
        %v2785 = vld [vmem:[%s2773 + $0xad] sm:$0xff]
        %v2786 = vld [vmem:[%s2773 + $0xc5] sm:$0xff]
        %v2787 = vld [vmem:[%s2773 + $0xcd] sm:$0xff]
        %v2788 = vld [vmem:[%s2773 + $0xe5] sm:$0xff]
        %v2789 = vld [vmem:[%s2773 + $0xed] sm:$0xff]
        %v2790 = vld [vmem:[%s2773 + $0x105] sm:$0xff]
        %v2791 = vld [vmem:[%s2773 + $0x10d] sm:$0xff]
        %v2792 = vld [vmem:[%s2773 + $0x125] sm:$0xff]
        %v2793 = vld [vmem:[%s2773 + $0x12d] sm:$0xff]
        %v2794 = vld [vmem:[%s2773 + $0x145] sm:$0xff]
        %v2795 = vld [vmem:[%s2773 + $0x14d] sm:$0xff]
        %v2796 = vld [vmem:[%s2773 + $0x165] sm:$0xff]
        %v2797 = vld [vmem:[%s2773 + $0x16d] sm:$0xff]
        %v2798 = vld [vmem:[%s2773 + $0x185] sm:$0xff]
        %v2799 = vld [vmem:[%s2773 + $0x18d] sm:$0xff]
        %v2800 = vld [vmem:[%s2773 + $0x1a5] sm:$0xff]
        %v2801 = vld [vmem:[%s2773 + $0x1ad] sm:$0xff]
        %v2802 = vld [vmem:[%s2773 + $0x1c5] sm:$0xff]
        %v2803 = vld [vmem:[%s2773 + $0x1cd] sm:$0xff]
        %v2804 = vld [vmem:[%s2773 + $0x1e5] sm:$0xff]
        %v2805 = vld [vmem:[%s2773 + $0x1ed] sm:$0xff]
        %v2806 = vlaneseq
        %v2807 = vshrl.u32 %v2806, 7
        %v2808 = vsub.s32 1, %v2807
        %v2809 = vrot.slane %v735, %v2808
        %v2810 = vmul.f32 %v2774, %v2809
        %v2811 = vmul.f32 %v2775, %v2809
        %v2812 = vmul.f32 %v2776, %v2809
        %v2813 = vmul.f32 %v2777, %v2809
        %v2814 = vmul.f32 %v2778, %v2809
        %v2815 = vmul.f32 %v2779, %v2809
        %v2816 = vmul.f32 %v2780, %v2809
        %v2817 = vmul.f32 %v2781, %v2809
        %v2818 = vmul.f32 %v2782, %v2809
        %v2819 = vmul.f32 %v2783, %v2809
        %v2820 = vmul.f32 %v2784, %v2809
        %v2821 = vmul.f32 %v2785, %v2809
        %v2822 = vmul.f32 %v2786, %v2809
        %v2823 = vmul.f32 %v2787, %v2809
        %v2824 = vmul.f32 %v2788, %v2809
        %v2825 = vmul.f32 %v2789, %v2809
        %v2826 = vmul.f32 %v2790, %v2809
        %v2827 = vmul.f32 %v2791, %v2809
        %v2828 = vmul.f32 %v2792, %v2809
        %v2829 = vmul.f32 %v2793, %v2809
        %v2830 = vmul.f32 %v2794, %v2809
        %v2831 = vmul.f32 %v2795, %v2809
        %v2832 = vmul.f32 %v2796, %v2809
        %v2833 = vmul.f32 %v2797, %v2809
        %v2834 = vmul.f32 %v2798, %v2809
        %v2835 = vmul.f32 %v2799, %v2809
        %v2836 = vmul.f32 %v2800, %v2809
        %v2837 = vmul.f32 %v2801, %v2809
        %v2838 = vmul.f32 %v2802, %v2809
        %v2839 = vmul.f32 %v2803, %v2809
        %v2840 = vmul.f32 %v2804, %v2809
        %v2841 = vmul.f32 %v2805, %v2809
        %v2842 = vadd.f32 %v2741, %v2810
        %v2843 = vadd.f32 %v2742, %v2811
        %v2844 = vadd.f32 %v2743, %v2812
        %v2845 = vadd.f32 %v2744, %v2813
        %v2846 = vadd.f32 %v2745, %v2814
        %v2847 = vadd.f32 %v2746, %v2815
        %v2848 = vadd.f32 %v2747, %v2816
        %v2849 = vadd.f32 %v2748, %v2817
        %v2850 = vadd.f32 %v2749, %v2818
        %v2851 = vadd.f32 %v2750, %v2819
        %v2852 = vadd.f32 %v2751, %v2820
        %v2853 = vadd.f32 %v2752, %v2821
        %v2854 = vadd.f32 %v2753, %v2822
        %v2855 = vadd.f32 %v2754, %v2823
        %v2856 = vadd.f32 %v2755, %v2824
        %v2857 = vadd.f32 %v2756, %v2825
        %v2858 = vadd.f32 %v2757, %v2826
        %v2859 = vadd.f32 %v2758, %v2827
        %v2860 = vadd.f32 %v2759, %v2828
        %v2861 = vadd.f32 %v2760, %v2829
        %v2862 = vadd.f32 %v2761, %v2830
        %v2863 = vadd.f32 %v2762, %v2831
        %v2864 = vadd.f32 %v2763, %v2832
        %v2865 = vadd.f32 %v2764, %v2833
        %v2866 = vadd.f32 %v2765, %v2834
        %v2867 = vadd.f32 %v2766, %v2835
        %v2868 = vadd.f32 %v2767, %v2836
        %v2869 = vadd.f32 %v2768, %v2837
        %v2870 = vadd.f32 %v2769, %v2838
        %v2871 = vadd.f32 %v2770, %v2839
        %v2872 = vadd.f32 %v2771, %v2840
        %v2873 = vadd.f32 %v2772, %v2841
        %s2874 = scalar_lea.vmem [#allocation2], 64
        %v2875 = vld [vmem:[%s2874 + $0x5] sm:$0xff]
        %v2876 = vld [vmem:[%s2874 + $0xd] sm:$0xff]
        %v2877 = vld [vmem:[%s2874 + $0x25] sm:$0xff]
        %v2878 = vld [vmem:[%s2874 + $0x2d] sm:$0xff]
        %v2879 = vld [vmem:[%s2874 + $0x45] sm:$0xff]
        %v2880 = vld [vmem:[%s2874 + $0x4d] sm:$0xff]
        %v2881 = vld [vmem:[%s2874 + $0x65] sm:$0xff]
        %v2882 = vld [vmem:[%s2874 + $0x6d] sm:$0xff]
        %v2883 = vld [vmem:[%s2874 + $0x85] sm:$0xff]
        %v2884 = vld [vmem:[%s2874 + $0x8d] sm:$0xff]
        %v2885 = vld [vmem:[%s2874 + $0xa5] sm:$0xff]
        %v2886 = vld [vmem:[%s2874 + $0xad] sm:$0xff]
        %v2887 = vld [vmem:[%s2874 + $0xc5] sm:$0xff]
        %v2888 = vld [vmem:[%s2874 + $0xcd] sm:$0xff]
        %v2889 = vld [vmem:[%s2874 + $0xe5] sm:$0xff]
        %v2890 = vld [vmem:[%s2874 + $0xed] sm:$0xff]
        %v2891 = vld [vmem:[%s2874 + $0x105] sm:$0xff]
        %v2892 = vld [vmem:[%s2874 + $0x10d] sm:$0xff]
        %v2893 = vld [vmem:[%s2874 + $0x125] sm:$0xff]
        %v2894 = vld [vmem:[%s2874 + $0x12d] sm:$0xff]
        %v2895 = vld [vmem:[%s2874 + $0x145] sm:$0xff]
        %v2896 = vld [vmem:[%s2874 + $0x14d] sm:$0xff]
        %v2897 = vld [vmem:[%s2874 + $0x165] sm:$0xff]
        %v2898 = vld [vmem:[%s2874 + $0x16d] sm:$0xff]
        %v2899 = vld [vmem:[%s2874 + $0x185] sm:$0xff]
        %v2900 = vld [vmem:[%s2874 + $0x18d] sm:$0xff]
        %v2901 = vld [vmem:[%s2874 + $0x1a5] sm:$0xff]
        %v2902 = vld [vmem:[%s2874 + $0x1ad] sm:$0xff]
        %v2903 = vld [vmem:[%s2874 + $0x1c5] sm:$0xff]
        %v2904 = vld [vmem:[%s2874 + $0x1cd] sm:$0xff]
        %v2905 = vld [vmem:[%s2874 + $0x1e5] sm:$0xff]
        %v2906 = vld [vmem:[%s2874 + $0x1ed] sm:$0xff]
        %v2907 = vlaneseq
        %v2908 = vshrl.u32 %v2907, 7
        %v2909 = vsub.s32 2, %v2908
        %v2910 = vrot.slane %v735, %v2909
        %v2911 = vmul.f32 %v2875, %v2910
        %v2912 = vmul.f32 %v2876, %v2910
        %v2913 = vmul.f32 %v2877, %v2910
        %v2914 = vmul.f32 %v2878, %v2910
        %v2915 = vmul.f32 %v2879, %v2910
        %v2916 = vmul.f32 %v2880, %v2910
        %v2917 = vmul.f32 %v2881, %v2910
        %v2918 = vmul.f32 %v2882, %v2910
        %v2919 = vmul.f32 %v2883, %v2910
        %v2920 = vmul.f32 %v2884, %v2910
        %v2921 = vmul.f32 %v2885, %v2910
        %v2922 = vmul.f32 %v2886, %v2910
        %v2923 = vmul.f32 %v2887, %v2910
        %v2924 = vmul.f32 %v2888, %v2910
        %v2925 = vmul.f32 %v2889, %v2910
        %v2926 = vmul.f32 %v2890, %v2910
        %v2927 = vmul.f32 %v2891, %v2910
        %v2928 = vmul.f32 %v2892, %v2910
        %v2929 = vmul.f32 %v2893, %v2910
        %v2930 = vmul.f32 %v2894, %v2910
        %v2931 = vmul.f32 %v2895, %v2910
        %v2932 = vmul.f32 %v2896, %v2910
        %v2933 = vmul.f32 %v2897, %v2910
        %v2934 = vmul.f32 %v2898, %v2910
        %v2935 = vmul.f32 %v2899, %v2910
        %v2936 = vmul.f32 %v2900, %v2910
        %v2937 = vmul.f32 %v2901, %v2910
        %v2938 = vmul.f32 %v2902, %v2910
        %v2939 = vmul.f32 %v2903, %v2910
        %v2940 = vmul.f32 %v2904, %v2910
        %v2941 = vmul.f32 %v2905, %v2910
        %v2942 = vmul.f32 %v2906, %v2910
        %v2943 = vadd.f32 %v2842, %v2911
        %v2944 = vadd.f32 %v2843, %v2912
        %v2945 = vadd.f32 %v2844, %v2913
        %v2946 = vadd.f32 %v2845, %v2914
        %v2947 = vadd.f32 %v2846, %v2915
        %v2948 = vadd.f32 %v2847, %v2916
        %v2949 = vadd.f32 %v2848, %v2917
        %v2950 = vadd.f32 %v2849, %v2918
        %v2951 = vadd.f32 %v2850, %v2919
        %v2952 = vadd.f32 %v2851, %v2920
        %v2953 = vadd.f32 %v2852, %v2921
        %v2954 = vadd.f32 %v2853, %v2922
        %v2955 = vadd.f32 %v2854, %v2923
        %v2956 = vadd.f32 %v2855, %v2924
        %v2957 = vadd.f32 %v2856, %v2925
        %v2958 = vadd.f32 %v2857, %v2926
        %v2959 = vadd.f32 %v2858, %v2927
        %v2960 = vadd.f32 %v2859, %v2928
        %v2961 = vadd.f32 %v2860, %v2929
        %v2962 = vadd.f32 %v2861, %v2930
        %v2963 = vadd.f32 %v2862, %v2931
        %v2964 = vadd.f32 %v2863, %v2932
        %v2965 = vadd.f32 %v2864, %v2933
        %v2966 = vadd.f32 %v2865, %v2934
        %v2967 = vadd.f32 %v2866, %v2935
        %v2968 = vadd.f32 %v2867, %v2936
        %v2969 = vadd.f32 %v2868, %v2937
        %v2970 = vadd.f32 %v2869, %v2938
        %v2971 = vadd.f32 %v2870, %v2939
        %v2972 = vadd.f32 %v2871, %v2940
        %v2973 = vadd.f32 %v2872, %v2941
        %v2974 = vadd.f32 %v2873, %v2942
        %s2975 = scalar_lea.vmem [#allocation2], 96
        %v2976 = vld [vmem:[%s2975 + $0x5] sm:$0xff]
        %v2977 = vld [vmem:[%s2975 + $0xd] sm:$0xff]
        %v2978 = vld [vmem:[%s2975 + $0x25] sm:$0xff]
        %v2979 = vld [vmem:[%s2975 + $0x2d] sm:$0xff]
        %v2980 = vld [vmem:[%s2975 + $0x45] sm:$0xff]
        %v2981 = vld [vmem:[%s2975 + $0x4d] sm:$0xff]
        %v2982 = vld [vmem:[%s2975 + $0x65] sm:$0xff]
        %v2983 = vld [vmem:[%s2975 + $0x6d] sm:$0xff]
        %v2984 = vld [vmem:[%s2975 + $0x85] sm:$0xff]
        %v2985 = vld [vmem:[%s2975 + $0x8d] sm:$0xff]
        %v2986 = vld [vmem:[%s2975 + $0xa5] sm:$0xff]
        %v2987 = vld [vmem:[%s2975 + $0xad] sm:$0xff]
        %v2988 = vld [vmem:[%s2975 + $0xc5] sm:$0xff]
        %v2989 = vld [vmem:[%s2975 + $0xcd] sm:$0xff]
        %v2990 = vld [vmem:[%s2975 + $0xe5] sm:$0xff]
        %v2991 = vld [vmem:[%s2975 + $0xed] sm:$0xff]
        %v2992 = vld [vmem:[%s2975 + $0x105] sm:$0xff]
        %v2993 = vld [vmem:[%s2975 + $0x10d] sm:$0xff]
        %v2994 = vld [vmem:[%s2975 + $0x125] sm:$0xff]
        %v2995 = vld [vmem:[%s2975 + $0x12d] sm:$0xff]
        %v2996 = vld [vmem:[%s2975 + $0x145] sm:$0xff]
        %v2997 = vld [vmem:[%s2975 + $0x14d] sm:$0xff]
        %v2998 = vld [vmem:[%s2975 + $0x165] sm:$0xff]
        %v2999 = vld [vmem:[%s2975 + $0x16d] sm:$0xff]
        %v3000 = vld [vmem:[%s2975 + $0x185] sm:$0xff]
        %v3001 = vld [vmem:[%s2975 + $0x18d] sm:$0xff]
        %v3002 = vld [vmem:[%s2975 + $0x1a5] sm:$0xff]
        %v3003 = vld [vmem:[%s2975 + $0x1ad] sm:$0xff]
        %v3004 = vld [vmem:[%s2975 + $0x1c5] sm:$0xff]
        %v3005 = vld [vmem:[%s2975 + $0x1cd] sm:$0xff]
        %v3006 = vld [vmem:[%s2975 + $0x1e5] sm:$0xff]
        %v3007 = vld [vmem:[%s2975 + $0x1ed] sm:$0xff]
        %v3008 = vlaneseq
        %v3009 = vshrl.u32 %v3008, 7
        %v3010 = vsub.s32 3, %v3009
        %v3011 = vrot.slane %v735, %v3010
        %v3012 = vmul.f32 %v2976, %v3011
        %v3013 = vmul.f32 %v2977, %v3011
        %v3014 = vmul.f32 %v2978, %v3011
        %v3015 = vmul.f32 %v2979, %v3011
        %v3016 = vmul.f32 %v2980, %v3011
        %v3017 = vmul.f32 %v2981, %v3011
        %v3018 = vmul.f32 %v2982, %v3011
        %v3019 = vmul.f32 %v2983, %v3011
        %v3020 = vmul.f32 %v2984, %v3011
        %v3021 = vmul.f32 %v2985, %v3011
        %v3022 = vmul.f32 %v2986, %v3011
        %v3023 = vmul.f32 %v2987, %v3011
        %v3024 = vmul.f32 %v2988, %v3011
        %v3025 = vmul.f32 %v2989, %v3011
        %v3026 = vmul.f32 %v2990, %v3011
        %v3027 = vmul.f32 %v2991, %v3011
        %v3028 = vmul.f32 %v2992, %v3011
        %v3029 = vmul.f32 %v2993, %v3011
        %v3030 = vmul.f32 %v2994, %v3011
        %v3031 = vmul.f32 %v2995, %v3011
        %v3032 = vmul.f32 %v2996, %v3011
        %v3033 = vmul.f32 %v2997, %v3011
        %v3034 = vmul.f32 %v2998, %v3011
        %v3035 = vmul.f32 %v2999, %v3011
        %v3036 = vmul.f32 %v3000, %v3011
        %v3037 = vmul.f32 %v3001, %v3011
        %v3038 = vmul.f32 %v3002, %v3011
        %v3039 = vmul.f32 %v3003, %v3011
        %v3040 = vmul.f32 %v3004, %v3011
        %v3041 = vmul.f32 %v3005, %v3011
        %v3042 = vmul.f32 %v3006, %v3011
        %v3043 = vmul.f32 %v3007, %v3011
        %v3044 = vadd.f32 %v2943, %v3012
        %v3045 = vadd.f32 %v2944, %v3013
        %v3046 = vadd.f32 %v2945, %v3014
        %v3047 = vadd.f32 %v2946, %v3015
        %v3048 = vadd.f32 %v2947, %v3016
        %v3049 = vadd.f32 %v2948, %v3017
        %v3050 = vadd.f32 %v2949, %v3018
        %v3051 = vadd.f32 %v2950, %v3019
        %v3052 = vadd.f32 %v2951, %v3020
        %v3053 = vadd.f32 %v2952, %v3021
        %v3054 = vadd.f32 %v2953, %v3022
        %v3055 = vadd.f32 %v2954, %v3023
        %v3056 = vadd.f32 %v2955, %v3024
        %v3057 = vadd.f32 %v2956, %v3025
        %v3058 = vadd.f32 %v2957, %v3026
        %v3059 = vadd.f32 %v2958, %v3027
        %v3060 = vadd.f32 %v2959, %v3028
        %v3061 = vadd.f32 %v2960, %v3029
        %v3062 = vadd.f32 %v2961, %v3030
        %v3063 = vadd.f32 %v2962, %v3031
        %v3064 = vadd.f32 %v2963, %v3032
        %v3065 = vadd.f32 %v2964, %v3033
        %v3066 = vadd.f32 %v2965, %v3034
        %v3067 = vadd.f32 %v2966, %v3035
        %v3068 = vadd.f32 %v2967, %v3036
        %v3069 = vadd.f32 %v2968, %v3037
        %v3070 = vadd.f32 %v2969, %v3038
        %v3071 = vadd.f32 %v2970, %v3039
        %v3072 = vadd.f32 %v2971, %v3040
        %v3073 = vadd.f32 %v2972, %v3041
        %v3074 = vadd.f32 %v2973, %v3042
        %v3075 = vadd.f32 %v2974, %v3043
        %v3076 = vlaneseq
        %v3077 = vshrl.u32 %v3076, 7
        %v3078 = vsub.s32 4, %v3077
        %v3079 = vrot.slane %v735, %v3078
        %v3080 = vmul.f32 %v948, %v3079
        %v3081 = vmul.f32 %v949, %v3079
        %v3082 = vmul.f32 %v950, %v3079
        %v3083 = vmul.f32 %v951, %v3079
        %v3084 = vmul.f32 %v952, %v3079
        %v3085 = vmul.f32 %v953, %v3079
        %v3086 = vmul.f32 %v954, %v3079
        %v3087 = vmul.f32 %v955, %v3079
        %v3088 = vmul.f32 %v956, %v3079
        %v3089 = vmul.f32 %v957, %v3079
        %v3090 = vmul.f32 %v958, %v3079
        %v3091 = vmul.f32 %v959, %v3079
        %v3092 = vmul.f32 %v960, %v3079
        %v3093 = vmul.f32 %v961, %v3079
        %v3094 = vmul.f32 %v962, %v3079
        %v3095 = vmul.f32 %v963, %v3079
        %v3096 = vmul.f32 %v964, %v3079
        %v3097 = vmul.f32 %v965, %v3079
        %v3098 = vmul.f32 %v966, %v3079
        %v3099 = vmul.f32 %v967, %v3079
        %v3100 = vmul.f32 %v968, %v3079
        %v3101 = vmul.f32 %v969, %v3079
        %v3102 = vmul.f32 %v970, %v3079
        %v3103 = vmul.f32 %v971, %v3079
        %v3104 = vmul.f32 %v972, %v3079
        %v3105 = vmul.f32 %v973, %v3079
        %v3106 = vmul.f32 %v974, %v3079
        %v3107 = vmul.f32 %v975, %v3079
        %v3108 = vmul.f32 %v976, %v3079
        %v3109 = vmul.f32 %v977, %v3079
        %v3110 = vmul.f32 %v978, %v3079
        %v3111 = vmul.f32 %v979, %v3079
        %v3112 = vadd.f32 %v3044, %v3080
        %v3113 = vadd.f32 %v3045, %v3081
        %v3114 = vadd.f32 %v3046, %v3082
        %v3115 = vadd.f32 %v3047, %v3083
        %v3116 = vadd.f32 %v3048, %v3084
        %v3117 = vadd.f32 %v3049, %v3085
        %v3118 = vadd.f32 %v3050, %v3086
        %v3119 = vadd.f32 %v3051, %v3087
        %v3120 = vadd.f32 %v3052, %v3088
        %v3121 = vadd.f32 %v3053, %v3089
        %v3122 = vadd.f32 %v3054, %v3090
        %v3123 = vadd.f32 %v3055, %v3091
        %v3124 = vadd.f32 %v3056, %v3092
        %v3125 = vadd.f32 %v3057, %v3093
        %v3126 = vadd.f32 %v3058, %v3094
        %v3127 = vadd.f32 %v3059, %v3095
        %v3128 = vadd.f32 %v3060, %v3096
        %v3129 = vadd.f32 %v3061, %v3097
        %v3130 = vadd.f32 %v3062, %v3098
        %v3131 = vadd.f32 %v3063, %v3099
        %v3132 = vadd.f32 %v3064, %v3100
        %v3133 = vadd.f32 %v3065, %v3101
        %v3134 = vadd.f32 %v3066, %v3102
        %v3135 = vadd.f32 %v3067, %v3103
        %v3136 = vadd.f32 %v3068, %v3104
        %v3137 = vadd.f32 %v3069, %v3105
        %v3138 = vadd.f32 %v3070, %v3106
        %v3139 = vadd.f32 %v3071, %v3107
        %v3140 = vadd.f32 %v3072, %v3108
        %v3141 = vadd.f32 %v3073, %v3109
        %v3142 = vadd.f32 %v3074, %v3110
        %v3143 = vadd.f32 %v3075, %v3111
        %v3144 = vlaneseq
        %v3145 = vshrl.u32 %v3144, 7
        %v3146 = vsub.s32 5, %v3145
        %v3147 = vrot.slane %v735, %v3146
        %v3148 = vmul.f32 %v737, %v3147
        %v3149 = vmul.f32 %v738, %v3147
        %v3150 = vmul.f32 %v739, %v3147
        %v3151 = vmul.f32 %v740, %v3147
        %v3152 = vmul.f32 %v741, %v3147
        %v3153 = vmul.f32 %v742, %v3147
        %v3154 = vmul.f32 %v743, %v3147
        %v3155 = vmul.f32 %v744, %v3147
        %v3156 = vmul.f32 %v745, %v3147
        %v3157 = vmul.f32 %v746, %v3147
        %v3158 = vmul.f32 %v747, %v3147
        %v3159 = vmul.f32 %v748, %v3147
        %v3160 = vmul.f32 %v749, %v3147
        %v3161 = vmul.f32 %v750, %v3147
        %v3162 = vmul.f32 %v751, %v3147
        %v3163 = vmul.f32 %v752, %v3147
        %v3164 = vmul.f32 %v753, %v3147
        %v3165 = vmul.f32 %v754, %v3147
        %v3166 = vmul.f32 %v755, %v3147
        %v3167 = vmul.f32 %v756, %v3147
        %v3168 = vmul.f32 %v757, %v3147
        %v3169 = vmul.f32 %v758, %v3147
        %v3170 = vmul.f32 %v759, %v3147
        %v3171 = vmul.f32 %v760, %v3147
        %v3172 = vmul.f32 %v761, %v3147
        %v3173 = vmul.f32 %v762, %v3147
        %v3174 = vmul.f32 %v763, %v3147
        %v3175 = vmul.f32 %v764, %v3147
        %v3176 = vmul.f32 %v765, %v3147
        %v3177 = vmul.f32 %v766, %v3147
        %v3178 = vmul.f32 %v767, %v3147
        %v3179 = vmul.f32 %v768, %v3147
        %v3180 = vadd.f32 %v3112, %v3148
        %v3181 = vadd.f32 %v3113, %v3149
        %v3182 = vadd.f32 %v3114, %v3150
        %v3183 = vadd.f32 %v3115, %v3151
        %v3184 = vadd.f32 %v3116, %v3152
        %v3185 = vadd.f32 %v3117, %v3153
        %v3186 = vadd.f32 %v3118, %v3154
        %v3187 = vadd.f32 %v3119, %v3155
        %v3188 = vadd.f32 %v3120, %v3156
        %v3189 = vadd.f32 %v3121, %v3157
        %v3190 = vadd.f32 %v3122, %v3158
        %v3191 = vadd.f32 %v3123, %v3159
        %v3192 = vadd.f32 %v3124, %v3160
        %v3193 = vadd.f32 %v3125, %v3161
        %v3194 = vadd.f32 %v3126, %v3162
        %v3195 = vadd.f32 %v3127, %v3163
        %v3196 = vadd.f32 %v3128, %v3164
        %v3197 = vadd.f32 %v3129, %v3165
        %v3198 = vadd.f32 %v3130, %v3166
        %v3199 = vadd.f32 %v3131, %v3167
        %v3200 = vadd.f32 %v3132, %v3168
        %v3201 = vadd.f32 %v3133, %v3169
        %v3202 = vadd.f32 %v3134, %v3170
        %v3203 = vadd.f32 %v3135, %v3171
        %v3204 = vadd.f32 %v3136, %v3172
        %v3205 = vadd.f32 %v3137, %v3173
        %v3206 = vadd.f32 %v3138, %v3174
        %v3207 = vadd.f32 %v3139, %v3175
        %v3208 = vadd.f32 %v3140, %v3176
        %v3209 = vadd.f32 %v3141, %v3177
        %v3210 = vadd.f32 %v3142, %v3178
        %v3211 = vadd.f32 %v3143, %v3179
        %v3212 = vlaneseq
        %v3213 = vshrl.u32 %v3212, 7
        %v3214 = vsub.s32 6, %v3213
        %v3215 = vrot.slane %v735, %v3214
        %v3216 = vmul.f32 %v1517, %v3215
        %v3217 = vmul.f32 %v1518, %v3215
        %v3218 = vmul.f32 %v1519, %v3215
        %v3219 = vmul.f32 %v1520, %v3215
        %v3220 = vmul.f32 %v1521, %v3215
        %v3221 = vmul.f32 %v1522, %v3215
        %v3222 = vmul.f32 %v1523, %v3215
        %v3223 = vmul.f32 %v1524, %v3215
        %v3224 = vmul.f32 %v1525, %v3215
        %v3225 = vmul.f32 %v1526, %v3215
        %v3226 = vmul.f32 %v1527, %v3215
        %v3227 = vmul.f32 %v1528, %v3215
        %v3228 = vmul.f32 %v1529, %v3215
        %v3229 = vmul.f32 %v1530, %v3215
        %v3230 = vmul.f32 %v1531, %v3215
        %v3231 = vmul.f32 %v1532, %v3215
        %v3232 = vmul.f32 %v1533, %v3215
        %v3233 = vmul.f32 %v1534, %v3215
        %v3234 = vmul.f32 %v1535, %v3215
        %v3235 = vmul.f32 %v1536, %v3215
        %v3236 = vmul.f32 %v1537, %v3215
        %v3237 = vmul.f32 %v1538, %v3215
        %v3238 = vmul.f32 %v1539, %v3215
        %v3239 = vmul.f32 %v1540, %v3215
        %v3240 = vmul.f32 %v1541, %v3215
        %v3241 = vmul.f32 %v1542, %v3215
        %v3242 = vmul.f32 %v1543, %v3215
        %v3243 = vmul.f32 %v1544, %v3215
        %v3244 = vmul.f32 %v1545, %v3215
        %v3245 = vmul.f32 %v1546, %v3215
        %v3246 = vmul.f32 %v1547, %v3215
        %v3247 = vmul.f32 %v1548, %v3215
        %v3248 = vadd.f32 %v3180, %v3216
        %v3249 = vadd.f32 %v3181, %v3217
        %v3250 = vadd.f32 %v3182, %v3218
        %v3251 = vadd.f32 %v3183, %v3219
        %v3252 = vadd.f32 %v3184, %v3220
        %v3253 = vadd.f32 %v3185, %v3221
        %v3254 = vadd.f32 %v3186, %v3222
        %v3255 = vadd.f32 %v3187, %v3223
        %v3256 = vadd.f32 %v3188, %v3224
        %v3257 = vadd.f32 %v3189, %v3225
        %v3258 = vadd.f32 %v3190, %v3226
        %v3259 = vadd.f32 %v3191, %v3227
        %v3260 = vadd.f32 %v3192, %v3228
        %v3261 = vadd.f32 %v3193, %v3229
        %v3262 = vadd.f32 %v3194, %v3230
        %v3263 = vadd.f32 %v3195, %v3231
        %v3264 = vadd.f32 %v3196, %v3232
        %v3265 = vadd.f32 %v3197, %v3233
        %v3266 = vadd.f32 %v3198, %v3234
        %v3267 = vadd.f32 %v3199, %v3235
        %v3268 = vadd.f32 %v3200, %v3236
        %v3269 = vadd.f32 %v3201, %v3237
        %v3270 = vadd.f32 %v3202, %v3238
        %v3271 = vadd.f32 %v3203, %v3239
        %v3272 = vadd.f32 %v3204, %v3240
        %v3273 = vadd.f32 %v3205, %v3241
        %v3274 = vadd.f32 %v3206, %v3242
        %v3275 = vadd.f32 %v3207, %v3243
        %v3276 = vadd.f32 %v3208, %v3244
        %v3277 = vadd.f32 %v3209, %v3245
        %v3278 = vadd.f32 %v3210, %v3246
        %v3279 = vadd.f32 %v3211, %v3247
        %s3280 = scalar_lea.vmem [#allocation2], 224
        %v3281 = vld [vmem:[%s3280 + $0x5] sm:$0xff]
        %v3282 = vld [vmem:[%s3280 + $0xd] sm:$0xff]
        %v3283 = vld [vmem:[%s3280 + $0x25] sm:$0xff]
        %v3284 = vld [vmem:[%s3280 + $0x2d] sm:$0xff]
        %v3285 = vld [vmem:[%s3280 + $0x45] sm:$0xff]
        %v3286 = vld [vmem:[%s3280 + $0x4d] sm:$0xff]
        %v3287 = vld [vmem:[%s3280 + $0x65] sm:$0xff]
        %v3288 = vld [vmem:[%s3280 + $0x6d] sm:$0xff]
        %v3289 = vld [vmem:[%s3280 + $0x85] sm:$0xff]
        %v3290 = vld [vmem:[%s3280 + $0x8d] sm:$0xff]
        %v3291 = vld [vmem:[%s3280 + $0xa5] sm:$0xff]
        %v3292 = vld [vmem:[%s3280 + $0xad] sm:$0xff]
        %v3293 = vld [vmem:[%s3280 + $0xc5] sm:$0xff]
        %v3294 = vld [vmem:[%s3280 + $0xcd] sm:$0xff]
        %v3295 = vld [vmem:[%s3280 + $0xe5] sm:$0xff]
        %v3296 = vld [vmem:[%s3280 + $0xed] sm:$0xff]
        %v3297 = vld [vmem:[%s3280 + $0x105] sm:$0xff]
        %v3298 = vld [vmem:[%s3280 + $0x10d] sm:$0xff]
        %v3299 = vld [vmem:[%s3280 + $0x125] sm:$0xff]
        %v3300 = vld [vmem:[%s3280 + $0x12d] sm:$0xff]
        %v3301 = vld [vmem:[%s3280 + $0x145] sm:$0xff]
        %v3302 = vld [vmem:[%s3280 + $0x14d] sm:$0xff]
        %v3303 = vld [vmem:[%s3280 + $0x165] sm:$0xff]
        %v3304 = vld [vmem:[%s3280 + $0x16d] sm:$0xff]
        %v3305 = vld [vmem:[%s3280 + $0x185] sm:$0xff]
        %v3306 = vld [vmem:[%s3280 + $0x18d] sm:$0xff]
        %v3307 = vld [vmem:[%s3280 + $0x1a5] sm:$0xff]
        %v3308 = vld [vmem:[%s3280 + $0x1ad] sm:$0xff]
        %v3309 = vld [vmem:[%s3280 + $0x1c5] sm:$0xff]
        %v3310 = vld [vmem:[%s3280 + $0x1cd] sm:$0xff]
        %v3311 = vld [vmem:[%s3280 + $0x1e5] sm:$0xff]
        %v3312 = vld [vmem:[%s3280 + $0x1ed] sm:$0xff]
        %v3313 = vlaneseq
        %v3314 = vshrl.u32 %v3313, 7
        %v3315 = vsub.s32 7, %v3314
        %v3316 = vrot.slane %v735, %v3315
        %v3317 = vmul.f32 %v3281, %v3316
        %v3318 = vmul.f32 %v3282, %v3316
        %v3319 = vmul.f32 %v3283, %v3316
        %v3320 = vmul.f32 %v3284, %v3316
        %v3321 = vmul.f32 %v3285, %v3316
        %v3322 = vmul.f32 %v3286, %v3316
        %v3323 = vmul.f32 %v3287, %v3316
        %v3324 = vmul.f32 %v3288, %v3316
        %v3325 = vmul.f32 %v3289, %v3316
        %v3326 = vmul.f32 %v3290, %v3316
        %v3327 = vmul.f32 %v3291, %v3316
        %v3328 = vmul.f32 %v3292, %v3316
        %v3329 = vmul.f32 %v3293, %v3316
        %v3330 = vmul.f32 %v3294, %v3316
        %v3331 = vmul.f32 %v3295, %v3316
        %v3332 = vmul.f32 %v3296, %v3316
        %v3333 = vmul.f32 %v3297, %v3316
        %v3334 = vmul.f32 %v3298, %v3316
        %v3335 = vmul.f32 %v3299, %v3316
        %v3336 = vmul.f32 %v3300, %v3316
        %v3337 = vmul.f32 %v3301, %v3316
        %v3338 = vmul.f32 %v3302, %v3316
        %v3339 = vmul.f32 %v3303, %v3316
        %v3340 = vmul.f32 %v3304, %v3316
        %v3341 = vmul.f32 %v3305, %v3316
        %v3342 = vmul.f32 %v3306, %v3316
        %v3343 = vmul.f32 %v3307, %v3316
        %v3344 = vmul.f32 %v3308, %v3316
        %v3345 = vmul.f32 %v3309, %v3316
        %v3346 = vmul.f32 %v3310, %v3316
        %v3347 = vmul.f32 %v3311, %v3316
        %v3348 = vmul.f32 %v3312, %v3316
        %v3349 = vadd.f32 %v3248, %v3317
        %v3350 = vadd.f32 %v3249, %v3318
        %v3351 = vadd.f32 %v3250, %v3319
        %v3352 = vadd.f32 %v3251, %v3320
        %v3353 = vadd.f32 %v3252, %v3321
        %v3354 = vadd.f32 %v3253, %v3322
        %v3355 = vadd.f32 %v3254, %v3323
        %v3356 = vadd.f32 %v3255, %v3324
        %v3357 = vadd.f32 %v3256, %v3325
        %v3358 = vadd.f32 %v3257, %v3326
        %v3359 = vadd.f32 %v3258, %v3327
        %v3360 = vadd.f32 %v3259, %v3328
        %v3361 = vadd.f32 %v3260, %v3329
        %v3362 = vadd.f32 %v3261, %v3330
        %v3363 = vadd.f32 %v3262, %v3331
        %v3364 = vadd.f32 %v3263, %v3332
        %v3365 = vadd.f32 %v3264, %v3333
        %v3366 = vadd.f32 %v3265, %v3334
        %v3367 = vadd.f32 %v3266, %v3335
        %v3368 = vadd.f32 %v3267, %v3336
        %v3369 = vadd.f32 %v3268, %v3337
        %v3370 = vadd.f32 %v3269, %v3338
        %v3371 = vadd.f32 %v3270, %v3339
        %v3372 = vadd.f32 %v3271, %v3340
        %v3373 = vadd.f32 %v3272, %v3341
        %v3374 = vadd.f32 %v3273, %v3342
        %v3375 = vadd.f32 %v3274, %v3343
        %v3376 = vadd.f32 %v3275, %v3344
        %v3377 = vadd.f32 %v3276, %v3345
        %v3378 = vadd.f32 %v3277, %v3346
        %v3379 = vadd.f32 %v3278, %v3347
        %v3380 = vadd.f32 %v3279, %v3348
        %s3381 = scalar_lea.vmem [#allocation2], 256
        %v3382 = vld [vmem:[%s3381 + $0x5] sm:$0xff]
        %v3383 = vld [vmem:[%s3381 + $0xd] sm:$0xff]
        %v3384 = vld [vmem:[%s3381 + $0x25] sm:$0xff]
        %v3385 = vld [vmem:[%s3381 + $0x2d] sm:$0xff]
        %v3386 = vld [vmem:[%s3381 + $0x45] sm:$0xff]
        %v3387 = vld [vmem:[%s3381 + $0x4d] sm:$0xff]
        %v3388 = vld [vmem:[%s3381 + $0x65] sm:$0xff]
        %v3389 = vld [vmem:[%s3381 + $0x6d] sm:$0xff]
        %v3390 = vld [vmem:[%s3381 + $0x85] sm:$0xff]
        %v3391 = vld [vmem:[%s3381 + $0x8d] sm:$0xff]
        %v3392 = vld [vmem:[%s3381 + $0xa5] sm:$0xff]
        %v3393 = vld [vmem:[%s3381 + $0xad] sm:$0xff]
        %v3394 = vld [vmem:[%s3381 + $0xc5] sm:$0xff]
        %v3395 = vld [vmem:[%s3381 + $0xcd] sm:$0xff]
        %v3396 = vld [vmem:[%s3381 + $0xe5] sm:$0xff]
        %v3397 = vld [vmem:[%s3381 + $0xed] sm:$0xff]
        %v3398 = vld [vmem:[%s3381 + $0x105] sm:$0xff]
        %v3399 = vld [vmem:[%s3381 + $0x10d] sm:$0xff]
        %v3400 = vld [vmem:[%s3381 + $0x125] sm:$0xff]
        %v3401 = vld [vmem:[%s3381 + $0x12d] sm:$0xff]
        %v3402 = vld [vmem:[%s3381 + $0x145] sm:$0xff]
        %v3403 = vld [vmem:[%s3381 + $0x14d] sm:$0xff]
        %v3404 = vld [vmem:[%s3381 + $0x165] sm:$0xff]
        %v3405 = vld [vmem:[%s3381 + $0x16d] sm:$0xff]
        %v3406 = vld [vmem:[%s3381 + $0x185] sm:$0xff]
        %v3407 = vld [vmem:[%s3381 + $0x18d] sm:$0xff]
        %v3408 = vld [vmem:[%s3381 + $0x1a5] sm:$0xff]
        %v3409 = vld [vmem:[%s3381 + $0x1ad] sm:$0xff]
        %v3410 = vld [vmem:[%s3381 + $0x1c5] sm:$0xff]
        %v3411 = vld [vmem:[%s3381 + $0x1cd] sm:$0xff]
        %v3412 = vld [vmem:[%s3381 + $0x1e5] sm:$0xff]
        %v3413 = vld [vmem:[%s3381 + $0x1ed] sm:$0xff]
        %v3414 = vlaneseq
        %v3415 = vshrl.u32 %v3414, 7
        %v3416 = vsub.s32 0, %v3415
        %v3417 = vrot.slane %v736, %v3416
        %v3418 = vmul.f32 %v3382, %v3417
        %v3419 = vmul.f32 %v3383, %v3417
        %v3420 = vmul.f32 %v3384, %v3417
        %v3421 = vmul.f32 %v3385, %v3417
        %v3422 = vmul.f32 %v3386, %v3417
        %v3423 = vmul.f32 %v3387, %v3417
        %v3424 = vmul.f32 %v3388, %v3417
        %v3425 = vmul.f32 %v3389, %v3417
        %v3426 = vmul.f32 %v3390, %v3417
        %v3427 = vmul.f32 %v3391, %v3417
        %v3428 = vmul.f32 %v3392, %v3417
        %v3429 = vmul.f32 %v3393, %v3417
        %v3430 = vmul.f32 %v3394, %v3417
        %v3431 = vmul.f32 %v3395, %v3417
        %v3432 = vmul.f32 %v3396, %v3417
        %v3433 = vmul.f32 %v3397, %v3417
        %v3434 = vmul.f32 %v3398, %v3417
        %v3435 = vmul.f32 %v3399, %v3417
        %v3436 = vmul.f32 %v3400, %v3417
        %v3437 = vmul.f32 %v3401, %v3417
        %v3438 = vmul.f32 %v3402, %v3417
        %v3439 = vmul.f32 %v3403, %v3417
        %v3440 = vmul.f32 %v3404, %v3417
        %v3441 = vmul.f32 %v3405, %v3417
        %v3442 = vmul.f32 %v3406, %v3417
        %v3443 = vmul.f32 %v3407, %v3417
        %v3444 = vmul.f32 %v3408, %v3417
        %v3445 = vmul.f32 %v3409, %v3417
        %v3446 = vmul.f32 %v3410, %v3417
        %v3447 = vmul.f32 %v3411, %v3417
        %v3448 = vmul.f32 %v3412, %v3417
        %v3449 = vmul.f32 %v3413, %v3417
        %v3450 = vadd.f32 %v3349, %v3418
        %v3451 = vadd.f32 %v3350, %v3419
        %v3452 = vadd.f32 %v3351, %v3420
        %v3453 = vadd.f32 %v3352, %v3421
        %v3454 = vadd.f32 %v3353, %v3422
        %v3455 = vadd.f32 %v3354, %v3423
        %v3456 = vadd.f32 %v3355, %v3424
        %v3457 = vadd.f32 %v3356, %v3425
        %v3458 = vadd.f32 %v3357, %v3426
        %v3459 = vadd.f32 %v3358, %v3427
        %v3460 = vadd.f32 %v3359, %v3428
        %v3461 = vadd.f32 %v3360, %v3429
        %v3462 = vadd.f32 %v3361, %v3430
        %v3463 = vadd.f32 %v3362, %v3431
        %v3464 = vadd.f32 %v3363, %v3432
        %v3465 = vadd.f32 %v3364, %v3433
        %v3466 = vadd.f32 %v3365, %v3434
        %v3467 = vadd.f32 %v3366, %v3435
        %v3468 = vadd.f32 %v3367, %v3436
        %v3469 = vadd.f32 %v3368, %v3437
        %v3470 = vadd.f32 %v3369, %v3438
        %v3471 = vadd.f32 %v3370, %v3439
        %v3472 = vadd.f32 %v3371, %v3440
        %v3473 = vadd.f32 %v3372, %v3441
        %v3474 = vadd.f32 %v3373, %v3442
        %v3475 = vadd.f32 %v3374, %v3443
        %v3476 = vadd.f32 %v3375, %v3444
        %v3477 = vadd.f32 %v3376, %v3445
        %v3478 = vadd.f32 %v3377, %v3446
        %v3479 = vadd.f32 %v3378, %v3447
        %v3480 = vadd.f32 %v3379, %v3448
        %v3481 = vadd.f32 %v3380, %v3449
        %s3482 = scalar_lea.vmem [#allocation2], 288
        %v3483 = vld [vmem:[%s3482 + $0x5] sm:$0xff]
        %v3484 = vld [vmem:[%s3482 + $0xd] sm:$0xff]
        %v3485 = vld [vmem:[%s3482 + $0x25] sm:$0xff]
        %v3486 = vld [vmem:[%s3482 + $0x2d] sm:$0xff]
        %v3487 = vld [vmem:[%s3482 + $0x45] sm:$0xff]
        %v3488 = vld [vmem:[%s3482 + $0x4d] sm:$0xff]
        %v3489 = vld [vmem:[%s3482 + $0x65] sm:$0xff]
        %v3490 = vld [vmem:[%s3482 + $0x6d] sm:$0xff]
        %v3491 = vld [vmem:[%s3482 + $0x85] sm:$0xff]
        %v3492 = vld [vmem:[%s3482 + $0x8d] sm:$0xff]
        %v3493 = vld [vmem:[%s3482 + $0xa5] sm:$0xff]
        %v3494 = vld [vmem:[%s3482 + $0xad] sm:$0xff]
        %v3495 = vld [vmem:[%s3482 + $0xc5] sm:$0xff]
        %v3496 = vld [vmem:[%s3482 + $0xcd] sm:$0xff]
        %v3497 = vld [vmem:[%s3482 + $0xe5] sm:$0xff]
        %v3498 = vld [vmem:[%s3482 + $0xed] sm:$0xff]
        %v3499 = vld [vmem:[%s3482 + $0x105] sm:$0xff]
        %v3500 = vld [vmem:[%s3482 + $0x10d] sm:$0xff]
        %v3501 = vld [vmem:[%s3482 + $0x125] sm:$0xff]
        %v3502 = vld [vmem:[%s3482 + $0x12d] sm:$0xff]
        %v3503 = vld [vmem:[%s3482 + $0x145] sm:$0xff]
        %v3504 = vld [vmem:[%s3482 + $0x14d] sm:$0xff]
        %v3505 = vld [vmem:[%s3482 + $0x165] sm:$0xff]
        %v3506 = vld [vmem:[%s3482 + $0x16d] sm:$0xff]
        %v3507 = vld [vmem:[%s3482 + $0x185] sm:$0xff]
        %v3508 = vld [vmem:[%s3482 + $0x18d] sm:$0xff]
        %v3509 = vld [vmem:[%s3482 + $0x1a5] sm:$0xff]
        %v3510 = vld [vmem:[%s3482 + $0x1ad] sm:$0xff]
        %v3511 = vld [vmem:[%s3482 + $0x1c5] sm:$0xff]
        %v3512 = vld [vmem:[%s3482 + $0x1cd] sm:$0xff]
        %v3513 = vld [vmem:[%s3482 + $0x1e5] sm:$0xff]
        %v3514 = vld [vmem:[%s3482 + $0x1ed] sm:$0xff]
        %v3515 = vlaneseq
        %v3516 = vshrl.u32 %v3515, 7
        %v3517 = vsub.s32 1, %v3516
        %v3518 = vrot.slane %v736, %v3517
        %v3519 = vmul.f32 %v3483, %v3518
        %v3520 = vmul.f32 %v3484, %v3518
        %v3521 = vmul.f32 %v3485, %v3518
        %v3522 = vmul.f32 %v3486, %v3518
        %v3523 = vmul.f32 %v3487, %v3518
        %v3524 = vmul.f32 %v3488, %v3518
        %v3525 = vmul.f32 %v3489, %v3518
        %v3526 = vmul.f32 %v3490, %v3518
        %v3527 = vmul.f32 %v3491, %v3518
        %v3528 = vmul.f32 %v3492, %v3518
        %v3529 = vmul.f32 %v3493, %v3518
        %v3530 = vmul.f32 %v3494, %v3518
        %v3531 = vmul.f32 %v3495, %v3518
        %v3532 = vmul.f32 %v3496, %v3518
        %v3533 = vmul.f32 %v3497, %v3518
        %v3534 = vmul.f32 %v3498, %v3518
        %v3535 = vmul.f32 %v3499, %v3518
        %v3536 = vmul.f32 %v3500, %v3518
        %v3537 = vmul.f32 %v3501, %v3518
        %v3538 = vmul.f32 %v3502, %v3518
        %v3539 = vmul.f32 %v3503, %v3518
        %v3540 = vmul.f32 %v3504, %v3518
        %v3541 = vmul.f32 %v3505, %v3518
        %v3542 = vmul.f32 %v3506, %v3518
        %v3543 = vmul.f32 %v3507, %v3518
        %v3544 = vmul.f32 %v3508, %v3518
        %v3545 = vmul.f32 %v3509, %v3518
        %v3546 = vmul.f32 %v3510, %v3518
        %v3547 = vmul.f32 %v3511, %v3518
        %v3548 = vmul.f32 %v3512, %v3518
        %v3549 = vmul.f32 %v3513, %v3518
        %v3550 = vmul.f32 %v3514, %v3518
        %v3551 = vadd.f32 %v3450, %v3519
        %v3552 = vadd.f32 %v3451, %v3520
        %v3553 = vadd.f32 %v3452, %v3521
        %v3554 = vadd.f32 %v3453, %v3522
        %v3555 = vadd.f32 %v3454, %v3523
        %v3556 = vadd.f32 %v3455, %v3524
        %v3557 = vadd.f32 %v3456, %v3525
        %v3558 = vadd.f32 %v3457, %v3526
        %v3559 = vadd.f32 %v3458, %v3527
        %v3560 = vadd.f32 %v3459, %v3528
        %v3561 = vadd.f32 %v3460, %v3529
        %v3562 = vadd.f32 %v3461, %v3530
        %v3563 = vadd.f32 %v3462, %v3531
        %v3564 = vadd.f32 %v3463, %v3532
        %v3565 = vadd.f32 %v3464, %v3533
        %v3566 = vadd.f32 %v3465, %v3534
        %v3567 = vadd.f32 %v3466, %v3535
        %v3568 = vadd.f32 %v3467, %v3536
        %v3569 = vadd.f32 %v3468, %v3537
        %v3570 = vadd.f32 %v3469, %v3538
        %v3571 = vadd.f32 %v3470, %v3539
        %v3572 = vadd.f32 %v3471, %v3540
        %v3573 = vadd.f32 %v3472, %v3541
        %v3574 = vadd.f32 %v3473, %v3542
        %v3575 = vadd.f32 %v3474, %v3543
        %v3576 = vadd.f32 %v3475, %v3544
        %v3577 = vadd.f32 %v3476, %v3545
        %v3578 = vadd.f32 %v3477, %v3546
        %v3579 = vadd.f32 %v3478, %v3547
        %v3580 = vadd.f32 %v3479, %v3548
        %v3581 = vadd.f32 %v3480, %v3549
        %v3582 = vadd.f32 %v3481, %v3550
        %s3583 = scalar_lea.vmem [#allocation2], 320
        %v3584 = vld [vmem:[%s3583 + $0x5] sm:$0xff]
        %v3585 = vld [vmem:[%s3583 + $0xd] sm:$0xff]
        %v3586 = vld [vmem:[%s3583 + $0x25] sm:$0xff]
        %v3587 = vld [vmem:[%s3583 + $0x2d] sm:$0xff]
        %v3588 = vld [vmem:[%s3583 + $0x45] sm:$0xff]
        %v3589 = vld [vmem:[%s3583 + $0x4d] sm:$0xff]
        %v3590 = vld [vmem:[%s3583 + $0x65] sm:$0xff]
        %v3591 = vld [vmem:[%s3583 + $0x6d] sm:$0xff]
        %v3592 = vld [vmem:[%s3583 + $0x85] sm:$0xff]
        %v3593 = vld [vmem:[%s3583 + $0x8d] sm:$0xff]
        %v3594 = vld [vmem:[%s3583 + $0xa5] sm:$0xff]
        %v3595 = vld [vmem:[%s3583 + $0xad] sm:$0xff]
        %v3596 = vld [vmem:[%s3583 + $0xc5] sm:$0xff]
        %v3597 = vld [vmem:[%s3583 + $0xcd] sm:$0xff]
        %v3598 = vld [vmem:[%s3583 + $0xe5] sm:$0xff]
        %v3599 = vld [vmem:[%s3583 + $0xed] sm:$0xff]
        %v3600 = vld [vmem:[%s3583 + $0x105] sm:$0xff]
        %v3601 = vld [vmem:[%s3583 + $0x10d] sm:$0xff]
        %v3602 = vld [vmem:[%s3583 + $0x125] sm:$0xff]
        %v3603 = vld [vmem:[%s3583 + $0x12d] sm:$0xff]
        %v3604 = vld [vmem:[%s3583 + $0x145] sm:$0xff]
        %v3605 = vld [vmem:[%s3583 + $0x14d] sm:$0xff]
        %v3606 = vld [vmem:[%s3583 + $0x165] sm:$0xff]
        %v3607 = vld [vmem:[%s3583 + $0x16d] sm:$0xff]
        %v3608 = vld [vmem:[%s3583 + $0x185] sm:$0xff]
        %v3609 = vld [vmem:[%s3583 + $0x18d] sm:$0xff]
        %v3610 = vld [vmem:[%s3583 + $0x1a5] sm:$0xff]
        %v3611 = vld [vmem:[%s3583 + $0x1ad] sm:$0xff]
        %v3612 = vld [vmem:[%s3583 + $0x1c5] sm:$0xff]
        %v3613 = vld [vmem:[%s3583 + $0x1cd] sm:$0xff]
        %v3614 = vld [vmem:[%s3583 + $0x1e5] sm:$0xff]
        %v3615 = vld [vmem:[%s3583 + $0x1ed] sm:$0xff]
        %v3616 = vlaneseq
        %v3617 = vshrl.u32 %v3616, 7
        %v3618 = vsub.s32 2, %v3617
        %v3619 = vrot.slane %v736, %v3618
        %v3620 = vmul.f32 %v3584, %v3619
        %v3621 = vmul.f32 %v3585, %v3619
        %v3622 = vmul.f32 %v3586, %v3619
        %v3623 = vmul.f32 %v3587, %v3619
        %v3624 = vmul.f32 %v3588, %v3619
        %v3625 = vmul.f32 %v3589, %v3619
        %v3626 = vmul.f32 %v3590, %v3619
        %v3627 = vmul.f32 %v3591, %v3619
        %v3628 = vmul.f32 %v3592, %v3619
        %v3629 = vmul.f32 %v3593, %v3619
        %v3630 = vmul.f32 %v3594, %v3619
        %v3631 = vmul.f32 %v3595, %v3619
        %v3632 = vmul.f32 %v3596, %v3619
        %v3633 = vmul.f32 %v3597, %v3619
        %v3634 = vmul.f32 %v3598, %v3619
        %v3635 = vmul.f32 %v3599, %v3619
        %v3636 = vmul.f32 %v3600, %v3619
        %v3637 = vmul.f32 %v3601, %v3619
        %v3638 = vmul.f32 %v3602, %v3619
        %v3639 = vmul.f32 %v3603, %v3619
        %v3640 = vmul.f32 %v3604, %v3619
        %v3641 = vmul.f32 %v3605, %v3619
        %v3642 = vmul.f32 %v3606, %v3619
        %v3643 = vmul.f32 %v3607, %v3619
        %v3644 = vmul.f32 %v3608, %v3619
        %v3645 = vmul.f32 %v3609, %v3619
        %v3646 = vmul.f32 %v3610, %v3619
        %v3647 = vmul.f32 %v3611, %v3619
        %v3648 = vmul.f32 %v3612, %v3619
        %v3649 = vmul.f32 %v3613, %v3619
        %v3650 = vmul.f32 %v3614, %v3619
        %v3651 = vmul.f32 %v3615, %v3619
        %v3652 = vadd.f32 %v3551, %v3620
        %v3653 = vadd.f32 %v3552, %v3621
        %v3654 = vadd.f32 %v3553, %v3622
        %v3655 = vadd.f32 %v3554, %v3623
        %v3656 = vadd.f32 %v3555, %v3624
        %v3657 = vadd.f32 %v3556, %v3625
        %v3658 = vadd.f32 %v3557, %v3626
        %v3659 = vadd.f32 %v3558, %v3627
        %v3660 = vadd.f32 %v3559, %v3628
        %v3661 = vadd.f32 %v3560, %v3629
        %v3662 = vadd.f32 %v3561, %v3630
        %v3663 = vadd.f32 %v3562, %v3631
        %v3664 = vadd.f32 %v3563, %v3632
        %v3665 = vadd.f32 %v3564, %v3633
        %v3666 = vadd.f32 %v3565, %v3634
        %v3667 = vadd.f32 %v3566, %v3635
        %v3668 = vadd.f32 %v3567, %v3636
        %v3669 = vadd.f32 %v3568, %v3637
        %v3670 = vadd.f32 %v3569, %v3638
        %v3671 = vadd.f32 %v3570, %v3639
        %v3672 = vadd.f32 %v3571, %v3640
        %v3673 = vadd.f32 %v3572, %v3641
        %v3674 = vadd.f32 %v3573, %v3642
        %v3675 = vadd.f32 %v3574, %v3643
        %v3676 = vadd.f32 %v3575, %v3644
        %v3677 = vadd.f32 %v3576, %v3645
        %v3678 = vadd.f32 %v3577, %v3646
        %v3679 = vadd.f32 %v3578, %v3647
        %v3680 = vadd.f32 %v3579, %v3648
        %v3681 = vadd.f32 %v3580, %v3649
        %v3682 = vadd.f32 %v3581, %v3650
        %v3683 = vadd.f32 %v3582, %v3651
        %v3684 = vld [vmem:[%s7] sm:$0xff]
        %v3685 = vld [vmem:[%s7 + $0x8] sm:$0xff]
        %v3686 = vld [vmem:[%s7 + $0x10] sm:$0xff]
        %v3687 = vld [vmem:[%s7 + $0x18] sm:$0x1]
        %v3688 = vld [vmem:[#allocation3] sm:$0xff]
        %v3689 = vld [vmem:[#allocation3 + $0x8] sm:$0xff]
        %v3690 = vld [vmem:[#allocation3 + $0x18] sm:$0xff]
        %v3691 = vld [vmem:[#allocation3 + $0x20] sm:$0xff]
        %v3692 = vld [vmem:[#allocation3 + $0x30] sm:$0xff]
        %v3693 = vld [vmem:[#allocation3 + $0x38] sm:$0xff]
        %v3694 = vld [vmem:[#allocation3 + $0x48] sm:$0xff]
        %v3695 = vld [vmem:[#allocation3 + $0x50] sm:$0xff]
        %v3696 = vld [vmem:[#allocation3 + $0x60] sm:$0xff]
        %v3697 = vld [vmem:[#allocation3 + $0x68] sm:$0xff]
        %v3698 = vld [vmem:[#allocation3 + $0x78] sm:$0xff]
        %v3699 = vld [vmem:[#allocation3 + $0x80] sm:$0xff]
        %v3700 = vld [vmem:[#allocation3 + $0x90] sm:$0xff]
        %v3701 = vld [vmem:[#allocation3 + $0x98] sm:$0xff]
        %v3702 = vld [vmem:[#allocation3 + $0xa8] sm:$0xff]
        %v3703 = vld [vmem:[#allocation3 + $0xb0] sm:$0xff]
        %v3704 = vld [vmem:[#allocation3 + $0xc0] sm:$0xff]
        %v3705 = vld [vmem:[#allocation3 + $0xc8] sm:$0xff]
        %v3706 = vld [vmem:[#allocation3 + $0xd8] sm:$0xff]
        %v3707 = vld [vmem:[#allocation3 + $0xe0] sm:$0xff]
        %v3708 = vld [vmem:[#allocation3 + $0xf0] sm:$0xff]
        %v3709 = vld [vmem:[#allocation3 + $0xf8] sm:$0xff]
        %v3710 = vld [vmem:[#allocation3 + $0x108] sm:$0xff]
        %v3711 = vld [vmem:[#allocation3 + $0x110] sm:$0xff]
        %v3712 = vld [vmem:[#allocation3 + $0x120] sm:$0xff]
        %v3713 = vld [vmem:[#allocation3 + $0x128] sm:$0xff]
        %v3714 = vld [vmem:[#allocation3 + $0x138] sm:$0xff]
        %v3715 = vld [vmem:[#allocation3 + $0x140] sm:$0xff]
        %v3716 = vld [vmem:[#allocation3 + $0x150] sm:$0xff]
        %v3717 = vld [vmem:[#allocation3 + $0x158] sm:$0xff]
        %v3718 = vld [vmem:[#allocation3 + $0x168] sm:$0xff]
        %v3719 = vld [vmem:[#allocation3 + $0x170] sm:$0xff]
        %v3720 = vlaneseq
        %v3721 = vshrl.u32 %v3720, 7
        %v3722 = vsub.s32 0, %v3721
        %v3723 = vrot.slane %v3684, %v3722
        %v3724 = vmul.f32 %v3688, %v3723
        %v3725 = vmul.f32 %v3689, %v3723
        %v3726 = vmul.f32 %v3690, %v3723
        %v3727 = vmul.f32 %v3691, %v3723
        %v3728 = vmul.f32 %v3692, %v3723
        %v3729 = vmul.f32 %v3693, %v3723
        %v3730 = vmul.f32 %v3694, %v3723
        %v3731 = vmul.f32 %v3695, %v3723
        %v3732 = vmul.f32 %v3696, %v3723
        %v3733 = vmul.f32 %v3697, %v3723
        %v3734 = vmul.f32 %v3698, %v3723
        %v3735 = vmul.f32 %v3699, %v3723
        %v3736 = vmul.f32 %v3700, %v3723
        %v3737 = vmul.f32 %v3701, %v3723
        %v3738 = vmul.f32 %v3702, %v3723
        %v3739 = vmul.f32 %v3703, %v3723
        %v3740 = vmul.f32 %v3704, %v3723
        %v3741 = vmul.f32 %v3705, %v3723
        %v3742 = vmul.f32 %v3706, %v3723
        %v3743 = vmul.f32 %v3707, %v3723
        %v3744 = vmul.f32 %v3708, %v3723
        %v3745 = vmul.f32 %v3709, %v3723
        %v3746 = vmul.f32 %v3710, %v3723
        %v3747 = vmul.f32 %v3711, %v3723
        %v3748 = vmul.f32 %v3712, %v3723
        %v3749 = vmul.f32 %v3713, %v3723
        %v3750 = vmul.f32 %v3714, %v3723
        %v3751 = vmul.f32 %v3715, %v3723
        %v3752 = vmul.f32 %v3716, %v3723
        %v3753 = vmul.f32 %v3717, %v3723
        %v3754 = vmul.f32 %v3718, %v3723
        %v3755 = vmul.f32 %v3719, %v3723
        %v3756 = vadd.f32 %v3724, 0.0
        %v3757 = vadd.f32 %v3725, 0.0
        %v3758 = vadd.f32 %v3726, 0.0
        %v3759 = vadd.f32 %v3727, 0.0
        %v3760 = vadd.f32 %v3728, 0.0
        %v3761 = vadd.f32 %v3729, 0.0
        %v3762 = vadd.f32 %v3730, 0.0
        %v3763 = vadd.f32 %v3731, 0.0
        %v3764 = vadd.f32 %v3732, 0.0
        %v3765 = vadd.f32 %v3733, 0.0
        %v3766 = vadd.f32 %v3734, 0.0
        %v3767 = vadd.f32 %v3735, 0.0
        %v3768 = vadd.f32 %v3736, 0.0
        %v3769 = vadd.f32 %v3737, 0.0
        %v3770 = vadd.f32 %v3738, 0.0
        %v3771 = vadd.f32 %v3739, 0.0
        %v3772 = vadd.f32 %v3740, 0.0
        %v3773 = vadd.f32 %v3741, 0.0
        %v3774 = vadd.f32 %v3742, 0.0
        %v3775 = vadd.f32 %v3743, 0.0
        %v3776 = vadd.f32 %v3744, 0.0
        %v3777 = vadd.f32 %v3745, 0.0
        %v3778 = vadd.f32 %v3746, 0.0
        %v3779 = vadd.f32 %v3747, 0.0
        %v3780 = vadd.f32 %v3748, 0.0
        %v3781 = vadd.f32 %v3749, 0.0
        %v3782 = vadd.f32 %v3750, 0.0
        %v3783 = vadd.f32 %v3751, 0.0
        %v3784 = vadd.f32 %v3752, 0.0
        %v3785 = vadd.f32 %v3753, 0.0
        %v3786 = vadd.f32 %v3754, 0.0
        %v3787 = vadd.f32 %v3755, 0.0
        %v3788 = vld [vmem:[#allocation3 + $0x1] sm:$0xff]
        %v3789 = vld [vmem:[#allocation3 + $0x9] sm:$0xff]
        %v3790 = vld [vmem:[#allocation3 + $0x19] sm:$0xff]
        %v3791 = vld [vmem:[#allocation3 + $0x21] sm:$0xff]
        %v3792 = vld [vmem:[#allocation3 + $0x31] sm:$0xff]
        %v3793 = vld [vmem:[#allocation3 + $0x39] sm:$0xff]
        %v3794 = vld [vmem:[#allocation3 + $0x49] sm:$0xff]
        %v3795 = vld [vmem:[#allocation3 + $0x51] sm:$0xff]
        %v3796 = vld [vmem:[#allocation3 + $0x61] sm:$0xff]
        %v3797 = vld [vmem:[#allocation3 + $0x69] sm:$0xff]
        %v3798 = vld [vmem:[#allocation3 + $0x79] sm:$0xff]
        %v3799 = vld [vmem:[#allocation3 + $0x81] sm:$0xff]
        %v3800 = vld [vmem:[#allocation3 + $0x91] sm:$0xff]
        %v3801 = vld [vmem:[#allocation3 + $0x99] sm:$0xff]
        %v3802 = vld [vmem:[#allocation3 + $0xa9] sm:$0xff]
        %v3803 = vld [vmem:[#allocation3 + $0xb1] sm:$0xff]
        %v3804 = vld [vmem:[#allocation3 + $0xc1] sm:$0xff]
        %v3805 = vld [vmem:[#allocation3 + $0xc9] sm:$0xff]
        %v3806 = vld [vmem:[#allocation3 + $0xd9] sm:$0xff]
        %v3807 = vld [vmem:[#allocation3 + $0xe1] sm:$0xff]
        %v3808 = vld [vmem:[#allocation3 + $0xf1] sm:$0xff]
        %v3809 = vld [vmem:[#allocation3 + $0xf9] sm:$0xff]
        %v3810 = vld [vmem:[#allocation3 + $0x109] sm:$0xff]
        %v3811 = vld [vmem:[#allocation3 + $0x111] sm:$0xff]
        %v3812 = vld [vmem:[#allocation3 + $0x121] sm:$0xff]
        %v3813 = vld [vmem:[#allocation3 + $0x129] sm:$0xff]
        %v3814 = vld [vmem:[#allocation3 + $0x139] sm:$0xff]
        %v3815 = vld [vmem:[#allocation3 + $0x141] sm:$0xff]
        %v3816 = vld [vmem:[#allocation3 + $0x151] sm:$0xff]
        %v3817 = vld [vmem:[#allocation3 + $0x159] sm:$0xff]
        %v3818 = vld [vmem:[#allocation3 + $0x169] sm:$0xff]
        %v3819 = vld [vmem:[#allocation3 + $0x171] sm:$0xff]
        %v3820 = vlaneseq
        %v3821 = vshrl.u32 %v3820, 7
        %v3822 = vsub.s32 1, %v3821
        %v3823 = vrot.slane %v3684, %v3822
        %v3824 = vmul.f32 %v3788, %v3823
        %v3825 = vmul.f32 %v3789, %v3823
        %v3826 = vmul.f32 %v3790, %v3823
        %v3827 = vmul.f32 %v3791, %v3823
        %v3828 = vmul.f32 %v3792, %v3823
        %v3829 = vmul.f32 %v3793, %v3823
        %v3830 = vmul.f32 %v3794, %v3823
        %v3831 = vmul.f32 %v3795, %v3823
        %v3832 = vmul.f32 %v3796, %v3823
        %v3833 = vmul.f32 %v3797, %v3823
        %v3834 = vmul.f32 %v3798, %v3823
        %v3835 = vmul.f32 %v3799, %v3823
        %v3836 = vmul.f32 %v3800, %v3823
        %v3837 = vmul.f32 %v3801, %v3823
        %v3838 = vmul.f32 %v3802, %v3823
        %v3839 = vmul.f32 %v3803, %v3823
        %v3840 = vmul.f32 %v3804, %v3823
        %v3841 = vmul.f32 %v3805, %v3823
        %v3842 = vmul.f32 %v3806, %v3823
        %v3843 = vmul.f32 %v3807, %v3823
        %v3844 = vmul.f32 %v3808, %v3823
        %v3845 = vmul.f32 %v3809, %v3823
        %v3846 = vmul.f32 %v3810, %v3823
        %v3847 = vmul.f32 %v3811, %v3823
        %v3848 = vmul.f32 %v3812, %v3823
        %v3849 = vmul.f32 %v3813, %v3823
        %v3850 = vmul.f32 %v3814, %v3823
        %v3851 = vmul.f32 %v3815, %v3823
        %v3852 = vmul.f32 %v3816, %v3823
        %v3853 = vmul.f32 %v3817, %v3823
        %v3854 = vmul.f32 %v3818, %v3823
        %v3855 = vmul.f32 %v3819, %v3823
        %v3856 = vadd.f32 %v3756, %v3824
        %v3857 = vadd.f32 %v3757, %v3825
        %v3858 = vadd.f32 %v3758, %v3826
        %v3859 = vadd.f32 %v3759, %v3827
        %v3860 = vadd.f32 %v3760, %v3828
        %v3861 = vadd.f32 %v3761, %v3829
        %v3862 = vadd.f32 %v3762, %v3830
        %v3863 = vadd.f32 %v3763, %v3831
        %v3864 = vadd.f32 %v3764, %v3832
        %v3865 = vadd.f32 %v3765, %v3833
        %v3866 = vadd.f32 %v3766, %v3834
        %v3867 = vadd.f32 %v3767, %v3835
        %v3868 = vadd.f32 %v3768, %v3836
        %v3869 = vadd.f32 %v3769, %v3837
        %v3870 = vadd.f32 %v3770, %v3838
        %v3871 = vadd.f32 %v3771, %v3839
        %v3872 = vadd.f32 %v3772, %v3840
        %v3873 = vadd.f32 %v3773, %v3841
        %v3874 = vadd.f32 %v3774, %v3842
        %v3875 = vadd.f32 %v3775, %v3843
        %v3876 = vadd.f32 %v3776, %v3844
        %v3877 = vadd.f32 %v3777, %v3845
        %v3878 = vadd.f32 %v3778, %v3846
        %v3879 = vadd.f32 %v3779, %v3847
        %v3880 = vadd.f32 %v3780, %v3848
        %v3881 = vadd.f32 %v3781, %v3849
        %v3882 = vadd.f32 %v3782, %v3850
        %v3883 = vadd.f32 %v3783, %v3851
        %v3884 = vadd.f32 %v3784, %v3852
        %v3885 = vadd.f32 %v3785, %v3853
        %v3886 = vadd.f32 %v3786, %v3854
        %v3887 = vadd.f32 %v3787, %v3855
        %v3888 = vld [vmem:[#allocation3 + $0x2] sm:$0xff]
        %v3889 = vld [vmem:[#allocation3 + $0xa] sm:$0xff]
        %v3890 = vld [vmem:[#allocation3 + $0x1a] sm:$0xff]
        %v3891 = vld [vmem:[#allocation3 + $0x22] sm:$0xff]
        %v3892 = vld [vmem:[#allocation3 + $0x32] sm:$0xff]
        %v3893 = vld [vmem:[#allocation3 + $0x3a] sm:$0xff]
        %v3894 = vld [vmem:[#allocation3 + $0x4a] sm:$0xff]
        %v3895 = vld [vmem:[#allocation3 + $0x52] sm:$0xff]
        %v3896 = vld [vmem:[#allocation3 + $0x62] sm:$0xff]
        %v3897 = vld [vmem:[#allocation3 + $0x6a] sm:$0xff]
        %v3898 = vld [vmem:[#allocation3 + $0x7a] sm:$0xff]
        %v3899 = vld [vmem:[#allocation3 + $0x82] sm:$0xff]
        %v3900 = vld [vmem:[#allocation3 + $0x92] sm:$0xff]
        %v3901 = vld [vmem:[#allocation3 + $0x9a] sm:$0xff]
        %v3902 = vld [vmem:[#allocation3 + $0xaa] sm:$0xff]
        %v3903 = vld [vmem:[#allocation3 + $0xb2] sm:$0xff]
        %v3904 = vld [vmem:[#allocation3 + $0xc2] sm:$0xff]
        %v3905 = vld [vmem:[#allocation3 + $0xca] sm:$0xff]
        %v3906 = vld [vmem:[#allocation3 + $0xda] sm:$0xff]
        %v3907 = vld [vmem:[#allocation3 + $0xe2] sm:$0xff]
        %v3908 = vld [vmem:[#allocation3 + $0xf2] sm:$0xff]
        %v3909 = vld [vmem:[#allocation3 + $0xfa] sm:$0xff]
        %v3910 = vld [vmem:[#allocation3 + $0x10a] sm:$0xff]
        %v3911 = vld [vmem:[#allocation3 + $0x112] sm:$0xff]
        %v3912 = vld [vmem:[#allocation3 + $0x122] sm:$0xff]
        %v3913 = vld [vmem:[#allocation3 + $0x12a] sm:$0xff]
        %v3914 = vld [vmem:[#allocation3 + $0x13a] sm:$0xff]
        %v3915 = vld [vmem:[#allocation3 + $0x142] sm:$0xff]
        %v3916 = vld [vmem:[#allocation3 + $0x152] sm:$0xff]
        %v3917 = vld [vmem:[#allocation3 + $0x15a] sm:$0xff]
        %v3918 = vld [vmem:[#allocation3 + $0x16a] sm:$0xff]
        %v3919 = vld [vmem:[#allocation3 + $0x172] sm:$0xff]
        %v3920 = vlaneseq
        %v3921 = vshrl.u32 %v3920, 7
        %v3922 = vsub.s32 2, %v3921
        %v3923 = vrot.slane %v3684, %v3922
        %v3924 = vmul.f32 %v3888, %v3923
        %v3925 = vmul.f32 %v3889, %v3923
        %v3926 = vmul.f32 %v3890, %v3923
        %v3927 = vmul.f32 %v3891, %v3923
        %v3928 = vmul.f32 %v3892, %v3923
        %v3929 = vmul.f32 %v3893, %v3923
        %v3930 = vmul.f32 %v3894, %v3923
        %v3931 = vmul.f32 %v3895, %v3923
        %v3932 = vmul.f32 %v3896, %v3923
        %v3933 = vmul.f32 %v3897, %v3923
        %v3934 = vmul.f32 %v3898, %v3923
        %v3935 = vmul.f32 %v3899, %v3923
        %v3936 = vmul.f32 %v3900, %v3923
        %v3937 = vmul.f32 %v3901, %v3923
        %v3938 = vmul.f32 %v3902, %v3923
        %v3939 = vmul.f32 %v3903, %v3923
        %v3940 = vmul.f32 %v3904, %v3923
        %v3941 = vmul.f32 %v3905, %v3923
        %v3942 = vmul.f32 %v3906, %v3923
        %v3943 = vmul.f32 %v3907, %v3923
        %v3944 = vmul.f32 %v3908, %v3923
        %v3945 = vmul.f32 %v3909, %v3923
        %v3946 = vmul.f32 %v3910, %v3923
        %v3947 = vmul.f32 %v3911, %v3923
        %v3948 = vmul.f32 %v3912, %v3923
        %v3949 = vmul.f32 %v3913, %v3923
        %v3950 = vmul.f32 %v3914, %v3923
        %v3951 = vmul.f32 %v3915, %v3923
        %v3952 = vmul.f32 %v3916, %v3923
        %v3953 = vmul.f32 %v3917, %v3923
        %v3954 = vmul.f32 %v3918, %v3923
        %v3955 = vmul.f32 %v3919, %v3923
        %v3956 = vadd.f32 %v3856, %v3924
        %v3957 = vadd.f32 %v3857, %v3925
        %v3958 = vadd.f32 %v3858, %v3926
        %v3959 = vadd.f32 %v3859, %v3927
        %v3960 = vadd.f32 %v3860, %v3928
        %v3961 = vadd.f32 %v3861, %v3929
        %v3962 = vadd.f32 %v3862, %v3930
        %v3963 = vadd.f32 %v3863, %v3931
        %v3964 = vadd.f32 %v3864, %v3932
        %v3965 = vadd.f32 %v3865, %v3933
        %v3966 = vadd.f32 %v3866, %v3934
        %v3967 = vadd.f32 %v3867, %v3935
        %v3968 = vadd.f32 %v3868, %v3936
        %v3969 = vadd.f32 %v3869, %v3937
        %v3970 = vadd.f32 %v3870, %v3938
        %v3971 = vadd.f32 %v3871, %v3939
        %v3972 = vadd.f32 %v3872, %v3940
        %v3973 = vadd.f32 %v3873, %v3941
        %v3974 = vadd.f32 %v3874, %v3942
        %v3975 = vadd.f32 %v3875, %v3943
        %v3976 = vadd.f32 %v3876, %v3944
        %v3977 = vadd.f32 %v3877, %v3945
        %v3978 = vadd.f32 %v3878, %v3946
        %v3979 = vadd.f32 %v3879, %v3947
        %v3980 = vadd.f32 %v3880, %v3948
        %v3981 = vadd.f32 %v3881, %v3949
        %v3982 = vadd.f32 %v3882, %v3950
        %v3983 = vadd.f32 %v3883, %v3951
        %v3984 = vadd.f32 %v3884, %v3952
        %v3985 = vadd.f32 %v3885, %v3953
        %v3986 = vadd.f32 %v3886, %v3954
        %v3987 = vadd.f32 %v3887, %v3955
        %v3988 = vld [vmem:[#allocation3 + $0x3] sm:$0xff]
        %v3989 = vld [vmem:[#allocation3 + $0xb] sm:$0xff]
        %v3990 = vld [vmem:[#allocation3 + $0x1b] sm:$0xff]
        %v3991 = vld [vmem:[#allocation3 + $0x23] sm:$0xff]
        %v3992 = vld [vmem:[#allocation3 + $0x33] sm:$0xff]
        %v3993 = vld [vmem:[#allocation3 + $0x3b] sm:$0xff]
        %v3994 = vld [vmem:[#allocation3 + $0x4b] sm:$0xff]
        %v3995 = vld [vmem:[#allocation3 + $0x53] sm:$0xff]
        %v3996 = vld [vmem:[#allocation3 + $0x63] sm:$0xff]
        %v3997 = vld [vmem:[#allocation3 + $0x6b] sm:$0xff]
        %v3998 = vld [vmem:[#allocation3 + $0x7b] sm:$0xff]
        %v3999 = vld [vmem:[#allocation3 + $0x83] sm:$0xff]
        %v4000 = vld [vmem:[#allocation3 + $0x93] sm:$0xff]
        %v4001 = vld [vmem:[#allocation3 + $0x9b] sm:$0xff]
        %v4002 = vld [vmem:[#allocation3 + $0xab] sm:$0xff]
        %v4003 = vld [vmem:[#allocation3 + $0xb3] sm:$0xff]
        %v4004 = vld [vmem:[#allocation3 + $0xc3] sm:$0xff]
        %v4005 = vld [vmem:[#allocation3 + $0xcb] sm:$0xff]
        %v4006 = vld [vmem:[#allocation3 + $0xdb] sm:$0xff]
        %v4007 = vld [vmem:[#allocation3 + $0xe3] sm:$0xff]
        %v4008 = vld [vmem:[#allocation3 + $0xf3] sm:$0xff]
        %v4009 = vld [vmem:[#allocation3 + $0xfb] sm:$0xff]
        %v4010 = vld [vmem:[#allocation3 + $0x10b] sm:$0xff]
        %v4011 = vld [vmem:[#allocation3 + $0x113] sm:$0xff]
        %v4012 = vld [vmem:[#allocation3 + $0x123] sm:$0xff]
        %v4013 = vld [vmem:[#allocation3 + $0x12b] sm:$0xff]
        %v4014 = vld [vmem:[#allocation3 + $0x13b] sm:$0xff]
        %v4015 = vld [vmem:[#allocation3 + $0x143] sm:$0xff]
        %v4016 = vld [vmem:[#allocation3 + $0x153] sm:$0xff]
        %v4017 = vld [vmem:[#allocation3 + $0x15b] sm:$0xff]
        %v4018 = vld [vmem:[#allocation3 + $0x16b] sm:$0xff]
        %v4019 = vld [vmem:[#allocation3 + $0x173] sm:$0xff]
        %v4020 = vlaneseq
        %v4021 = vshrl.u32 %v4020, 7
        %v4022 = vsub.s32 3, %v4021
        %v4023 = vrot.slane %v3684, %v4022
        %v4024 = vmul.f32 %v3988, %v4023
        %v4025 = vmul.f32 %v3989, %v4023
        %v4026 = vmul.f32 %v3990, %v4023
        %v4027 = vmul.f32 %v3991, %v4023
        %v4028 = vmul.f32 %v3992, %v4023
        %v4029 = vmul.f32 %v3993, %v4023
        %v4030 = vmul.f32 %v3994, %v4023
        %v4031 = vmul.f32 %v3995, %v4023
        %v4032 = vmul.f32 %v3996, %v4023
        %v4033 = vmul.f32 %v3997, %v4023
        %v4034 = vmul.f32 %v3998, %v4023
        %v4035 = vmul.f32 %v3999, %v4023
        %v4036 = vmul.f32 %v4000, %v4023
        %v4037 = vmul.f32 %v4001, %v4023
        %v4038 = vmul.f32 %v4002, %v4023
        %v4039 = vmul.f32 %v4003, %v4023
        %v4040 = vmul.f32 %v4004, %v4023
        %v4041 = vmul.f32 %v4005, %v4023
        %v4042 = vmul.f32 %v4006, %v4023
        %v4043 = vmul.f32 %v4007, %v4023
        %v4044 = vmul.f32 %v4008, %v4023
        %v4045 = vmul.f32 %v4009, %v4023
        %v4046 = vmul.f32 %v4010, %v4023
        %v4047 = vmul.f32 %v4011, %v4023
        %v4048 = vmul.f32 %v4012, %v4023
        %v4049 = vmul.f32 %v4013, %v4023
        %v4050 = vmul.f32 %v4014, %v4023
        %v4051 = vmul.f32 %v4015, %v4023
        %v4052 = vmul.f32 %v4016, %v4023
        %v4053 = vmul.f32 %v4017, %v4023
        %v4054 = vmul.f32 %v4018, %v4023
        %v4055 = vmul.f32 %v4019, %v4023
        %v4056 = vadd.f32 %v3956, %v4024
        %v4057 = vadd.f32 %v3957, %v4025
        %v4058 = vadd.f32 %v3958, %v4026
        %v4059 = vadd.f32 %v3959, %v4027
        %v4060 = vadd.f32 %v3960, %v4028
        %v4061 = vadd.f32 %v3961, %v4029
        %v4062 = vadd.f32 %v3962, %v4030
        %v4063 = vadd.f32 %v3963, %v4031
        %v4064 = vadd.f32 %v3964, %v4032
        %v4065 = vadd.f32 %v3965, %v4033
        %v4066 = vadd.f32 %v3966, %v4034
        %v4067 = vadd.f32 %v3967, %v4035
        %v4068 = vadd.f32 %v3968, %v4036
        %v4069 = vadd.f32 %v3969, %v4037
        %v4070 = vadd.f32 %v3970, %v4038
        %v4071 = vadd.f32 %v3971, %v4039
        %v4072 = vadd.f32 %v3972, %v4040
        %v4073 = vadd.f32 %v3973, %v4041
        %v4074 = vadd.f32 %v3974, %v4042
        %v4075 = vadd.f32 %v3975, %v4043
        %v4076 = vadd.f32 %v3976, %v4044
        %v4077 = vadd.f32 %v3977, %v4045
        %v4078 = vadd.f32 %v3978, %v4046
        %v4079 = vadd.f32 %v3979, %v4047
        %v4080 = vadd.f32 %v3980, %v4048
        %v4081 = vadd.f32 %v3981, %v4049
        %v4082 = vadd.f32 %v3982, %v4050
        %v4083 = vadd.f32 %v3983, %v4051
        %v4084 = vadd.f32 %v3984, %v4052
        %v4085 = vadd.f32 %v3985, %v4053
        %v4086 = vadd.f32 %v3986, %v4054
        %v4087 = vadd.f32 %v3987, %v4055
        %v4088 = vld [vmem:[#allocation3 + $0x4] sm:$0xff]
        %v4089 = vld [vmem:[#allocation3 + $0xc] sm:$0xff]
        %v4090 = vld [vmem:[#allocation3 + $0x1c] sm:$0xff]
        %v4091 = vld [vmem:[#allocation3 + $0x24] sm:$0xff]
        %v4092 = vld [vmem:[#allocation3 + $0x34] sm:$0xff]
        %v4093 = vld [vmem:[#allocation3 + $0x3c] sm:$0xff]
        %v4094 = vld [vmem:[#allocation3 + $0x4c] sm:$0xff]
        %v4095 = vld [vmem:[#allocation3 + $0x54] sm:$0xff]
        %v4096 = vld [vmem:[#allocation3 + $0x64] sm:$0xff]
        %v4097 = vld [vmem:[#allocation3 + $0x6c] sm:$0xff]
        %v4098 = vld [vmem:[#allocation3 + $0x7c] sm:$0xff]
        %v4099 = vld [vmem:[#allocation3 + $0x84] sm:$0xff]
        %v4100 = vld [vmem:[#allocation3 + $0x94] sm:$0xff]
        %v4101 = vld [vmem:[#allocation3 + $0x9c] sm:$0xff]
        %v4102 = vld [vmem:[#allocation3 + $0xac] sm:$0xff]
        %v4103 = vld [vmem:[#allocation3 + $0xb4] sm:$0xff]
        %v4104 = vld [vmem:[#allocation3 + $0xc4] sm:$0xff]
        %v4105 = vld [vmem:[#allocation3 + $0xcc] sm:$0xff]
        %v4106 = vld [vmem:[#allocation3 + $0xdc] sm:$0xff]
        %v4107 = vld [vmem:[#allocation3 + $0xe4] sm:$0xff]
        %v4108 = vld [vmem:[#allocation3 + $0xf4] sm:$0xff]
        %v4109 = vld [vmem:[#allocation3 + $0xfc] sm:$0xff]
        %v4110 = vld [vmem:[#allocation3 + $0x10c] sm:$0xff]
        %v4111 = vld [vmem:[#allocation3 + $0x114] sm:$0xff]
        %v4112 = vld [vmem:[#allocation3 + $0x124] sm:$0xff]
        %v4113 = vld [vmem:[#allocation3 + $0x12c] sm:$0xff]
        %v4114 = vld [vmem:[#allocation3 + $0x13c] sm:$0xff]
        %v4115 = vld [vmem:[#allocation3 + $0x144] sm:$0xff]
        %v4116 = vld [vmem:[#allocation3 + $0x154] sm:$0xff]
        %v4117 = vld [vmem:[#allocation3 + $0x15c] sm:$0xff]
        %v4118 = vld [vmem:[#allocation3 + $0x16c] sm:$0xff]
        %v4119 = vld [vmem:[#allocation3 + $0x174] sm:$0xff]
        %v4120 = vlaneseq
        %v4121 = vshrl.u32 %v4120, 7
        %v4122 = vsub.s32 4, %v4121
        %v4123 = vrot.slane %v3684, %v4122
        %v4124 = vmul.f32 %v4088, %v4123
        %v4125 = vmul.f32 %v4089, %v4123
        %v4126 = vmul.f32 %v4090, %v4123
        %v4127 = vmul.f32 %v4091, %v4123
        %v4128 = vmul.f32 %v4092, %v4123
        %v4129 = vmul.f32 %v4093, %v4123
        %v4130 = vmul.f32 %v4094, %v4123
        %v4131 = vmul.f32 %v4095, %v4123
        %v4132 = vmul.f32 %v4096, %v4123
        %v4133 = vmul.f32 %v4097, %v4123
        %v4134 = vmul.f32 %v4098, %v4123
        %v4135 = vmul.f32 %v4099, %v4123
        %v4136 = vmul.f32 %v4100, %v4123
        %v4137 = vmul.f32 %v4101, %v4123
        %v4138 = vmul.f32 %v4102, %v4123
        %v4139 = vmul.f32 %v4103, %v4123
        %v4140 = vmul.f32 %v4104, %v4123
        %v4141 = vmul.f32 %v4105, %v4123
        %v4142 = vmul.f32 %v4106, %v4123
        %v4143 = vmul.f32 %v4107, %v4123
        %v4144 = vmul.f32 %v4108, %v4123
        %v4145 = vmul.f32 %v4109, %v4123
        %v4146 = vmul.f32 %v4110, %v4123
        %v4147 = vmul.f32 %v4111, %v4123
        %v4148 = vmul.f32 %v4112, %v4123
        %v4149 = vmul.f32 %v4113, %v4123
        %v4150 = vmul.f32 %v4114, %v4123
        %v4151 = vmul.f32 %v4115, %v4123
        %v4152 = vmul.f32 %v4116, %v4123
        %v4153 = vmul.f32 %v4117, %v4123
        %v4154 = vmul.f32 %v4118, %v4123
        %v4155 = vmul.f32 %v4119, %v4123
        %v4156 = vadd.f32 %v4056, %v4124
        %v4157 = vadd.f32 %v4057, %v4125
        %v4158 = vadd.f32 %v4058, %v4126
        %v4159 = vadd.f32 %v4059, %v4127
        %v4160 = vadd.f32 %v4060, %v4128
        %v4161 = vadd.f32 %v4061, %v4129
        %v4162 = vadd.f32 %v4062, %v4130
        %v4163 = vadd.f32 %v4063, %v4131
        %v4164 = vadd.f32 %v4064, %v4132
        %v4165 = vadd.f32 %v4065, %v4133
        %v4166 = vadd.f32 %v4066, %v4134
        %v4167 = vadd.f32 %v4067, %v4135
        %v4168 = vadd.f32 %v4068, %v4136
        %v4169 = vadd.f32 %v4069, %v4137
        %v4170 = vadd.f32 %v4070, %v4138
        %v4171 = vadd.f32 %v4071, %v4139
        %v4172 = vadd.f32 %v4072, %v4140
        %v4173 = vadd.f32 %v4073, %v4141
        %v4174 = vadd.f32 %v4074, %v4142
        %v4175 = vadd.f32 %v4075, %v4143
        %v4176 = vadd.f32 %v4076, %v4144
        %v4177 = vadd.f32 %v4077, %v4145
        %v4178 = vadd.f32 %v4078, %v4146
        %v4179 = vadd.f32 %v4079, %v4147
        %v4180 = vadd.f32 %v4080, %v4148
        %v4181 = vadd.f32 %v4081, %v4149
        %v4182 = vadd.f32 %v4082, %v4150
        %v4183 = vadd.f32 %v4083, %v4151
        %v4184 = vadd.f32 %v4084, %v4152
        %v4185 = vadd.f32 %v4085, %v4153
        %v4186 = vadd.f32 %v4086, %v4154
        %v4187 = vadd.f32 %v4087, %v4155
        %s4188 = scalar_lea.vmem [#allocation3], 24
        %v4189 = vld [vmem:[%s4188] sm:$0xff]
        %v4190 = vld [vmem:[%s4188 + $0x8] sm:$0xff]
        %v4191 = vld [vmem:[%s4188 + $0x18] sm:$0xff]
        %v4192 = vld [vmem:[%s4188 + $0x20] sm:$0xff]
        %v4193 = vld [vmem:[%s4188 + $0x30] sm:$0xff]
        %v4194 = vld [vmem:[%s4188 + $0x38] sm:$0xff]
        %v4195 = vld [vmem:[%s4188 + $0x48] sm:$0xff]
        %v4196 = vld [vmem:[%s4188 + $0x50] sm:$0xff]
        %v4197 = vld [vmem:[%s4188 + $0x60] sm:$0xff]
        %v4198 = vld [vmem:[%s4188 + $0x68] sm:$0xff]
        %v4199 = vld [vmem:[%s4188 + $0x78] sm:$0xff]
        %v4200 = vld [vmem:[%s4188 + $0x80] sm:$0xff]
        %v4201 = vld [vmem:[%s4188 + $0x90] sm:$0xff]
        %v4202 = vld [vmem:[%s4188 + $0x98] sm:$0xff]
        %v4203 = vld [vmem:[%s4188 + $0xa8] sm:$0xff]
        %v4204 = vld [vmem:[%s4188 + $0xb0] sm:$0xff]
        %v4205 = vld [vmem:[%s4188 + $0xc0] sm:$0xff]
        %v4206 = vld [vmem:[%s4188 + $0xc8] sm:$0xff]
        %v4207 = vld [vmem:[%s4188 + $0xd8] sm:$0xff]
        %v4208 = vld [vmem:[%s4188 + $0xe0] sm:$0xff]
        %v4209 = vld [vmem:[%s4188 + $0xf0] sm:$0xff]
        %v4210 = vld [vmem:[%s4188 + $0xf8] sm:$0xff]
        %v4211 = vld [vmem:[%s4188 + $0x108] sm:$0xff]
        %v4212 = vld [vmem:[%s4188 + $0x110] sm:$0xff]
        %v4213 = vld [vmem:[%s4188 + $0x120] sm:$0xff]
        %v4214 = vld [vmem:[%s4188 + $0x128] sm:$0xff]
        %v4215 = vld [vmem:[%s4188 + $0x138] sm:$0xff]
        %v4216 = vld [vmem:[%s4188 + $0x140] sm:$0xff]
        %v4217 = vld [vmem:[%s4188 + $0x150] sm:$0xff]
        %v4218 = vld [vmem:[%s4188 + $0x158] sm:$0xff]
        %v4219 = vld [vmem:[%s4188 + $0x168] sm:$0xff]
        %v4220 = vld [vmem:[%s4188 + $0x170] sm:$0xff]
        %v4221 = vlaneseq
        %v4222 = vshrl.u32 %v4221, 7
        %v4223 = vsub.s32 5, %v4222
        %v4224 = vrot.slane %v3684, %v4223
        %v4225 = vmul.f32 %v4189, %v4224
        %v4226 = vmul.f32 %v4190, %v4224
        %v4227 = vmul.f32 %v4191, %v4224
        %v4228 = vmul.f32 %v4192, %v4224
        %v4229 = vmul.f32 %v4193, %v4224
        %v4230 = vmul.f32 %v4194, %v4224
        %v4231 = vmul.f32 %v4195, %v4224
        %v4232 = vmul.f32 %v4196, %v4224
        %v4233 = vmul.f32 %v4197, %v4224
        %v4234 = vmul.f32 %v4198, %v4224
        %v4235 = vmul.f32 %v4199, %v4224
        %v4236 = vmul.f32 %v4200, %v4224
        %v4237 = vmul.f32 %v4201, %v4224
        %v4238 = vmul.f32 %v4202, %v4224
        %v4239 = vmul.f32 %v4203, %v4224
        %v4240 = vmul.f32 %v4204, %v4224
        %v4241 = vmul.f32 %v4205, %v4224
        %v4242 = vmul.f32 %v4206, %v4224
        %v4243 = vmul.f32 %v4207, %v4224
        %v4244 = vmul.f32 %v4208, %v4224
        %v4245 = vmul.f32 %v4209, %v4224
        %v4246 = vmul.f32 %v4210, %v4224
        %v4247 = vmul.f32 %v4211, %v4224
        %v4248 = vmul.f32 %v4212, %v4224
        %v4249 = vmul.f32 %v4213, %v4224
        %v4250 = vmul.f32 %v4214, %v4224
        %v4251 = vmul.f32 %v4215, %v4224
        %v4252 = vmul.f32 %v4216, %v4224
        %v4253 = vmul.f32 %v4217, %v4224
        %v4254 = vmul.f32 %v4218, %v4224
        %v4255 = vmul.f32 %v4219, %v4224
        %v4256 = vmul.f32 %v4220, %v4224
        %v4257 = vadd.f32 %v4156, %v4225
        %v4258 = vadd.f32 %v4157, %v4226
        %v4259 = vadd.f32 %v4158, %v4227
        %v4260 = vadd.f32 %v4159, %v4228
        %v4261 = vadd.f32 %v4160, %v4229
        %v4262 = vadd.f32 %v4161, %v4230
        %v4263 = vadd.f32 %v4162, %v4231
        %v4264 = vadd.f32 %v4163, %v4232
        %v4265 = vadd.f32 %v4164, %v4233
        %v4266 = vadd.f32 %v4165, %v4234
        %v4267 = vadd.f32 %v4166, %v4235
        %v4268 = vadd.f32 %v4167, %v4236
        %v4269 = vadd.f32 %v4168, %v4237
        %v4270 = vadd.f32 %v4169, %v4238
        %v4271 = vadd.f32 %v4170, %v4239
        %v4272 = vadd.f32 %v4171, %v4240
        %v4273 = vadd.f32 %v4172, %v4241
        %v4274 = vadd.f32 %v4173, %v4242
        %v4275 = vadd.f32 %v4174, %v4243
        %v4276 = vadd.f32 %v4175, %v4244
        %v4277 = vadd.f32 %v4176, %v4245
        %v4278 = vadd.f32 %v4177, %v4246
        %v4279 = vadd.f32 %v4178, %v4247
        %v4280 = vadd.f32 %v4179, %v4248
        %v4281 = vadd.f32 %v4180, %v4249
        %v4282 = vadd.f32 %v4181, %v4250
        %v4283 = vadd.f32 %v4182, %v4251
        %v4284 = vadd.f32 %v4183, %v4252
        %v4285 = vadd.f32 %v4184, %v4253
        %v4286 = vadd.f32 %v4185, %v4254
        %v4287 = vadd.f32 %v4186, %v4255
        %v4288 = vadd.f32 %v4187, %v4256
        %v4289 = vld [vmem:[%s4188 + $0x1] sm:$0xff]
        %v4290 = vld [vmem:[%s4188 + $0x9] sm:$0xff]
        %v4291 = vld [vmem:[%s4188 + $0x19] sm:$0xff]
        %v4292 = vld [vmem:[%s4188 + $0x21] sm:$0xff]
        %v4293 = vld [vmem:[%s4188 + $0x31] sm:$0xff]
        %v4294 = vld [vmem:[%s4188 + $0x39] sm:$0xff]
        %v4295 = vld [vmem:[%s4188 + $0x49] sm:$0xff]
        %v4296 = vld [vmem:[%s4188 + $0x51] sm:$0xff]
        %v4297 = vld [vmem:[%s4188 + $0x61] sm:$0xff]
        %v4298 = vld [vmem:[%s4188 + $0x69] sm:$0xff]
        %v4299 = vld [vmem:[%s4188 + $0x79] sm:$0xff]
        %v4300 = vld [vmem:[%s4188 + $0x81] sm:$0xff]
        %v4301 = vld [vmem:[%s4188 + $0x91] sm:$0xff]
        %v4302 = vld [vmem:[%s4188 + $0x99] sm:$0xff]
        %v4303 = vld [vmem:[%s4188 + $0xa9] sm:$0xff]
        %v4304 = vld [vmem:[%s4188 + $0xb1] sm:$0xff]
        %v4305 = vld [vmem:[%s4188 + $0xc1] sm:$0xff]
        %v4306 = vld [vmem:[%s4188 + $0xc9] sm:$0xff]
        %v4307 = vld [vmem:[%s4188 + $0xd9] sm:$0xff]
        %v4308 = vld [vmem:[%s4188 + $0xe1] sm:$0xff]
        %v4309 = vld [vmem:[%s4188 + $0xf1] sm:$0xff]
        %v4310 = vld [vmem:[%s4188 + $0xf9] sm:$0xff]
        %v4311 = vld [vmem:[%s4188 + $0x109] sm:$0xff]
        %v4312 = vld [vmem:[%s4188 + $0x111] sm:$0xff]
        %v4313 = vld [vmem:[%s4188 + $0x121] sm:$0xff]
        %v4314 = vld [vmem:[%s4188 + $0x129] sm:$0xff]
        %v4315 = vld [vmem:[%s4188 + $0x139] sm:$0xff]
        %v4316 = vld [vmem:[%s4188 + $0x141] sm:$0xff]
        %v4317 = vld [vmem:[%s4188 + $0x151] sm:$0xff]
        %v4318 = vld [vmem:[%s4188 + $0x159] sm:$0xff]
        %v4319 = vld [vmem:[%s4188 + $0x169] sm:$0xff]
        %v4320 = vld [vmem:[%s4188 + $0x171] sm:$0xff]
        %v4321 = vlaneseq
        %v4322 = vshrl.u32 %v4321, 7
        %v4323 = vsub.s32 6, %v4322
        %v4324 = vrot.slane %v3684, %v4323
        %v4325 = vmul.f32 %v4289, %v4324
        %v4326 = vmul.f32 %v4290, %v4324
        %v4327 = vmul.f32 %v4291, %v4324
        %v4328 = vmul.f32 %v4292, %v4324
        %v4329 = vmul.f32 %v4293, %v4324
        %v4330 = vmul.f32 %v4294, %v4324
        %v4331 = vmul.f32 %v4295, %v4324
        %v4332 = vmul.f32 %v4296, %v4324
        %v4333 = vmul.f32 %v4297, %v4324
        %v4334 = vmul.f32 %v4298, %v4324
        %v4335 = vmul.f32 %v4299, %v4324
        %v4336 = vmul.f32 %v4300, %v4324
        %v4337 = vmul.f32 %v4301, %v4324
        %v4338 = vmul.f32 %v4302, %v4324
        %v4339 = vmul.f32 %v4303, %v4324
        %v4340 = vmul.f32 %v4304, %v4324
        %v4341 = vmul.f32 %v4305, %v4324
        %v4342 = vmul.f32 %v4306, %v4324
        %v4343 = vmul.f32 %v4307, %v4324
        %v4344 = vmul.f32 %v4308, %v4324
        %v4345 = vmul.f32 %v4309, %v4324
        %v4346 = vmul.f32 %v4310, %v4324
        %v4347 = vmul.f32 %v4311, %v4324
        %v4348 = vmul.f32 %v4312, %v4324
        %v4349 = vmul.f32 %v4313, %v4324
        %v4350 = vmul.f32 %v4314, %v4324
        %v4351 = vmul.f32 %v4315, %v4324
        %v4352 = vmul.f32 %v4316, %v4324
        %v4353 = vmul.f32 %v4317, %v4324
        %v4354 = vmul.f32 %v4318, %v4324
        %v4355 = vmul.f32 %v4319, %v4324
        %v4356 = vmul.f32 %v4320, %v4324
        %v4357 = vadd.f32 %v4257, %v4325
        %v4358 = vadd.f32 %v4258, %v4326
        %v4359 = vadd.f32 %v4259, %v4327
        %v4360 = vadd.f32 %v4260, %v4328
        %v4361 = vadd.f32 %v4261, %v4329
        %v4362 = vadd.f32 %v4262, %v4330
        %v4363 = vadd.f32 %v4263, %v4331
        %v4364 = vadd.f32 %v4264, %v4332
        %v4365 = vadd.f32 %v4265, %v4333
        %v4366 = vadd.f32 %v4266, %v4334
        %v4367 = vadd.f32 %v4267, %v4335
        %v4368 = vadd.f32 %v4268, %v4336
        %v4369 = vadd.f32 %v4269, %v4337
        %v4370 = vadd.f32 %v4270, %v4338
        %v4371 = vadd.f32 %v4271, %v4339
        %v4372 = vadd.f32 %v4272, %v4340
        %v4373 = vadd.f32 %v4273, %v4341
        %v4374 = vadd.f32 %v4274, %v4342
        %v4375 = vadd.f32 %v4275, %v4343
        %v4376 = vadd.f32 %v4276, %v4344
        %v4377 = vadd.f32 %v4277, %v4345
        %v4378 = vadd.f32 %v4278, %v4346
        %v4379 = vadd.f32 %v4279, %v4347
        %v4380 = vadd.f32 %v4280, %v4348
        %v4381 = vadd.f32 %v4281, %v4349
        %v4382 = vadd.f32 %v4282, %v4350
        %v4383 = vadd.f32 %v4283, %v4351
        %v4384 = vadd.f32 %v4284, %v4352
        %v4385 = vadd.f32 %v4285, %v4353
        %v4386 = vadd.f32 %v4286, %v4354
        %v4387 = vadd.f32 %v4287, %v4355
        %v4388 = vadd.f32 %v4288, %v4356
        %v4389 = vld [vmem:[%s4188 + $0x2] sm:$0xff]
        %v4390 = vld [vmem:[%s4188 + $0xa] sm:$0xff]
        %v4391 = vld [vmem:[%s4188 + $0x1a] sm:$0xff]
        %v4392 = vld [vmem:[%s4188 + $0x22] sm:$0xff]
        %v4393 = vld [vmem:[%s4188 + $0x32] sm:$0xff]
        %v4394 = vld [vmem:[%s4188 + $0x3a] sm:$0xff]
        %v4395 = vld [vmem:[%s4188 + $0x4a] sm:$0xff]
        %v4396 = vld [vmem:[%s4188 + $0x52] sm:$0xff]
        %v4397 = vld [vmem:[%s4188 + $0x62] sm:$0xff]
        %v4398 = vld [vmem:[%s4188 + $0x6a] sm:$0xff]
        %v4399 = vld [vmem:[%s4188 + $0x7a] sm:$0xff]
        %v4400 = vld [vmem:[%s4188 + $0x82] sm:$0xff]
        %v4401 = vld [vmem:[%s4188 + $0x92] sm:$0xff]
        %v4402 = vld [vmem:[%s4188 + $0x9a] sm:$0xff]
        %v4403 = vld [vmem:[%s4188 + $0xaa] sm:$0xff]
        %v4404 = vld [vmem:[%s4188 + $0xb2] sm:$0xff]
        %v4405 = vld [vmem:[%s4188 + $0xc2] sm:$0xff]
        %v4406 = vld [vmem:[%s4188 + $0xca] sm:$0xff]
        %v4407 = vld [vmem:[%s4188 + $0xda] sm:$0xff]
        %v4408 = vld [vmem:[%s4188 + $0xe2] sm:$0xff]
        %v4409 = vld [vmem:[%s4188 + $0xf2] sm:$0xff]
        %v4410 = vld [vmem:[%s4188 + $0xfa] sm:$0xff]
        %v4411 = vld [vmem:[%s4188 + $0x10a] sm:$0xff]
        %v4412 = vld [vmem:[%s4188 + $0x112] sm:$0xff]
        %v4413 = vld [vmem:[%s4188 + $0x122] sm:$0xff]
        %v4414 = vld [vmem:[%s4188 + $0x12a] sm:$0xff]
        %v4415 = vld [vmem:[%s4188 + $0x13a] sm:$0xff]
        %v4416 = vld [vmem:[%s4188 + $0x142] sm:$0xff]
        %v4417 = vld [vmem:[%s4188 + $0x152] sm:$0xff]
        %v4418 = vld [vmem:[%s4188 + $0x15a] sm:$0xff]
        %v4419 = vld [vmem:[%s4188 + $0x16a] sm:$0xff]
        %v4420 = vld [vmem:[%s4188 + $0x172] sm:$0xff]
        %v4421 = vlaneseq
        %v4422 = vshrl.u32 %v4421, 7
        %v4423 = vsub.s32 7, %v4422
        %v4424 = vrot.slane %v3684, %v4423
        %v4425 = vmul.f32 %v4389, %v4424
        %v4426 = vmul.f32 %v4390, %v4424
        %v4427 = vmul.f32 %v4391, %v4424
        %v4428 = vmul.f32 %v4392, %v4424
        %v4429 = vmul.f32 %v4393, %v4424
        %v4430 = vmul.f32 %v4394, %v4424
        %v4431 = vmul.f32 %v4395, %v4424
        %v4432 = vmul.f32 %v4396, %v4424
        %v4433 = vmul.f32 %v4397, %v4424
        %v4434 = vmul.f32 %v4398, %v4424
        %v4435 = vmul.f32 %v4399, %v4424
        %v4436 = vmul.f32 %v4400, %v4424
        %v4437 = vmul.f32 %v4401, %v4424
        %v4438 = vmul.f32 %v4402, %v4424
        %v4439 = vmul.f32 %v4403, %v4424
        %v4440 = vmul.f32 %v4404, %v4424
        %v4441 = vmul.f32 %v4405, %v4424
        %v4442 = vmul.f32 %v4406, %v4424
        %v4443 = vmul.f32 %v4407, %v4424
        %v4444 = vmul.f32 %v4408, %v4424
        %v4445 = vmul.f32 %v4409, %v4424
        %v4446 = vmul.f32 %v4410, %v4424
        %v4447 = vmul.f32 %v4411, %v4424
        %v4448 = vmul.f32 %v4412, %v4424
        %v4449 = vmul.f32 %v4413, %v4424
        %v4450 = vmul.f32 %v4414, %v4424
        %v4451 = vmul.f32 %v4415, %v4424
        %v4452 = vmul.f32 %v4416, %v4424
        %v4453 = vmul.f32 %v4417, %v4424
        %v4454 = vmul.f32 %v4418, %v4424
        %v4455 = vmul.f32 %v4419, %v4424
        %v4456 = vmul.f32 %v4420, %v4424
        %v4457 = vadd.f32 %v4357, %v4425
        %v4458 = vadd.f32 %v4358, %v4426
        %v4459 = vadd.f32 %v4359, %v4427
        %v4460 = vadd.f32 %v4360, %v4428
        %v4461 = vadd.f32 %v4361, %v4429
        %v4462 = vadd.f32 %v4362, %v4430
        %v4463 = vadd.f32 %v4363, %v4431
        %v4464 = vadd.f32 %v4364, %v4432
        %v4465 = vadd.f32 %v4365, %v4433
        %v4466 = vadd.f32 %v4366, %v4434
        %v4467 = vadd.f32 %v4367, %v4435
        %v4468 = vadd.f32 %v4368, %v4436
        %v4469 = vadd.f32 %v4369, %v4437
        %v4470 = vadd.f32 %v4370, %v4438
        %v4471 = vadd.f32 %v4371, %v4439
        %v4472 = vadd.f32 %v4372, %v4440
        %v4473 = vadd.f32 %v4373, %v4441
        %v4474 = vadd.f32 %v4374, %v4442
        %v4475 = vadd.f32 %v4375, %v4443
        %v4476 = vadd.f32 %v4376, %v4444
        %v4477 = vadd.f32 %v4377, %v4445
        %v4478 = vadd.f32 %v4378, %v4446
        %v4479 = vadd.f32 %v4379, %v4447
        %v4480 = vadd.f32 %v4380, %v4448
        %v4481 = vadd.f32 %v4381, %v4449
        %v4482 = vadd.f32 %v4382, %v4450
        %v4483 = vadd.f32 %v4383, %v4451
        %v4484 = vadd.f32 %v4384, %v4452
        %v4485 = vadd.f32 %v4385, %v4453
        %v4486 = vadd.f32 %v4386, %v4454
        %v4487 = vadd.f32 %v4387, %v4455
        %v4488 = vadd.f32 %v4388, %v4456
        %v4489 = vld [vmem:[%s4188 + $0x3] sm:$0xff]
        %v4490 = vld [vmem:[%s4188 + $0xb] sm:$0xff]
        %v4491 = vld [vmem:[%s4188 + $0x1b] sm:$0xff]
        %v4492 = vld [vmem:[%s4188 + $0x23] sm:$0xff]
        %v4493 = vld [vmem:[%s4188 + $0x33] sm:$0xff]
        %v4494 = vld [vmem:[%s4188 + $0x3b] sm:$0xff]
        %v4495 = vld [vmem:[%s4188 + $0x4b] sm:$0xff]
        %v4496 = vld [vmem:[%s4188 + $0x53] sm:$0xff]
        %v4497 = vld [vmem:[%s4188 + $0x63] sm:$0xff]
        %v4498 = vld [vmem:[%s4188 + $0x6b] sm:$0xff]
        %v4499 = vld [vmem:[%s4188 + $0x7b] sm:$0xff]
        %v4500 = vld [vmem:[%s4188 + $0x83] sm:$0xff]
        %v4501 = vld [vmem:[%s4188 + $0x93] sm:$0xff]
        %v4502 = vld [vmem:[%s4188 + $0x9b] sm:$0xff]
        %v4503 = vld [vmem:[%s4188 + $0xab] sm:$0xff]
        %v4504 = vld [vmem:[%s4188 + $0xb3] sm:$0xff]
        %v4505 = vld [vmem:[%s4188 + $0xc3] sm:$0xff]
        %v4506 = vld [vmem:[%s4188 + $0xcb] sm:$0xff]
        %v4507 = vld [vmem:[%s4188 + $0xdb] sm:$0xff]
        %v4508 = vld [vmem:[%s4188 + $0xe3] sm:$0xff]
        %v4509 = vld [vmem:[%s4188 + $0xf3] sm:$0xff]
        %v4510 = vld [vmem:[%s4188 + $0xfb] sm:$0xff]
        %v4511 = vld [vmem:[%s4188 + $0x10b] sm:$0xff]
        %v4512 = vld [vmem:[%s4188 + $0x113] sm:$0xff]
        %v4513 = vld [vmem:[%s4188 + $0x123] sm:$0xff]
        %v4514 = vld [vmem:[%s4188 + $0x12b] sm:$0xff]
        %v4515 = vld [vmem:[%s4188 + $0x13b] sm:$0xff]
        %v4516 = vld [vmem:[%s4188 + $0x143] sm:$0xff]
        %v4517 = vld [vmem:[%s4188 + $0x153] sm:$0xff]
        %v4518 = vld [vmem:[%s4188 + $0x15b] sm:$0xff]
        %v4519 = vld [vmem:[%s4188 + $0x16b] sm:$0xff]
        %v4520 = vld [vmem:[%s4188 + $0x173] sm:$0xff]
        %v4521 = vlaneseq
        %v4522 = vshrl.u32 %v4521, 7
        %v4523 = vsub.s32 0, %v4522
        %v4524 = vrot.slane %v3685, %v4523
        %v4525 = vmul.f32 %v4489, %v4524
        %v4526 = vmul.f32 %v4490, %v4524
        %v4527 = vmul.f32 %v4491, %v4524
        %v4528 = vmul.f32 %v4492, %v4524
        %v4529 = vmul.f32 %v4493, %v4524
        %v4530 = vmul.f32 %v4494, %v4524
        %v4531 = vmul.f32 %v4495, %v4524
        %v4532 = vmul.f32 %v4496, %v4524
        %v4533 = vmul.f32 %v4497, %v4524
        %v4534 = vmul.f32 %v4498, %v4524
        %v4535 = vmul.f32 %v4499, %v4524
        %v4536 = vmul.f32 %v4500, %v4524
        %v4537 = vmul.f32 %v4501, %v4524
        %v4538 = vmul.f32 %v4502, %v4524
        %v4539 = vmul.f32 %v4503, %v4524
        %v4540 = vmul.f32 %v4504, %v4524
        %v4541 = vmul.f32 %v4505, %v4524
        %v4542 = vmul.f32 %v4506, %v4524
        %v4543 = vmul.f32 %v4507, %v4524
        %v4544 = vmul.f32 %v4508, %v4524
        %v4545 = vmul.f32 %v4509, %v4524
        %v4546 = vmul.f32 %v4510, %v4524
        %v4547 = vmul.f32 %v4511, %v4524
        %v4548 = vmul.f32 %v4512, %v4524
        %v4549 = vmul.f32 %v4513, %v4524
        %v4550 = vmul.f32 %v4514, %v4524
        %v4551 = vmul.f32 %v4515, %v4524
        %v4552 = vmul.f32 %v4516, %v4524
        %v4553 = vmul.f32 %v4517, %v4524
        %v4554 = vmul.f32 %v4518, %v4524
        %v4555 = vmul.f32 %v4519, %v4524
        %v4556 = vmul.f32 %v4520, %v4524
        %v4557 = vadd.f32 %v4457, %v4525
        %v4558 = vadd.f32 %v4458, %v4526
        %v4559 = vadd.f32 %v4459, %v4527
        %v4560 = vadd.f32 %v4460, %v4528
        %v4561 = vadd.f32 %v4461, %v4529
        %v4562 = vadd.f32 %v4462, %v4530
        %v4563 = vadd.f32 %v4463, %v4531
        %v4564 = vadd.f32 %v4464, %v4532
        %v4565 = vadd.f32 %v4465, %v4533
        %v4566 = vadd.f32 %v4466, %v4534
        %v4567 = vadd.f32 %v4467, %v4535
        %v4568 = vadd.f32 %v4468, %v4536
        %v4569 = vadd.f32 %v4469, %v4537
        %v4570 = vadd.f32 %v4470, %v4538
        %v4571 = vadd.f32 %v4471, %v4539
        %v4572 = vadd.f32 %v4472, %v4540
        %v4573 = vadd.f32 %v4473, %v4541
        %v4574 = vadd.f32 %v4474, %v4542
        %v4575 = vadd.f32 %v4475, %v4543
        %v4576 = vadd.f32 %v4476, %v4544
        %v4577 = vadd.f32 %v4477, %v4545
        %v4578 = vadd.f32 %v4478, %v4546
        %v4579 = vadd.f32 %v4479, %v4547
        %v4580 = vadd.f32 %v4480, %v4548
        %v4581 = vadd.f32 %v4481, %v4549
        %v4582 = vadd.f32 %v4482, %v4550
        %v4583 = vadd.f32 %v4483, %v4551
        %v4584 = vadd.f32 %v4484, %v4552
        %v4585 = vadd.f32 %v4485, %v4553
        %v4586 = vadd.f32 %v4486, %v4554
        %v4587 = vadd.f32 %v4487, %v4555
        %v4588 = vadd.f32 %v4488, %v4556
        %v4589 = vld [vmem:[%s4188 + $0x4] sm:$0xff]
        %v4590 = vld [vmem:[%s4188 + $0xc] sm:$0xff]
        %v4591 = vld [vmem:[%s4188 + $0x1c] sm:$0xff]
        %v4592 = vld [vmem:[%s4188 + $0x24] sm:$0xff]
        %v4593 = vld [vmem:[%s4188 + $0x34] sm:$0xff]
        %v4594 = vld [vmem:[%s4188 + $0x3c] sm:$0xff]
        %v4595 = vld [vmem:[%s4188 + $0x4c] sm:$0xff]
        %v4596 = vld [vmem:[%s4188 + $0x54] sm:$0xff]
        %v4597 = vld [vmem:[%s4188 + $0x64] sm:$0xff]
        %v4598 = vld [vmem:[%s4188 + $0x6c] sm:$0xff]
        %v4599 = vld [vmem:[%s4188 + $0x7c] sm:$0xff]
        %v4600 = vld [vmem:[%s4188 + $0x84] sm:$0xff]
        %v4601 = vld [vmem:[%s4188 + $0x94] sm:$0xff]
        %v4602 = vld [vmem:[%s4188 + $0x9c] sm:$0xff]
        %v4603 = vld [vmem:[%s4188 + $0xac] sm:$0xff]
        %v4604 = vld [vmem:[%s4188 + $0xb4] sm:$0xff]
        %v4605 = vld [vmem:[%s4188 + $0xc4] sm:$0xff]
        %v4606 = vld [vmem:[%s4188 + $0xcc] sm:$0xff]
        %v4607 = vld [vmem:[%s4188 + $0xdc] sm:$0xff]
        %v4608 = vld [vmem:[%s4188 + $0xe4] sm:$0xff]
        %v4609 = vld [vmem:[%s4188 + $0xf4] sm:$0xff]
        %v4610 = vld [vmem:[%s4188 + $0xfc] sm:$0xff]
        %v4611 = vld [vmem:[%s4188 + $0x10c] sm:$0xff]
        %v4612 = vld [vmem:[%s4188 + $0x114] sm:$0xff]
        %v4613 = vld [vmem:[%s4188 + $0x124] sm:$0xff]
        %v4614 = vld [vmem:[%s4188 + $0x12c] sm:$0xff]
        %v4615 = vld [vmem:[%s4188 + $0x13c] sm:$0xff]
        %v4616 = vld [vmem:[%s4188 + $0x144] sm:$0xff]
        %v4617 = vld [vmem:[%s4188 + $0x154] sm:$0xff]
        %v4618 = vld [vmem:[%s4188 + $0x15c] sm:$0xff]
        %v4619 = vld [vmem:[%s4188 + $0x16c] sm:$0xff]
        %v4620 = vld [vmem:[%s4188 + $0x174] sm:$0xff]
        %v4621 = vlaneseq
        %v4622 = vshrl.u32 %v4621, 7
        %v4623 = vsub.s32 1, %v4622
        %v4624 = vrot.slane %v3685, %v4623
        %v4625 = vmul.f32 %v4589, %v4624
        %v4626 = vmul.f32 %v4590, %v4624
        %v4627 = vmul.f32 %v4591, %v4624
        %v4628 = vmul.f32 %v4592, %v4624
        %v4629 = vmul.f32 %v4593, %v4624
        %v4630 = vmul.f32 %v4594, %v4624
        %v4631 = vmul.f32 %v4595, %v4624
        %v4632 = vmul.f32 %v4596, %v4624
        %v4633 = vmul.f32 %v4597, %v4624
        %v4634 = vmul.f32 %v4598, %v4624
        %v4635 = vmul.f32 %v4599, %v4624
        %v4636 = vmul.f32 %v4600, %v4624
        %v4637 = vmul.f32 %v4601, %v4624
        %v4638 = vmul.f32 %v4602, %v4624
        %v4639 = vmul.f32 %v4603, %v4624
        %v4640 = vmul.f32 %v4604, %v4624
        %v4641 = vmul.f32 %v4605, %v4624
        %v4642 = vmul.f32 %v4606, %v4624
        %v4643 = vmul.f32 %v4607, %v4624
        %v4644 = vmul.f32 %v4608, %v4624
        %v4645 = vmul.f32 %v4609, %v4624
        %v4646 = vmul.f32 %v4610, %v4624
        %v4647 = vmul.f32 %v4611, %v4624
        %v4648 = vmul.f32 %v4612, %v4624
        %v4649 = vmul.f32 %v4613, %v4624
        %v4650 = vmul.f32 %v4614, %v4624
        %v4651 = vmul.f32 %v4615, %v4624
        %v4652 = vmul.f32 %v4616, %v4624
        %v4653 = vmul.f32 %v4617, %v4624
        %v4654 = vmul.f32 %v4618, %v4624
        %v4655 = vmul.f32 %v4619, %v4624
        %v4656 = vmul.f32 %v4620, %v4624
        %v4657 = vadd.f32 %v4557, %v4625
        %v4658 = vadd.f32 %v4558, %v4626
        %v4659 = vadd.f32 %v4559, %v4627
        %v4660 = vadd.f32 %v4560, %v4628
        %v4661 = vadd.f32 %v4561, %v4629
        %v4662 = vadd.f32 %v4562, %v4630
        %v4663 = vadd.f32 %v4563, %v4631
        %v4664 = vadd.f32 %v4564, %v4632
        %v4665 = vadd.f32 %v4565, %v4633
        %v4666 = vadd.f32 %v4566, %v4634
        %v4667 = vadd.f32 %v4567, %v4635
        %v4668 = vadd.f32 %v4568, %v4636
        %v4669 = vadd.f32 %v4569, %v4637
        %v4670 = vadd.f32 %v4570, %v4638
        %v4671 = vadd.f32 %v4571, %v4639
        %v4672 = vadd.f32 %v4572, %v4640
        %v4673 = vadd.f32 %v4573, %v4641
        %v4674 = vadd.f32 %v4574, %v4642
        %v4675 = vadd.f32 %v4575, %v4643
        %v4676 = vadd.f32 %v4576, %v4644
        %v4677 = vadd.f32 %v4577, %v4645
        %v4678 = vadd.f32 %v4578, %v4646
        %v4679 = vadd.f32 %v4579, %v4647
        %v4680 = vadd.f32 %v4580, %v4648
        %v4681 = vadd.f32 %v4581, %v4649
        %v4682 = vadd.f32 %v4582, %v4650
        %v4683 = vadd.f32 %v4583, %v4651
        %v4684 = vadd.f32 %v4584, %v4652
        %v4685 = vadd.f32 %v4585, %v4653
        %v4686 = vadd.f32 %v4586, %v4654
        %v4687 = vadd.f32 %v4587, %v4655
        %v4688 = vadd.f32 %v4588, %v4656
        %v4689 = vld [vmem:[%s698] sm:$0xff]
        %v4690 = vld [vmem:[%s698 + $0x8] sm:$0xff]
        %v4691 = vld [vmem:[%s698 + $0x18] sm:$0xff]
        %v4692 = vld [vmem:[%s698 + $0x20] sm:$0xff]
        %v4693 = vld [vmem:[%s698 + $0x30] sm:$0xff]
        %v4694 = vld [vmem:[%s698 + $0x38] sm:$0xff]
        %v4695 = vld [vmem:[%s698 + $0x48] sm:$0xff]
        %v4696 = vld [vmem:[%s698 + $0x50] sm:$0xff]
        %v4697 = vld [vmem:[%s698 + $0x60] sm:$0xff]
        %v4698 = vld [vmem:[%s698 + $0x68] sm:$0xff]
        %v4699 = vld [vmem:[%s698 + $0x78] sm:$0xff]
        %v4700 = vld [vmem:[%s698 + $0x80] sm:$0xff]
        %v4701 = vld [vmem:[%s698 + $0x90] sm:$0xff]
        %v4702 = vld [vmem:[%s698 + $0x98] sm:$0xff]
        %v4703 = vld [vmem:[%s698 + $0xa8] sm:$0xff]
        %v4704 = vld [vmem:[%s698 + $0xb0] sm:$0xff]
        %v4705 = vld [vmem:[%s698 + $0xc0] sm:$0xff]
        %v4706 = vld [vmem:[%s698 + $0xc8] sm:$0xff]
        %v4707 = vld [vmem:[%s698 + $0xd8] sm:$0xff]
        %v4708 = vld [vmem:[%s698 + $0xe0] sm:$0xff]
        %v4709 = vld [vmem:[%s698 + $0xf0] sm:$0xff]
        %v4710 = vld [vmem:[%s698 + $0xf8] sm:$0xff]
        %v4711 = vld [vmem:[%s698 + $0x108] sm:$0xff]
        %v4712 = vld [vmem:[%s698 + $0x110] sm:$0xff]
        %v4713 = vld [vmem:[%s698 + $0x120] sm:$0xff]
        %v4714 = vld [vmem:[%s698 + $0x128] sm:$0xff]
        %v4715 = vld [vmem:[%s698 + $0x138] sm:$0xff]
        %v4716 = vld [vmem:[%s698 + $0x140] sm:$0xff]
        %v4717 = vld [vmem:[%s698 + $0x150] sm:$0xff]
        %v4718 = vld [vmem:[%s698 + $0x158] sm:$0xff]
        %v4719 = vld [vmem:[%s698 + $0x168] sm:$0xff]
        %v4720 = vld [vmem:[%s698 + $0x170] sm:$0xff]
        %v4721 = vlaneseq
        %v4722 = vshrl.u32 %v4721, 7
        %v4723 = vsub.s32 2, %v4722
        %v4724 = vrot.slane %v3685, %v4723
        %v4725 = vmul.f32 %v4689, %v4724
        %v4726 = vmul.f32 %v4690, %v4724
        %v4727 = vmul.f32 %v4691, %v4724
        %v4728 = vmul.f32 %v4692, %v4724
        %v4729 = vmul.f32 %v4693, %v4724
        %v4730 = vmul.f32 %v4694, %v4724
        %v4731 = vmul.f32 %v4695, %v4724
        %v4732 = vmul.f32 %v4696, %v4724
        %v4733 = vmul.f32 %v4697, %v4724
        %v4734 = vmul.f32 %v4698, %v4724
        %v4735 = vmul.f32 %v4699, %v4724
        %v4736 = vmul.f32 %v4700, %v4724
        %v4737 = vmul.f32 %v4701, %v4724
        %v4738 = vmul.f32 %v4702, %v4724
        %v4739 = vmul.f32 %v4703, %v4724
        %v4740 = vmul.f32 %v4704, %v4724
        %v4741 = vmul.f32 %v4705, %v4724
        %v4742 = vmul.f32 %v4706, %v4724
        %v4743 = vmul.f32 %v4707, %v4724
        %v4744 = vmul.f32 %v4708, %v4724
        %v4745 = vmul.f32 %v4709, %v4724
        %v4746 = vmul.f32 %v4710, %v4724
        %v4747 = vmul.f32 %v4711, %v4724
        %v4748 = vmul.f32 %v4712, %v4724
        %v4749 = vmul.f32 %v4713, %v4724
        %v4750 = vmul.f32 %v4714, %v4724
        %v4751 = vmul.f32 %v4715, %v4724
        %v4752 = vmul.f32 %v4716, %v4724
        %v4753 = vmul.f32 %v4717, %v4724
        %v4754 = vmul.f32 %v4718, %v4724
        %v4755 = vmul.f32 %v4719, %v4724
        %v4756 = vmul.f32 %v4720, %v4724
        %v4757 = vadd.f32 %v4657, %v4725
        %v4758 = vadd.f32 %v4658, %v4726
        %v4759 = vadd.f32 %v4659, %v4727
        %v4760 = vadd.f32 %v4660, %v4728
        %v4761 = vadd.f32 %v4661, %v4729
        %v4762 = vadd.f32 %v4662, %v4730
        %v4763 = vadd.f32 %v4663, %v4731
        %v4764 = vadd.f32 %v4664, %v4732
        %v4765 = vadd.f32 %v4665, %v4733
        %v4766 = vadd.f32 %v4666, %v4734
        %v4767 = vadd.f32 %v4667, %v4735
        %v4768 = vadd.f32 %v4668, %v4736
        %v4769 = vadd.f32 %v4669, %v4737
        %v4770 = vadd.f32 %v4670, %v4738
        %v4771 = vadd.f32 %v4671, %v4739
        %v4772 = vadd.f32 %v4672, %v4740
        %v4773 = vadd.f32 %v4673, %v4741
        %v4774 = vadd.f32 %v4674, %v4742
        %v4775 = vadd.f32 %v4675, %v4743
        %v4776 = vadd.f32 %v4676, %v4744
        %v4777 = vadd.f32 %v4677, %v4745
        %v4778 = vadd.f32 %v4678, %v4746
        %v4779 = vadd.f32 %v4679, %v4747
        %v4780 = vadd.f32 %v4680, %v4748
        %v4781 = vadd.f32 %v4681, %v4749
        %v4782 = vadd.f32 %v4682, %v4750
        %v4783 = vadd.f32 %v4683, %v4751
        %v4784 = vadd.f32 %v4684, %v4752
        %v4785 = vadd.f32 %v4685, %v4753
        %v4786 = vadd.f32 %v4686, %v4754
        %v4787 = vadd.f32 %v4687, %v4755
        %v4788 = vadd.f32 %v4688, %v4756
        %v4789 = vld [vmem:[%s698 + $0x1] sm:$0xff]
        %v4790 = vld [vmem:[%s698 + $0x9] sm:$0xff]
        %v4791 = vld [vmem:[%s698 + $0x19] sm:$0xff]
        %v4792 = vld [vmem:[%s698 + $0x21] sm:$0xff]
        %v4793 = vld [vmem:[%s698 + $0x31] sm:$0xff]
        %v4794 = vld [vmem:[%s698 + $0x39] sm:$0xff]
        %v4795 = vld [vmem:[%s698 + $0x49] sm:$0xff]
        %v4796 = vld [vmem:[%s698 + $0x51] sm:$0xff]
        %v4797 = vld [vmem:[%s698 + $0x61] sm:$0xff]
        %v4798 = vld [vmem:[%s698 + $0x69] sm:$0xff]
        %v4799 = vld [vmem:[%s698 + $0x79] sm:$0xff]
        %v4800 = vld [vmem:[%s698 + $0x81] sm:$0xff]
        %v4801 = vld [vmem:[%s698 + $0x91] sm:$0xff]
        %v4802 = vld [vmem:[%s698 + $0x99] sm:$0xff]
        %v4803 = vld [vmem:[%s698 + $0xa9] sm:$0xff]
        %v4804 = vld [vmem:[%s698 + $0xb1] sm:$0xff]
        %v4805 = vld [vmem:[%s698 + $0xc1] sm:$0xff]
        %v4806 = vld [vmem:[%s698 + $0xc9] sm:$0xff]
        %v4807 = vld [vmem:[%s698 + $0xd9] sm:$0xff]
        %v4808 = vld [vmem:[%s698 + $0xe1] sm:$0xff]
        %v4809 = vld [vmem:[%s698 + $0xf1] sm:$0xff]
        %v4810 = vld [vmem:[%s698 + $0xf9] sm:$0xff]
        %v4811 = vld [vmem:[%s698 + $0x109] sm:$0xff]
        %v4812 = vld [vmem:[%s698 + $0x111] sm:$0xff]
        %v4813 = vld [vmem:[%s698 + $0x121] sm:$0xff]
        %v4814 = vld [vmem:[%s698 + $0x129] sm:$0xff]
        %v4815 = vld [vmem:[%s698 + $0x139] sm:$0xff]
        %v4816 = vld [vmem:[%s698 + $0x141] sm:$0xff]
        %v4817 = vld [vmem:[%s698 + $0x151] sm:$0xff]
        %v4818 = vld [vmem:[%s698 + $0x159] sm:$0xff]
        %v4819 = vld [vmem:[%s698 + $0x169] sm:$0xff]
        %v4820 = vld [vmem:[%s698 + $0x171] sm:$0xff]
        %v4821 = vlaneseq
        %v4822 = vshrl.u32 %v4821, 7
        %v4823 = vsub.s32 3, %v4822
        %v4824 = vrot.slane %v3685, %v4823
        %v4825 = vmul.f32 %v4789, %v4824
        %v4826 = vmul.f32 %v4790, %v4824
        %v4827 = vmul.f32 %v4791, %v4824
        %v4828 = vmul.f32 %v4792, %v4824
        %v4829 = vmul.f32 %v4793, %v4824
        %v4830 = vmul.f32 %v4794, %v4824
        %v4831 = vmul.f32 %v4795, %v4824
        %v4832 = vmul.f32 %v4796, %v4824
        %v4833 = vmul.f32 %v4797, %v4824
        %v4834 = vmul.f32 %v4798, %v4824
        %v4835 = vmul.f32 %v4799, %v4824
        %v4836 = vmul.f32 %v4800, %v4824
        %v4837 = vmul.f32 %v4801, %v4824
        %v4838 = vmul.f32 %v4802, %v4824
        %v4839 = vmul.f32 %v4803, %v4824
        %v4840 = vmul.f32 %v4804, %v4824
        %v4841 = vmul.f32 %v4805, %v4824
        %v4842 = vmul.f32 %v4806, %v4824
        %v4843 = vmul.f32 %v4807, %v4824
        %v4844 = vmul.f32 %v4808, %v4824
        %v4845 = vmul.f32 %v4809, %v4824
        %v4846 = vmul.f32 %v4810, %v4824
        %v4847 = vmul.f32 %v4811, %v4824
        %v4848 = vmul.f32 %v4812, %v4824
        %v4849 = vmul.f32 %v4813, %v4824
        %v4850 = vmul.f32 %v4814, %v4824
        %v4851 = vmul.f32 %v4815, %v4824
        %v4852 = vmul.f32 %v4816, %v4824
        %v4853 = vmul.f32 %v4817, %v4824
        %v4854 = vmul.f32 %v4818, %v4824
        %v4855 = vmul.f32 %v4819, %v4824
        %v4856 = vmul.f32 %v4820, %v4824
        %v4857 = vadd.f32 %v4757, %v4825
        %v4858 = vadd.f32 %v4758, %v4826
        %v4859 = vadd.f32 %v4759, %v4827
        %v4860 = vadd.f32 %v4760, %v4828
        %v4861 = vadd.f32 %v4761, %v4829
        %v4862 = vadd.f32 %v4762, %v4830
        %v4863 = vadd.f32 %v4763, %v4831
        %v4864 = vadd.f32 %v4764, %v4832
        %v4865 = vadd.f32 %v4765, %v4833
        %v4866 = vadd.f32 %v4766, %v4834
        %v4867 = vadd.f32 %v4767, %v4835
        %v4868 = vadd.f32 %v4768, %v4836
        %v4869 = vadd.f32 %v4769, %v4837
        %v4870 = vadd.f32 %v4770, %v4838
        %v4871 = vadd.f32 %v4771, %v4839
        %v4872 = vadd.f32 %v4772, %v4840
        %v4873 = vadd.f32 %v4773, %v4841
        %v4874 = vadd.f32 %v4774, %v4842
        %v4875 = vadd.f32 %v4775, %v4843
        %v4876 = vadd.f32 %v4776, %v4844
        %v4877 = vadd.f32 %v4777, %v4845
        %v4878 = vadd.f32 %v4778, %v4846
        %v4879 = vadd.f32 %v4779, %v4847
        %v4880 = vadd.f32 %v4780, %v4848
        %v4881 = vadd.f32 %v4781, %v4849
        %v4882 = vadd.f32 %v4782, %v4850
        %v4883 = vadd.f32 %v4783, %v4851
        %v4884 = vadd.f32 %v4784, %v4852
        %v4885 = vadd.f32 %v4785, %v4853
        %v4886 = vadd.f32 %v4786, %v4854
        %v4887 = vadd.f32 %v4787, %v4855
        %v4888 = vadd.f32 %v4788, %v4856
        %v4889 = vld [vmem:[%s698 + $0x2] sm:$0xff]
        %v4890 = vld [vmem:[%s698 + $0xa] sm:$0xff]
        %v4891 = vld [vmem:[%s698 + $0x1a] sm:$0xff]
        %v4892 = vld [vmem:[%s698 + $0x22] sm:$0xff]
        %v4893 = vld [vmem:[%s698 + $0x32] sm:$0xff]
        %v4894 = vld [vmem:[%s698 + $0x3a] sm:$0xff]
        %v4895 = vld [vmem:[%s698 + $0x4a] sm:$0xff]
        %v4896 = vld [vmem:[%s698 + $0x52] sm:$0xff]
        %v4897 = vld [vmem:[%s698 + $0x62] sm:$0xff]
        %v4898 = vld [vmem:[%s698 + $0x6a] sm:$0xff]
        %v4899 = vld [vmem:[%s698 + $0x7a] sm:$0xff]
        %v4900 = vld [vmem:[%s698 + $0x82] sm:$0xff]
        %v4901 = vld [vmem:[%s698 + $0x92] sm:$0xff]
        %v4902 = vld [vmem:[%s698 + $0x9a] sm:$0xff]
        %v4903 = vld [vmem:[%s698 + $0xaa] sm:$0xff]
        %v4904 = vld [vmem:[%s698 + $0xb2] sm:$0xff]
        %v4905 = vld [vmem:[%s698 + $0xc2] sm:$0xff]
        %v4906 = vld [vmem:[%s698 + $0xca] sm:$0xff]
        %v4907 = vld [vmem:[%s698 + $0xda] sm:$0xff]
        %v4908 = vld [vmem:[%s698 + $0xe2] sm:$0xff]
        %v4909 = vld [vmem:[%s698 + $0xf2] sm:$0xff]
        %v4910 = vld [vmem:[%s698 + $0xfa] sm:$0xff]
        %v4911 = vld [vmem:[%s698 + $0x10a] sm:$0xff]
        %v4912 = vld [vmem:[%s698 + $0x112] sm:$0xff]
        %v4913 = vld [vmem:[%s698 + $0x122] sm:$0xff]
        %v4914 = vld [vmem:[%s698 + $0x12a] sm:$0xff]
        %v4915 = vld [vmem:[%s698 + $0x13a] sm:$0xff]
        %v4916 = vld [vmem:[%s698 + $0x142] sm:$0xff]
        %v4917 = vld [vmem:[%s698 + $0x152] sm:$0xff]
        %v4918 = vld [vmem:[%s698 + $0x15a] sm:$0xff]
        %v4919 = vld [vmem:[%s698 + $0x16a] sm:$0xff]
        %v4920 = vld [vmem:[%s698 + $0x172] sm:$0xff]
        %v4921 = vlaneseq
        %v4922 = vshrl.u32 %v4921, 7
        %v4923 = vsub.s32 4, %v4922
        %v4924 = vrot.slane %v3685, %v4923
        %v4925 = vmul.f32 %v4889, %v4924
        %v4926 = vmul.f32 %v4890, %v4924
        %v4927 = vmul.f32 %v4891, %v4924
        %v4928 = vmul.f32 %v4892, %v4924
        %v4929 = vmul.f32 %v4893, %v4924
        %v4930 = vmul.f32 %v4894, %v4924
        %v4931 = vmul.f32 %v4895, %v4924
        %v4932 = vmul.f32 %v4896, %v4924
        %v4933 = vmul.f32 %v4897, %v4924
        %v4934 = vmul.f32 %v4898, %v4924
        %v4935 = vmul.f32 %v4899, %v4924
        %v4936 = vmul.f32 %v4900, %v4924
        %v4937 = vmul.f32 %v4901, %v4924
        %v4938 = vmul.f32 %v4902, %v4924
        %v4939 = vmul.f32 %v4903, %v4924
        %v4940 = vmul.f32 %v4904, %v4924
        %v4941 = vmul.f32 %v4905, %v4924
        %v4942 = vmul.f32 %v4906, %v4924
        %v4943 = vmul.f32 %v4907, %v4924
        %v4944 = vmul.f32 %v4908, %v4924
        %v4945 = vmul.f32 %v4909, %v4924
        %v4946 = vmul.f32 %v4910, %v4924
        %v4947 = vmul.f32 %v4911, %v4924
        %v4948 = vmul.f32 %v4912, %v4924
        %v4949 = vmul.f32 %v4913, %v4924
        %v4950 = vmul.f32 %v4914, %v4924
        %v4951 = vmul.f32 %v4915, %v4924
        %v4952 = vmul.f32 %v4916, %v4924
        %v4953 = vmul.f32 %v4917, %v4924
        %v4954 = vmul.f32 %v4918, %v4924
        %v4955 = vmul.f32 %v4919, %v4924
        %v4956 = vmul.f32 %v4920, %v4924
        %v4957 = vadd.f32 %v4857, %v4925
        %v4958 = vadd.f32 %v4858, %v4926
        %v4959 = vadd.f32 %v4859, %v4927
        %v4960 = vadd.f32 %v4860, %v4928
        %v4961 = vadd.f32 %v4861, %v4929
        %v4962 = vadd.f32 %v4862, %v4930
        %v4963 = vadd.f32 %v4863, %v4931
        %v4964 = vadd.f32 %v4864, %v4932
        %v4965 = vadd.f32 %v4865, %v4933
        %v4966 = vadd.f32 %v4866, %v4934
        %v4967 = vadd.f32 %v4867, %v4935
        %v4968 = vadd.f32 %v4868, %v4936
        %v4969 = vadd.f32 %v4869, %v4937
        %v4970 = vadd.f32 %v4870, %v4938
        %v4971 = vadd.f32 %v4871, %v4939
        %v4972 = vadd.f32 %v4872, %v4940
        %v4973 = vadd.f32 %v4873, %v4941
        %v4974 = vadd.f32 %v4874, %v4942
        %v4975 = vadd.f32 %v4875, %v4943
        %v4976 = vadd.f32 %v4876, %v4944
        %v4977 = vadd.f32 %v4877, %v4945
        %v4978 = vadd.f32 %v4878, %v4946
        %v4979 = vadd.f32 %v4879, %v4947
        %v4980 = vadd.f32 %v4880, %v4948
        %v4981 = vadd.f32 %v4881, %v4949
        %v4982 = vadd.f32 %v4882, %v4950
        %v4983 = vadd.f32 %v4883, %v4951
        %v4984 = vadd.f32 %v4884, %v4952
        %v4985 = vadd.f32 %v4885, %v4953
        %v4986 = vadd.f32 %v4886, %v4954
        %v4987 = vadd.f32 %v4887, %v4955
        %v4988 = vadd.f32 %v4888, %v4956
        %v4989 = vld [vmem:[%s698 + $0x3] sm:$0xff]
        %v4990 = vld [vmem:[%s698 + $0xb] sm:$0xff]
        %v4991 = vld [vmem:[%s698 + $0x1b] sm:$0xff]
        %v4992 = vld [vmem:[%s698 + $0x23] sm:$0xff]
        %v4993 = vld [vmem:[%s698 + $0x33] sm:$0xff]
        %v4994 = vld [vmem:[%s698 + $0x3b] sm:$0xff]
        %v4995 = vld [vmem:[%s698 + $0x4b] sm:$0xff]
        %v4996 = vld [vmem:[%s698 + $0x53] sm:$0xff]
        %v4997 = vld [vmem:[%s698 + $0x63] sm:$0xff]
        %v4998 = vld [vmem:[%s698 + $0x6b] sm:$0xff]
        %v4999 = vld [vmem:[%s698 + $0x7b] sm:$0xff]
        %v5000 = vld [vmem:[%s698 + $0x83] sm:$0xff]
        %v5001 = vld [vmem:[%s698 + $0x93] sm:$0xff]
        %v5002 = vld [vmem:[%s698 + $0x9b] sm:$0xff]
        %v5003 = vld [vmem:[%s698 + $0xab] sm:$0xff]
        %v5004 = vld [vmem:[%s698 + $0xb3] sm:$0xff]
        %v5005 = vld [vmem:[%s698 + $0xc3] sm:$0xff]
        %v5006 = vld [vmem:[%s698 + $0xcb] sm:$0xff]
        %v5007 = vld [vmem:[%s698 + $0xdb] sm:$0xff]
        %v5008 = vld [vmem:[%s698 + $0xe3] sm:$0xff]
        %v5009 = vld [vmem:[%s698 + $0xf3] sm:$0xff]
        %v5010 = vld [vmem:[%s698 + $0xfb] sm:$0xff]
        %v5011 = vld [vmem:[%s698 + $0x10b] sm:$0xff]
        %v5012 = vld [vmem:[%s698 + $0x113] sm:$0xff]
        %v5013 = vld [vmem:[%s698 + $0x123] sm:$0xff]
        %v5014 = vld [vmem:[%s698 + $0x12b] sm:$0xff]
        %v5015 = vld [vmem:[%s698 + $0x13b] sm:$0xff]
        %v5016 = vld [vmem:[%s698 + $0x143] sm:$0xff]
        %v5017 = vld [vmem:[%s698 + $0x153] sm:$0xff]
        %v5018 = vld [vmem:[%s698 + $0x15b] sm:$0xff]
        %v5019 = vld [vmem:[%s698 + $0x16b] sm:$0xff]
        %v5020 = vld [vmem:[%s698 + $0x173] sm:$0xff]
        %v5021 = vlaneseq
        %v5022 = vshrl.u32 %v5021, 7
        %v5023 = vsub.s32 5, %v5022
        %v5024 = vrot.slane %v3685, %v5023
        %v5025 = vmul.f32 %v4989, %v5024
        %v5026 = vmul.f32 %v4990, %v5024
        %v5027 = vmul.f32 %v4991, %v5024
        %v5028 = vmul.f32 %v4992, %v5024
        %v5029 = vmul.f32 %v4993, %v5024
        %v5030 = vmul.f32 %v4994, %v5024
        %v5031 = vmul.f32 %v4995, %v5024
        %v5032 = vmul.f32 %v4996, %v5024
        %v5033 = vmul.f32 %v4997, %v5024
        %v5034 = vmul.f32 %v4998, %v5024
        %v5035 = vmul.f32 %v4999, %v5024
        %v5036 = vmul.f32 %v5000, %v5024
        %v5037 = vmul.f32 %v5001, %v5024
        %v5038 = vmul.f32 %v5002, %v5024
        %v5039 = vmul.f32 %v5003, %v5024
        %v5040 = vmul.f32 %v5004, %v5024
        %v5041 = vmul.f32 %v5005, %v5024
        %v5042 = vmul.f32 %v5006, %v5024
        %v5043 = vmul.f32 %v5007, %v5024
        %v5044 = vmul.f32 %v5008, %v5024
        %v5045 = vmul.f32 %v5009, %v5024
        %v5046 = vmul.f32 %v5010, %v5024
        %v5047 = vmul.f32 %v5011, %v5024
        %v5048 = vmul.f32 %v5012, %v5024
        %v5049 = vmul.f32 %v5013, %v5024
        %v5050 = vmul.f32 %v5014, %v5024
        %v5051 = vmul.f32 %v5015, %v5024
        %v5052 = vmul.f32 %v5016, %v5024
        %v5053 = vmul.f32 %v5017, %v5024
        %v5054 = vmul.f32 %v5018, %v5024
        %v5055 = vmul.f32 %v5019, %v5024
        %v5056 = vmul.f32 %v5020, %v5024
        %v5057 = vadd.f32 %v4957, %v5025
        %v5058 = vadd.f32 %v4958, %v5026
        %v5059 = vadd.f32 %v4959, %v5027
        %v5060 = vadd.f32 %v4960, %v5028
        %v5061 = vadd.f32 %v4961, %v5029
        %v5062 = vadd.f32 %v4962, %v5030
        %v5063 = vadd.f32 %v4963, %v5031
        %v5064 = vadd.f32 %v4964, %v5032
        %v5065 = vadd.f32 %v4965, %v5033
        %v5066 = vadd.f32 %v4966, %v5034
        %v5067 = vadd.f32 %v4967, %v5035
        %v5068 = vadd.f32 %v4968, %v5036
        %v5069 = vadd.f32 %v4969, %v5037
        %v5070 = vadd.f32 %v4970, %v5038
        %v5071 = vadd.f32 %v4971, %v5039
        %v5072 = vadd.f32 %v4972, %v5040
        %v5073 = vadd.f32 %v4973, %v5041
        %v5074 = vadd.f32 %v4974, %v5042
        %v5075 = vadd.f32 %v4975, %v5043
        %v5076 = vadd.f32 %v4976, %v5044
        %v5077 = vadd.f32 %v4977, %v5045
        %v5078 = vadd.f32 %v4978, %v5046
        %v5079 = vadd.f32 %v4979, %v5047
        %v5080 = vadd.f32 %v4980, %v5048
        %v5081 = vadd.f32 %v4981, %v5049
        %v5082 = vadd.f32 %v4982, %v5050
        %v5083 = vadd.f32 %v4983, %v5051
        %v5084 = vadd.f32 %v4984, %v5052
        %v5085 = vadd.f32 %v4985, %v5053
        %v5086 = vadd.f32 %v4986, %v5054
        %v5087 = vadd.f32 %v4987, %v5055
        %v5088 = vadd.f32 %v4988, %v5056
        %v5089 = vld [vmem:[%s698 + $0x4] sm:$0xff]
        %v5090 = vld [vmem:[%s698 + $0xc] sm:$0xff]
        %v5091 = vld [vmem:[%s698 + $0x1c] sm:$0xff]
        %v5092 = vld [vmem:[%s698 + $0x24] sm:$0xff]
        %v5093 = vld [vmem:[%s698 + $0x34] sm:$0xff]
        %v5094 = vld [vmem:[%s698 + $0x3c] sm:$0xff]
        %v5095 = vld [vmem:[%s698 + $0x4c] sm:$0xff]
        %v5096 = vld [vmem:[%s698 + $0x54] sm:$0xff]
        %v5097 = vld [vmem:[%s698 + $0x64] sm:$0xff]
        %v5098 = vld [vmem:[%s698 + $0x6c] sm:$0xff]
        %v5099 = vld [vmem:[%s698 + $0x7c] sm:$0xff]
        %v5100 = vld [vmem:[%s698 + $0x84] sm:$0xff]
        %v5101 = vld [vmem:[%s698 + $0x94] sm:$0xff]
        %v5102 = vld [vmem:[%s698 + $0x9c] sm:$0xff]
        %v5103 = vld [vmem:[%s698 + $0xac] sm:$0xff]
        %v5104 = vld [vmem:[%s698 + $0xb4] sm:$0xff]
        %v5105 = vld [vmem:[%s698 + $0xc4] sm:$0xff]
        %v5106 = vld [vmem:[%s698 + $0xcc] sm:$0xff]
        %v5107 = vld [vmem:[%s698 + $0xdc] sm:$0xff]
        %v5108 = vld [vmem:[%s698 + $0xe4] sm:$0xff]
        %v5109 = vld [vmem:[%s698 + $0xf4] sm:$0xff]
        %v5110 = vld [vmem:[%s698 + $0xfc] sm:$0xff]
        %v5111 = vld [vmem:[%s698 + $0x10c] sm:$0xff]
        %v5112 = vld [vmem:[%s698 + $0x114] sm:$0xff]
        %v5113 = vld [vmem:[%s698 + $0x124] sm:$0xff]
        %v5114 = vld [vmem:[%s698 + $0x12c] sm:$0xff]
        %v5115 = vld [vmem:[%s698 + $0x13c] sm:$0xff]
        %v5116 = vld [vmem:[%s698 + $0x144] sm:$0xff]
        %v5117 = vld [vmem:[%s698 + $0x154] sm:$0xff]
        %v5118 = vld [vmem:[%s698 + $0x15c] sm:$0xff]
        %v5119 = vld [vmem:[%s698 + $0x16c] sm:$0xff]
        %v5120 = vld [vmem:[%s698 + $0x174] sm:$0xff]
        %v5121 = vlaneseq
        %v5122 = vshrl.u32 %v5121, 7
        %v5123 = vsub.s32 6, %v5122
        %v5124 = vrot.slane %v3685, %v5123
        %v5125 = vmul.f32 %v5089, %v5124
        %v5126 = vmul.f32 %v5090, %v5124
        %v5127 = vmul.f32 %v5091, %v5124
        %v5128 = vmul.f32 %v5092, %v5124
        %v5129 = vmul.f32 %v5093, %v5124
        %v5130 = vmul.f32 %v5094, %v5124
        %v5131 = vmul.f32 %v5095, %v5124
        %v5132 = vmul.f32 %v5096, %v5124
        %v5133 = vmul.f32 %v5097, %v5124
        %v5134 = vmul.f32 %v5098, %v5124
        %v5135 = vmul.f32 %v5099, %v5124
        %v5136 = vmul.f32 %v5100, %v5124
        %v5137 = vmul.f32 %v5101, %v5124
        %v5138 = vmul.f32 %v5102, %v5124
        %v5139 = vmul.f32 %v5103, %v5124
        %v5140 = vmul.f32 %v5104, %v5124
        %v5141 = vmul.f32 %v5105, %v5124
        %v5142 = vmul.f32 %v5106, %v5124
        %v5143 = vmul.f32 %v5107, %v5124
        %v5144 = vmul.f32 %v5108, %v5124
        %v5145 = vmul.f32 %v5109, %v5124
        %v5146 = vmul.f32 %v5110, %v5124
        %v5147 = vmul.f32 %v5111, %v5124
        %v5148 = vmul.f32 %v5112, %v5124
        %v5149 = vmul.f32 %v5113, %v5124
        %v5150 = vmul.f32 %v5114, %v5124
        %v5151 = vmul.f32 %v5115, %v5124
        %v5152 = vmul.f32 %v5116, %v5124
        %v5153 = vmul.f32 %v5117, %v5124
        %v5154 = vmul.f32 %v5118, %v5124
        %v5155 = vmul.f32 %v5119, %v5124
        %v5156 = vmul.f32 %v5120, %v5124
        %v5157 = vadd.f32 %v5057, %v5125
        %v5158 = vadd.f32 %v5058, %v5126
        %v5159 = vadd.f32 %v5059, %v5127
        %v5160 = vadd.f32 %v5060, %v5128
        %v5161 = vadd.f32 %v5061, %v5129
        %v5162 = vadd.f32 %v5062, %v5130
        %v5163 = vadd.f32 %v5063, %v5131
        %v5164 = vadd.f32 %v5064, %v5132
        %v5165 = vadd.f32 %v5065, %v5133
        %v5166 = vadd.f32 %v5066, %v5134
        %v5167 = vadd.f32 %v5067, %v5135
        %v5168 = vadd.f32 %v5068, %v5136
        %v5169 = vadd.f32 %v5069, %v5137
        %v5170 = vadd.f32 %v5070, %v5138
        %v5171 = vadd.f32 %v5071, %v5139
        %v5172 = vadd.f32 %v5072, %v5140
        %v5173 = vadd.f32 %v5073, %v5141
        %v5174 = vadd.f32 %v5074, %v5142
        %v5175 = vadd.f32 %v5075, %v5143
        %v5176 = vadd.f32 %v5076, %v5144
        %v5177 = vadd.f32 %v5077, %v5145
        %v5178 = vadd.f32 %v5078, %v5146
        %v5179 = vadd.f32 %v5079, %v5147
        %v5180 = vadd.f32 %v5080, %v5148
        %v5181 = vadd.f32 %v5081, %v5149
        %v5182 = vadd.f32 %v5082, %v5150
        %v5183 = vadd.f32 %v5083, %v5151
        %v5184 = vadd.f32 %v5084, %v5152
        %v5185 = vadd.f32 %v5085, %v5153
        %v5186 = vadd.f32 %v5086, %v5154
        %v5187 = vadd.f32 %v5087, %v5155
        %v5188 = vadd.f32 %v5088, %v5156
        %s5189 = scalar_lea.vmem [#allocation3], 72
        %v5190 = vld [vmem:[%s5189] sm:$0xff]
        %v5191 = vld [vmem:[%s5189 + $0x8] sm:$0xff]
        %v5192 = vld [vmem:[%s5189 + $0x18] sm:$0xff]
        %v5193 = vld [vmem:[%s5189 + $0x20] sm:$0xff]
        %v5194 = vld [vmem:[%s5189 + $0x30] sm:$0xff]
        %v5195 = vld [vmem:[%s5189 + $0x38] sm:$0xff]
        %v5196 = vld [vmem:[%s5189 + $0x48] sm:$0xff]
        %v5197 = vld [vmem:[%s5189 + $0x50] sm:$0xff]
        %v5198 = vld [vmem:[%s5189 + $0x60] sm:$0xff]
        %v5199 = vld [vmem:[%s5189 + $0x68] sm:$0xff]
        %v5200 = vld [vmem:[%s5189 + $0x78] sm:$0xff]
        %v5201 = vld [vmem:[%s5189 + $0x80] sm:$0xff]
        %v5202 = vld [vmem:[%s5189 + $0x90] sm:$0xff]
        %v5203 = vld [vmem:[%s5189 + $0x98] sm:$0xff]
        %v5204 = vld [vmem:[%s5189 + $0xa8] sm:$0xff]
        %v5205 = vld [vmem:[%s5189 + $0xb0] sm:$0xff]
        %v5206 = vld [vmem:[%s5189 + $0xc0] sm:$0xff]
        %v5207 = vld [vmem:[%s5189 + $0xc8] sm:$0xff]
        %v5208 = vld [vmem:[%s5189 + $0xd8] sm:$0xff]
        %v5209 = vld [vmem:[%s5189 + $0xe0] sm:$0xff]
        %v5210 = vld [vmem:[%s5189 + $0xf0] sm:$0xff]
        %v5211 = vld [vmem:[%s5189 + $0xf8] sm:$0xff]
        %v5212 = vld [vmem:[%s5189 + $0x108] sm:$0xff]
        %v5213 = vld [vmem:[%s5189 + $0x110] sm:$0xff]
        %v5214 = vld [vmem:[%s5189 + $0x120] sm:$0xff]
        %v5215 = vld [vmem:[%s5189 + $0x128] sm:$0xff]
        %v5216 = vld [vmem:[%s5189 + $0x138] sm:$0xff]
        %v5217 = vld [vmem:[%s5189 + $0x140] sm:$0xff]
        %v5218 = vld [vmem:[%s5189 + $0x150] sm:$0xff]
        %v5219 = vld [vmem:[%s5189 + $0x158] sm:$0xff]
        %v5220 = vld [vmem:[%s5189 + $0x168] sm:$0xff]
        %v5221 = vld [vmem:[%s5189 + $0x170] sm:$0xff]
        %v5222 = vlaneseq
        %v5223 = vshrl.u32 %v5222, 7
        %v5224 = vsub.s32 7, %v5223
        %v5225 = vrot.slane %v3685, %v5224
        %v5226 = vmul.f32 %v5190, %v5225
        %v5227 = vmul.f32 %v5191, %v5225
        %v5228 = vmul.f32 %v5192, %v5225
        %v5229 = vmul.f32 %v5193, %v5225
        %v5230 = vmul.f32 %v5194, %v5225
        %v5231 = vmul.f32 %v5195, %v5225
        %v5232 = vmul.f32 %v5196, %v5225
        %v5233 = vmul.f32 %v5197, %v5225
        %v5234 = vmul.f32 %v5198, %v5225
        %v5235 = vmul.f32 %v5199, %v5225
        %v5236 = vmul.f32 %v5200, %v5225
        %v5237 = vmul.f32 %v5201, %v5225
        %v5238 = vmul.f32 %v5202, %v5225
        %v5239 = vmul.f32 %v5203, %v5225
        %v5240 = vmul.f32 %v5204, %v5225
        %v5241 = vmul.f32 %v5205, %v5225
        %v5242 = vmul.f32 %v5206, %v5225
        %v5243 = vmul.f32 %v5207, %v5225
        %v5244 = vmul.f32 %v5208, %v5225
        %v5245 = vmul.f32 %v5209, %v5225
        %v5246 = vmul.f32 %v5210, %v5225
        %v5247 = vmul.f32 %v5211, %v5225
        %v5248 = vmul.f32 %v5212, %v5225
        %v5249 = vmul.f32 %v5213, %v5225
        %v5250 = vmul.f32 %v5214, %v5225
        %v5251 = vmul.f32 %v5215, %v5225
        %v5252 = vmul.f32 %v5216, %v5225
        %v5253 = vmul.f32 %v5217, %v5225
        %v5254 = vmul.f32 %v5218, %v5225
        %v5255 = vmul.f32 %v5219, %v5225
        %v5256 = vmul.f32 %v5220, %v5225
        %v5257 = vmul.f32 %v5221, %v5225
        %v5258 = vadd.f32 %v5157, %v5226
        %v5259 = vadd.f32 %v5158, %v5227
        %v5260 = vadd.f32 %v5159, %v5228
        %v5261 = vadd.f32 %v5160, %v5229
        %v5262 = vadd.f32 %v5161, %v5230
        %v5263 = vadd.f32 %v5162, %v5231
        %v5264 = vadd.f32 %v5163, %v5232
        %v5265 = vadd.f32 %v5164, %v5233
        %v5266 = vadd.f32 %v5165, %v5234
        %v5267 = vadd.f32 %v5166, %v5235
        %v5268 = vadd.f32 %v5167, %v5236
        %v5269 = vadd.f32 %v5168, %v5237
        %v5270 = vadd.f32 %v5169, %v5238
        %v5271 = vadd.f32 %v5170, %v5239
        %v5272 = vadd.f32 %v5171, %v5240
        %v5273 = vadd.f32 %v5172, %v5241
        %v5274 = vadd.f32 %v5173, %v5242
        %v5275 = vadd.f32 %v5174, %v5243
        %v5276 = vadd.f32 %v5175, %v5244
        %v5277 = vadd.f32 %v5176, %v5245
        %v5278 = vadd.f32 %v5177, %v5246
        %v5279 = vadd.f32 %v5178, %v5247
        %v5280 = vadd.f32 %v5179, %v5248
        %v5281 = vadd.f32 %v5180, %v5249
        %v5282 = vadd.f32 %v5181, %v5250
        %v5283 = vadd.f32 %v5182, %v5251
        %v5284 = vadd.f32 %v5183, %v5252
        %v5285 = vadd.f32 %v5184, %v5253
        %v5286 = vadd.f32 %v5185, %v5254
        %v5287 = vadd.f32 %v5186, %v5255
        %v5288 = vadd.f32 %v5187, %v5256
        %v5289 = vadd.f32 %v5188, %v5257
        %v5290 = vld [vmem:[%s5189 + $0x1] sm:$0xff]
        %v5291 = vld [vmem:[%s5189 + $0x9] sm:$0xff]
        %v5292 = vld [vmem:[%s5189 + $0x19] sm:$0xff]
        %v5293 = vld [vmem:[%s5189 + $0x21] sm:$0xff]
        %v5294 = vld [vmem:[%s5189 + $0x31] sm:$0xff]
        %v5295 = vld [vmem:[%s5189 + $0x39] sm:$0xff]
        %v5296 = vld [vmem:[%s5189 + $0x49] sm:$0xff]
        %v5297 = vld [vmem:[%s5189 + $0x51] sm:$0xff]
        %v5298 = vld [vmem:[%s5189 + $0x61] sm:$0xff]
        %v5299 = vld [vmem:[%s5189 + $0x69] sm:$0xff]
        %v5300 = vld [vmem:[%s5189 + $0x79] sm:$0xff]
        %v5301 = vld [vmem:[%s5189 + $0x81] sm:$0xff]
        %v5302 = vld [vmem:[%s5189 + $0x91] sm:$0xff]
        %v5303 = vld [vmem:[%s5189 + $0x99] sm:$0xff]
        %v5304 = vld [vmem:[%s5189 + $0xa9] sm:$0xff]
        %v5305 = vld [vmem:[%s5189 + $0xb1] sm:$0xff]
        %v5306 = vld [vmem:[%s5189 + $0xc1] sm:$0xff]
        %v5307 = vld [vmem:[%s5189 + $0xc9] sm:$0xff]
        %v5308 = vld [vmem:[%s5189 + $0xd9] sm:$0xff]
        %v5309 = vld [vmem:[%s5189 + $0xe1] sm:$0xff]
        %v5310 = vld [vmem:[%s5189 + $0xf1] sm:$0xff]
        %v5311 = vld [vmem:[%s5189 + $0xf9] sm:$0xff]
        %v5312 = vld [vmem:[%s5189 + $0x109] sm:$0xff]
        %v5313 = vld [vmem:[%s5189 + $0x111] sm:$0xff]
        %v5314 = vld [vmem:[%s5189 + $0x121] sm:$0xff]
        %v5315 = vld [vmem:[%s5189 + $0x129] sm:$0xff]
        %v5316 = vld [vmem:[%s5189 + $0x139] sm:$0xff]
        %v5317 = vld [vmem:[%s5189 + $0x141] sm:$0xff]
        %v5318 = vld [vmem:[%s5189 + $0x151] sm:$0xff]
        %v5319 = vld [vmem:[%s5189 + $0x159] sm:$0xff]
        %v5320 = vld [vmem:[%s5189 + $0x169] sm:$0xff]
        %v5321 = vld [vmem:[%s5189 + $0x171] sm:$0xff]
        %v5322 = vlaneseq
        %v5323 = vshrl.u32 %v5322, 7
        %v5324 = vsub.s32 0, %v5323
        %v5325 = vrot.slane %v3686, %v5324
        %v5326 = vmul.f32 %v5290, %v5325
        %v5327 = vmul.f32 %v5291, %v5325
        %v5328 = vmul.f32 %v5292, %v5325
        %v5329 = vmul.f32 %v5293, %v5325
        %v5330 = vmul.f32 %v5294, %v5325
        %v5331 = vmul.f32 %v5295, %v5325
        %v5332 = vmul.f32 %v5296, %v5325
        %v5333 = vmul.f32 %v5297, %v5325
        %v5334 = vmul.f32 %v5298, %v5325
        %v5335 = vmul.f32 %v5299, %v5325
        %v5336 = vmul.f32 %v5300, %v5325
        %v5337 = vmul.f32 %v5301, %v5325
        %v5338 = vmul.f32 %v5302, %v5325
        %v5339 = vmul.f32 %v5303, %v5325
        %v5340 = vmul.f32 %v5304, %v5325
        %v5341 = vmul.f32 %v5305, %v5325
        %v5342 = vmul.f32 %v5306, %v5325
        %v5343 = vmul.f32 %v5307, %v5325
        %v5344 = vmul.f32 %v5308, %v5325
        %v5345 = vmul.f32 %v5309, %v5325
        %v5346 = vmul.f32 %v5310, %v5325
        %v5347 = vmul.f32 %v5311, %v5325
        %v5348 = vmul.f32 %v5312, %v5325
        %v5349 = vmul.f32 %v5313, %v5325
        %v5350 = vmul.f32 %v5314, %v5325
        %v5351 = vmul.f32 %v5315, %v5325
        %v5352 = vmul.f32 %v5316, %v5325
        %v5353 = vmul.f32 %v5317, %v5325
        %v5354 = vmul.f32 %v5318, %v5325
        %v5355 = vmul.f32 %v5319, %v5325
        %v5356 = vmul.f32 %v5320, %v5325
        %v5357 = vmul.f32 %v5321, %v5325
        %v5358 = vadd.f32 %v5258, %v5326
        %v5359 = vadd.f32 %v5259, %v5327
        %v5360 = vadd.f32 %v5260, %v5328
        %v5361 = vadd.f32 %v5261, %v5329
        %v5362 = vadd.f32 %v5262, %v5330
        %v5363 = vadd.f32 %v5263, %v5331
        %v5364 = vadd.f32 %v5264, %v5332
        %v5365 = vadd.f32 %v5265, %v5333
        %v5366 = vadd.f32 %v5266, %v5334
        %v5367 = vadd.f32 %v5267, %v5335
        %v5368 = vadd.f32 %v5268, %v5336
        %v5369 = vadd.f32 %v5269, %v5337
        %v5370 = vadd.f32 %v5270, %v5338
        %v5371 = vadd.f32 %v5271, %v5339
        %v5372 = vadd.f32 %v5272, %v5340
        %v5373 = vadd.f32 %v5273, %v5341
        %v5374 = vadd.f32 %v5274, %v5342
        %v5375 = vadd.f32 %v5275, %v5343
        %v5376 = vadd.f32 %v5276, %v5344
        %v5377 = vadd.f32 %v5277, %v5345
        %v5378 = vadd.f32 %v5278, %v5346
        %v5379 = vadd.f32 %v5279, %v5347
        %v5380 = vadd.f32 %v5280, %v5348
        %v5381 = vadd.f32 %v5281, %v5349
        %v5382 = vadd.f32 %v5282, %v5350
        %v5383 = vadd.f32 %v5283, %v5351
        %v5384 = vadd.f32 %v5284, %v5352
        %v5385 = vadd.f32 %v5285, %v5353
        %v5386 = vadd.f32 %v5286, %v5354
        %v5387 = vadd.f32 %v5287, %v5355
        %v5388 = vadd.f32 %v5288, %v5356
        %v5389 = vadd.f32 %v5289, %v5357
        %v5390 = vld [vmem:[%s5189 + $0x2] sm:$0xff]
        %v5391 = vld [vmem:[%s5189 + $0xa] sm:$0xff]
        %v5392 = vld [vmem:[%s5189 + $0x1a] sm:$0xff]
        %v5393 = vld [vmem:[%s5189 + $0x22] sm:$0xff]
        %v5394 = vld [vmem:[%s5189 + $0x32] sm:$0xff]
        %v5395 = vld [vmem:[%s5189 + $0x3a] sm:$0xff]
        %v5396 = vld [vmem:[%s5189 + $0x4a] sm:$0xff]
        %v5397 = vld [vmem:[%s5189 + $0x52] sm:$0xff]
        %v5398 = vld [vmem:[%s5189 + $0x62] sm:$0xff]
        %v5399 = vld [vmem:[%s5189 + $0x6a] sm:$0xff]
        %v5400 = vld [vmem:[%s5189 + $0x7a] sm:$0xff]
        %v5401 = vld [vmem:[%s5189 + $0x82] sm:$0xff]
        %v5402 = vld [vmem:[%s5189 + $0x92] sm:$0xff]
        %v5403 = vld [vmem:[%s5189 + $0x9a] sm:$0xff]
        %v5404 = vld [vmem:[%s5189 + $0xaa] sm:$0xff]
        %v5405 = vld [vmem:[%s5189 + $0xb2] sm:$0xff]
        %v5406 = vld [vmem:[%s5189 + $0xc2] sm:$0xff]
        %v5407 = vld [vmem:[%s5189 + $0xca] sm:$0xff]
        %v5408 = vld [vmem:[%s5189 + $0xda] sm:$0xff]
        %v5409 = vld [vmem:[%s5189 + $0xe2] sm:$0xff]
        %v5410 = vld [vmem:[%s5189 + $0xf2] sm:$0xff]
        %v5411 = vld [vmem:[%s5189 + $0xfa] sm:$0xff]
        %v5412 = vld [vmem:[%s5189 + $0x10a] sm:$0xff]
        %v5413 = vld [vmem:[%s5189 + $0x112] sm:$0xff]
        %v5414 = vld [vmem:[%s5189 + $0x122] sm:$0xff]
        %v5415 = vld [vmem:[%s5189 + $0x12a] sm:$0xff]
        %v5416 = vld [vmem:[%s5189 + $0x13a] sm:$0xff]
        %v5417 = vld [vmem:[%s5189 + $0x142] sm:$0xff]
        %v5418 = vld [vmem:[%s5189 + $0x152] sm:$0xff]
        %v5419 = vld [vmem:[%s5189 + $0x15a] sm:$0xff]
        %v5420 = vld [vmem:[%s5189 + $0x16a] sm:$0xff]
        %v5421 = vld [vmem:[%s5189 + $0x172] sm:$0xff]
        %v5422 = vlaneseq
        %v5423 = vshrl.u32 %v5422, 7
        %v5424 = vsub.s32 1, %v5423
        %v5425 = vrot.slane %v3686, %v5424
        %v5426 = vmul.f32 %v5390, %v5425
        %v5427 = vmul.f32 %v5391, %v5425
        %v5428 = vmul.f32 %v5392, %v5425
        %v5429 = vmul.f32 %v5393, %v5425
        %v5430 = vmul.f32 %v5394, %v5425
        %v5431 = vmul.f32 %v5395, %v5425
        %v5432 = vmul.f32 %v5396, %v5425
        %v5433 = vmul.f32 %v5397, %v5425
        %v5434 = vmul.f32 %v5398, %v5425
        %v5435 = vmul.f32 %v5399, %v5425
        %v5436 = vmul.f32 %v5400, %v5425
        %v5437 = vmul.f32 %v5401, %v5425
        %v5438 = vmul.f32 %v5402, %v5425
        %v5439 = vmul.f32 %v5403, %v5425
        %v5440 = vmul.f32 %v5404, %v5425
        %v5441 = vmul.f32 %v5405, %v5425
        %v5442 = vmul.f32 %v5406, %v5425
        %v5443 = vmul.f32 %v5407, %v5425
        %v5444 = vmul.f32 %v5408, %v5425
        %v5445 = vmul.f32 %v5409, %v5425
        %v5446 = vmul.f32 %v5410, %v5425
        %v5447 = vmul.f32 %v5411, %v5425
        %v5448 = vmul.f32 %v5412, %v5425
        %v5449 = vmul.f32 %v5413, %v5425
        %v5450 = vmul.f32 %v5414, %v5425
        %v5451 = vmul.f32 %v5415, %v5425
        %v5452 = vmul.f32 %v5416, %v5425
        %v5453 = vmul.f32 %v5417, %v5425
        %v5454 = vmul.f32 %v5418, %v5425
        %v5455 = vmul.f32 %v5419, %v5425
        %v5456 = vmul.f32 %v5420, %v5425
        %v5457 = vmul.f32 %v5421, %v5425
        %v5458 = vadd.f32 %v5358, %v5426
        %v5459 = vadd.f32 %v5359, %v5427
        %v5460 = vadd.f32 %v5360, %v5428
        %v5461 = vadd.f32 %v5361, %v5429
        %v5462 = vadd.f32 %v5362, %v5430
        %v5463 = vadd.f32 %v5363, %v5431
        %v5464 = vadd.f32 %v5364, %v5432
        %v5465 = vadd.f32 %v5365, %v5433
        %v5466 = vadd.f32 %v5366, %v5434
        %v5467 = vadd.f32 %v5367, %v5435
        %v5468 = vadd.f32 %v5368, %v5436
        %v5469 = vadd.f32 %v5369, %v5437
        %v5470 = vadd.f32 %v5370, %v5438
        %v5471 = vadd.f32 %v5371, %v5439
        %v5472 = vadd.f32 %v5372, %v5440
        %v5473 = vadd.f32 %v5373, %v5441
        %v5474 = vadd.f32 %v5374, %v5442
        %v5475 = vadd.f32 %v5375, %v5443
        %v5476 = vadd.f32 %v5376, %v5444
        %v5477 = vadd.f32 %v5377, %v5445
        %v5478 = vadd.f32 %v5378, %v5446
        %v5479 = vadd.f32 %v5379, %v5447
        %v5480 = vadd.f32 %v5380, %v5448
        %v5481 = vadd.f32 %v5381, %v5449
        %v5482 = vadd.f32 %v5382, %v5450
        %v5483 = vadd.f32 %v5383, %v5451
        %v5484 = vadd.f32 %v5384, %v5452
        %v5485 = vadd.f32 %v5385, %v5453
        %v5486 = vadd.f32 %v5386, %v5454
        %v5487 = vadd.f32 %v5387, %v5455
        %v5488 = vadd.f32 %v5388, %v5456
        %v5489 = vadd.f32 %v5389, %v5457
        %v5490 = vld [vmem:[%s5189 + $0x3] sm:$0xff]
        %v5491 = vld [vmem:[%s5189 + $0xb] sm:$0xff]
        %v5492 = vld [vmem:[%s5189 + $0x1b] sm:$0xff]
        %v5493 = vld [vmem:[%s5189 + $0x23] sm:$0xff]
        %v5494 = vld [vmem:[%s5189 + $0x33] sm:$0xff]
        %v5495 = vld [vmem:[%s5189 + $0x3b] sm:$0xff]
        %v5496 = vld [vmem:[%s5189 + $0x4b] sm:$0xff]
        %v5497 = vld [vmem:[%s5189 + $0x53] sm:$0xff]
        %v5498 = vld [vmem:[%s5189 + $0x63] sm:$0xff]
        %v5499 = vld [vmem:[%s5189 + $0x6b] sm:$0xff]
        %v5500 = vld [vmem:[%s5189 + $0x7b] sm:$0xff]
        %v5501 = vld [vmem:[%s5189 + $0x83] sm:$0xff]
        %v5502 = vld [vmem:[%s5189 + $0x93] sm:$0xff]
        %v5503 = vld [vmem:[%s5189 + $0x9b] sm:$0xff]
        %v5504 = vld [vmem:[%s5189 + $0xab] sm:$0xff]
        %v5505 = vld [vmem:[%s5189 + $0xb3] sm:$0xff]
        %v5506 = vld [vmem:[%s5189 + $0xc3] sm:$0xff]
        %v5507 = vld [vmem:[%s5189 + $0xcb] sm:$0xff]
        %v5508 = vld [vmem:[%s5189 + $0xdb] sm:$0xff]
        %v5509 = vld [vmem:[%s5189 + $0xe3] sm:$0xff]
        %v5510 = vld [vmem:[%s5189 + $0xf3] sm:$0xff]
        %v5511 = vld [vmem:[%s5189 + $0xfb] sm:$0xff]
        %v5512 = vld [vmem:[%s5189 + $0x10b] sm:$0xff]
        %v5513 = vld [vmem:[%s5189 + $0x113] sm:$0xff]
        %v5514 = vld [vmem:[%s5189 + $0x123] sm:$0xff]
        %v5515 = vld [vmem:[%s5189 + $0x12b] sm:$0xff]
        %v5516 = vld [vmem:[%s5189 + $0x13b] sm:$0xff]
        %v5517 = vld [vmem:[%s5189 + $0x143] sm:$0xff]
        %v5518 = vld [vmem:[%s5189 + $0x153] sm:$0xff]
        %v5519 = vld [vmem:[%s5189 + $0x15b] sm:$0xff]
        %v5520 = vld [vmem:[%s5189 + $0x16b] sm:$0xff]
        %v5521 = vld [vmem:[%s5189 + $0x173] sm:$0xff]
        %v5522 = vlaneseq
        %v5523 = vshrl.u32 %v5522, 7
        %v5524 = vsub.s32 2, %v5523
        %v5525 = vrot.slane %v3686, %v5524
        %v5526 = vmul.f32 %v5490, %v5525
        %v5527 = vmul.f32 %v5491, %v5525
        %v5528 = vmul.f32 %v5492, %v5525
        %v5529 = vmul.f32 %v5493, %v5525
        %v5530 = vmul.f32 %v5494, %v5525
        %v5531 = vmul.f32 %v5495, %v5525
        %v5532 = vmul.f32 %v5496, %v5525
        %v5533 = vmul.f32 %v5497, %v5525
        %v5534 = vmul.f32 %v5498, %v5525
        %v5535 = vmul.f32 %v5499, %v5525
        %v5536 = vmul.f32 %v5500, %v5525
        %v5537 = vmul.f32 %v5501, %v5525
        %v5538 = vmul.f32 %v5502, %v5525
        %v5539 = vmul.f32 %v5503, %v5525
        %v5540 = vmul.f32 %v5504, %v5525
        %v5541 = vmul.f32 %v5505, %v5525
        %v5542 = vmul.f32 %v5506, %v5525
        %v5543 = vmul.f32 %v5507, %v5525
        %v5544 = vmul.f32 %v5508, %v5525
        %v5545 = vmul.f32 %v5509, %v5525
        %v5546 = vmul.f32 %v5510, %v5525
        %v5547 = vmul.f32 %v5511, %v5525
        %v5548 = vmul.f32 %v5512, %v5525
        %v5549 = vmul.f32 %v5513, %v5525
        %v5550 = vmul.f32 %v5514, %v5525
        %v5551 = vmul.f32 %v5515, %v5525
        %v5552 = vmul.f32 %v5516, %v5525
        %v5553 = vmul.f32 %v5517, %v5525
        %v5554 = vmul.f32 %v5518, %v5525
        %v5555 = vmul.f32 %v5519, %v5525
        %v5556 = vmul.f32 %v5520, %v5525
        %v5557 = vmul.f32 %v5521, %v5525
        %v5558 = vadd.f32 %v5458, %v5526
        %v5559 = vadd.f32 %v5459, %v5527
        %v5560 = vadd.f32 %v5460, %v5528
        %v5561 = vadd.f32 %v5461, %v5529
        %v5562 = vadd.f32 %v5462, %v5530
        %v5563 = vadd.f32 %v5463, %v5531
        %v5564 = vadd.f32 %v5464, %v5532
        %v5565 = vadd.f32 %v5465, %v5533
        %v5566 = vadd.f32 %v5466, %v5534
        %v5567 = vadd.f32 %v5467, %v5535
        %v5568 = vadd.f32 %v5468, %v5536
        %v5569 = vadd.f32 %v5469, %v5537
        %v5570 = vadd.f32 %v5470, %v5538
        %v5571 = vadd.f32 %v5471, %v5539
        %v5572 = vadd.f32 %v5472, %v5540
        %v5573 = vadd.f32 %v5473, %v5541
        %v5574 = vadd.f32 %v5474, %v5542
        %v5575 = vadd.f32 %v5475, %v5543
        %v5576 = vadd.f32 %v5476, %v5544
        %v5577 = vadd.f32 %v5477, %v5545
        %v5578 = vadd.f32 %v5478, %v5546
        %v5579 = vadd.f32 %v5479, %v5547
        %v5580 = vadd.f32 %v5480, %v5548
        %v5581 = vadd.f32 %v5481, %v5549
        %v5582 = vadd.f32 %v5482, %v5550
        %v5583 = vadd.f32 %v5483, %v5551
        %v5584 = vadd.f32 %v5484, %v5552
        %v5585 = vadd.f32 %v5485, %v5553
        %v5586 = vadd.f32 %v5486, %v5554
        %v5587 = vadd.f32 %v5487, %v5555
        %v5588 = vadd.f32 %v5488, %v5556
        %v5589 = vadd.f32 %v5489, %v5557
        %v5590 = vld [vmem:[%s5189 + $0x4] sm:$0xff]
        %v5591 = vld [vmem:[%s5189 + $0xc] sm:$0xff]
        %v5592 = vld [vmem:[%s5189 + $0x1c] sm:$0xff]
        %v5593 = vld [vmem:[%s5189 + $0x24] sm:$0xff]
        %v5594 = vld [vmem:[%s5189 + $0x34] sm:$0xff]
        %v5595 = vld [vmem:[%s5189 + $0x3c] sm:$0xff]
        %v5596 = vld [vmem:[%s5189 + $0x4c] sm:$0xff]
        %v5597 = vld [vmem:[%s5189 + $0x54] sm:$0xff]
        %v5598 = vld [vmem:[%s5189 + $0x64] sm:$0xff]
        %v5599 = vld [vmem:[%s5189 + $0x6c] sm:$0xff]
        %v5600 = vld [vmem:[%s5189 + $0x7c] sm:$0xff]
        %v5601 = vld [vmem:[%s5189 + $0x84] sm:$0xff]
        %v5602 = vld [vmem:[%s5189 + $0x94] sm:$0xff]
        %v5603 = vld [vmem:[%s5189 + $0x9c] sm:$0xff]
        %v5604 = vld [vmem:[%s5189 + $0xac] sm:$0xff]
        %v5605 = vld [vmem:[%s5189 + $0xb4] sm:$0xff]
        %v5606 = vld [vmem:[%s5189 + $0xc4] sm:$0xff]
        %v5607 = vld [vmem:[%s5189 + $0xcc] sm:$0xff]
        %v5608 = vld [vmem:[%s5189 + $0xdc] sm:$0xff]
        %v5609 = vld [vmem:[%s5189 + $0xe4] sm:$0xff]
        %v5610 = vld [vmem:[%s5189 + $0xf4] sm:$0xff]
        %v5611 = vld [vmem:[%s5189 + $0xfc] sm:$0xff]
        %v5612 = vld [vmem:[%s5189 + $0x10c] sm:$0xff]
        %v5613 = vld [vmem:[%s5189 + $0x114] sm:$0xff]
        %v5614 = vld [vmem:[%s5189 + $0x124] sm:$0xff]
        %v5615 = vld [vmem:[%s5189 + $0x12c] sm:$0xff]
        %v5616 = vld [vmem:[%s5189 + $0x13c] sm:$0xff]
        %v5617 = vld [vmem:[%s5189 + $0x144] sm:$0xff]
        %v5618 = vld [vmem:[%s5189 + $0x154] sm:$0xff]
        %v5619 = vld [vmem:[%s5189 + $0x15c] sm:$0xff]
        %v5620 = vld [vmem:[%s5189 + $0x16c] sm:$0xff]
        %v5621 = vld [vmem:[%s5189 + $0x174] sm:$0xff]
        %v5622 = vlaneseq
        %v5623 = vshrl.u32 %v5622, 7
        %v5624 = vsub.s32 3, %v5623
        %v5625 = vrot.slane %v3686, %v5624
        %v5626 = vmul.f32 %v5590, %v5625
        %v5627 = vmul.f32 %v5591, %v5625
        %v5628 = vmul.f32 %v5592, %v5625
        %v5629 = vmul.f32 %v5593, %v5625
        %v5630 = vmul.f32 %v5594, %v5625
        %v5631 = vmul.f32 %v5595, %v5625
        %v5632 = vmul.f32 %v5596, %v5625
        %v5633 = vmul.f32 %v5597, %v5625
        %v5634 = vmul.f32 %v5598, %v5625
        %v5635 = vmul.f32 %v5599, %v5625
        %v5636 = vmul.f32 %v5600, %v5625
        %v5637 = vmul.f32 %v5601, %v5625
        %v5638 = vmul.f32 %v5602, %v5625
        %v5639 = vmul.f32 %v5603, %v5625
        %v5640 = vmul.f32 %v5604, %v5625
        %v5641 = vmul.f32 %v5605, %v5625
        %v5642 = vmul.f32 %v5606, %v5625
        %v5643 = vmul.f32 %v5607, %v5625
        %v5644 = vmul.f32 %v5608, %v5625
        %v5645 = vmul.f32 %v5609, %v5625
        %v5646 = vmul.f32 %v5610, %v5625
        %v5647 = vmul.f32 %v5611, %v5625
        %v5648 = vmul.f32 %v5612, %v5625
        %v5649 = vmul.f32 %v5613, %v5625
        %v5650 = vmul.f32 %v5614, %v5625
        %v5651 = vmul.f32 %v5615, %v5625
        %v5652 = vmul.f32 %v5616, %v5625
        %v5653 = vmul.f32 %v5617, %v5625
        %v5654 = vmul.f32 %v5618, %v5625
        %v5655 = vmul.f32 %v5619, %v5625
        %v5656 = vmul.f32 %v5620, %v5625
        %v5657 = vmul.f32 %v5621, %v5625
        %v5658 = vadd.f32 %v5558, %v5626
        %v5659 = vadd.f32 %v5559, %v5627
        %v5660 = vadd.f32 %v5560, %v5628
        %v5661 = vadd.f32 %v5561, %v5629
        %v5662 = vadd.f32 %v5562, %v5630
        %v5663 = vadd.f32 %v5563, %v5631
        %v5664 = vadd.f32 %v5564, %v5632
        %v5665 = vadd.f32 %v5565, %v5633
        %v5666 = vadd.f32 %v5566, %v5634
        %v5667 = vadd.f32 %v5567, %v5635
        %v5668 = vadd.f32 %v5568, %v5636
        %v5669 = vadd.f32 %v5569, %v5637
        %v5670 = vadd.f32 %v5570, %v5638
        %v5671 = vadd.f32 %v5571, %v5639
        %v5672 = vadd.f32 %v5572, %v5640
        %v5673 = vadd.f32 %v5573, %v5641
        %v5674 = vadd.f32 %v5574, %v5642
        %v5675 = vadd.f32 %v5575, %v5643
        %v5676 = vadd.f32 %v5576, %v5644
        %v5677 = vadd.f32 %v5577, %v5645
        %v5678 = vadd.f32 %v5578, %v5646
        %v5679 = vadd.f32 %v5579, %v5647
        %v5680 = vadd.f32 %v5580, %v5648
        %v5681 = vadd.f32 %v5581, %v5649
        %v5682 = vadd.f32 %v5582, %v5650
        %v5683 = vadd.f32 %v5583, %v5651
        %v5684 = vadd.f32 %v5584, %v5652
        %v5685 = vadd.f32 %v5585, %v5653
        %v5686 = vadd.f32 %v5586, %v5654
        %v5687 = vadd.f32 %v5587, %v5655
        %v5688 = vadd.f32 %v5588, %v5656
        %v5689 = vadd.f32 %v5589, %v5657
        %s5690 = scalar_lea.vmem [#allocation3], 96
        %v5691 = vld [vmem:[%s5690] sm:$0xff]
        %v5692 = vld [vmem:[%s5690 + $0x8] sm:$0xff]
        %v5693 = vld [vmem:[%s5690 + $0x18] sm:$0xff]
        %v5694 = vld [vmem:[%s5690 + $0x20] sm:$0xff]
        %v5695 = vld [vmem:[%s5690 + $0x30] sm:$0xff]
        %v5696 = vld [vmem:[%s5690 + $0x38] sm:$0xff]
        %v5697 = vld [vmem:[%s5690 + $0x48] sm:$0xff]
        %v5698 = vld [vmem:[%s5690 + $0x50] sm:$0xff]
        %v5699 = vld [vmem:[%s5690 + $0x60] sm:$0xff]
        %v5700 = vld [vmem:[%s5690 + $0x68] sm:$0xff]
        %v5701 = vld [vmem:[%s5690 + $0x78] sm:$0xff]
        %v5702 = vld [vmem:[%s5690 + $0x80] sm:$0xff]
        %v5703 = vld [vmem:[%s5690 + $0x90] sm:$0xff]
        %v5704 = vld [vmem:[%s5690 + $0x98] sm:$0xff]
        %v5705 = vld [vmem:[%s5690 + $0xa8] sm:$0xff]
        %v5706 = vld [vmem:[%s5690 + $0xb0] sm:$0xff]
        %v5707 = vld [vmem:[%s5690 + $0xc0] sm:$0xff]
        %v5708 = vld [vmem:[%s5690 + $0xc8] sm:$0xff]
        %v5709 = vld [vmem:[%s5690 + $0xd8] sm:$0xff]
        %v5710 = vld [vmem:[%s5690 + $0xe0] sm:$0xff]
        %v5711 = vld [vmem:[%s5690 + $0xf0] sm:$0xff]
        %v5712 = vld [vmem:[%s5690 + $0xf8] sm:$0xff]
        %v5713 = vld [vmem:[%s5690 + $0x108] sm:$0xff]
        %v5714 = vld [vmem:[%s5690 + $0x110] sm:$0xff]
        %v5715 = vld [vmem:[%s5690 + $0x120] sm:$0xff]
        %v5716 = vld [vmem:[%s5690 + $0x128] sm:$0xff]
        %v5717 = vld [vmem:[%s5690 + $0x138] sm:$0xff]
        %v5718 = vld [vmem:[%s5690 + $0x140] sm:$0xff]
        %v5719 = vld [vmem:[%s5690 + $0x150] sm:$0xff]
        %v5720 = vld [vmem:[%s5690 + $0x158] sm:$0xff]
        %v5721 = vld [vmem:[%s5690 + $0x168] sm:$0xff]
        %v5722 = vld [vmem:[%s5690 + $0x170] sm:$0xff]
        %v5723 = vlaneseq
        %v5724 = vshrl.u32 %v5723, 7
        %v5725 = vsub.s32 4, %v5724
        %v5726 = vrot.slane %v3686, %v5725
        %v5727 = vmul.f32 %v5691, %v5726
        %v5728 = vmul.f32 %v5692, %v5726
        %v5729 = vmul.f32 %v5693, %v5726
        %v5730 = vmul.f32 %v5694, %v5726
        %v5731 = vmul.f32 %v5695, %v5726
        %v5732 = vmul.f32 %v5696, %v5726
        %v5733 = vmul.f32 %v5697, %v5726
        %v5734 = vmul.f32 %v5698, %v5726
        %v5735 = vmul.f32 %v5699, %v5726
        %v5736 = vmul.f32 %v5700, %v5726
        %v5737 = vmul.f32 %v5701, %v5726
        %v5738 = vmul.f32 %v5702, %v5726
        %v5739 = vmul.f32 %v5703, %v5726
        %v5740 = vmul.f32 %v5704, %v5726
        %v5741 = vmul.f32 %v5705, %v5726
        %v5742 = vmul.f32 %v5706, %v5726
        %v5743 = vmul.f32 %v5707, %v5726
        %v5744 = vmul.f32 %v5708, %v5726
        %v5745 = vmul.f32 %v5709, %v5726
        %v5746 = vmul.f32 %v5710, %v5726
        %v5747 = vmul.f32 %v5711, %v5726
        %v5748 = vmul.f32 %v5712, %v5726
        %v5749 = vmul.f32 %v5713, %v5726
        %v5750 = vmul.f32 %v5714, %v5726
        %v5751 = vmul.f32 %v5715, %v5726
        %v5752 = vmul.f32 %v5716, %v5726
        %v5753 = vmul.f32 %v5717, %v5726
        %v5754 = vmul.f32 %v5718, %v5726
        %v5755 = vmul.f32 %v5719, %v5726
        %v5756 = vmul.f32 %v5720, %v5726
        %v5757 = vmul.f32 %v5721, %v5726
        %v5758 = vmul.f32 %v5722, %v5726
        %v5759 = vadd.f32 %v5658, %v5727
        %v5760 = vadd.f32 %v5659, %v5728
        %v5761 = vadd.f32 %v5660, %v5729
        %v5762 = vadd.f32 %v5661, %v5730
        %v5763 = vadd.f32 %v5662, %v5731
        %v5764 = vadd.f32 %v5663, %v5732
        %v5765 = vadd.f32 %v5664, %v5733
        %v5766 = vadd.f32 %v5665, %v5734
        %v5767 = vadd.f32 %v5666, %v5735
        %v5768 = vadd.f32 %v5667, %v5736
        %v5769 = vadd.f32 %v5668, %v5737
        %v5770 = vadd.f32 %v5669, %v5738
        %v5771 = vadd.f32 %v5670, %v5739
        %v5772 = vadd.f32 %v5671, %v5740
        %v5773 = vadd.f32 %v5672, %v5741
        %v5774 = vadd.f32 %v5673, %v5742
        %v5775 = vadd.f32 %v5674, %v5743
        %v5776 = vadd.f32 %v5675, %v5744
        %v5777 = vadd.f32 %v5676, %v5745
        %v5778 = vadd.f32 %v5677, %v5746
        %v5779 = vadd.f32 %v5678, %v5747
        %v5780 = vadd.f32 %v5679, %v5748
        %v5781 = vadd.f32 %v5680, %v5749
        %v5782 = vadd.f32 %v5681, %v5750
        %v5783 = vadd.f32 %v5682, %v5751
        %v5784 = vadd.f32 %v5683, %v5752
        %v5785 = vadd.f32 %v5684, %v5753
        %v5786 = vadd.f32 %v5685, %v5754
        %v5787 = vadd.f32 %v5686, %v5755
        %v5788 = vadd.f32 %v5687, %v5756
        %v5789 = vadd.f32 %v5688, %v5757
        %v5790 = vadd.f32 %v5689, %v5758
        %v5791 = vld [vmem:[%s5690 + $0x1] sm:$0xff]
        %v5792 = vld [vmem:[%s5690 + $0x9] sm:$0xff]
        %v5793 = vld [vmem:[%s5690 + $0x19] sm:$0xff]
        %v5794 = vld [vmem:[%s5690 + $0x21] sm:$0xff]
        %v5795 = vld [vmem:[%s5690 + $0x31] sm:$0xff]
        %v5796 = vld [vmem:[%s5690 + $0x39] sm:$0xff]
        %v5797 = vld [vmem:[%s5690 + $0x49] sm:$0xff]
        %v5798 = vld [vmem:[%s5690 + $0x51] sm:$0xff]
        %v5799 = vld [vmem:[%s5690 + $0x61] sm:$0xff]
        %v5800 = vld [vmem:[%s5690 + $0x69] sm:$0xff]
        %v5801 = vld [vmem:[%s5690 + $0x79] sm:$0xff]
        %v5802 = vld [vmem:[%s5690 + $0x81] sm:$0xff]
        %v5803 = vld [vmem:[%s5690 + $0x91] sm:$0xff]
        %v5804 = vld [vmem:[%s5690 + $0x99] sm:$0xff]
        %v5805 = vld [vmem:[%s5690 + $0xa9] sm:$0xff]
        %v5806 = vld [vmem:[%s5690 + $0xb1] sm:$0xff]
        %v5807 = vld [vmem:[%s5690 + $0xc1] sm:$0xff]
        %v5808 = vld [vmem:[%s5690 + $0xc9] sm:$0xff]
        %v5809 = vld [vmem:[%s5690 + $0xd9] sm:$0xff]
        %v5810 = vld [vmem:[%s5690 + $0xe1] sm:$0xff]
        %v5811 = vld [vmem:[%s5690 + $0xf1] sm:$0xff]
        %v5812 = vld [vmem:[%s5690 + $0xf9] sm:$0xff]
        %v5813 = vld [vmem:[%s5690 + $0x109] sm:$0xff]
        %v5814 = vld [vmem:[%s5690 + $0x111] sm:$0xff]
        %v5815 = vld [vmem:[%s5690 + $0x121] sm:$0xff]
        %v5816 = vld [vmem:[%s5690 + $0x129] sm:$0xff]
        %v5817 = vld [vmem:[%s5690 + $0x139] sm:$0xff]
        %v5818 = vld [vmem:[%s5690 + $0x141] sm:$0xff]
        %v5819 = vld [vmem:[%s5690 + $0x151] sm:$0xff]
        %v5820 = vld [vmem:[%s5690 + $0x159] sm:$0xff]
        %v5821 = vld [vmem:[%s5690 + $0x169] sm:$0xff]
        %v5822 = vld [vmem:[%s5690 + $0x171] sm:$0xff]
        %v5823 = vlaneseq
        %v5824 = vshrl.u32 %v5823, 7
        %v5825 = vsub.s32 5, %v5824
        %v5826 = vrot.slane %v3686, %v5825
        %v5827 = vmul.f32 %v5791, %v5826
        %v5828 = vmul.f32 %v5792, %v5826
        %v5829 = vmul.f32 %v5793, %v5826
        %v5830 = vmul.f32 %v5794, %v5826
        %v5831 = vmul.f32 %v5795, %v5826
        %v5832 = vmul.f32 %v5796, %v5826
        %v5833 = vmul.f32 %v5797, %v5826
        %v5834 = vmul.f32 %v5798, %v5826
        %v5835 = vmul.f32 %v5799, %v5826
        %v5836 = vmul.f32 %v5800, %v5826
        %v5837 = vmul.f32 %v5801, %v5826
        %v5838 = vmul.f32 %v5802, %v5826
        %v5839 = vmul.f32 %v5803, %v5826
        %v5840 = vmul.f32 %v5804, %v5826
        %v5841 = vmul.f32 %v5805, %v5826
        %v5842 = vmul.f32 %v5806, %v5826
        %v5843 = vmul.f32 %v5807, %v5826
        %v5844 = vmul.f32 %v5808, %v5826
        %v5845 = vmul.f32 %v5809, %v5826
        %v5846 = vmul.f32 %v5810, %v5826
        %v5847 = vmul.f32 %v5811, %v5826
        %v5848 = vmul.f32 %v5812, %v5826
        %v5849 = vmul.f32 %v5813, %v5826
        %v5850 = vmul.f32 %v5814, %v5826
        %v5851 = vmul.f32 %v5815, %v5826
        %v5852 = vmul.f32 %v5816, %v5826
        %v5853 = vmul.f32 %v5817, %v5826
        %v5854 = vmul.f32 %v5818, %v5826
        %v5855 = vmul.f32 %v5819, %v5826
        %v5856 = vmul.f32 %v5820, %v5826
        %v5857 = vmul.f32 %v5821, %v5826
        %v5858 = vmul.f32 %v5822, %v5826
        %v5859 = vadd.f32 %v5759, %v5827
        %v5860 = vadd.f32 %v5760, %v5828
        %v5861 = vadd.f32 %v5761, %v5829
        %v5862 = vadd.f32 %v5762, %v5830
        %v5863 = vadd.f32 %v5763, %v5831
        %v5864 = vadd.f32 %v5764, %v5832
        %v5865 = vadd.f32 %v5765, %v5833
        %v5866 = vadd.f32 %v5766, %v5834
        %v5867 = vadd.f32 %v5767, %v5835
        %v5868 = vadd.f32 %v5768, %v5836
        %v5869 = vadd.f32 %v5769, %v5837
        %v5870 = vadd.f32 %v5770, %v5838
        %v5871 = vadd.f32 %v5771, %v5839
        %v5872 = vadd.f32 %v5772, %v5840
        %v5873 = vadd.f32 %v5773, %v5841
        %v5874 = vadd.f32 %v5774, %v5842
        %v5875 = vadd.f32 %v5775, %v5843
        %v5876 = vadd.f32 %v5776, %v5844
        %v5877 = vadd.f32 %v5777, %v5845
        %v5878 = vadd.f32 %v5778, %v5846
        %v5879 = vadd.f32 %v5779, %v5847
        %v5880 = vadd.f32 %v5780, %v5848
        %v5881 = vadd.f32 %v5781, %v5849
        %v5882 = vadd.f32 %v5782, %v5850
        %v5883 = vadd.f32 %v5783, %v5851
        %v5884 = vadd.f32 %v5784, %v5852
        %v5885 = vadd.f32 %v5785, %v5853
        %v5886 = vadd.f32 %v5786, %v5854
        %v5887 = vadd.f32 %v5787, %v5855
        %v5888 = vadd.f32 %v5788, %v5856
        %v5889 = vadd.f32 %v5789, %v5857
        %v5890 = vadd.f32 %v5790, %v5858
        %v5891 = vld [vmem:[%s5690 + $0x2] sm:$0xff]
        %v5892 = vld [vmem:[%s5690 + $0xa] sm:$0xff]
        %v5893 = vld [vmem:[%s5690 + $0x1a] sm:$0xff]
        %v5894 = vld [vmem:[%s5690 + $0x22] sm:$0xff]
        %v5895 = vld [vmem:[%s5690 + $0x32] sm:$0xff]
        %v5896 = vld [vmem:[%s5690 + $0x3a] sm:$0xff]
        %v5897 = vld [vmem:[%s5690 + $0x4a] sm:$0xff]
        %v5898 = vld [vmem:[%s5690 + $0x52] sm:$0xff]
        %v5899 = vld [vmem:[%s5690 + $0x62] sm:$0xff]
        %v5900 = vld [vmem:[%s5690 + $0x6a] sm:$0xff]
        %v5901 = vld [vmem:[%s5690 + $0x7a] sm:$0xff]
        %v5902 = vld [vmem:[%s5690 + $0x82] sm:$0xff]
        %v5903 = vld [vmem:[%s5690 + $0x92] sm:$0xff]
        %v5904 = vld [vmem:[%s5690 + $0x9a] sm:$0xff]
        %v5905 = vld [vmem:[%s5690 + $0xaa] sm:$0xff]
        %v5906 = vld [vmem:[%s5690 + $0xb2] sm:$0xff]
        %v5907 = vld [vmem:[%s5690 + $0xc2] sm:$0xff]
        %v5908 = vld [vmem:[%s5690 + $0xca] sm:$0xff]
        %v5909 = vld [vmem:[%s5690 + $0xda] sm:$0xff]
        %v5910 = vld [vmem:[%s5690 + $0xe2] sm:$0xff]
        %v5911 = vld [vmem:[%s5690 + $0xf2] sm:$0xff]
        %v5912 = vld [vmem:[%s5690 + $0xfa] sm:$0xff]
        %v5913 = vld [vmem:[%s5690 + $0x10a] sm:$0xff]
        %v5914 = vld [vmem:[%s5690 + $0x112] sm:$0xff]
        %v5915 = vld [vmem:[%s5690 + $0x122] sm:$0xff]
        %v5916 = vld [vmem:[%s5690 + $0x12a] sm:$0xff]
        %v5917 = vld [vmem:[%s5690 + $0x13a] sm:$0xff]
        %v5918 = vld [vmem:[%s5690 + $0x142] sm:$0xff]
        %v5919 = vld [vmem:[%s5690 + $0x152] sm:$0xff]
        %v5920 = vld [vmem:[%s5690 + $0x15a] sm:$0xff]
        %v5921 = vld [vmem:[%s5690 + $0x16a] sm:$0xff]
        %v5922 = vld [vmem:[%s5690 + $0x172] sm:$0xff]
        %v5923 = vlaneseq
        %v5924 = vshrl.u32 %v5923, 7
        %v5925 = vsub.s32 6, %v5924
        %v5926 = vrot.slane %v3686, %v5925
        %v5927 = vmul.f32 %v5891, %v5926
        %v5928 = vmul.f32 %v5892, %v5926
        %v5929 = vmul.f32 %v5893, %v5926
        %v5930 = vmul.f32 %v5894, %v5926
        %v5931 = vmul.f32 %v5895, %v5926
        %v5932 = vmul.f32 %v5896, %v5926
        %v5933 = vmul.f32 %v5897, %v5926
        %v5934 = vmul.f32 %v5898, %v5926
        %v5935 = vmul.f32 %v5899, %v5926
        %v5936 = vmul.f32 %v5900, %v5926
        %v5937 = vmul.f32 %v5901, %v5926
        %v5938 = vmul.f32 %v5902, %v5926
        %v5939 = vmul.f32 %v5903, %v5926
        %v5940 = vmul.f32 %v5904, %v5926
        %v5941 = vmul.f32 %v5905, %v5926
        %v5942 = vmul.f32 %v5906, %v5926
        %v5943 = vmul.f32 %v5907, %v5926
        %v5944 = vmul.f32 %v5908, %v5926
        %v5945 = vmul.f32 %v5909, %v5926
        %v5946 = vmul.f32 %v5910, %v5926
        %v5947 = vmul.f32 %v5911, %v5926
        %v5948 = vmul.f32 %v5912, %v5926
        %v5949 = vmul.f32 %v5913, %v5926
        %v5950 = vmul.f32 %v5914, %v5926
        %v5951 = vmul.f32 %v5915, %v5926
        %v5952 = vmul.f32 %v5916, %v5926
        %v5953 = vmul.f32 %v5917, %v5926
        %v5954 = vmul.f32 %v5918, %v5926
        %v5955 = vmul.f32 %v5919, %v5926
        %v5956 = vmul.f32 %v5920, %v5926
        %v5957 = vmul.f32 %v5921, %v5926
        %v5958 = vmul.f32 %v5922, %v5926
        %v5959 = vadd.f32 %v5859, %v5927
        %v5960 = vadd.f32 %v5860, %v5928
        %v5961 = vadd.f32 %v5861, %v5929
        %v5962 = vadd.f32 %v5862, %v5930
        %v5963 = vadd.f32 %v5863, %v5931
        %v5964 = vadd.f32 %v5864, %v5932
        %v5965 = vadd.f32 %v5865, %v5933
        %v5966 = vadd.f32 %v5866, %v5934
        %v5967 = vadd.f32 %v5867, %v5935
        %v5968 = vadd.f32 %v5868, %v5936
        %v5969 = vadd.f32 %v5869, %v5937
        %v5970 = vadd.f32 %v5870, %v5938
        %v5971 = vadd.f32 %v5871, %v5939
        %v5972 = vadd.f32 %v5872, %v5940
        %v5973 = vadd.f32 %v5873, %v5941
        %v5974 = vadd.f32 %v5874, %v5942
        %v5975 = vadd.f32 %v5875, %v5943
        %v5976 = vadd.f32 %v5876, %v5944
        %v5977 = vadd.f32 %v5877, %v5945
        %v5978 = vadd.f32 %v5878, %v5946
        %v5979 = vadd.f32 %v5879, %v5947
        %v5980 = vadd.f32 %v5880, %v5948
        %v5981 = vadd.f32 %v5881, %v5949
        %v5982 = vadd.f32 %v5882, %v5950
        %v5983 = vadd.f32 %v5883, %v5951
        %v5984 = vadd.f32 %v5884, %v5952
        %v5985 = vadd.f32 %v5885, %v5953
        %v5986 = vadd.f32 %v5886, %v5954
        %v5987 = vadd.f32 %v5887, %v5955
        %v5988 = vadd.f32 %v5888, %v5956
        %v5989 = vadd.f32 %v5889, %v5957
        %v5990 = vadd.f32 %v5890, %v5958
        %v5991 = vld [vmem:[%s5690 + $0x3] sm:$0xff]
        %v5992 = vld [vmem:[%s5690 + $0xb] sm:$0xff]
        %v5993 = vld [vmem:[%s5690 + $0x1b] sm:$0xff]
        %v5994 = vld [vmem:[%s5690 + $0x23] sm:$0xff]
        %v5995 = vld [vmem:[%s5690 + $0x33] sm:$0xff]
        %v5996 = vld [vmem:[%s5690 + $0x3b] sm:$0xff]
        %v5997 = vld [vmem:[%s5690 + $0x4b] sm:$0xff]
        %v5998 = vld [vmem:[%s5690 + $0x53] sm:$0xff]
        %v5999 = vld [vmem:[%s5690 + $0x63] sm:$0xff]
        %v6000 = vld [vmem:[%s5690 + $0x6b] sm:$0xff]
        %v6001 = vld [vmem:[%s5690 + $0x7b] sm:$0xff]
        %v6002 = vld [vmem:[%s5690 + $0x83] sm:$0xff]
        %v6003 = vld [vmem:[%s5690 + $0x93] sm:$0xff]
        %v6004 = vld [vmem:[%s5690 + $0x9b] sm:$0xff]
        %v6005 = vld [vmem:[%s5690 + $0xab] sm:$0xff]
        %v6006 = vld [vmem:[%s5690 + $0xb3] sm:$0xff]
        %v6007 = vld [vmem:[%s5690 + $0xc3] sm:$0xff]
        %v6008 = vld [vmem:[%s5690 + $0xcb] sm:$0xff]
        %v6009 = vld [vmem:[%s5690 + $0xdb] sm:$0xff]
        %v6010 = vld [vmem:[%s5690 + $0xe3] sm:$0xff]
        %v6011 = vld [vmem:[%s5690 + $0xf3] sm:$0xff]
        %v6012 = vld [vmem:[%s5690 + $0xfb] sm:$0xff]
        %v6013 = vld [vmem:[%s5690 + $0x10b] sm:$0xff]
        %v6014 = vld [vmem:[%s5690 + $0x113] sm:$0xff]
        %v6015 = vld [vmem:[%s5690 + $0x123] sm:$0xff]
        %v6016 = vld [vmem:[%s5690 + $0x12b] sm:$0xff]
        %v6017 = vld [vmem:[%s5690 + $0x13b] sm:$0xff]
        %v6018 = vld [vmem:[%s5690 + $0x143] sm:$0xff]
        %v6019 = vld [vmem:[%s5690 + $0x153] sm:$0xff]
        %v6020 = vld [vmem:[%s5690 + $0x15b] sm:$0xff]
        %v6021 = vld [vmem:[%s5690 + $0x16b] sm:$0xff]
        %v6022 = vld [vmem:[%s5690 + $0x173] sm:$0xff]
        %v6023 = vlaneseq
        %v6024 = vshrl.u32 %v6023, 7
        %v6025 = vsub.s32 7, %v6024
        %v6026 = vrot.slane %v3686, %v6025
        %v6027 = vmul.f32 %v5991, %v6026
        %v6028 = vmul.f32 %v5992, %v6026
        %v6029 = vmul.f32 %v5993, %v6026
        %v6030 = vmul.f32 %v5994, %v6026
        %v6031 = vmul.f32 %v5995, %v6026
        %v6032 = vmul.f32 %v5996, %v6026
        %v6033 = vmul.f32 %v5997, %v6026
        %v6034 = vmul.f32 %v5998, %v6026
        %v6035 = vmul.f32 %v5999, %v6026
        %v6036 = vmul.f32 %v6000, %v6026
        %v6037 = vmul.f32 %v6001, %v6026
        %v6038 = vmul.f32 %v6002, %v6026
        %v6039 = vmul.f32 %v6003, %v6026
        %v6040 = vmul.f32 %v6004, %v6026
        %v6041 = vmul.f32 %v6005, %v6026
        %v6042 = vmul.f32 %v6006, %v6026
        %v6043 = vmul.f32 %v6007, %v6026
        %v6044 = vmul.f32 %v6008, %v6026
        %v6045 = vmul.f32 %v6009, %v6026
        %v6046 = vmul.f32 %v6010, %v6026
        %v6047 = vmul.f32 %v6011, %v6026
        %v6048 = vmul.f32 %v6012, %v6026
        %v6049 = vmul.f32 %v6013, %v6026
        %v6050 = vmul.f32 %v6014, %v6026
        %v6051 = vmul.f32 %v6015, %v6026
        %v6052 = vmul.f32 %v6016, %v6026
        %v6053 = vmul.f32 %v6017, %v6026
        %v6054 = vmul.f32 %v6018, %v6026
        %v6055 = vmul.f32 %v6019, %v6026
        %v6056 = vmul.f32 %v6020, %v6026
        %v6057 = vmul.f32 %v6021, %v6026
        %v6058 = vmul.f32 %v6022, %v6026
        %v6059 = vadd.f32 %v5959, %v6027
        %v6060 = vadd.f32 %v5960, %v6028
        %v6061 = vadd.f32 %v5961, %v6029
        %v6062 = vadd.f32 %v5962, %v6030
        %v6063 = vadd.f32 %v5963, %v6031
        %v6064 = vadd.f32 %v5964, %v6032
        %v6065 = vadd.f32 %v5965, %v6033
        %v6066 = vadd.f32 %v5966, %v6034
        %v6067 = vadd.f32 %v5967, %v6035
        %v6068 = vadd.f32 %v5968, %v6036
        %v6069 = vadd.f32 %v5969, %v6037
        %v6070 = vadd.f32 %v5970, %v6038
        %v6071 = vadd.f32 %v5971, %v6039
        %v6072 = vadd.f32 %v5972, %v6040
        %v6073 = vadd.f32 %v5973, %v6041
        %v6074 = vadd.f32 %v5974, %v6042
        %v6075 = vadd.f32 %v5975, %v6043
        %v6076 = vadd.f32 %v5976, %v6044
        %v6077 = vadd.f32 %v5977, %v6045
        %v6078 = vadd.f32 %v5978, %v6046
        %v6079 = vadd.f32 %v5979, %v6047
        %v6080 = vadd.f32 %v5980, %v6048
        %v6081 = vadd.f32 %v5981, %v6049
        %v6082 = vadd.f32 %v5982, %v6050
        %v6083 = vadd.f32 %v5983, %v6051
        %v6084 = vadd.f32 %v5984, %v6052
        %v6085 = vadd.f32 %v5985, %v6053
        %v6086 = vadd.f32 %v5986, %v6054
        %v6087 = vadd.f32 %v5987, %v6055
        %v6088 = vadd.f32 %v5988, %v6056
        %v6089 = vadd.f32 %v5989, %v6057
        %v6090 = vadd.f32 %v5990, %v6058
        %v6091 = vld [vmem:[%s5690 + $0x4] sm:$0xff]
        %v6092 = vld [vmem:[%s5690 + $0xc] sm:$0xff]
        %v6093 = vld [vmem:[%s5690 + $0x1c] sm:$0xff]
        %v6094 = vld [vmem:[%s5690 + $0x24] sm:$0xff]
        %v6095 = vld [vmem:[%s5690 + $0x34] sm:$0xff]
        %v6096 = vld [vmem:[%s5690 + $0x3c] sm:$0xff]
        %v6097 = vld [vmem:[%s5690 + $0x4c] sm:$0xff]
        %v6098 = vld [vmem:[%s5690 + $0x54] sm:$0xff]
        %v6099 = vld [vmem:[%s5690 + $0x64] sm:$0xff]
        %v6100 = vld [vmem:[%s5690 + $0x6c] sm:$0xff]
        %v6101 = vld [vmem:[%s5690 + $0x7c] sm:$0xff]
        %v6102 = vld [vmem:[%s5690 + $0x84] sm:$0xff]
        %v6103 = vld [vmem:[%s5690 + $0x94] sm:$0xff]
        %v6104 = vld [vmem:[%s5690 + $0x9c] sm:$0xff]
        %v6105 = vld [vmem:[%s5690 + $0xac] sm:$0xff]
        %v6106 = vld [vmem:[%s5690 + $0xb4] sm:$0xff]
        %v6107 = vld [vmem:[%s5690 + $0xc4] sm:$0xff]
        %v6108 = vld [vmem:[%s5690 + $0xcc] sm:$0xff]
        %v6109 = vld [vmem:[%s5690 + $0xdc] sm:$0xff]
        %v6110 = vld [vmem:[%s5690 + $0xe4] sm:$0xff]
        %v6111 = vld [vmem:[%s5690 + $0xf4] sm:$0xff]
        %v6112 = vld [vmem:[%s5690 + $0xfc] sm:$0xff]
        %v6113 = vld [vmem:[%s5690 + $0x10c] sm:$0xff]
        %v6114 = vld [vmem:[%s5690 + $0x114] sm:$0xff]
        %v6115 = vld [vmem:[%s5690 + $0x124] sm:$0xff]
        %v6116 = vld [vmem:[%s5690 + $0x12c] sm:$0xff]
        %v6117 = vld [vmem:[%s5690 + $0x13c] sm:$0xff]
        %v6118 = vld [vmem:[%s5690 + $0x144] sm:$0xff]
        %v6119 = vld [vmem:[%s5690 + $0x154] sm:$0xff]
        %v6120 = vld [vmem:[%s5690 + $0x15c] sm:$0xff]
        %v6121 = vld [vmem:[%s5690 + $0x16c] sm:$0xff]
        %v6122 = vld [vmem:[%s5690 + $0x174] sm:$0xff]
        %v6123 = vlaneseq
        %v6124 = vshrl.u32 %v6123, 7
        %v6125 = vsub.s32 0, %v6124
        %v6126 = vrot.slane %v3687, %v6125
        %v6127 = vmul.f32 %v6091, %v6126
        %v6128 = vmul.f32 %v6092, %v6126
        %v6129 = vmul.f32 %v6093, %v6126
        %v6130 = vmul.f32 %v6094, %v6126
        %v6131 = vmul.f32 %v6095, %v6126
        %v6132 = vmul.f32 %v6096, %v6126
        %v6133 = vmul.f32 %v6097, %v6126
        %v6134 = vmul.f32 %v6098, %v6126
        %v6135 = vmul.f32 %v6099, %v6126
        %v6136 = vmul.f32 %v6100, %v6126
        %v6137 = vmul.f32 %v6101, %v6126
        %v6138 = vmul.f32 %v6102, %v6126
        %v6139 = vmul.f32 %v6103, %v6126
        %v6140 = vmul.f32 %v6104, %v6126
        %v6141 = vmul.f32 %v6105, %v6126
        %v6142 = vmul.f32 %v6106, %v6126
        %v6143 = vmul.f32 %v6107, %v6126
        %v6144 = vmul.f32 %v6108, %v6126
        %v6145 = vmul.f32 %v6109, %v6126
        %v6146 = vmul.f32 %v6110, %v6126
        %v6147 = vmul.f32 %v6111, %v6126
        %v6148 = vmul.f32 %v6112, %v6126
        %v6149 = vmul.f32 %v6113, %v6126
        %v6150 = vmul.f32 %v6114, %v6126
        %v6151 = vmul.f32 %v6115, %v6126
        %v6152 = vmul.f32 %v6116, %v6126
        %v6153 = vmul.f32 %v6117, %v6126
        %v6154 = vmul.f32 %v6118, %v6126
        %v6155 = vmul.f32 %v6119, %v6126
        %v6156 = vmul.f32 %v6120, %v6126
        %v6157 = vmul.f32 %v6121, %v6126
        %v6158 = vmul.f32 %v6122, %v6126
        %v6159 = vadd.f32 %v6059, %v6127
        %v6160 = vadd.f32 %v6060, %v6128
        %v6161 = vadd.f32 %v6061, %v6129
        %v6162 = vadd.f32 %v6062, %v6130
        %v6163 = vadd.f32 %v6063, %v6131
        %v6164 = vadd.f32 %v6064, %v6132
        %v6165 = vadd.f32 %v6065, %v6133
        %v6166 = vadd.f32 %v6066, %v6134
        %v6167 = vadd.f32 %v6067, %v6135
        %v6168 = vadd.f32 %v6068, %v6136
        %v6169 = vadd.f32 %v6069, %v6137
        %v6170 = vadd.f32 %v6070, %v6138
        %v6171 = vadd.f32 %v6071, %v6139
        %v6172 = vadd.f32 %v6072, %v6140
        %v6173 = vadd.f32 %v6073, %v6141
        %v6174 = vadd.f32 %v6074, %v6142
        %v6175 = vadd.f32 %v6075, %v6143
        %v6176 = vadd.f32 %v6076, %v6144
        %v6177 = vadd.f32 %v6077, %v6145
        %v6178 = vadd.f32 %v6078, %v6146
        %v6179 = vadd.f32 %v6079, %v6147
        %v6180 = vadd.f32 %v6080, %v6148
        %v6181 = vadd.f32 %v6081, %v6149
        %v6182 = vadd.f32 %v6082, %v6150
        %v6183 = vadd.f32 %v6083, %v6151
        %v6184 = vadd.f32 %v6084, %v6152
        %v6185 = vadd.f32 %v6085, %v6153
        %v6186 = vadd.f32 %v6086, %v6154
        %v6187 = vadd.f32 %v6087, %v6155
        %v6188 = vadd.f32 %v6088, %v6156
        %v6189 = vadd.f32 %v6089, %v6157
        %v6190 = vadd.f32 %v6090, %v6158
        %v6191 = vld [vmem:[#allocation4] sm:$0x1]
        %v6193 = vlaneseq
        %v6194 = vshrl.u32 %v6193, 7
        %v6195 = vsub.s32 0, %v6194
        %v6196 = vrot.slane %v6191, %v6195
        %v6198 = vadd.f32 %v6159, %v6196
        %v6199 = vadd.f32 %v6160, %v6196
        %v6200 = vadd.f32 %v6161, %v6196
        %v6201 = vadd.f32 %v6162, %v6196
        %v6202 = vadd.f32 %v6163, %v6196
        %v6203 = vadd.f32 %v6164, %v6196
        %v6204 = vadd.f32 %v6165, %v6196
        %v6205 = vadd.f32 %v6166, %v6196
        %v6206 = vadd.f32 %v6167, %v6196
        %v6207 = vadd.f32 %v6168, %v6196
        %v6208 = vadd.f32 %v6169, %v6196
        %v6209 = vadd.f32 %v6170, %v6196
        %v6210 = vadd.f32 %v6171, %v6196
        %v6211 = vadd.f32 %v6172, %v6196
        %v6212 = vadd.f32 %v6173, %v6196
        %v6213 = vadd.f32 %v6174, %v6196
        %v6214 = vadd.f32 %v6175, %v6196
        %v6215 = vadd.f32 %v6176, %v6196
        %v6216 = vadd.f32 %v6177, %v6196
        %v6217 = vadd.f32 %v6178, %v6196
        %v6218 = vadd.f32 %v6179, %v6196
        %v6219 = vadd.f32 %v6180, %v6196
        %v6220 = vadd.f32 %v6181, %v6196
        %v6221 = vadd.f32 %v6182, %v6196
        %v6222 = vadd.f32 %v6183, %v6196
        %v6223 = vadd.f32 %v6184, %v6196
        %v6224 = vadd.f32 %v6185, %v6196
        %v6225 = vadd.f32 %v6186, %v6196
        %v6226 = vadd.f32 %v6187, %v6196
        %v6227 = vadd.f32 %v6188, %v6196
        %v6228 = vadd.f32 %v6189, %v6196
        %v6229 = vadd.f32 %v6190, %v6196
        %v6230 = vxor.u32 %v6198, 2147483648
        %v6231 = vxor.u32 %v6199, 2147483648
        %v6232 = vxor.u32 %v6200, 2147483648
        %v6233 = vxor.u32 %v6201, 2147483648
        %v6234 = vxor.u32 %v6202, 2147483648
        %v6235 = vxor.u32 %v6203, 2147483648
        %v6236 = vxor.u32 %v6204, 2147483648
        %v6237 = vxor.u32 %v6205, 2147483648
        %v6238 = vxor.u32 %v6206, 2147483648
        %v6239 = vxor.u32 %v6207, 2147483648
        %v6240 = vxor.u32 %v6208, 2147483648
        %v6241 = vxor.u32 %v6209, 2147483648
        %v6242 = vxor.u32 %v6210, 2147483648
        %v6243 = vxor.u32 %v6211, 2147483648
        %v6244 = vxor.u32 %v6212, 2147483648
        %v6245 = vxor.u32 %v6213, 2147483648
        %v6246 = vxor.u32 %v6214, 2147483648
        %v6247 = vxor.u32 %v6215, 2147483648
        %v6248 = vxor.u32 %v6216, 2147483648
        %v6249 = vxor.u32 %v6217, 2147483648
        %v6250 = vxor.u32 %v6218, 2147483648
        %v6251 = vxor.u32 %v6219, 2147483648
        %v6252 = vxor.u32 %v6220, 2147483648
        %v6253 = vxor.u32 %v6221, 2147483648
        %v6254 = vxor.u32 %v6222, 2147483648
        %v6255 = vxor.u32 %v6223, 2147483648
        %v6256 = vxor.u32 %v6224, 2147483648
        %v6257 = vxor.u32 %v6225, 2147483648
        %v6258 = vxor.u32 %v6226, 2147483648
        %v6259 = vxor.u32 %v6227, 2147483648
        %v6260 = vxor.u32 %v6228, 2147483648
        %v6261 = vxor.u32 %v6229, 2147483648
        %v6262 = vmul.f32 %v6230, 1.442695
        %v6263 = vpow.pop %v6262
        %v6264 = vmul.f32 %v6231, 1.442695
        %v6265 = vpow.pop %v6264
        %v6266 = vmul.f32 %v6232, 1.442695
        %v6267 = vpow.pop %v6266
        %v6268 = vmul.f32 %v6233, 1.442695
        %v6269 = vpow.pop %v6268
        %v6270 = vmul.f32 %v6234, 1.442695
        %v6271 = vpow.pop %v6270
        %v6272 = vmul.f32 %v6235, 1.442695
        %v6273 = vpow.pop %v6272
        %v6274 = vmul.f32 %v6236, 1.442695
        %v6275 = vpow.pop %v6274
        %v6276 = vmul.f32 %v6237, 1.442695
        %v6277 = vpow.pop %v6276
        %v6278 = vmul.f32 %v6238, 1.442695
        %v6279 = vpow.pop %v6278
        %v6280 = vmul.f32 %v6239, 1.442695
        %v6281 = vpow.pop %v6280
        %v6282 = vmul.f32 %v6240, 1.442695
        %v6283 = vpow.pop %v6282
        %v6284 = vmul.f32 %v6241, 1.442695
        %v6285 = vpow.pop %v6284
        %v6286 = vmul.f32 %v6242, 1.442695
        %v6287 = vpow.pop %v6286
        %v6288 = vmul.f32 %v6243, 1.442695
        %v6289 = vpow.pop %v6288
        %v6290 = vmul.f32 %v6244, 1.442695
        %v6291 = vpow.pop %v6290
        %v6292 = vmul.f32 %v6245, 1.442695
        %v6293 = vpow.pop %v6292
        %v6294 = vmul.f32 %v6246, 1.442695
        %v6295 = vpow.pop %v6294
        %v6296 = vmul.f32 %v6247, 1.442695
        %v6297 = vpow.pop %v6296
        %v6298 = vmul.f32 %v6248, 1.442695
        %v6299 = vpow.pop %v6298
        %v6300 = vmul.f32 %v6249, 1.442695
        %v6301 = vpow.pop %v6300
        %v6302 = vmul.f32 %v6250, 1.442695
        %v6303 = vpow.pop %v6302
        %v6304 = vmul.f32 %v6251, 1.442695
        %v6305 = vpow.pop %v6304
        %v6306 = vmul.f32 %v6252, 1.442695
        %v6307 = vpow.pop %v6306
        %v6308 = vmul.f32 %v6253, 1.442695
        %v6309 = vpow.pop %v6308
        %v6310 = vmul.f32 %v6254, 1.442695
        %v6311 = vpow.pop %v6310
        %v6312 = vmul.f32 %v6255, 1.442695
        %v6313 = vpow.pop %v6312
        %v6314 = vmul.f32 %v6256, 1.442695
        %v6315 = vpow.pop %v6314
        %v6316 = vmul.f32 %v6257, 1.442695
        %v6317 = vpow.pop %v6316
        %v6318 = vmul.f32 %v6258, 1.442695
        %v6319 = vpow.pop %v6318
        %v6320 = vmul.f32 %v6259, 1.442695
        %v6321 = vpow.pop %v6320
        %v6322 = vmul.f32 %v6260, 1.442695
        %v6323 = vpow.pop %v6322
        %v6324 = vmul.f32 %v6261, 1.442695
        %v6325 = vpow.pop %v6324
        %v6326 = vadd.f32 %v6263, 1.0
        %v6327 = vadd.f32 %v6265, 1.0
        %v6328 = vadd.f32 %v6267, 1.0
        %v6329 = vadd.f32 %v6269, 1.0
        %v6330 = vadd.f32 %v6271, 1.0
        %v6331 = vadd.f32 %v6273, 1.0
        %v6332 = vadd.f32 %v6275, 1.0
        %v6333 = vadd.f32 %v6277, 1.0
        %v6334 = vadd.f32 %v6279, 1.0
        %v6335 = vadd.f32 %v6281, 1.0
        %v6336 = vadd.f32 %v6283, 1.0
        %v6337 = vadd.f32 %v6285, 1.0
        %v6338 = vadd.f32 %v6287, 1.0
        %v6339 = vadd.f32 %v6289, 1.0
        %v6340 = vadd.f32 %v6291, 1.0
        %v6341 = vadd.f32 %v6293, 1.0
        %v6342 = vadd.f32 %v6295, 1.0
        %v6343 = vadd.f32 %v6297, 1.0
        %v6344 = vadd.f32 %v6299, 1.0
        %v6345 = vadd.f32 %v6301, 1.0
        %v6346 = vadd.f32 %v6303, 1.0
        %v6347 = vadd.f32 %v6305, 1.0
        %v6348 = vadd.f32 %v6307, 1.0
        %v6349 = vadd.f32 %v6309, 1.0
        %v6350 = vadd.f32 %v6311, 1.0
        %v6351 = vadd.f32 %v6313, 1.0
        %v6352 = vadd.f32 %v6315, 1.0
        %v6353 = vadd.f32 %v6317, 1.0
        %v6354 = vadd.f32 %v6319, 1.0
        %v6355 = vadd.f32 %v6321, 1.0
        %v6356 = vadd.f32 %v6323, 1.0
        %v6357 = vadd.f32 %v6325, 1.0
        %v6358 = vrcp.pop %v6326
        %v6359 = vmul.f32 1.0, %v6358
        %v6360 = vrcp.pop %v6327
        %v6361 = vmul.f32 1.0, %v6360
        %v6362 = vrcp.pop %v6328
        %v6363 = vmul.f32 1.0, %v6362
        %v6364 = vrcp.pop %v6329
        %v6365 = vmul.f32 1.0, %v6364
        %v6366 = vrcp.pop %v6330
        %v6367 = vmul.f32 1.0, %v6366
        %v6368 = vrcp.pop %v6331
        %v6369 = vmul.f32 1.0, %v6368
        %v6370 = vrcp.pop %v6332
        %v6371 = vmul.f32 1.0, %v6370
        %v6372 = vrcp.pop %v6333
        %v6373 = vmul.f32 1.0, %v6372
        %v6374 = vrcp.pop %v6334
        %v6375 = vmul.f32 1.0, %v6374
        %v6376 = vrcp.pop %v6335
        %v6377 = vmul.f32 1.0, %v6376
        %v6378 = vrcp.pop %v6336
        %v6379 = vmul.f32 1.0, %v6378
        %v6380 = vrcp.pop %v6337
        %v6381 = vmul.f32 1.0, %v6380
        %v6382 = vrcp.pop %v6338
        %v6383 = vmul.f32 1.0, %v6382
        %v6384 = vrcp.pop %v6339
        %v6385 = vmul.f32 1.0, %v6384
        %v6386 = vrcp.pop %v6340
        %v6387 = vmul.f32 1.0, %v6386
        %v6388 = vrcp.pop %v6341
        %v6389 = vmul.f32 1.0, %v6388
        %v6390 = vrcp.pop %v6342
        %v6391 = vmul.f32 1.0, %v6390
        %v6392 = vrcp.pop %v6343
        %v6393 = vmul.f32 1.0, %v6392
        %v6394 = vrcp.pop %v6344
        %v6395 = vmul.f32 1.0, %v6394
        %v6396 = vrcp.pop %v6345
        %v6397 = vmul.f32 1.0, %v6396
        %v6398 = vrcp.pop %v6346
        %v6399 = vmul.f32 1.0, %v6398
        %v6400 = vrcp.pop %v6347
        %v6401 = vmul.f32 1.0, %v6400
        %v6402 = vrcp.pop %v6348
        %v6403 = vmul.f32 1.0, %v6402
        %v6404 = vrcp.pop %v6349
        %v6405 = vmul.f32 1.0, %v6404
        %v6406 = vrcp.pop %v6350
        %v6407 = vmul.f32 1.0, %v6406
        %v6408 = vrcp.pop %v6351
        %v6409 = vmul.f32 1.0, %v6408
        %v6410 = vrcp.pop %v6352
        %v6411 = vmul.f32 1.0, %v6410
        %v6412 = vrcp.pop %v6353
        %v6413 = vmul.f32 1.0, %v6412
        %v6414 = vrcp.pop %v6354
        %v6415 = vmul.f32 1.0, %v6414
        %v6416 = vrcp.pop %v6355
        %v6417 = vmul.f32 1.0, %v6416
        %v6418 = vrcp.pop %v6356
        %v6419 = vmul.f32 1.0, %v6418
        %v6420 = vrcp.pop %v6357
        %v6421 = vmul.f32 1.0, %v6420
        %v6422 = vsel %vm539, %v6359, 0.0
        %v6423 = vsel %vm539, %v6361, 0.0
        %v6424 = vadd.f32 %v6422, %v6423
        %v6425 = vsel %vm539, %v6363, 0.0
        %v6426 = vadd.f32 %v6424, %v6425
        %v6427 = vsel %vm539, %v6365, 0.0
        %v6428 = vadd.f32 %v6426, %v6427
        %v6429 = vsel %vm539, %v6367, 0.0
        %v6430 = vadd.f32 %v6428, %v6429
        %v6431 = vsel %vm539, %v6369, 0.0
        %v6432 = vadd.f32 %v6430, %v6431
        %v6433 = vsel %vm539, %v6371, 0.0
        %v6434 = vadd.f32 %v6432, %v6433
        %v6435 = vsel %vm539, %v6373, 0.0
        %v6436 = vadd.f32 %v6434, %v6435
        %v6437 = vsel %vm539, %v6375, 0.0
        %v6438 = vadd.f32 %v6436, %v6437
        %v6439 = vsel %vm539, %v6377, 0.0
        %v6440 = vadd.f32 %v6438, %v6439
        %v6441 = vsel %vm539, %v6379, 0.0
        %v6442 = vadd.f32 %v6440, %v6441
        %v6443 = vsel %vm539, %v6381, 0.0
        %v6444 = vadd.f32 %v6442, %v6443
        %v6445 = vsel %vm539, %v6383, 0.0
        %v6446 = vadd.f32 %v6444, %v6445
        %v6447 = vsel %vm539, %v6385, 0.0
        %v6448 = vadd.f32 %v6446, %v6447
        %v6449 = vsel %vm539, %v6387, 0.0
        %v6450 = vadd.f32 %v6448, %v6449
        %v6451 = vsel %vm539, %v6389, 0.0
        %v6452 = vadd.f32 %v6450, %v6451
        %v6453 = vsel %vm539, %v6391, 0.0
        %v6454 = vadd.f32 %v6452, %v6453
        %v6455 = vsel %vm539, %v6393, 0.0
        %v6456 = vadd.f32 %v6454, %v6455
        %v6457 = vsel %vm539, %v6395, 0.0
        %v6458 = vadd.f32 %v6456, %v6457
        %v6459 = vsel %vm539, %v6397, 0.0
        %v6460 = vadd.f32 %v6458, %v6459
        %v6461 = vsel %vm539, %v6399, 0.0
        %v6462 = vadd.f32 %v6460, %v6461
        %v6463 = vsel %vm539, %v6401, 0.0
        %v6464 = vadd.f32 %v6462, %v6463
        %v6465 = vsel %vm539, %v6403, 0.0
        %v6466 = vadd.f32 %v6464, %v6465
        %v6467 = vsel %vm539, %v6405, 0.0
        %v6468 = vadd.f32 %v6466, %v6467
        %v6469 = vsel %vm539, %v6407, 0.0
        %v6470 = vadd.f32 %v6468, %v6469
        %v6471 = vsel %vm539, %v6409, 0.0
        %v6472 = vadd.f32 %v6470, %v6471
        %v6473 = vsel %vm539, %v6411, 0.0
        %v6474 = vadd.f32 %v6472, %v6473
        %v6475 = vsel %vm539, %v6413, 0.0
        %v6476 = vadd.f32 %v6474, %v6475
        %v6477 = vsel %vm539, %v6415, 0.0
        %v6478 = vadd.f32 %v6476, %v6477
        %v6479 = vsel %vm539, %v6417, 0.0
        %v6480 = vadd.f32 %v6478, %v6479
        %v6481 = vsel %vm539, %v6419, 0.0
        %v6482 = vadd.f32 %v6480, %v6481
        %v6483 = vsel %vm539, %v6421, 0.0
        %v6484 = vadd.f32 %v6482, %v6483
        %6485 = vadd.xlane.f32.xlu0 %v6484
        %v6486 = vpop.xlane.xlu0 %6485
        %v6487 = vrot.slane %v6486, 4
        %v6488 = vadd.f32 %v6486, %v6487
        %v6489 = vrot.slane %v6488, 2
        %v6490 = vadd.f32 %v6488, %v6489
        %v6491 = vrot.slane %v6490, 1
        %v6492 = vadd.f32 %v6490, %v6491
        %s6493 = vtos %v6492
        %s6494 = sadd.f32 %s6493, 0.0005
        %6496 = vset.pattern.permute.xlu0 0
        %6497 = vperm.xlu0 %6496, %v6359
        %v6498 = vpop.permute.xlu0 %6497
        %6501 = vset.pattern.permute.xlu0 0
        %6502 = vperm.xlu0 %6501, %v6361
        %v6503 = vpop.permute.xlu0 %6502
        %6506 = vset.pattern.permute.xlu0 0
        %6507 = vperm.xlu0 %6506, %v6363
        %v6508 = vpop.permute.xlu0 %6507
        %6511 = vset.pattern.permute.xlu0 0
        %6512 = vperm.xlu0 %6511, %v6365
        %v6513 = vpop.permute.xlu0 %6512
        %6516 = vset.pattern.permute.xlu0 0
        %6517 = vperm.xlu0 %6516, %v6367
        %v6518 = vpop.permute.xlu0 %6517
        %6521 = vset.pattern.permute.xlu0 0
        %6522 = vperm.xlu0 %6521, %v6369
        %v6523 = vpop.permute.xlu0 %6522
        %6526 = vset.pattern.permute.xlu0 0
        %6527 = vperm.xlu0 %6526, %v6371
        %v6528 = vpop.permute.xlu0 %6527
        %6531 = vset.pattern.permute.xlu0 0
        %6532 = vperm.xlu0 %6531, %v6373
        %v6533 = vpop.permute.xlu0 %6532
        %6536 = vset.pattern.permute.xlu0 0
        %6537 = vperm.xlu0 %6536, %v6375
        %v6538 = vpop.permute.xlu0 %6537
        %6541 = vset.pattern.permute.xlu0 0
        %6542 = vperm.xlu0 %6541, %v6377
        %v6543 = vpop.permute.xlu0 %6542
        %6546 = vset.pattern.permute.xlu0 0
        %6547 = vperm.xlu0 %6546, %v6379
        %v6548 = vpop.permute.xlu0 %6547
        %6551 = vset.pattern.permute.xlu0 0
        %6552 = vperm.xlu0 %6551, %v6381
        %v6553 = vpop.permute.xlu0 %6552
        %6556 = vset.pattern.permute.xlu0 0
        %6557 = vperm.xlu0 %6556, %v6383
        %v6558 = vpop.permute.xlu0 %6557
        %6561 = vset.pattern.permute.xlu0 0
        %6562 = vperm.xlu0 %6561, %v6385
        %v6563 = vpop.permute.xlu0 %6562
        %6566 = vset.pattern.permute.xlu0 0
        %6567 = vperm.xlu0 %6566, %v6387
        %v6568 = vpop.permute.xlu0 %6567
        %6571 = vset.pattern.permute.xlu0 0
        %6572 = vperm.xlu0 %6571, %v6389
        %v6573 = vpop.permute.xlu0 %6572
        %6576 = vset.pattern.permute.xlu0 0
        %6577 = vperm.xlu0 %6576, %v6391
        %v6578 = vpop.permute.xlu0 %6577
        %6581 = vset.pattern.permute.xlu0 0
        %6582 = vperm.xlu0 %6581, %v6393
        %v6583 = vpop.permute.xlu0 %6582
        %6586 = vset.pattern.permute.xlu0 0
        %6587 = vperm.xlu0 %6586, %v6395
        %v6588 = vpop.permute.xlu0 %6587
        %6591 = vset.pattern.permute.xlu0 0
        %6592 = vperm.xlu0 %6591, %v6397
        %v6593 = vpop.permute.xlu0 %6592
        %6596 = vset.pattern.permute.xlu0 0
        %6597 = vperm.xlu0 %6596, %v6399
        %v6598 = vpop.permute.xlu0 %6597
        %6601 = vset.pattern.permute.xlu0 0
        %6602 = vperm.xlu0 %6601, %v6401
        %v6603 = vpop.permute.xlu0 %6602
        %6606 = vset.pattern.permute.xlu0 0
        %6607 = vperm.xlu0 %6606, %v6403
        %v6608 = vpop.permute.xlu0 %6607
        %6611 = vset.pattern.permute.xlu0 0
        %6612 = vperm.xlu0 %6611, %v6405
        %v6613 = vpop.permute.xlu0 %6612
        %6616 = vset.pattern.permute.xlu0 0
        %6617 = vperm.xlu0 %6616, %v6407
        %v6618 = vpop.permute.xlu0 %6617
        %6621 = vset.pattern.permute.xlu0 0
        %6622 = vperm.xlu0 %6621, %v6409
        %v6623 = vpop.permute.xlu0 %6622
        %6626 = vset.pattern.permute.xlu0 0
        %6627 = vperm.xlu0 %6626, %v6411
        %v6628 = vpop.permute.xlu0 %6627
        %6631 = vset.pattern.permute.xlu0 0
        %6632 = vperm.xlu0 %6631, %v6413
        %v6633 = vpop.permute.xlu0 %6632
        %6636 = vset.pattern.permute.xlu0 0
        %6637 = vperm.xlu0 %6636, %v6415
        %v6638 = vpop.permute.xlu0 %6637
        %6641 = vset.pattern.permute.xlu0 0
        %6642 = vperm.xlu0 %6641, %v6417
        %v6643 = vpop.permute.xlu0 %6642
        %6646 = vset.pattern.permute.xlu0 0
        %6647 = vperm.xlu0 %6646, %v6419
        %v6648 = vpop.permute.xlu0 %6647
        %6651 = vset.pattern.permute.xlu0 0
        %6652 = vperm.xlu0 %6651, %v6421
        %v6653 = vpop.permute.xlu0 %6652
        %v6655 = vmul.f32 %v3652, %v6498
        %v6656 = vmul.f32 %v3653, %v6503
        %v6657 = vmul.f32 %v3654, %v6508
        %v6658 = vmul.f32 %v3655, %v6513
        %v6659 = vmul.f32 %v3656, %v6518
        %v6660 = vmul.f32 %v3657, %v6523
        %v6661 = vmul.f32 %v3658, %v6528
        %v6662 = vmul.f32 %v3659, %v6533
        %v6663 = vmul.f32 %v3660, %v6538
        %v6664 = vmul.f32 %v3661, %v6543
        %v6665 = vmul.f32 %v3662, %v6548
        %v6666 = vmul.f32 %v3663, %v6553
        %v6667 = vmul.f32 %v3664, %v6558
        %v6668 = vmul.f32 %v3665, %v6563
        %v6669 = vmul.f32 %v3666, %v6568
        %v6670 = vmul.f32 %v3667, %v6573
        %v6671 = vmul.f32 %v3668, %v6578
        %v6672 = vmul.f32 %v3669, %v6583
        %v6673 = vmul.f32 %v3670, %v6588
        %v6674 = vmul.f32 %v3671, %v6593
        %v6675 = vmul.f32 %v3672, %v6598
        %v6676 = vmul.f32 %v3673, %v6603
        %v6677 = vmul.f32 %v3674, %v6608
        %v6678 = vmul.f32 %v3675, %v6613
        %v6679 = vmul.f32 %v3676, %v6618
        %v6680 = vmul.f32 %v3677, %v6623
        %v6681 = vmul.f32 %v3678, %v6628
        %v6682 = vmul.f32 %v3679, %v6633
        %v6683 = vmul.f32 %v3680, %v6638
        %v6684 = vmul.f32 %v3681, %v6643
        %v6685 = vmul.f32 %v3682, %v6648
        %v6686 = vmul.f32 %v3683, %v6653
        %v6687 = vsel %vm433, %v6655, 0.0
        %v6688 = vsel %vm433, %v6657, 0.0
        %v6689 = vadd.f32 %v6687, %v6688
        %v6690 = vsel %vm433, %v6659, 0.0
        %v6691 = vadd.f32 %v6689, %v6690
        %v6692 = vsel %vm433, %v6661, 0.0
        %v6693 = vadd.f32 %v6691, %v6692
        %v6694 = vsel %vm433, %v6663, 0.0
        %v6695 = vadd.f32 %v6693, %v6694
        %v6696 = vsel %vm433, %v6665, 0.0
        %v6697 = vadd.f32 %v6695, %v6696
        %v6698 = vsel %vm433, %v6667, 0.0
        %v6699 = vadd.f32 %v6697, %v6698
        %v6700 = vsel %vm433, %v6669, 0.0
        %v6701 = vadd.f32 %v6699, %v6700
        %v6702 = vsel %vm433, %v6671, 0.0
        %v6703 = vadd.f32 %v6701, %v6702
        %v6704 = vsel %vm433, %v6673, 0.0
        %v6705 = vadd.f32 %v6703, %v6704
        %v6706 = vsel %vm433, %v6675, 0.0
        %v6707 = vadd.f32 %v6705, %v6706
        %v6708 = vsel %vm433, %v6677, 0.0
        %v6709 = vadd.f32 %v6707, %v6708
        %v6710 = vsel %vm433, %v6679, 0.0
        %v6711 = vadd.f32 %v6709, %v6710
        %v6712 = vsel %vm433, %v6681, 0.0
        %v6713 = vadd.f32 %v6711, %v6712
        %v6714 = vsel %vm433, %v6683, 0.0
        %v6715 = vadd.f32 %v6713, %v6714
        %v6716 = vsel %vm433, %v6685, 0.0
        %v6717 = vadd.f32 %v6715, %v6716
        %v6718 = vsel %vm433, %v6656, 0.0
        %v6719 = vsel %vm433, %v6658, 0.0
        %v6720 = vadd.f32 %v6718, %v6719
        %v6721 = vsel %vm433, %v6660, 0.0
        %v6722 = vadd.f32 %v6720, %v6721
        %v6723 = vsel %vm433, %v6662, 0.0
        %v6724 = vadd.f32 %v6722, %v6723
        %v6725 = vsel %vm433, %v6664, 0.0
        %v6726 = vadd.f32 %v6724, %v6725
        %v6727 = vsel %vm433, %v6666, 0.0
        %v6728 = vadd.f32 %v6726, %v6727
        %v6729 = vsel %vm433, %v6668, 0.0
        %v6730 = vadd.f32 %v6728, %v6729
        %v6731 = vsel %vm433, %v6670, 0.0
        %v6732 = vadd.f32 %v6730, %v6731
        %v6733 = vsel %vm433, %v6672, 0.0
        %v6734 = vadd.f32 %v6732, %v6733
        %v6735 = vsel %vm433, %v6674, 0.0
        %v6736 = vadd.f32 %v6734, %v6735
        %v6737 = vsel %vm433, %v6676, 0.0
        %v6738 = vadd.f32 %v6736, %v6737
        %v6739 = vsel %vm433, %v6678, 0.0
        %v6740 = vadd.f32 %v6738, %v6739
        %v6741 = vsel %vm433, %v6680, 0.0
        %v6742 = vadd.f32 %v6740, %v6741
        %v6743 = vsel %vm433, %v6682, 0.0
        %v6744 = vadd.f32 %v6742, %v6743
        %v6745 = vsel %vm433, %v6684, 0.0
        %v6746 = vadd.f32 %v6744, %v6745
        %v6747 = vsel %vm433, %v6686, 0.0
        %v6748 = vadd.f32 %v6746, %v6747
        %v6749 = vsel %vm433, %v6717, 0.0
        %v6750 = vsel %vm433, %v6748, 0.0
        %v6751 = vadd.f32 %v6749, %v6750
        %v6752 = vrot.slane %v6751, 4
        %v6753 = vadd.f32 %v6751, %v6752
        %v6754 = vrot.slane %v6753, 2
        %v6755 = vadd.f32 %v6753, %v6754
        %v6756 = vrot.slane %v6755, 1
        %v6757 = vadd.f32 %v6755, %v6756
        %v6758 = vstv %s6494
        %v6759 = vrcp.pop %v6758
        %v6760 = vmul.f32 %v6757, %v6759
        %v6761 = vld [vmem:[%s9] sm:$0xff]
        %v6762 = vld [vmem:[%s9 + $0x8] sm:$0xff]
        %v6764 = vsel %vm433, %v6760, 0
        %6766 = vmatprep.subr.mxu0 0.0
        %6767 = vmatpush1.msra.mxu0 %v6761
        %6768 = vmatprep.subr.mxu0 0.0
        %6769 = vmatpush1.msra.mxu0 %v6762
        %6770 = vmatprep.subr.mxu0 0.0
        %6771 = vmatpush1.msra.mxu0 0.0
        %6772 = vmatprep.subr.mxu0 0.0
        %6773 = vmatpush1.msra.mxu0 0.0
        %6774 = vmatprep.subr.mxu0 0.0
        %6775 = vmatpush1.msra.mxu0 0.0
        %6776 = vmatprep.subr.mxu0 0.0
        %6777 = vmatpush1.msra.mxu0 0.0
        %6778 = vmatprep.subr.mxu0 0.0
        %6779 = vmatpush1.msra.mxu0 0.0
        %6780 = vmatprep.subr.mxu0 0.0
        %6781 = vmatpush1.msra.mxu0 0.0
        %6782 = vmatprep.subr.mxu0 0.0
        %6783 = vmatpush1.msra.mxu0 0.0
        %6784 = vmatprep.subr.mxu0 0.0
        %6785 = vmatpush1.msra.mxu0 0.0
        %6786 = vmatprep.subr.mxu0 0.0
        %6787 = vmatpush1.msra.mxu0 0.0
        %6788 = vmatprep.subr.mxu0 0.0
        %6789 = vmatpush1.msra.mxu0 0.0
        %6790 = vmatprep.subr.mxu0 0.0
        %6791 = vmatpush1.msra.mxu0 0.0
        %6792 = vmatprep.subr.mxu0 0.0
        %6793 = vmatpush1.msra.mxu0 0.0
        %6794 = vmatprep.subr.mxu0 0.0
        %6795 = vmatpush1.msra.mxu0 0.0
        %6796 = vmatprep.subr.mxu0 0.0
        %6797 = vmatpush1.msra.mxu0 0.0
        %6798 = vmatprep.subr.mxu0 0.0
        %6799 = vmatpush1.msra.mxu0 0.0
        %6800 = vmatprep.subr.mxu0 0.0
        %6801 = vmatpush1.msra.mxu0 0.0
        %6802 = vmatprep.subr.mxu0 0.0
        %6803 = vmatpush1.msra.mxu0 0.0
        %6804 = vmatprep.subr.mxu0 0.0
        %6805 = vmatpush1.msra.mxu0 0.0
        %6806 = vmatprep.subr.mxu0 0.0
        %6807 = vmatpush1.msra.mxu0 0.0
        %6808 = vmatprep.subr.mxu0 0.0
        %6809 = vmatpush1.msra.mxu0 0.0
        %6810 = vmatprep.subr.mxu0 0.0
        %6811 = vmatpush1.msra.mxu0 0.0
        %6812 = vmatprep.subr.mxu0 0.0
        %6813 = vmatpush1.msra.mxu0 0.0
        %6814 = vmatprep.subr.mxu0 0.0
        %6815 = vmatpush1.msra.mxu0 0.0
        %6816 = vmatprep.subr.mxu0 0.0
        %6817 = vmatpush1.msra.mxu0 0.0
        %6818 = vmatprep.subr.mxu0 0.0
        %6819 = vmatpush1.msra.mxu0 0.0
        %6820 = vmatprep.subr.mxu0 0.0
        %6821 = vmatpush1.msra.mxu0 0.0
        %6822 = vmatprep.subr.mxu0 0.0
        %6823 = vmatpush1.msra.mxu0 0.0
        %6824 = vmatprep.subr.mxu0 0.0
        %6825 = vmatpush1.msra.mxu0 0.0
        %6826 = vmatprep.subr.mxu0 0.0
        %6827 = vmatpush1.msra.mxu0 0.0
        %6828 = vmatprep.subr.mxu0 0.0
        %6829 = vmatpush1.msra.mxu0 0.0
        %6830 = vmatprep.mubr.f32.mxu0 0.0
        %6831 = vmatmul.mubr.f32.gmra.mrb[0].mxu0 %v6764
        %v6832 = vpop.f32.mrb[0].mxu0
        %v6833 = vadd.f32 0.0, %v6832
        %v6834 = vpop.f32.mrb[0].mxu0
        %6835 = vdwg.mxu0
        %v6836 = vld [vmem:[%s10] sm:$0xff]
        %v6837 = vld [vmem:[%s10 + $0x8] sm:$0xff]
        %v6838 = vld [vmem:[%s10 + $0x10] sm:$0xff]
        %v6839 = vld [vmem:[%s10 + $0x18] sm:$0xff]
        %v6840 = vld [vmem:[%s11] sm:$0x1]
        %vm6841 = vcmask 261120
        %v6843 = vsel %vm6841, %v6833, 0
        %6845 = vmatprep.subr.mxu0 0.0
        %6846 = vmatpush1.msra.mxu0 %v6836
        %6847 = vmatprep.subr.mxu0 0.0
        %6848 = vmatpush1.msra.mxu0 %v6837
        %6849 = vmatprep.subr.mxu0 0.0
        %6850 = vmatpush1.msra.mxu0 %v6838
        %6851 = vmatprep.subr.mxu0 0.0
        %6852 = vmatpush1.msra.mxu0 %v6839
        %6853 = vmatprep.subr.mxu0 0.0
        %6854 = vmatpush1.msra.mxu0 0.0
        %6855 = vmatprep.subr.mxu0 0.0
        %6856 = vmatpush1.msra.mxu0 0.0
        %6857 = vmatprep.subr.mxu0 0.0
        %6858 = vmatpush1.msra.mxu0 0.0
        %6859 = vmatprep.subr.mxu0 0.0
        %6860 = vmatpush1.msra.mxu0 0.0
        %6861 = vmatprep.subr.mxu0 0.0
        %6862 = vmatpush1.msra.mxu0 0.0
        %6863 = vmatprep.subr.mxu0 0.0
        %6864 = vmatpush1.msra.mxu0 0.0
        %6865 = vmatprep.subr.mxu0 0.0
        %6866 = vmatpush1.msra.mxu0 0.0
        %6867 = vmatprep.subr.mxu0 0.0
        %6868 = vmatpush1.msra.mxu0 0.0
        %6869 = vmatprep.subr.mxu0 0.0
        %6870 = vmatpush1.msra.mxu0 0.0
        %6871 = vmatprep.subr.mxu0 0.0
        %6872 = vmatpush1.msra.mxu0 0.0
        %6873 = vmatprep.subr.mxu0 0.0
        %6874 = vmatpush1.msra.mxu0 0.0
        %6875 = vmatprep.subr.mxu0 0.0
        %6876 = vmatpush1.msra.mxu0 0.0
        %6877 = vmatprep.subr.mxu0 0.0
        %6878 = vmatpush1.msra.mxu0 0.0
        %6879 = vmatprep.subr.mxu0 0.0
        %6880 = vmatpush1.msra.mxu0 0.0
        %6881 = vmatprep.subr.mxu0 0.0
        %6882 = vmatpush1.msra.mxu0 0.0
        %6883 = vmatprep.subr.mxu0 0.0
        %6884 = vmatpush1.msra.mxu0 0.0
        %6885 = vmatprep.subr.mxu0 0.0
        %6886 = vmatpush1.msra.mxu0 0.0
        %6887 = vmatprep.subr.mxu0 0.0
        %6888 = vmatpush1.msra.mxu0 0.0
        %6889 = vmatprep.subr.mxu0 0.0
        %6890 = vmatpush1.msra.mxu0 0.0
        %6891 = vmatprep.subr.mxu0 0.0
        %6892 = vmatpush1.msra.mxu0 0.0
        %6893 = vmatprep.subr.mxu0 0.0
        %6894 = vmatpush1.msra.mxu0 0.0
        %6895 = vmatprep.subr.mxu0 0.0
        %6896 = vmatpush1.msra.mxu0 0.0
        %6897 = vmatprep.subr.mxu0 0.0
        %6898 = vmatpush1.msra.mxu0 0.0
        %6899 = vmatprep.subr.mxu0 0.0
        %6900 = vmatpush1.msra.mxu0 0.0
        %6901 = vmatprep.subr.mxu0 0.0
        %6902 = vmatpush1.msra.mxu0 0.0
        %6903 = vmatprep.subr.mxu0 0.0
        %6904 = vmatpush1.msra.mxu0 0.0
        %6905 = vmatprep.subr.mxu0 0.0
        %6906 = vmatpush1.msra.mxu0 0.0
        %6907 = vmatprep.subr.mxu0 0.0
        %6908 = vmatpush1.msra.mxu0 0.0
        %6909 = vmatprep.mubr.f32.mxu0 0.0
        %6910 = vmatmul.mubr.f32.gmra.mrb[0].mxu0 %v6843
        %v6911 = vpop.f32.mrb[0].mxu0
        %v6912 = vadd.f32 %v6840, %v6911
        %v6913 = vpop.f32.mrb[0].mxu0
        %6914 = vdwg.mxu0
        %vm6915 = vcmask 122880
        %6916 = vst.msk [vmem:[%s422] sm:$0x1] %vm6915, %v6912
        %s6917 = sand.u32 %s298, 1
        %s6918 = scalar_lea.sflag [#allocation6], %s6917
        %s6919 = sand.u32 %s298, 1
        %s6920 = scalar_lea.vmem [#allocation5], %s6919
        // Predicated region
        $region69: #{tpu_custom_call.1} parent=67 // pred_check
          %p6921 = pneg %p308
        $region70: #{tpu_custom_call.1} parent=67 // pred_check_branch
          %6923 = sbr.rel (%p6921) target = $region72
        $region71: #{tpu_custom_call.1} parent=67 // pred_region
          %s6925 = ssub.s32 16, 16
          %6926 = vsyncadd %s6918, %s6925
          %s6927 = smul.addr %s28, 16
          %s6928 = scalar_lea.hbm %s12, %s6927
          %s6930 = sshll.u32 %s6920, 4
          %s6931 = int_to_ptr.vmem [resolvable:$true] %s6930
          %6933 = dma.vmem_to_hbm [thread:$0]  %s6931, 16, %s6928, %s6918
        $region72: #{tpu_custom_call.1} parent=67 // pred_fallthru
          _
      $region68: #{tpu_custom_call.1} parent=5 // pred_fallthru
        _
      %p6934 = scmp.le.s32.totalorder 2, %s23
      // Predicated region
      $region73: #{tpu_custom_call.1} parent=5 // pred_check
        %p6935 = pneg %p6934
      $region74: #{tpu_custom_call.1} parent=5 // pred_check_branch
        %6937 = sbr.rel (%p6935) target = $region76
      $region75: #{tpu_custom_call.1} parent=5 // pred_region
        %s6938 = ssub.s32 %s23, 2
        // Predicated region
        $region77: #{tpu_custom_call.1} parent=75 // pred_check
          %p6939 = pneg %p314
        $region78: #{tpu_custom_call.1} parent=75 // pred_check_branch
          %6941 = sbr.rel (%p6939) target = $region80
        $region79: #{tpu_custom_call.1} parent=75 // pred_region
          %s6942 = sand.u32 %s299, 1
          %s6943 = scalar_lea.sflag [#allocation6], %s6942
          %s6944 = sand.u32 %s299, 1
          %s6945 = scalar_lea.vmem [#allocation5], %s6944
          %6946 = dma.done %s6943, 16
        $region80: #{tpu_custom_call.1} parent=75 // pred_fallthru
          _
      $region76: #{tpu_custom_call.1} parent=5 // pred_fallthru
        _
    $region6: #{tpu_custom_call.1} parent=1 // loop_footer
      %s27 = sadd.s32 1, %s23
    $region7: #{tpu_custom_call.1} parent=1 // loop_footer_branch
      %22 = sbr.rel target = $region3
    $region8: #{tpu_custom_call.1} parent=1 // loop_exit
      _
    %6947 = vsyncpa [#allocation6], 1
    %s6948 = scalar_lea.sflag [#allocation6], 1
    %6949 = vsyncpa %s6948, 1

</llo_original>
